<compile_context>
chip_gen: v6e
topology: v6e:2x2x1
jax: 0.10.0
libtpu: 0.0.40
codegen_flags: <defaults>
</compile_context>

<pallas_src>
import jax
import jax.numpy as jnp
from jax.experimental import pallas as pl
from jax.experimental.pallas import tpu as pltpu

OUT_PAD = 128  # lane-dense padded output width (real output dim is 6)


def _mlp_kernel(x_ref, y_ref, w1x_ref, w1y_ref, b1_ref, w2_ref, b2_ref,
                w3_ref, b3_ref, o_ref):
    # x/y arrive as bf16; accumulate in f32 on the MXU.
    h1 = (jnp.dot(x_ref[...], w1x_ref[...], preferred_element_type=jnp.float32)
          + jnp.dot(y_ref[...], w1y_ref[...], preferred_element_type=jnp.float32)
          + b1_ref[...])
    h1 = jnp.maximum(h1, 0.0).astype(jnp.bfloat16)
    h2 = jnp.dot(h1, w2_ref[...], preferred_element_type=jnp.float32) + b2_ref[...]
    h2 = jnp.maximum(h2, 0.0).astype(jnp.bfloat16)
    o_ref[...] = (jnp.dot(h2, w3_ref[...], preferred_element_type=jnp.float32)
                  + b3_ref[...])


def mlp_pallas(x_flat, y_flat, w1x, w1y, b1, w2, b2, w3p, b3p, *, tm):
    pb, in_half = x_flat.shape
    h1 = w1x.shape[1]
    h2 = w2.shape[1]
    out_pad = w3p.shape[1]
    out_dim = 6
    grid = (pb // tm,)

    act_bytes_per_el = x_flat.dtype.itemsize  # bf16 -> 2

    weight_bytes = (2 * in_half * h1 + h1 * h2 + h2 * out_pad) * 2  # bf16
    bias_bytes = (h1 + h2 + out_pad) * 4
    act_bytes = pb * (2 * in_half * act_bytes_per_el + out_pad * 4)
    bytes_accessed = weight_bytes + bias_bytes + act_bytes
    # Last-layer flops counted with the real 6 output columns (advisory; the
    # MXU physically computes the zero-padded 128-wide product).
    flops = 2 * pb * (2 * in_half * h1 + h1 * h2 + h2 * out_dim)

    # VMEM budget: double-buffered x/y/out tiles + resident weights (counted
    # twice in case the Buffered(1) request is not honored) + f32/bf16
    # intermediates + headroom; clamped to [16 MiB, 48 MiB] so it stays above
    # v5e's scoped default and safely under v7x's 64 MiB per-TC physical VMEM.
    tile_bytes = 2 * (2 * tm * in_half * act_bytes_per_el + tm * out_pad * 4)
    inter_bytes = tm * (h1 + h2) * 6
    vmem_limit = int(min(48 << 20,
                         max(16 << 20,
                             2 * weight_bytes + bias_bytes + tile_bytes
                             + inter_bytes + (4 << 20))))

    def build(single_buffer_weights):
        if single_buffer_weights:
            def resident(shape):
                # Constant index_map => weight stays VMEM-resident; a single
                # buffer is enough (saves ~3 MB VMEM vs default double-buffer).
                return pl.BlockSpec(shape, lambda i: (0, 0),
                                    pipeline_mode=pl.Buffered(1))
        else:
            def resident(shape):
                return pl.BlockSpec(shape, lambda i: (0, 0))

        return pl.pallas_call(
            _mlp_kernel,
            out_shape=jax.ShapeDtypeStruct((pb, out_pad), jnp.float32),
            grid_spec=pltpu.PrefetchScalarGridSpec(
                num_scalar_prefetch=0,
                grid=grid,
                in_specs=[
                    pl.BlockSpec((tm, in_half), lambda i: (i, 0)),   # x tile
                    pl.BlockSpec((tm, in_half), lambda i: (i, 0)),   # y tile
                    resident(w1x.shape),
                    resident(w1y.shape),
                    resident(b1.shape),
                    resident(w2.shape),
                    resident(b2.shape),
                    resident(w3p.shape),
                    resident(b3p.shape),
                ],
                out_specs=pl.BlockSpec((tm, out_pad), lambda i: (i, 0)),
            ),
            compiler_params=pltpu.CompilerParams(
                dimension_semantics=("parallel",),
                vmem_limit_bytes=vmem_limit,
            ),
            cost_estimate=pl.CostEstimate(
                flops=flops, transcendentals=0, bytes_accessed=bytes_accessed),
        )

    args = (x_flat, y_flat, w1x, w1y, b1, w2, b2, w3p, b3p)
    try:
        return build(True)(*args)
    except Exception:
        # pipeline_mode=pl.Buffered(1) not accepted by this jax build; fall
        # back to default double-buffered resident weights (same semantics).
        return build(False)(*args)


class DenseMatrixNetPallas:
    """JAX/Pallas re-implementation of DenseMatrixNet (dimension=2)."""

    def __init__(self, size=28, dimension=2, key=jax.random.PRNGKey(0)):
        assert dimension == 2, "only the 2-D branch is exercised here"
        self.size = size
        self.dimension = dimension
        in_half = size * size
        in_dim = 2 * in_half
        out_dim = 6  # dimension == 2
        H1, H2 = 800, 300
        self.H1, self.H2 = H1, H2
        self.out_dim = out_dim

        k1, k2, k3, k4, k5 = jax.random.split(key, 5)

        def uinit(k, shape, fan_in):
            bound = 1.0 / jnp.sqrt(jnp.float32(fan_in))
            return jax.random.uniform(k, shape, jnp.float32, -bound, bound)

        # Weights stored (in, out) so the kernel does x @ W + b.
        # W1 is split into x-rows and y-rows so no concat is needed:
        # torch.cat([x, y], 1).reshape(-1, 2*S*S) @ W1 == x@W1x + y@W1y.
        w1 = uinit(k1, (in_dim, H1), in_dim)
        self.w1x = w1[:in_half].astype(jnp.bfloat16)
        self.w1y = w1[in_half:].astype(jnp.bfloat16)
        self.b1 = uinit(k2, (1, H1), in_dim)
        self.w2 = uinit(k3, (H1, H2), H1).astype(jnp.bfloat16)
        self.b2 = uinit(k4, (1, H2), H1)
        # torch.nn.init.zeros_(dense3.weight); bias keeps default init.
        # Zero-padded to OUT_PAD columns for a lane-dense kernel output, and
        # the "+identity" epilogue offset is folded into bias cols 0 and 4
        # (matrix entries (0,0) and (1,1)).
        self.w3p = jnp.zeros((H2, OUT_PAD), jnp.bfloat16)
        b3 = uinit(k5, (1, out_dim), H2)
        self.b3p = (jnp.zeros((1, OUT_PAD), jnp.float32)
                    .at[:, :out_dim].set(b3)
                    .at[0, 0].add(1.0)
                    .at[0, 4].add(1.0))

    def load_dense3(self, w3, b3):
        """Install trained dense3 params. w3: (H2, 6) in/out layout, b3: (6,)."""
        w3 = jnp.asarray(w3, jnp.float32).reshape(self.H2, self.out_dim)
        b3 = jnp.asarray(b3, jnp.float32).reshape(1, self.out_dim)
        self.w3p = (jnp.zeros((self.H2, OUT_PAD), jnp.float32)
                    .at[:, :self.out_dim].set(w3)).astype(jnp.bfloat16)
        self.b3p = (jnp.zeros((1, OUT_PAD), jnp.float32)
                    .at[:, :self.out_dim].set(b3)
                    .at[0, 0].add(1.0)
                    .at[0, 4].add(1.0))

    def __call__(self, x, y):
        B = x.shape[0]
        S = self.size
        # cat([x, y], 1).reshape(-1, 2*S*S) with 1-channel inputs is the row
        # block [x_flat | y_flat]; halves kept separate, W1 split accordingly.
        # Cast to bf16 here (fuses with the reshape/pad) to halve input DMA.
        x_flat = x.reshape(B, S * S).astype(jnp.bfloat16)
        y_flat = y.reshape(B, S * S).astype(jnp.bfloat16)

        # Tiling policy: as few grid steps as possible.
        #  - B <= 512: one padded tile, grid=(1,)  (weights hit the MXU once,
        #    no per-step overhead, no per-core weight duplication on v7x).
        #  - B  > 512: tm=256 tiles (fills the 256-wide MXU on v6e/v7x,
        #    fine on v5e), batch axis parallel over TensorCores.
        if B <= 512:
            tm = max(128, ((B + 127) // 128) * 128)
        else:
            tm = 256
        pb = ((B + tm - 1) // tm) * tm
        if pb != B:
            x_flat = jnp.pad(x_flat, ((0, pb - B), (0, 0)))
            y_flat = jnp.pad(y_flat, ((0, pb - B), (0, 0)))

        out_pad = mlp_pallas(x_flat, y_flat, self.w1x, self.w1y, self.b1,
                             self.w2, self.b2, self.w3p, self.b3p, tm=tm)
        out = out_pad[:B, :self.out_dim]

        # 2-D branch: (B, 6) -> (B, 2, 3), append [0, 0, 1] row.  The identity
        # offset is already folded into b3p, so no extra add here.
        m = out.reshape(B, 2, 3)
        last_row = jnp.broadcast_to(
            jnp.array([[[0.0, 0.0, 1.0]]], jnp.float32), (B, 1, 3))
        return jnp.concatenate([m, last_row], axis=1)


def _reference(net, x, y):
    """Pure-JAX reference using the same (bf16) params and bf16 activations."""
    B = x.shape[0]
    S = net.size
    xf = x.reshape(B, S * S).astype(jnp.bfloat16)
    yf = y.reshape(B, S * S).astype(jnp.bfloat16)
    h1 = (jnp.dot(xf, net.w1x, preferred_element_type=jnp.float32)
          + jnp.dot(yf, net.w1y, preferred_element_type=jnp.float32) + net.b1)
    h1 = jnp.maximum(h1, 0.0).astype(jnp.bfloat16)
    h2 = jnp.dot(h1, net.w2, preferred_element_type=jnp.float32) + net.b2
    h2 = jnp.maximum(h2, 0.0).astype(jnp.bfloat16)
    o = (jnp.dot(h2, net.w3p, preferred_element_type=jnp.float32)
         + net.b3p)[:, :net.out_dim]
    m = o.reshape(B, 2, 3)
    last_row = jnp.broadcast_to(
        jnp.array([[[0.0, 0.0, 1.0]]], jnp.float32), (B, 1, 3))
    return jnp.concatenate([m, last_row], axis=1)


if __name__ == "__main__":
    size = 16   # small spatial size consistent with the module's `size` param
    B = 2
    key = jax.random.PRNGKey(0)
    kx, ky, kp, kw, kb = jax.random.split(key, 5)

    x = jax.random.normal(kx, (B, 1, size, size), jnp.float32)
    y = jax.random.normal(ky, (B, 1, size, size), jnp.float32)

    net = DenseMatrixNetPallas(size=size, dimension=2, key=kp)
    # Install a non-zero dense3 so the full matmul path is exercised
    # (the reference init has dense3.weight == 0, which would hide bugs).
    w3 = jax.random.uniform(kw, (net.H2, net.out_dim), jnp.float32, -0.05, 0.05)
    b3 = jax.random.uniform(kb, (net.out_dim,), jnp.float32, -0.05, 0.05)
    net.load_dense3(w3, b3)

    out = net(x, y)
    out = jax.block_until_ready(out)

    assert out.shape == (B, 3, 3), out.shape
    assert bool(jnp.all(jnp.isfinite(out)))
    ref = jax.block_until_ready(_reference(net, x, y))
    assert bool(jnp.allclose(out, ref, rtol=2e-3, atol=2e-3)), (
        "kernel/reference mismatch: max abs err "
        f"{float(jnp.max(jnp.abs(out - ref)))}")
    print("KERNEL_OK")
</pallas_src>

<mosaic_0001>
module attributes {stable_mosaic.version = 11 : i64} {
  func.func @_mlp_kernel(%arg0: i32, %arg1: memref<128x256xbf16, #tpu.memory_space<vmem>>, %arg2: memref<128x256xbf16, #tpu.memory_space<vmem>>, %arg3: memref<256x800xbf16, #tpu.memory_space<vmem>>, %arg4: memref<256x800xbf16, #tpu.memory_space<vmem>>, %arg5: memref<1x800xf32, #tpu.memory_space<vmem>>, %arg6: memref<800x300xbf16, #tpu.memory_space<vmem>>, %arg7: memref<1x300xf32, #tpu.memory_space<vmem>>, %arg8: memref<300x128xbf16, #tpu.memory_space<vmem>>, %arg9: memref<1x128xf32, #tpu.memory_space<vmem>>, %arg10: memref<128x128xf32, #tpu.memory_space<vmem>>) attributes {dimension_semantics = [#tpu.dimension_semantics<parallel>], iteration_bounds = array<i64: 1>, scalar_prefetch = 0 : i64, scratch_operands = 0 : i64, tpu.core_type = #tpu.core_type<tc>, window_params = [{transform_indices = @transform_0, window_bounds = array<i64: 128, 256>}, {transform_indices = @transform_1, window_bounds = array<i64: 128, 256>}, {pipeline_mode = #tpu.pipeline_mode<synchronous>, transform_indices = @transform_2, window_bounds = array<i64: 256, 800>}, {pipeline_mode = #tpu.pipeline_mode<synchronous>, transform_indices = @transform_3, window_bounds = array<i64: 256, 800>}, {pipeline_mode = #tpu.pipeline_mode<synchronous>, transform_indices = @transform_4, window_bounds = array<i64: 1, 800>}, {pipeline_mode = #tpu.pipeline_mode<synchronous>, transform_indices = @transform_5, window_bounds = array<i64: 800, 300>}, {pipeline_mode = #tpu.pipeline_mode<synchronous>, transform_indices = @transform_6, window_bounds = array<i64: 1, 300>}, {pipeline_mode = #tpu.pipeline_mode<synchronous>, transform_indices = @transform_7, window_bounds = array<i64: 300, 128>}, {pipeline_mode = #tpu.pipeline_mode<synchronous>, transform_indices = @transform_8, window_bounds = array<i64: 1, 128>}, {transform_indices = @transform_9, window_bounds = array<i64: 128, 128>}]} {
    %c0 = arith.constant 0 : index
    %c0_0 = arith.constant 0 : index
    %0 = vector.load %arg1[%c0, %c0_0] : memref<128x256xbf16, #tpu.memory_space<vmem>>, vector<128x256xbf16>
    %c0_1 = arith.constant 0 : index
    %c0_2 = arith.constant 0 : index
    %1 = vector.load %arg3[%c0_1, %c0_2] : memref<256x800xbf16, #tpu.memory_space<vmem>>, vector<256x800xbf16>
    %cst = arith.constant dense<0.000000e+00> : vector<128x800xf32>
    %2 = tpu.matmul %0, %1, %cst {dimension_numbers = #tpu.dot_dimension_numbers<[1], [0], [0], [1], [0, 0, 1, 1], [], []>} : vector<128x256xbf16>, vector<256x800xbf16>, vector<128x800xf32> -> vector<128x800xf32>
    %c0_3 = arith.constant 0 : index
    %c0_4 = arith.constant 0 : index
    %3 = vector.load %arg2[%c0_3, %c0_4] : memref<128x256xbf16, #tpu.memory_space<vmem>>, vector<128x256xbf16>
    %c0_5 = arith.constant 0 : index
    %c0_6 = arith.constant 0 : index
    %4 = vector.load %arg4[%c0_5, %c0_6] : memref<256x800xbf16, #tpu.memory_space<vmem>>, vector<256x800xbf16>
    %cst_7 = arith.constant dense<0.000000e+00> : vector<128x800xf32>
    %5 = tpu.matmul %3, %4, %cst_7 {dimension_numbers = #tpu.dot_dimension_numbers<[1], [0], [0], [1], [0, 0, 1, 1], [], []>} : vector<128x256xbf16>, vector<256x800xbf16>, vector<128x800xf32> -> vector<128x800xf32>
    %6 = arith.addf %2, %5 : vector<128x800xf32>
    %c0_8 = arith.constant 0 : index
    %c0_9 = arith.constant 0 : index
    %7 = vector.load %arg5[%c0_8, %c0_9] : memref<1x800xf32, #tpu.memory_space<vmem>>, vector<1x800xf32>
    %8 = vector.broadcast %7 : vector<1x800xf32> to vector<128x800xf32>
    %9 = arith.addf %6, %8 : vector<128x800xf32>
    %cst_10 = arith.constant 0.000000e+00 : f32
    %10 = vector.broadcast %cst_10 : f32 to vector<128x800xf32>
    %11 = arith.maximumf %9, %10 : vector<128x800xf32>
    %12 = arith.truncf %11 : vector<128x800xf32> to vector<128x800xbf16>
    %c0_11 = arith.constant 0 : index
    %c0_12 = arith.constant 0 : index
    %13 = vector.load %arg6[%c0_11, %c0_12] : memref<800x300xbf16, #tpu.memory_space<vmem>>, vector<800x300xbf16>
    %cst_13 = arith.constant dense<0.000000e+00> : vector<128x300xf32>
    %14 = tpu.matmul %12, %13, %cst_13 {dimension_numbers = #tpu.dot_dimension_numbers<[1], [0], [0], [1], [0, 0, 1, 1], [], []>} : vector<128x800xbf16>, vector<800x300xbf16>, vector<128x300xf32> -> vector<128x300xf32>
    %c0_14 = arith.constant 0 : index
    %c0_15 = arith.constant 0 : index
    %15 = vector.load %arg7[%c0_14, %c0_15] : memref<1x300xf32, #tpu.memory_space<vmem>>, vector<1x300xf32>
    %16 = vector.broadcast %15 : vector<1x300xf32> to vector<128x300xf32>
    %17 = arith.addf %14, %16 : vector<128x300xf32>
    %cst_16 = arith.constant 0.000000e+00 : f32
    %18 = vector.broadcast %cst_16 : f32 to vector<128x300xf32>
    %19 = arith.maximumf %17, %18 : vector<128x300xf32>
    %20 = arith.truncf %19 : vector<128x300xf32> to vector<128x300xbf16>
    %c0_17 = arith.constant 0 : index
    %c0_18 = arith.constant 0 : index
    %21 = vector.load %arg8[%c0_17, %c0_18] : memref<300x128xbf16, #tpu.memory_space<vmem>>, vector<300x128xbf16>
    %cst_19 = arith.constant dense<0.000000e+00> : vector<128x128xf32>
    %22 = tpu.matmul %20, %21, %cst_19 {dimension_numbers = #tpu.dot_dimension_numbers<[1], [0], [0], [1], [0, 0, 1, 1], [], []>} : vector<128x300xbf16>, vector<300x128xbf16>, vector<128x128xf32> -> vector<128x128xf32>
    %c0_20 = arith.constant 0 : index
    %c0_21 = arith.constant 0 : index
    %23 = vector.load %arg9[%c0_20, %c0_21] : memref<1x128xf32, #tpu.memory_space<vmem>>, vector<1x128xf32>
    %24 = vector.broadcast %23 : vector<1x128xf32> to vector<128x128xf32>
    %25 = arith.addf %22, %24 : vector<128x128xf32>
    %c0_22 = arith.constant 0 : index
    %c0_23 = arith.constant 0 : index
    %26 = vector.load %arg10[%c0_22, %c0_23] : memref<128x128xf32, #tpu.memory_space<vmem>>, vector<128x128xf32>
    tpu.vector_store %arg10[%c0_22, %c0_23], %25 {strides = array<i32>} : memref<128x128xf32, #tpu.memory_space<vmem>>, vector<128x128xf32>,
    return
  }
  func.func @transform_0(%arg0: i32) -> (i32, i32) {
    %c0_i32 = arith.constant 0 : i32
    %c0_i32_0 = arith.constant 0 : i32
    return %arg0, %c0_i32 : i32, i32
  }
  func.func @transform_1(%arg0: i32) -> (i32, i32) {
    %c0_i32 = arith.constant 0 : i32
    %c0_i32_0 = arith.constant 0 : i32
    return %arg0, %c0_i32 : i32, i32
  }
  func.func @transform_2(%arg0: i32) -> (i32, i32) {
    %c0_i32 = arith.constant 0 : i32
    %c0_i32_0 = arith.constant 0 : i32
    %c0_i32_1 = arith.constant 0 : i32
    return %c0_i32, %c0_i32_0 : i32, i32
  }
  func.func @transform_3(%arg0: i32) -> (i32, i32) {
    %c0_i32 = arith.constant 0 : i32
    %c0_i32_0 = arith.constant 0 : i32
    %c0_i32_1 = arith.constant 0 : i32
    return %c0_i32, %c0_i32_0 : i32, i32
  }
  func.func @transform_4(%arg0: i32) -> (i32, i32) {
    %c0_i32 = arith.constant 0 : i32
    %c0_i32_0 = arith.constant 0 : i32
    %c0_i32_1 = arith.constant 0 : i32
    return %c0_i32, %c0_i32_0 : i32, i32
  }
  func.func @transform_5(%arg0: i32) -> (i32, i32) {
    %c0_i32 = arith.constant 0 : i32
    %c0_i32_0 = arith.constant 0 : i32
    %c0_i32_1 = arith.constant 0 : i32
    return %c0_i32, %c0_i32_0 : i32, i32
  }
  func.func @transform_6(%arg0: i32) -> (i32, i32) {
    %c0_i32 = arith.constant 0 : i32
    %c0_i32_0 = arith.constant 0 : i32
    %c0_i32_1 = arith.constant 0 : i32
    return %c0_i32, %c0_i32_0 : i32, i32
  }
  func.func @transform_7(%arg0: i32) -> (i32, i32) {
    %c0_i32 = arith.constant 0 : i32
    %c0_i32_0 = arith.constant 0 : i32
    %c0_i32_1 = arith.constant 0 : i32
    return %c0_i32, %c0_i32_0 : i32, i32
  }
  func.func @transform_8(%arg0: i32) -> (i32, i32) {
    %c0_i32 = arith.constant 0 : i32
    %c0_i32_0 = arith.constant 0 : i32
    %c0_i32_1 = arith.constant 0 : i32
    return %c0_i32, %c0_i32_0 : i32, i32
  }
  func.func @transform_9(%arg0: i32) -> (i32, i32) {
    %c0_i32 = arith.constant 0 : i32
    %c0_i32_0 = arith.constant 0 : i32
    return %arg0, %c0_i32 : i32, i32
  }
}

module attributes {stable_mosaic.version = 11 : i64} {
  func.func @_mlp_kernel(%arg0: i32, %arg1: memref<128x256xbf16, #tpu.memory_space<vmem>>, %arg2: memref<128x256xbf16, #tpu.memory_space<vmem>>, %arg3: memref<256x800xbf16, #tpu.memory_space<vmem>>, %arg4: memref<256x800xbf16, #tpu.memory_space<vmem>>, %arg5: memref<1x800xf32, #tpu.memory_space<vmem>>, %arg6: memref<800x300xbf16, #tpu.memory_space<vmem>>, %arg7: memref<1x300xf32, #tpu.memory_space<vmem>>, %arg8: memref<300x128xbf16, #tpu.memory_space<vmem>>, %arg9: memref<1x128xf32, #tpu.memory_space<vmem>>, %arg10: memref<128x128xf32, #tpu.memory_space<vmem>>) attributes {dimension_semantics = [#tpu.dimension_semantics<parallel>], iteration_bounds = array<i64: 1>, scalar_prefetch = 0 : i64, scratch_operands = 0 : i64, tpu.core_type = #tpu.core_type<tc>, window_params = [{transform_indices = @transform_0, window_bounds = array<i64: 128, 256>}, {transform_indices = @transform_1, window_bounds = array<i64: 128, 256>}, {pipeline_mode = #tpu.pipeline_mode<synchronous>, transform_indices = @transform_2, window_bounds = array<i64: 256, 800>}, {pipeline_mode = #tpu.pipeline_mode<synchronous>, transform_indices = @transform_3, window_bounds = array<i64: 256, 800>}, {pipeline_mode = #tpu.pipeline_mode<synchronous>, transform_indices = @transform_4, window_bounds = array<i64: 1, 800>}, {pipeline_mode = #tpu.pipeline_mode<synchronous>, transform_indices = @transform_5, window_bounds = array<i64: 800, 300>}, {pipeline_mode = #tpu.pipeline_mode<synchronous>, transform_indices = @transform_6, window_bounds = array<i64: 1, 300>}, {pipeline_mode = #tpu.pipeline_mode<synchronous>, transform_indices = @transform_7, window_bounds = array<i64: 300, 128>}, {pipeline_mode = #tpu.pipeline_mode<synchronous>, transform_indices = @transform_8, window_bounds = array<i64: 1, 128>}, {transform_indices = @transform_9, window_bounds = array<i64: 128, 128>}]} {
    %c0 = arith.constant 0 : index
    %c0_0 = arith.constant 0 : index
    %0 = vector.load %arg1[%c0, %c0_0] : memref<128x256xbf16, #tpu.memory_space<vmem>>, vector<128x256xbf16>
    %c0_1 = arith.constant 0 : index
    %c0_2 = arith.constant 0 : index
    %1 = vector.load %arg3[%c0_1, %c0_2] : memref<256x800xbf16, #tpu.memory_space<vmem>>, vector<256x800xbf16>
    %cst = arith.constant dense<0.000000e+00> : vector<128x800xf32>
    %2 = tpu.matmul %0, %1, %cst {dimension_numbers = #tpu.dot_dimension_numbers<[1], [0], [0], [1], [0, 0, 1, 1], [], []>} : vector<128x256xbf16>, vector<256x800xbf16>, vector<128x800xf32> -> vector<128x800xf32>
    %c0_3 = arith.constant 0 : index
    %c0_4 = arith.constant 0 : index
    %3 = vector.load %arg2[%c0_3, %c0_4] : memref<128x256xbf16, #tpu.memory_space<vmem>>, vector<128x256xbf16>
    %c0_5 = arith.constant 0 : index
    %c0_6 = arith.constant 0 : index
    %4 = vector.load %arg4[%c0_5, %c0_6] : memref<256x800xbf16, #tpu.memory_space<vmem>>, vector<256x800xbf16>
    %cst_7 = arith.constant dense<0.000000e+00> : vector<128x800xf32>
    %5 = tpu.matmul %3, %4, %cst_7 {dimension_numbers = #tpu.dot_dimension_numbers<[1], [0], [0], [1], [0, 0, 1, 1], [], []>} : vector<128x256xbf16>, vector<256x800xbf16>, vector<128x800xf32> -> vector<128x800xf32>
    %6 = arith.addf %2, %5 : vector<128x800xf32>
    %c0_8 = arith.constant 0 : index
    %c0_9 = arith.constant 0 : index
    %7 = vector.load %arg5[%c0_8, %c0_9] : memref<1x800xf32, #tpu.memory_space<vmem>>, vector<1x800xf32>
    %8 = vector.broadcast %7 : vector<1x800xf32> to vector<128x800xf32>
    %9 = arith.addf %6, %8 : vector<128x800xf32>
    %cst_10 = arith.constant 0.000000e+00 : f32
    %10 = vector.broadcast %cst_10 : f32 to vector<128x800xf32>
    %11 = arith.maximumf %9, %10 : vector<128x800xf32>
    %12 = arith.truncf %11 : vector<128x800xf32> to vector<128x800xbf16>
    %c0_11 = arith.constant 0 : index
    %c0_12 = arith.constant 0 : index
    %13 = vector.load %arg6[%c0_11, %c0_12] : memref<800x300xbf16, #tpu.memory_space<vmem>>, vector<800x300xbf16>
    %cst_13 = arith.constant dense<0.000000e+00> : vector<128x300xf32>
    %14 = tpu.matmul %12, %13, %cst_13 {dimension_numbers = #tpu.dot_dimension_numbers<[1], [0], [0], [1], [0, 0, 1, 1], [], []>} : vector<128x800xbf16>, vector<800x300xbf16>, vector<128x300xf32> -> vector<128x300xf32>
    %c0_14 = arith.constant 0 : index
    %c0_15 = arith.constant 0 : index
    %15 = vector.load %arg7[%c0_14, %c0_15] : memref<1x300xf32, #tpu.memory_space<vmem>>, vector<1x300xf32>
    %16 = vector.broadcast %15 : vector<1x300xf32> to vector<128x300xf32>
    %17 = arith.addf %14, %16 : vector<128x300xf32>
    %cst_16 = arith.constant 0.000000e+00 : f32
    %18 = vector.broadcast %cst_16 : f32 to vector<128x300xf32>
    %19 = arith.maximumf %17, %18 : vector<128x300xf32>
    %20 = arith.truncf %19 : vector<128x300xf32> to vector<128x300xbf16>
    %c0_17 = arith.constant 0 : index
    %c0_18 = arith.constant 0 : index
    %21 = vector.load %arg8[%c0_17, %c0_18] : memref<300x128xbf16, #tpu.memory_space<vmem>>, vector<300x128xbf16>
    %cst_19 = arith.constant dense<0.000000e+00> : vector<128x128xf32>
    %22 = tpu.matmul %20, %21, %cst_19 {dimension_numbers = #tpu.dot_dimension_numbers<[1], [0], [0], [1], [0, 0, 1, 1], [], []>} : vector<128x300xbf16>, vector<300x128xbf16>, vector<128x128xf32> -> vector<128x128xf32>
    %c0_20 = arith.constant 0 : index
    %c0_21 = arith.constant 0 : index
    %23 = vector.load %arg9[%c0_20, %c0_21] : memref<1x128xf32, #tpu.memory_space<vmem>>, vector<1x128xf32>
    %24 = vector.broadcast %23 : vector<1x128xf32> to vector<128x128xf32>
    %25 = arith.addf %22, %24 : vector<128x128xf32>
    %c0_22 = arith.constant 0 : index
    %c0_23 = arith.constant 0 : index
    %26 = vector.load %arg10[%c0_22, %c0_23] : memref<128x128xf32, #tpu.memory_space<vmem>>, vector<128x128xf32>
    tpu.vector_store %arg10[%c0_22, %c0_23], %25 {strides = array<i32>} : memref<128x128xf32, #tpu.memory_space<vmem>>, vector<128x128xf32>,
    return
  }
  func.func @transform_0(%arg0: i32) -> (i32, i32) {
    %c0_i32 = arith.constant 0 : i32
    %c0_i32_0 = arith.constant 0 : i32
    return %arg0, %c0_i32 : i32, i32
  }
  func.func @transform_1(%arg0: i32) -> (i32, i32) {
    %c0_i32 = arith.constant 0 : i32
    %c0_i32_0 = arith.constant 0 : i32
    return %arg0, %c0_i32 : i32, i32
  }
  func.func @transform_2(%arg0: i32) -> (i32, i32) {
    %c0_i32 = arith.constant 0 : i32
    %c0_i32_0 = arith.constant 0 : i32
    %c0_i32_1 = arith.constant 0 : i32
    return %c0_i32, %c0_i32_0 : i32, i32
  }
  func.func @transform_3(%arg0: i32) -> (i32, i32) {
    %c0_i32 = arith.constant 0 : i32
    %c0_i32_0 = arith.constant 0 : i32
    %c0_i32_1 = arith.constant 0 : i32
    return %c0_i32, %c0_i32_0 : i32, i32
  }
  func.func @transform_4(%arg0: i32) -> (i32, i32) {
    %c0_i32 = arith.constant 0 : i32
    %c0_i32_0 = arith.constant 0 : i32
    %c0_i32_1 = arith.constant 0 : i32
    return %c0_i32, %c0_i32_0 : i32, i32
  }
  func.func @transform_5(%arg0: i32) -> (i32, i32) {
    %c0_i32 = arith.constant 0 : i32
    %c0_i32_0 = arith.constant 0 : i32
    %c0_i32_1 = arith.constant 0 : i32
    return %c0_i32, %c0_i32_0 : i32, i32
  }
  func.func @transform_6(%arg0: i32) -> (i32, i32) {
    %c0_i32 = arith.constant 0 : i32
    %c0_i32_0 = arith.constant 0 : i32
    %c0_i32_1 = arith.constant 0 : i32
    return %c0_i32, %c0_i32_0 : i32, i32
  }
  func.func @transform_7(%arg0: i32) -> (i32, i32) {
    %c0_i32 = arith.constant 0 : i32
    %c0_i32_0 = arith.constant 0 : i32
    %c0_i32_1 = arith.constant 0 : i32
    return %c0_i32, %c0_i32_0 : i32, i32
  }
  func.func @transform_8(%arg0: i32) -> (i32, i32) {
    %c0_i32 = arith.constant 0 : i32
    %c0_i32_0 = arith.constant 0 : i32
    %c0_i32_1 = arith.constant 0 : i32
    return %c0_i32, %c0_i32_0 : i32, i32
  }
  func.func @transform_9(%arg0: i32) -> (i32, i32) {
    %c0_i32 = arith.constant 0 : i32
    %c0_i32_0 = arith.constant 0 : i32
    return %arg0, %c0_i32 : i32, i32
  }
}

</mosaic_0001>

<llo_original>
// kernel: tpu_custom_call.1
$region0: #{tpu_custom_call.1}
  #allocation0 [shape = 'u32[]', space=smem, size = 0x4, offset = 0x4, fixed_abs, tag = 'smem constant byte address 0x4 - core index']
  #allocation1 [shape = 'u32[144,128]{1,0:T(1,128)}', space=vmem, size = 0x12000, scoped, tag = 'internal scratch']
  %s0 = inlined_call_operand.vmem [shape: bf16[128,256], index: 0, kind: input, shape index: {}]
  %s1 = inlined_call_operand.vmem [shape: bf16[128,256], index: 1, kind: input, shape index: {}]
  %s2 = inlined_call_operand.vmem [shape: bf16[256,800], index: 2, kind: input, shape index: {}]
  %s3 = inlined_call_operand.vmem [shape: bf16[256,800], index: 3, kind: input, shape index: {}]
  %s4 = inlined_call_operand.vmem [shape: f32[1,800], index: 4, kind: input, shape index: {}]
  %s5 = inlined_call_operand.vmem [shape: bf16[800,300], index: 5, kind: input, shape index: {}]
  %s6 = inlined_call_operand.vmem [shape: f32[1,300], index: 6, kind: input, shape index: {}]
  %s7 = inlined_call_operand.vmem [shape: bf16[300,128], index: 7, kind: input, shape index: {}]
  %s8 = inlined_call_operand.vmem [shape: f32[1,128], index: 8, kind: input, shape index: {}]
  %s9 = inlined_call_operand.hbm [shape: f32[128,128], index: 9, kind: output, shape index: {}]
  %s10 = sld [smem:[#allocation0]]
  $region46: #{tpu_custom_call.1} parent=0
    _
  %s12 = ssub.s32 1, %s10
  %s13 = scalar_select 0, %s12, %s10
  $region1: #{tpu_custom_call.1} parent=0
    #allocation2 [shape = 'u8[65536]{0}', space=vmem, size = 0x10000, scoped, tag = 'output window, operand 0, single buffered']
    #allocation3 [shape = 's32[1]{0}', space=sflag, size = 0x4, scoped, tag = 'scoped memory for tpu_custom_call.1']
    %14 = vsyncpa [#allocation3], 0
    // Predicated region
    $region2: #{tpu_custom_call.1} parent=1 // pred_check
      _
    $region3: #{tpu_custom_call.1} parent=1 // pred_check_branch
      %16 = sbr.rel (0) target = $region5
    $region4: #{tpu_custom_call.1} parent=1 // pred_region
      _
    $region5: #{tpu_custom_call.1} parent=1 // pred_fallthru
      _
    // Predicated region
    $region6: #{tpu_custom_call.1} parent=1 // pred_check
      _
    $region7: #{tpu_custom_call.1} parent=1 // pred_check_branch
      %18 = sbr.rel (0) target = $region9
    $region8: #{tpu_custom_call.1} parent=1 // pred_region
      _
    $region9: #{tpu_custom_call.1} parent=1 // pred_fallthru
      _
    // Predicated region
    $region10: #{tpu_custom_call.1} parent=1 // pred_check
      _
    $region11: #{tpu_custom_call.1} parent=1 // pred_check_branch
      %20 = sbr.rel (0) target = $region13
    $region12: #{tpu_custom_call.1} parent=1 // pred_region
      _
    $region13: #{tpu_custom_call.1} parent=1 // pred_fallthru
      _
    // Predicated region
    $region14: #{tpu_custom_call.1} parent=1 // pred_check
      _
    $region15: #{tpu_custom_call.1} parent=1 // pred_check_branch
      %22 = sbr.rel (0) target = $region17
    $region16: #{tpu_custom_call.1} parent=1 // pred_region
      _
    $region17: #{tpu_custom_call.1} parent=1 // pred_fallthru
      _
    // Predicated region
    $region18: #{tpu_custom_call.1} parent=1 // pred_check
      _
    $region19: #{tpu_custom_call.1} parent=1 // pred_check_branch
      %24 = sbr.rel (0) target = $region21
    $region20: #{tpu_custom_call.1} parent=1 // pred_region
      _
    $region21: #{tpu_custom_call.1} parent=1 // pred_fallthru
      _
    // Predicated region
    $region22: #{tpu_custom_call.1} parent=1 // pred_check
      _
    $region23: #{tpu_custom_call.1} parent=1 // pred_check_branch
      %26 = sbr.rel (0) target = $region25
    $region24: #{tpu_custom_call.1} parent=1 // pred_region
      _
    $region25: #{tpu_custom_call.1} parent=1 // pred_fallthru
      _
    // Predicated region
    $region26: #{tpu_custom_call.1} parent=1 // pred_check
      _
    $region27: #{tpu_custom_call.1} parent=1 // pred_check_branch
      %28 = sbr.rel (0) target = $region29
    $region28: #{tpu_custom_call.1} parent=1 // pred_region
      _
    $region29: #{tpu_custom_call.1} parent=1 // pred_fallthru
      _
    // Predicated region
    $region30: #{tpu_custom_call.1} parent=1 // pred_check
      _
    $region31: #{tpu_custom_call.1} parent=1 // pred_check_branch
      %30 = sbr.rel (0) target = $region33
    $region32: #{tpu_custom_call.1} parent=1 // pred_region
      _
    $region33: #{tpu_custom_call.1} parent=1 // pred_fallthru
      _
    // Predicated region
    $region34: #{tpu_custom_call.1} parent=1 // pred_check
      _
    $region35: #{tpu_custom_call.1} parent=1 // pred_check_branch
      %32 = sbr.rel (0) target = $region37
    $region36: #{tpu_custom_call.1} parent=1 // pred_region
      _
    $region37: #{tpu_custom_call.1} parent=1 // pred_fallthru
      _
    %v34 = vld [vmem:[%s0] sm:$0xff]
    %v35 = vld [vmem:[%s0 + $0x8] sm:$0xff]
    %v36 = vld [vmem:[%s0 + $0x10] sm:$0xff]
    %v37 = vld [vmem:[%s0 + $0x18] sm:$0xff]
    %v38 = vld [vmem:[%s0 + $0x20] sm:$0xff]
    %v39 = vld [vmem:[%s0 + $0x28] sm:$0xff]
    %v40 = vld [vmem:[%s0 + $0x30] sm:$0xff]
    %v41 = vld [vmem:[%s0 + $0x38] sm:$0xff]
    %v42 = vld [vmem:[%s0 + $0x40] sm:$0xff]
    %v43 = vld [vmem:[%s0 + $0x48] sm:$0xff]
    %v44 = vld [vmem:[%s0 + $0x50] sm:$0xff]
    %v45 = vld [vmem:[%s0 + $0x58] sm:$0xff]
    %v46 = vld [vmem:[%s0 + $0x60] sm:$0xff]
    %v47 = vld [vmem:[%s0 + $0x68] sm:$0xff]
    %v48 = vld [vmem:[%s0 + $0x70] sm:$0xff]
    %v49 = vld [vmem:[%s0 + $0x78] sm:$0xff]
    %v50 = vld [vmem:[%s2] sm:$0xff]
    %v51 = vld [vmem:[%s2 + $0x8] sm:$0xff]
    %v52 = vld [vmem:[%s2 + $0x10] sm:$0xff]
    %v53 = vld [vmem:[%s2 + $0x18] sm:$0xf]
    %v54 = vld [vmem:[%s2 + $0x1c] sm:$0xff]
    %v55 = vld [vmem:[%s2 + $0x24] sm:$0xff]
    %v56 = vld [vmem:[%s2 + $0x2c] sm:$0xff]
    %v57 = vld [vmem:[%s2 + $0x34] sm:$0xf]
    %v58 = vld [vmem:[%s2 + $0x38] sm:$0xff]
    %v59 = vld [vmem:[%s2 + $0x40] sm:$0xff]
    %v60 = vld [vmem:[%s2 + $0x48] sm:$0xff]
    %v61 = vld [vmem:[%s2 + $0x50] sm:$0xf]
    %v62 = vld [vmem:[%s2 + $0x54] sm:$0xff]
    %v63 = vld [vmem:[%s2 + $0x5c] sm:$0xff]
    %v64 = vld [vmem:[%s2 + $0x64] sm:$0xff]
    %v65 = vld [vmem:[%s2 + $0x6c] sm:$0xf]
    %v66 = vld [vmem:[%s2 + $0x70] sm:$0xff]
    %v67 = vld [vmem:[%s2 + $0x78] sm:$0xff]
    %v68 = vld [vmem:[%s2 + $0x80] sm:$0xff]
    %v69 = vld [vmem:[%s2 + $0x88] sm:$0xf]
    %v70 = vld [vmem:[%s2 + $0x8c] sm:$0xff]
    %v71 = vld [vmem:[%s2 + $0x94] sm:$0xff]
    %v72 = vld [vmem:[%s2 + $0x9c] sm:$0xff]
    %v73 = vld [vmem:[%s2 + $0xa4] sm:$0xf]
    %v74 = vld [vmem:[%s2 + $0xa8] sm:$0xff]
    %v75 = vld [vmem:[%s2 + $0xb0] sm:$0xff]
    %v76 = vld [vmem:[%s2 + $0xb8] sm:$0xff]
    %v77 = vld [vmem:[%s2 + $0xc0] sm:$0xf]
    %v78 = vld [vmem:[%s2 + $0xc4] sm:$0xff]
    %v79 = vld [vmem:[%s2 + $0xcc] sm:$0xff]
    %v80 = vld [vmem:[%s2 + $0xd4] sm:$0xff]
    %v81 = vld [vmem:[%s2 + $0xdc] sm:$0xf]
    %v82 = vld [vmem:[%s2 + $0xe0] sm:$0xff]
    %v83 = vld [vmem:[%s2 + $0xe8] sm:$0xff]
    %v84 = vld [vmem:[%s2 + $0xf0] sm:$0xff]
    %v85 = vld [vmem:[%s2 + $0xf8] sm:$0xf]
    %v86 = vld [vmem:[%s2 + $0xfc] sm:$0xff]
    %v87 = vld [vmem:[%s2 + $0x104] sm:$0xff]
    %v88 = vld [vmem:[%s2 + $0x10c] sm:$0xff]
    %v89 = vld [vmem:[%s2 + $0x114] sm:$0xf]
    %v90 = vld [vmem:[%s2 + $0x118] sm:$0xff]
    %v91 = vld [vmem:[%s2 + $0x120] sm:$0xff]
    %v92 = vld [vmem:[%s2 + $0x128] sm:$0xff]
    %v93 = vld [vmem:[%s2 + $0x130] sm:$0xf]
    %v94 = vld [vmem:[%s2 + $0x134] sm:$0xff]
    %v95 = vld [vmem:[%s2 + $0x13c] sm:$0xff]
    %v96 = vld [vmem:[%s2 + $0x144] sm:$0xff]
    %v97 = vld [vmem:[%s2 + $0x14c] sm:$0xf]
    %v98 = vld [vmem:[%s2 + $0x150] sm:$0xff]
    %v99 = vld [vmem:[%s2 + $0x158] sm:$0xff]
    %v100 = vld [vmem:[%s2 + $0x160] sm:$0xff]
    %v101 = vld [vmem:[%s2 + $0x168] sm:$0xf]
    %v102 = vld [vmem:[%s2 + $0x16c] sm:$0xff]
    %v103 = vld [vmem:[%s2 + $0x174] sm:$0xff]
    %v104 = vld [vmem:[%s2 + $0x17c] sm:$0xff]
    %v105 = vld [vmem:[%s2 + $0x184] sm:$0xf]
    %v106 = vld [vmem:[%s2 + $0x188] sm:$0xff]
    %v107 = vld [vmem:[%s2 + $0x190] sm:$0xff]
    %v108 = vld [vmem:[%s2 + $0x198] sm:$0xff]
    %v109 = vld [vmem:[%s2 + $0x1a0] sm:$0xf]
    %v110 = vld [vmem:[%s2 + $0x1a4] sm:$0xff]
    %v111 = vld [vmem:[%s2 + $0x1ac] sm:$0xff]
    %v112 = vld [vmem:[%s2 + $0x1b4] sm:$0xff]
    %v113 = vld [vmem:[%s2 + $0x1bc] sm:$0xf]
    %v114 = vld [vmem:[%s2 + $0x1c0] sm:$0xff]
    %v115 = vld [vmem:[%s2 + $0x1c8] sm:$0xff]
    %v116 = vld [vmem:[%s2 + $0x1d0] sm:$0xff]
    %v117 = vld [vmem:[%s2 + $0x1d8] sm:$0xf]
    %v118 = vld [vmem:[%s2 + $0x1dc] sm:$0xff]
    %v119 = vld [vmem:[%s2 + $0x1e4] sm:$0xff]
    %v120 = vld [vmem:[%s2 + $0x1ec] sm:$0xff]
    %v121 = vld [vmem:[%s2 + $0x1f4] sm:$0xf]
    %v122 = vld [vmem:[%s2 + $0x1f8] sm:$0xff]
    %v123 = vld [vmem:[%s2 + $0x200] sm:$0xff]
    %v124 = vld [vmem:[%s2 + $0x208] sm:$0xff]
    %v125 = vld [vmem:[%s2 + $0x210] sm:$0xf]
    %v126 = vld [vmem:[%s2 + $0x214] sm:$0xff]
    %v127 = vld [vmem:[%s2 + $0x21c] sm:$0xff]
    %v128 = vld [vmem:[%s2 + $0x224] sm:$0xff]
    %v129 = vld [vmem:[%s2 + $0x22c] sm:$0xf]
    %v130 = vld [vmem:[%s2 + $0x230] sm:$0xff]
    %v131 = vld [vmem:[%s2 + $0x238] sm:$0xff]
    %v132 = vld [vmem:[%s2 + $0x240] sm:$0xff]
    %v133 = vld [vmem:[%s2 + $0x248] sm:$0xf]
    %v134 = vld [vmem:[%s2 + $0x24c] sm:$0xff]
    %v135 = vld [vmem:[%s2 + $0x254] sm:$0xff]
    %v136 = vld [vmem:[%s2 + $0x25c] sm:$0xff]
    %v137 = vld [vmem:[%s2 + $0x264] sm:$0xf]
    %v138 = vld [vmem:[%s2 + $0x268] sm:$0xff]
    %v139 = vld [vmem:[%s2 + $0x270] sm:$0xff]
    %v140 = vld [vmem:[%s2 + $0x278] sm:$0xff]
    %v141 = vld [vmem:[%s2 + $0x280] sm:$0xf]
    %v142 = vld [vmem:[%s2 + $0x284] sm:$0xff]
    %v143 = vld [vmem:[%s2 + $0x28c] sm:$0xff]
    %v144 = vld [vmem:[%s2 + $0x294] sm:$0xff]
    %v145 = vld [vmem:[%s2 + $0x29c] sm:$0xf]
    %v146 = vld [vmem:[%s2 + $0x2a0] sm:$0xff]
    %v147 = vld [vmem:[%s2 + $0x2a8] sm:$0xff]
    %v148 = vld [vmem:[%s2 + $0x2b0] sm:$0xff]
    %v149 = vld [vmem:[%s2 + $0x2b8] sm:$0xf]
    %v150 = vld [vmem:[%s2 + $0x2bc] sm:$0xff]
    %v151 = vld [vmem:[%s2 + $0x2c4] sm:$0xff]
    %v152 = vld [vmem:[%s2 + $0x2cc] sm:$0xff]
    %v153 = vld [vmem:[%s2 + $0x2d4] sm:$0xf]
    %v154 = vld [vmem:[%s2 + $0x2d8] sm:$0xff]
    %v155 = vld [vmem:[%s2 + $0x2e0] sm:$0xff]
    %v156 = vld [vmem:[%s2 + $0x2e8] sm:$0xff]
    %v157 = vld [vmem:[%s2 + $0x2f0] sm:$0xf]
    %v158 = vld [vmem:[%s2 + $0x2f4] sm:$0xff]
    %v159 = vld [vmem:[%s2 + $0x2fc] sm:$0xff]
    %v160 = vld [vmem:[%s2 + $0x304] sm:$0xff]
    %v161 = vld [vmem:[%s2 + $0x30c] sm:$0xf]
    %v162 = vld [vmem:[%s2 + $0x310] sm:$0xff]
    %v163 = vld [vmem:[%s2 + $0x318] sm:$0xff]
    %v164 = vld [vmem:[%s2 + $0x320] sm:$0xff]
    %v165 = vld [vmem:[%s2 + $0x328] sm:$0xf]
    %v166 = vld [vmem:[%s2 + $0x32c] sm:$0xff]
    %v167 = vld [vmem:[%s2 + $0x334] sm:$0xff]
    %v168 = vld [vmem:[%s2 + $0x33c] sm:$0xff]
    %v169 = vld [vmem:[%s2 + $0x344] sm:$0xf]
    %v170 = vld [vmem:[%s2 + $0x348] sm:$0xff]
    %v171 = vld [vmem:[%s2 + $0x350] sm:$0xff]
    %v172 = vld [vmem:[%s2 + $0x358] sm:$0xff]
    %v173 = vld [vmem:[%s2 + $0x360] sm:$0xf]
    %v174 = vld [vmem:[%s2 + $0x364] sm:$0xff]
    %v175 = vld [vmem:[%s2 + $0x36c] sm:$0xff]
    %v176 = vld [vmem:[%s2 + $0x374] sm:$0xff]
    %v177 = vld [vmem:[%s2 + $0x37c] sm:$0xf]
    %v178 = vld [vmem:[%s1] sm:$0xff]
    %v179 = vld [vmem:[%s1 + $0x8] sm:$0xff]
    %v180 = vld [vmem:[%s1 + $0x10] sm:$0xff]
    %v181 = vld [vmem:[%s1 + $0x18] sm:$0xff]
    %v182 = vld [vmem:[%s1 + $0x20] sm:$0xff]
    %v183 = vld [vmem:[%s1 + $0x28] sm:$0xff]
    %v184 = vld [vmem:[%s1 + $0x30] sm:$0xff]
    %v185 = vld [vmem:[%s1 + $0x38] sm:$0xff]
    %v186 = vld [vmem:[%s1 + $0x40] sm:$0xff]
    %v187 = vld [vmem:[%s1 + $0x48] sm:$0xff]
    %v188 = vld [vmem:[%s1 + $0x50] sm:$0xff]
    %v189 = vld [vmem:[%s1 + $0x58] sm:$0xff]
    %v190 = vld [vmem:[%s1 + $0x60] sm:$0xff]
    %v191 = vld [vmem:[%s1 + $0x68] sm:$0xff]
    %v192 = vld [vmem:[%s1 + $0x70] sm:$0xff]
    %v193 = vld [vmem:[%s1 + $0x78] sm:$0xff]
    %v194 = vld [vmem:[%s3] sm:$0xff]
    %v195 = vld [vmem:[%s3 + $0x8] sm:$0xff]
    %v196 = vld [vmem:[%s3 + $0x10] sm:$0xff]
    %v197 = vld [vmem:[%s3 + $0x18] sm:$0xf]
    %v198 = vld [vmem:[%s3 + $0x1c] sm:$0xff]
    %v199 = vld [vmem:[%s3 + $0x24] sm:$0xff]
    %v200 = vld [vmem:[%s3 + $0x2c] sm:$0xff]
    %v201 = vld [vmem:[%s3 + $0x34] sm:$0xf]
    %v202 = vld [vmem:[%s3 + $0x38] sm:$0xff]
    %v203 = vld [vmem:[%s3 + $0x40] sm:$0xff]
    %v204 = vld [vmem:[%s3 + $0x48] sm:$0xff]
    %v205 = vld [vmem:[%s3 + $0x50] sm:$0xf]
    %v206 = vld [vmem:[%s3 + $0x54] sm:$0xff]
    %v207 = vld [vmem:[%s3 + $0x5c] sm:$0xff]
    %v208 = vld [vmem:[%s3 + $0x64] sm:$0xff]
    %v209 = vld [vmem:[%s3 + $0x6c] sm:$0xf]
    %v210 = vld [vmem:[%s3 + $0x70] sm:$0xff]
    %v211 = vld [vmem:[%s3 + $0x78] sm:$0xff]
    %v212 = vld [vmem:[%s3 + $0x80] sm:$0xff]
    %v213 = vld [vmem:[%s3 + $0x88] sm:$0xf]
    %v214 = vld [vmem:[%s3 + $0x8c] sm:$0xff]
    %v215 = vld [vmem:[%s3 + $0x94] sm:$0xff]
    %v216 = vld [vmem:[%s3 + $0x9c] sm:$0xff]
    %v217 = vld [vmem:[%s3 + $0xa4] sm:$0xf]
    %v218 = vld [vmem:[%s3 + $0xa8] sm:$0xff]
    %v219 = vld [vmem:[%s3 + $0xb0] sm:$0xff]
    %v220 = vld [vmem:[%s3 + $0xb8] sm:$0xff]
    %v221 = vld [vmem:[%s3 + $0xc0] sm:$0xf]
    %v222 = vld [vmem:[%s3 + $0xc4] sm:$0xff]
    %v223 = vld [vmem:[%s3 + $0xcc] sm:$0xff]
    %v224 = vld [vmem:[%s3 + $0xd4] sm:$0xff]
    %v225 = vld [vmem:[%s3 + $0xdc] sm:$0xf]
    %v226 = vld [vmem:[%s3 + $0xe0] sm:$0xff]
    %v227 = vld [vmem:[%s3 + $0xe8] sm:$0xff]
    %v228 = vld [vmem:[%s3 + $0xf0] sm:$0xff]
    %v229 = vld [vmem:[%s3 + $0xf8] sm:$0xf]
    %v230 = vld [vmem:[%s3 + $0xfc] sm:$0xff]
    %v231 = vld [vmem:[%s3 + $0x104] sm:$0xff]
    %v232 = vld [vmem:[%s3 + $0x10c] sm:$0xff]
    %v233 = vld [vmem:[%s3 + $0x114] sm:$0xf]
    %v234 = vld [vmem:[%s3 + $0x118] sm:$0xff]
    %v235 = vld [vmem:[%s3 + $0x120] sm:$0xff]
    %v236 = vld [vmem:[%s3 + $0x128] sm:$0xff]
    %v237 = vld [vmem:[%s3 + $0x130] sm:$0xf]
    %v238 = vld [vmem:[%s3 + $0x134] sm:$0xff]
    %v239 = vld [vmem:[%s3 + $0x13c] sm:$0xff]
    %v240 = vld [vmem:[%s3 + $0x144] sm:$0xff]
    %v241 = vld [vmem:[%s3 + $0x14c] sm:$0xf]
    %v242 = vld [vmem:[%s3 + $0x150] sm:$0xff]
    %v243 = vld [vmem:[%s3 + $0x158] sm:$0xff]
    %v244 = vld [vmem:[%s3 + $0x160] sm:$0xff]
    %v245 = vld [vmem:[%s3 + $0x168] sm:$0xf]
    %v246 = vld [vmem:[%s3 + $0x16c] sm:$0xff]
    %v247 = vld [vmem:[%s3 + $0x174] sm:$0xff]
    %v248 = vld [vmem:[%s3 + $0x17c] sm:$0xff]
    %v249 = vld [vmem:[%s3 + $0x184] sm:$0xf]
    %v250 = vld [vmem:[%s3 + $0x188] sm:$0xff]
    %v251 = vld [vmem:[%s3 + $0x190] sm:$0xff]
    %v252 = vld [vmem:[%s3 + $0x198] sm:$0xff]
    %v253 = vld [vmem:[%s3 + $0x1a0] sm:$0xf]
    %v254 = vld [vmem:[%s3 + $0x1a4] sm:$0xff]
    %v255 = vld [vmem:[%s3 + $0x1ac] sm:$0xff]
    %v256 = vld [vmem:[%s3 + $0x1b4] sm:$0xff]
    %v257 = vld [vmem:[%s3 + $0x1bc] sm:$0xf]
    %v258 = vld [vmem:[%s3 + $0x1c0] sm:$0xff]
    %v259 = vld [vmem:[%s3 + $0x1c8] sm:$0xff]
    %v260 = vld [vmem:[%s3 + $0x1d0] sm:$0xff]
    %v261 = vld [vmem:[%s3 + $0x1d8] sm:$0xf]
    %v262 = vld [vmem:[%s3 + $0x1dc] sm:$0xff]
    %v263 = vld [vmem:[%s3 + $0x1e4] sm:$0xff]
    %v264 = vld [vmem:[%s3 + $0x1ec] sm:$0xff]
    %v265 = vld [vmem:[%s3 + $0x1f4] sm:$0xf]
    %v266 = vld [vmem:[%s3 + $0x1f8] sm:$0xff]
    %v267 = vld [vmem:[%s3 + $0x200] sm:$0xff]
    %v268 = vld [vmem:[%s3 + $0x208] sm:$0xff]
    %v269 = vld [vmem:[%s3 + $0x210] sm:$0xf]
    %v270 = vld [vmem:[%s3 + $0x214] sm:$0xff]
    %v271 = vld [vmem:[%s3 + $0x21c] sm:$0xff]
    %v272 = vld [vmem:[%s3 + $0x224] sm:$0xff]
    %v273 = vld [vmem:[%s3 + $0x22c] sm:$0xf]
    %v274 = vld [vmem:[%s3 + $0x230] sm:$0xff]
    %v275 = vld [vmem:[%s3 + $0x238] sm:$0xff]
    %v276 = vld [vmem:[%s3 + $0x240] sm:$0xff]
    %v277 = vld [vmem:[%s3 + $0x248] sm:$0xf]
    %v278 = vld [vmem:[%s3 + $0x24c] sm:$0xff]
    %v279 = vld [vmem:[%s3 + $0x254] sm:$0xff]
    %v280 = vld [vmem:[%s3 + $0x25c] sm:$0xff]
    %v281 = vld [vmem:[%s3 + $0x264] sm:$0xf]
    %v282 = vld [vmem:[%s3 + $0x268] sm:$0xff]
    %v283 = vld [vmem:[%s3 + $0x270] sm:$0xff]
    %v284 = vld [vmem:[%s3 + $0x278] sm:$0xff]
    %v285 = vld [vmem:[%s3 + $0x280] sm:$0xf]
    %v286 = vld [vmem:[%s3 + $0x284] sm:$0xff]
    %v287 = vld [vmem:[%s3 + $0x28c] sm:$0xff]
    %v288 = vld [vmem:[%s3 + $0x294] sm:$0xff]
    %v289 = vld [vmem:[%s3 + $0x29c] sm:$0xf]
    %v290 = vld [vmem:[%s3 + $0x2a0] sm:$0xff]
    %v291 = vld [vmem:[%s3 + $0x2a8] sm:$0xff]
    %v292 = vld [vmem:[%s3 + $0x2b0] sm:$0xff]
    %v293 = vld [vmem:[%s3 + $0x2b8] sm:$0xf]
    %v294 = vld [vmem:[%s3 + $0x2bc] sm:$0xff]
    %v295 = vld [vmem:[%s3 + $0x2c4] sm:$0xff]
    %v296 = vld [vmem:[%s3 + $0x2cc] sm:$0xff]
    %v297 = vld [vmem:[%s3 + $0x2d4] sm:$0xf]
    %v298 = vld [vmem:[%s3 + $0x2d8] sm:$0xff]
    %v299 = vld [vmem:[%s3 + $0x2e0] sm:$0xff]
    %v300 = vld [vmem:[%s3 + $0x2e8] sm:$0xff]
    %v301 = vld [vmem:[%s3 + $0x2f0] sm:$0xf]
    %v302 = vld [vmem:[%s3 + $0x2f4] sm:$0xff]
    %v303 = vld [vmem:[%s3 + $0x2fc] sm:$0xff]
    %v304 = vld [vmem:[%s3 + $0x304] sm:$0xff]
    %v305 = vld [vmem:[%s3 + $0x30c] sm:$0xf]
    %v306 = vld [vmem:[%s3 + $0x310] sm:$0xff]
    %v307 = vld [vmem:[%s3 + $0x318] sm:$0xff]
    %v308 = vld [vmem:[%s3 + $0x320] sm:$0xff]
    %v309 = vld [vmem:[%s3 + $0x328] sm:$0xf]
    %v310 = vld [vmem:[%s3 + $0x32c] sm:$0xff]
    %v311 = vld [vmem:[%s3 + $0x334] sm:$0xff]
    %v312 = vld [vmem:[%s3 + $0x33c] sm:$0xff]
    %v313 = vld [vmem:[%s3 + $0x344] sm:$0xf]
    %v314 = vld [vmem:[%s3 + $0x348] sm:$0xff]
    %v315 = vld [vmem:[%s3 + $0x350] sm:$0xff]
    %v316 = vld [vmem:[%s3 + $0x358] sm:$0xff]
    %v317 = vld [vmem:[%s3 + $0x360] sm:$0xf]
    %v318 = vld [vmem:[%s3 + $0x364] sm:$0xff]
    %v319 = vld [vmem:[%s3 + $0x36c] sm:$0xff]
    %v320 = vld [vmem:[%s3 + $0x374] sm:$0xff]
    %v321 = vld [vmem:[%s3 + $0x37c] sm:$0xf]
    %v338 = vunpack.c.l.b16 %v178
    %v339 = vunpack.c.h.b16 %v178
    %v340 = vunpack.c.l.b16 %v179
    %v341 = vunpack.c.h.b16 %v179
    %v342 = vunpack.c.l.b16 %v180
    %v343 = vunpack.c.h.b16 %v180
    %v344 = vunpack.c.l.b16 %v181
    %v345 = vunpack.c.h.b16 %v181
    %v346 = vunpack.c.l.b16 %v182
    %v347 = vunpack.c.h.b16 %v182
    %v348 = vunpack.c.l.b16 %v183
    %v349 = vunpack.c.h.b16 %v183
    %v350 = vunpack.c.l.b16 %v184
    %v351 = vunpack.c.h.b16 %v184
    %v352 = vunpack.c.l.b16 %v185
    %v353 = vunpack.c.h.b16 %v185
    %v354 = vunpack.c.l.b16 %v186
    %v355 = vunpack.c.h.b16 %v186
    %v356 = vunpack.c.l.b16 %v187
    %v357 = vunpack.c.h.b16 %v187
    %v358 = vunpack.c.l.b16 %v188
    %v359 = vunpack.c.h.b16 %v188
    %v360 = vunpack.c.l.b16 %v189
    %v361 = vunpack.c.h.b16 %v189
    %v362 = vunpack.c.l.b16 %v190
    %v363 = vunpack.c.h.b16 %v190
    %v364 = vunpack.c.l.b16 %v191
    %v365 = vunpack.c.h.b16 %v191
    %v366 = vunpack.c.l.b16 %v192
    %v367 = vunpack.c.h.b16 %v192
    %v368 = vunpack.c.l.b16 %v193
    %v369 = vunpack.c.h.b16 %v193
    %v370 = vpack.c.b16 %v340, %v338
    %v371 = vpack.c.b16 %v341, %v339
    %v372 = vpack.c.b16 %v344, %v342
    %v373 = vpack.c.b16 %v345, %v343
    %v374 = vpack.c.b16 %v348, %v346
    %v375 = vpack.c.b16 %v349, %v347
    %v376 = vpack.c.b16 %v352, %v350
    %v377 = vpack.c.b16 %v353, %v351
    %v378 = vpack.c.b16 %v356, %v354
    %v379 = vpack.c.b16 %v357, %v355
    %v380 = vpack.c.b16 %v360, %v358
    %v381 = vpack.c.b16 %v361, %v359
    %v382 = vpack.c.b16 %v364, %v362
    %v383 = vpack.c.b16 %v365, %v363
    %v384 = vpack.c.b16 %v368, %v366
    %v385 = vpack.c.b16 %v369, %v367
    %v530 = vunpack.c.l.b16 %v194
    %v531 = vunpack.c.h.b16 %v194
    %v532 = vunpack.c.l.b16 %v195
    %v533 = vunpack.c.h.b16 %v195
    %v534 = vunpack.c.l.b16 %v196
    %v535 = vunpack.c.h.b16 %v196
    %v536 = vunpack.c.l.b16 %v197
    %v537 = vunpack.c.l.b16 %v198
    %v538 = vunpack.c.h.b16 %v198
    %v539 = vunpack.c.l.b16 %v199
    %v540 = vunpack.c.h.b16 %v199
    %v541 = vunpack.c.l.b16 %v200
    %v542 = vunpack.c.h.b16 %v200
    %v543 = vunpack.c.l.b16 %v201
    %v544 = vunpack.c.l.b16 %v202
    %v545 = vunpack.c.h.b16 %v202
    %v546 = vunpack.c.l.b16 %v203
    %v547 = vunpack.c.h.b16 %v203
    %v548 = vunpack.c.l.b16 %v204
    %v549 = vunpack.c.h.b16 %v204
    %v550 = vunpack.c.l.b16 %v205
    %v551 = vunpack.c.l.b16 %v206
    %v552 = vunpack.c.h.b16 %v206
    %v553 = vunpack.c.l.b16 %v207
    %v554 = vunpack.c.h.b16 %v207
    %v555 = vunpack.c.l.b16 %v208
    %v556 = vunpack.c.h.b16 %v208
    %v557 = vunpack.c.l.b16 %v209
    %v558 = vunpack.c.l.b16 %v210
    %v559 = vunpack.c.h.b16 %v210
    %v560 = vunpack.c.l.b16 %v211
    %v561 = vunpack.c.h.b16 %v211
    %v562 = vunpack.c.l.b16 %v212
    %v563 = vunpack.c.h.b16 %v212
    %v564 = vunpack.c.l.b16 %v213
    %v565 = vunpack.c.l.b16 %v214
    %v566 = vunpack.c.h.b16 %v214
    %v567 = vunpack.c.l.b16 %v215
    %v568 = vunpack.c.h.b16 %v215
    %v569 = vunpack.c.l.b16 %v216
    %v570 = vunpack.c.h.b16 %v216
    %v571 = vunpack.c.l.b16 %v217
    %v572 = vunpack.c.l.b16 %v218
    %v573 = vunpack.c.h.b16 %v218
    %v574 = vunpack.c.l.b16 %v219
    %v575 = vunpack.c.h.b16 %v219
    %v576 = vunpack.c.l.b16 %v220
    %v577 = vunpack.c.h.b16 %v220
    %v578 = vunpack.c.l.b16 %v221
    %v579 = vunpack.c.l.b16 %v222
    %v580 = vunpack.c.h.b16 %v222
    %v581 = vunpack.c.l.b16 %v223
    %v582 = vunpack.c.h.b16 %v223
    %v583 = vunpack.c.l.b16 %v224
    %v584 = vunpack.c.h.b16 %v224
    %v585 = vunpack.c.l.b16 %v225
    %v586 = vunpack.c.l.b16 %v226
    %v587 = vunpack.c.h.b16 %v226
    %v588 = vunpack.c.l.b16 %v227
    %v589 = vunpack.c.h.b16 %v227
    %v590 = vunpack.c.l.b16 %v228
    %v591 = vunpack.c.h.b16 %v228
    %v592 = vunpack.c.l.b16 %v229
    %v593 = vunpack.c.l.b16 %v230
    %v594 = vunpack.c.h.b16 %v230
    %v595 = vunpack.c.l.b16 %v231
    %v596 = vunpack.c.h.b16 %v231
    %v597 = vunpack.c.l.b16 %v232
    %v598 = vunpack.c.h.b16 %v232
    %v599 = vunpack.c.l.b16 %v233
    %v600 = vunpack.c.l.b16 %v234
    %v601 = vunpack.c.h.b16 %v234
    %v602 = vunpack.c.l.b16 %v235
    %v603 = vunpack.c.h.b16 %v235
    %v604 = vunpack.c.l.b16 %v236
    %v605 = vunpack.c.h.b16 %v236
    %v606 = vunpack.c.l.b16 %v237
    %v607 = vunpack.c.l.b16 %v238
    %v608 = vunpack.c.h.b16 %v238
    %v609 = vunpack.c.l.b16 %v239
    %v610 = vunpack.c.h.b16 %v239
    %v611 = vunpack.c.l.b16 %v240
    %v612 = vunpack.c.h.b16 %v240
    %v613 = vunpack.c.l.b16 %v241
    %v614 = vunpack.c.l.b16 %v242
    %v615 = vunpack.c.h.b16 %v242
    %v616 = vunpack.c.l.b16 %v243
    %v617 = vunpack.c.h.b16 %v243
    %v618 = vunpack.c.l.b16 %v244
    %v619 = vunpack.c.h.b16 %v244
    %v620 = vunpack.c.l.b16 %v245
    %v621 = vunpack.c.l.b16 %v246
    %v622 = vunpack.c.h.b16 %v246
    %v623 = vunpack.c.l.b16 %v247
    %v624 = vunpack.c.h.b16 %v247
    %v625 = vunpack.c.l.b16 %v248
    %v626 = vunpack.c.h.b16 %v248
    %v627 = vunpack.c.l.b16 %v249
    %v628 = vunpack.c.l.b16 %v250
    %v629 = vunpack.c.h.b16 %v250
    %v630 = vunpack.c.l.b16 %v251
    %v631 = vunpack.c.h.b16 %v251
    %v632 = vunpack.c.l.b16 %v252
    %v633 = vunpack.c.h.b16 %v252
    %v634 = vunpack.c.l.b16 %v253
    %v635 = vunpack.c.l.b16 %v254
    %v636 = vunpack.c.h.b16 %v254
    %v637 = vunpack.c.l.b16 %v255
    %v638 = vunpack.c.h.b16 %v255
    %v639 = vunpack.c.l.b16 %v256
    %v640 = vunpack.c.h.b16 %v256
    %v641 = vunpack.c.l.b16 %v257
    %v642 = vunpack.c.l.b16 %v258
    %v643 = vunpack.c.h.b16 %v258
    %v644 = vunpack.c.l.b16 %v259
    %v645 = vunpack.c.h.b16 %v259
    %v646 = vunpack.c.l.b16 %v260
    %v647 = vunpack.c.h.b16 %v260
    %v648 = vunpack.c.l.b16 %v261
    %v649 = vunpack.c.l.b16 %v262
    %v650 = vunpack.c.h.b16 %v262
    %v651 = vunpack.c.l.b16 %v263
    %v652 = vunpack.c.h.b16 %v263
    %v653 = vunpack.c.l.b16 %v264
    %v654 = vunpack.c.h.b16 %v264
    %v655 = vunpack.c.l.b16 %v265
    %v656 = vunpack.c.l.b16 %v266
    %v657 = vunpack.c.h.b16 %v266
    %v658 = vunpack.c.l.b16 %v267
    %v659 = vunpack.c.h.b16 %v267
    %v660 = vunpack.c.l.b16 %v268
    %v661 = vunpack.c.h.b16 %v268
    %v662 = vunpack.c.l.b16 %v269
    %v663 = vunpack.c.l.b16 %v270
    %v664 = vunpack.c.h.b16 %v270
    %v665 = vunpack.c.l.b16 %v271
    %v666 = vunpack.c.h.b16 %v271
    %v667 = vunpack.c.l.b16 %v272
    %v668 = vunpack.c.h.b16 %v272
    %v669 = vunpack.c.l.b16 %v273
    %v670 = vunpack.c.l.b16 %v274
    %v671 = vunpack.c.h.b16 %v274
    %v672 = vunpack.c.l.b16 %v275
    %v673 = vunpack.c.h.b16 %v275
    %v674 = vunpack.c.l.b16 %v276
    %v675 = vunpack.c.h.b16 %v276
    %v676 = vunpack.c.l.b16 %v277
    %v677 = vunpack.c.l.b16 %v278
    %v678 = vunpack.c.h.b16 %v278
    %v679 = vunpack.c.l.b16 %v279
    %v680 = vunpack.c.h.b16 %v279
    %v681 = vunpack.c.l.b16 %v280
    %v682 = vunpack.c.h.b16 %v280
    %v683 = vunpack.c.l.b16 %v281
    %v684 = vunpack.c.l.b16 %v282
    %v685 = vunpack.c.h.b16 %v282
    %v686 = vunpack.c.l.b16 %v283
    %v687 = vunpack.c.h.b16 %v283
    %v688 = vunpack.c.l.b16 %v284
    %v689 = vunpack.c.h.b16 %v284
    %v690 = vunpack.c.l.b16 %v285
    %v691 = vunpack.c.l.b16 %v286
    %v692 = vunpack.c.h.b16 %v286
    %v693 = vunpack.c.l.b16 %v287
    %v694 = vunpack.c.h.b16 %v287
    %v695 = vunpack.c.l.b16 %v288
    %v696 = vunpack.c.h.b16 %v288
    %v697 = vunpack.c.l.b16 %v289
    %v698 = vunpack.c.l.b16 %v290
    %v699 = vunpack.c.h.b16 %v290
    %v700 = vunpack.c.l.b16 %v291
    %v701 = vunpack.c.h.b16 %v291
    %v702 = vunpack.c.l.b16 %v292
    %v703 = vunpack.c.h.b16 %v292
    %v704 = vunpack.c.l.b16 %v293
    %v705 = vunpack.c.l.b16 %v294
    %v706 = vunpack.c.h.b16 %v294
    %v707 = vunpack.c.l.b16 %v295
    %v708 = vunpack.c.h.b16 %v295
    %v709 = vunpack.c.l.b16 %v296
    %v710 = vunpack.c.h.b16 %v296
    %v711 = vunpack.c.l.b16 %v297
    %v712 = vunpack.c.l.b16 %v298
    %v713 = vunpack.c.h.b16 %v298
    %v714 = vunpack.c.l.b16 %v299
    %v715 = vunpack.c.h.b16 %v299
    %v716 = vunpack.c.l.b16 %v300
    %v717 = vunpack.c.h.b16 %v300
    %v718 = vunpack.c.l.b16 %v301
    %v719 = vunpack.c.l.b16 %v302
    %v720 = vunpack.c.h.b16 %v302
    %v721 = vunpack.c.l.b16 %v303
    %v722 = vunpack.c.h.b16 %v303
    %v723 = vunpack.c.l.b16 %v304
    %v724 = vunpack.c.h.b16 %v304
    %v725 = vunpack.c.l.b16 %v305
    %v726 = vunpack.c.l.b16 %v306
    %v727 = vunpack.c.h.b16 %v306
    %v728 = vunpack.c.l.b16 %v307
    %v729 = vunpack.c.h.b16 %v307
    %v730 = vunpack.c.l.b16 %v308
    %v731 = vunpack.c.h.b16 %v308
    %v732 = vunpack.c.l.b16 %v309
    %v733 = vunpack.c.l.b16 %v310
    %v734 = vunpack.c.h.b16 %v310
    %v735 = vunpack.c.l.b16 %v311
    %v736 = vunpack.c.h.b16 %v311
    %v737 = vunpack.c.l.b16 %v312
    %v738 = vunpack.c.h.b16 %v312
    %v739 = vunpack.c.l.b16 %v313
    %v740 = vunpack.c.l.b16 %v314
    %v741 = vunpack.c.h.b16 %v314
    %v742 = vunpack.c.l.b16 %v315
    %v743 = vunpack.c.h.b16 %v315
    %v744 = vunpack.c.l.b16 %v316
    %v745 = vunpack.c.h.b16 %v316
    %v746 = vunpack.c.l.b16 %v317
    %v747 = vunpack.c.l.b16 %v318
    %v748 = vunpack.c.h.b16 %v318
    %v749 = vunpack.c.l.b16 %v319
    %v750 = vunpack.c.h.b16 %v319
    %v751 = vunpack.c.l.b16 %v320
    %v752 = vunpack.c.h.b16 %v320
    %v753 = vunpack.c.l.b16 %v321
    %v754 = vpack.c.b16 %v537, %v530
    %v755 = vpack.c.b16 %v538, %v531
    %v756 = vpack.c.b16 %v539, %v532
    %v757 = vpack.c.b16 %v540, %v533
    %v758 = vpack.c.b16 %v541, %v534
    %v759 = vpack.c.b16 %v542, %v535
    %v760 = vpack.c.b16 %v543, %v536
    %v761 = vpack.c.b16 %v551, %v544
    %v762 = vpack.c.b16 %v552, %v545
    %v763 = vpack.c.b16 %v553, %v546
    %v764 = vpack.c.b16 %v554, %v547
    %v765 = vpack.c.b16 %v555, %v548
    %v766 = vpack.c.b16 %v556, %v549
    %v767 = vpack.c.b16 %v557, %v550
    %v768 = vpack.c.b16 %v565, %v558
    %v769 = vpack.c.b16 %v566, %v559
    %v770 = vpack.c.b16 %v567, %v560
    %v771 = vpack.c.b16 %v568, %v561
    %v772 = vpack.c.b16 %v569, %v562
    %v773 = vpack.c.b16 %v570, %v563
    %v774 = vpack.c.b16 %v571, %v564
    %v775 = vpack.c.b16 %v579, %v572
    %v776 = vpack.c.b16 %v580, %v573
    %v777 = vpack.c.b16 %v581, %v574
    %v778 = vpack.c.b16 %v582, %v575
    %v779 = vpack.c.b16 %v583, %v576
    %v780 = vpack.c.b16 %v584, %v577
    %v781 = vpack.c.b16 %v585, %v578
    %v782 = vpack.c.b16 %v593, %v586
    %v783 = vpack.c.b16 %v594, %v587
    %v784 = vpack.c.b16 %v595, %v588
    %v785 = vpack.c.b16 %v596, %v589
    %v786 = vpack.c.b16 %v597, %v590
    %v787 = vpack.c.b16 %v598, %v591
    %v788 = vpack.c.b16 %v599, %v592
    %v789 = vpack.c.b16 %v607, %v600
    %v790 = vpack.c.b16 %v608, %v601
    %v791 = vpack.c.b16 %v609, %v602
    %v792 = vpack.c.b16 %v610, %v603
    %v793 = vpack.c.b16 %v611, %v604
    %v794 = vpack.c.b16 %v612, %v605
    %v795 = vpack.c.b16 %v613, %v606
    %v796 = vpack.c.b16 %v621, %v614
    %v797 = vpack.c.b16 %v622, %v615
    %v798 = vpack.c.b16 %v623, %v616
    %v799 = vpack.c.b16 %v624, %v617
    %v800 = vpack.c.b16 %v625, %v618
    %v801 = vpack.c.b16 %v626, %v619
    %v802 = vpack.c.b16 %v627, %v620
    %v803 = vpack.c.b16 %v635, %v628
    %v804 = vpack.c.b16 %v636, %v629
    %v805 = vpack.c.b16 %v637, %v630
    %v806 = vpack.c.b16 %v638, %v631
    %v807 = vpack.c.b16 %v639, %v632
    %v808 = vpack.c.b16 %v640, %v633
    %v809 = vpack.c.b16 %v641, %v634
    %v810 = vpack.c.b16 %v649, %v642
    %v811 = vpack.c.b16 %v650, %v643
    %v812 = vpack.c.b16 %v651, %v644
    %v813 = vpack.c.b16 %v652, %v645
    %v814 = vpack.c.b16 %v653, %v646
    %v815 = vpack.c.b16 %v654, %v647
    %v816 = vpack.c.b16 %v655, %v648
    %v817 = vpack.c.b16 %v663, %v656
    %v818 = vpack.c.b16 %v664, %v657
    %v819 = vpack.c.b16 %v665, %v658
    %v820 = vpack.c.b16 %v666, %v659
    %v821 = vpack.c.b16 %v667, %v660
    %v822 = vpack.c.b16 %v668, %v661
    %v823 = vpack.c.b16 %v669, %v662
    %v824 = vpack.c.b16 %v677, %v670
    %v825 = vpack.c.b16 %v678, %v671
    %v826 = vpack.c.b16 %v679, %v672
    %v827 = vpack.c.b16 %v680, %v673
    %v828 = vpack.c.b16 %v681, %v674
    %v829 = vpack.c.b16 %v682, %v675
    %v830 = vpack.c.b16 %v683, %v676
    %v831 = vpack.c.b16 %v691, %v684
    %v832 = vpack.c.b16 %v692, %v685
    %v833 = vpack.c.b16 %v693, %v686
    %v834 = vpack.c.b16 %v694, %v687
    %v835 = vpack.c.b16 %v695, %v688
    %v836 = vpack.c.b16 %v696, %v689
    %v837 = vpack.c.b16 %v697, %v690
    %v838 = vpack.c.b16 %v705, %v698
    %v839 = vpack.c.b16 %v706, %v699
    %v840 = vpack.c.b16 %v707, %v700
    %v841 = vpack.c.b16 %v708, %v701
    %v842 = vpack.c.b16 %v709, %v702
    %v843 = vpack.c.b16 %v710, %v703
    %v844 = vpack.c.b16 %v711, %v704
    %v845 = vpack.c.b16 %v719, %v712
    %v846 = vpack.c.b16 %v720, %v713
    %v847 = vpack.c.b16 %v721, %v714
    %v848 = vpack.c.b16 %v722, %v715
    %v849 = vpack.c.b16 %v723, %v716
    %v850 = vpack.c.b16 %v724, %v717
    %v851 = vpack.c.b16 %v725, %v718
    %v852 = vpack.c.b16 %v733, %v726
    %v853 = vpack.c.b16 %v734, %v727
    %v854 = vpack.c.b16 %v735, %v728
    %v855 = vpack.c.b16 %v736, %v729
    %v856 = vpack.c.b16 %v737, %v730
    %v857 = vpack.c.b16 %v738, %v731
    %v858 = vpack.c.b16 %v739, %v732
    %v859 = vpack.c.b16 %v747, %v740
    %v860 = vpack.c.b16 %v748, %v741
    %v861 = vpack.c.b16 %v749, %v742
    %v862 = vpack.c.b16 %v750, %v743
    %v863 = vpack.c.b16 %v751, %v744
    %v864 = vpack.c.b16 %v752, %v745
    %v865 = vpack.c.b16 %v753, %v746
    %978 = vmatprep.subr.bf16.mxu0 %v804
    %979 = vmatpush1.bf16.msra.mxu0 %v803
    %980 = vmatprep.subr.bf16.mxu0 %v797
    %981 = vmatpush1.bf16.msra.mxu0 %v796
    %982 = vmatprep.subr.bf16.mxu0 %v790
    %983 = vmatpush1.bf16.msra.mxu0 %v789
    %984 = vmatprep.subr.bf16.mxu0 %v783
    %985 = vmatpush1.bf16.msra.mxu0 %v782
    %986 = vmatprep.subr.bf16.mxu0 %v776
    %987 = vmatpush1.bf16.msra.mxu0 %v775
    %988 = vmatprep.subr.bf16.mxu0 %v769
    %989 = vmatpush1.bf16.msra.mxu0 %v768
    %990 = vmatprep.subr.bf16.mxu0 %v762
    %991 = vmatpush1.bf16.msra.mxu0 %v761
    %992 = vmatprep.subr.bf16.mxu0 %v755
    %993 = vmatpush1.bf16.msra.mxu0 %v754
    %994 = vmatprep.subr.bf16.mxu0 %v860
    %995 = vmatpush2.bf16.msra.mxu0 %v859
    %996 = vmatprep.subr.bf16.mxu0 %v853
    %997 = vmatpush2.bf16.msra.mxu0 %v852
    %998 = vmatprep.subr.bf16.mxu0 %v846
    %999 = vmatpush2.bf16.msra.mxu0 %v845
    %1000 = vmatprep.subr.bf16.mxu0 %v839
    %1001 = vmatpush2.bf16.msra.mxu0 %v838
    %1002 = vmatprep.subr.bf16.mxu0 %v832
    %1003 = vmatpush2.bf16.msra.mxu0 %v831
    %1004 = vmatprep.subr.bf16.mxu0 %v825
    %1005 = vmatpush2.bf16.msra.mxu0 %v824
    %1006 = vmatprep.subr.bf16.mxu0 %v818
    %1007 = vmatpush2.bf16.msra.mxu0 %v817
    %1008 = vmatprep.subr.bf16.mxu0 %v811
    %1009 = vmatpush2.bf16.msra.mxu0 %v810
    %1010 = vmatprep.mubr.bf16.mxu0 %v371
    %1011 = vmatmul.mubr.bf16.gmra.mxu0 %v370
    %v1012 = vpop.f32.mrf.mxu0
    %v1013 = vadd.f32 0.0, %v1012
    %v1014 = vpop.f32.mrf.mxu0
    %v1015 = vadd.f32 0.0, %v1014
    %v1016 = vpop.f32.mrf.mxu0
    %v1017 = vadd.f32 0.0, %v1016
    %v1018 = vpop.f32.mrf.mxu0
    %v1019 = vadd.f32 0.0, %v1018
    %1020 = vmatprep.mubr.bf16.mxu0 %v373
    %1021 = vmatmul.mubr.bf16.gmra.mxu0 %v372
    %v1022 = vpop.f32.mrf.mxu0
    %v1023 = vadd.f32 0.0, %v1022
    %v1024 = vpop.f32.mrf.mxu0
    %v1025 = vadd.f32 0.0, %v1024
    %v1026 = vpop.f32.mrf.mxu0
    %v1027 = vadd.f32 0.0, %v1026
    %v1028 = vpop.f32.mrf.mxu0
    %v1029 = vadd.f32 0.0, %v1028
    %1030 = vmatprep.mubr.bf16.mxu0 %v375
    %1031 = vmatmul.mubr.bf16.gmra.mxu0 %v374
    %v1032 = vpop.f32.mrf.mxu0
    %v1033 = vadd.f32 0.0, %v1032
    %v1034 = vpop.f32.mrf.mxu0
    %v1035 = vadd.f32 0.0, %v1034
    %v1036 = vpop.f32.mrf.mxu0
    %v1037 = vadd.f32 0.0, %v1036
    %v1038 = vpop.f32.mrf.mxu0
    %v1039 = vadd.f32 0.0, %v1038
    %1040 = vmatprep.mubr.bf16.mxu0 %v377
    %1041 = vmatmul.mubr.bf16.gmra.mxu0 %v376
    %v1042 = vpop.f32.mrf.mxu0
    %v1043 = vadd.f32 0.0, %v1042
    %v1044 = vpop.f32.mrf.mxu0
    %v1045 = vadd.f32 0.0, %v1044
    %v1046 = vpop.f32.mrf.mxu0
    %v1047 = vadd.f32 0.0, %v1046
    %v1048 = vpop.f32.mrf.mxu0
    %v1049 = vadd.f32 0.0, %v1048
    %1050 = vmatprep.mubr.bf16.mxu0 %v379
    %1051 = vmatmul.mubr.bf16.gmra.mxu0 %v378
    %v1052 = vpop.f32.mrf.mxu0
    %v1053 = vadd.f32 0.0, %v1052
    %v1054 = vpop.f32.mrf.mxu0
    %v1055 = vadd.f32 0.0, %v1054
    %v1056 = vpop.f32.mrf.mxu0
    %v1057 = vadd.f32 0.0, %v1056
    %v1058 = vpop.f32.mrf.mxu0
    %v1059 = vadd.f32 0.0, %v1058
    %1060 = vmatprep.mubr.bf16.mxu0 %v381
    %1061 = vmatmul.mubr.bf16.gmra.mxu0 %v380
    %v1062 = vpop.f32.mrf.mxu0
    %v1063 = vadd.f32 0.0, %v1062
    %v1064 = vpop.f32.mrf.mxu0
    %v1065 = vadd.f32 0.0, %v1064
    %v1066 = vpop.f32.mrf.mxu0
    %v1067 = vadd.f32 0.0, %v1066
    %v1068 = vpop.f32.mrf.mxu0
    %v1069 = vadd.f32 0.0, %v1068
    %1070 = vmatprep.mubr.bf16.mxu0 %v383
    %1071 = vmatmul.mubr.bf16.gmra.mxu0 %v382
    %v1072 = vpop.f32.mrf.mxu0
    %v1073 = vadd.f32 0.0, %v1072
    %v1074 = vpop.f32.mrf.mxu0
    %v1075 = vadd.f32 0.0, %v1074
    %v1076 = vpop.f32.mrf.mxu0
    %v1077 = vadd.f32 0.0, %v1076
    %v1078 = vpop.f32.mrf.mxu0
    %v1079 = vadd.f32 0.0, %v1078
    %1080 = vmatprep.mubr.bf16.mxu0 %v385
    %1081 = vmatmul.mubr.bf16.gmra.mxu0 %v384
    %v1082 = vpop.f32.mrf.mxu0
    %v1083 = vadd.f32 0.0, %v1082
    %v1084 = vpop.f32.mrf.mxu0
    %v1085 = vadd.f32 0.0, %v1084
    %v1086 = vpop.f32.mrf.mxu0
    %v1087 = vadd.f32 0.0, %v1086
    %v1088 = vpop.f32.mrf.mxu0
    %v1089 = vadd.f32 0.0, %v1088
    %1090 = vdwg.mxu0
    %1091 = vmatprep.subr.bf16.mxu0 %v806
    %1092 = vmatpush1.bf16.msra.mxu0 %v805
    %1093 = vmatprep.subr.bf16.mxu0 %v799
    %1094 = vmatpush1.bf16.msra.mxu0 %v798
    %1095 = vmatprep.subr.bf16.mxu0 %v792
    %1096 = vmatpush1.bf16.msra.mxu0 %v791
    %1097 = vmatprep.subr.bf16.mxu0 %v785
    %1098 = vmatpush1.bf16.msra.mxu0 %v784
    %1099 = vmatprep.subr.bf16.mxu0 %v778
    %1100 = vmatpush1.bf16.msra.mxu0 %v777
    %1101 = vmatprep.subr.bf16.mxu0 %v771
    %1102 = vmatpush1.bf16.msra.mxu0 %v770
    %1103 = vmatprep.subr.bf16.mxu0 %v764
    %1104 = vmatpush1.bf16.msra.mxu0 %v763
    %1105 = vmatprep.subr.bf16.mxu0 %v757
    %1106 = vmatpush1.bf16.msra.mxu0 %v756
    %1107 = vmatprep.subr.bf16.mxu0 %v862
    %1108 = vmatpush2.bf16.msra.mxu0 %v861
    %1109 = vmatprep.subr.bf16.mxu0 %v855
    %1110 = vmatpush2.bf16.msra.mxu0 %v854
    %1111 = vmatprep.subr.bf16.mxu0 %v848
    %1112 = vmatpush2.bf16.msra.mxu0 %v847
    %1113 = vmatprep.subr.bf16.mxu0 %v841
    %1114 = vmatpush2.bf16.msra.mxu0 %v840
    %1115 = vmatprep.subr.bf16.mxu0 %v834
    %1116 = vmatpush2.bf16.msra.mxu0 %v833
    %1117 = vmatprep.subr.bf16.mxu0 %v827
    %1118 = vmatpush2.bf16.msra.mxu0 %v826
    %1119 = vmatprep.subr.bf16.mxu0 %v820
    %1120 = vmatpush2.bf16.msra.mxu0 %v819
    %1121 = vmatprep.subr.bf16.mxu0 %v813
    %1122 = vmatpush2.bf16.msra.mxu0 %v812
    %1123 = vmatprep.mubr.bf16.mxu0 %v371
    %1124 = vmatmul.mubr.bf16.gmra.mxu0 %v370
    %v1125 = vpop.f32.mrf.mxu0
    %v1126 = vadd.f32 0.0, %v1125
    %v1127 = vpop.f32.mrf.mxu0
    %v1128 = vadd.f32 0.0, %v1127
    %v1129 = vpop.f32.mrf.mxu0
    %v1130 = vadd.f32 0.0, %v1129
    %v1131 = vpop.f32.mrf.mxu0
    %v1132 = vadd.f32 0.0, %v1131
    %1133 = vmatprep.mubr.bf16.mxu0 %v373
    %1134 = vmatmul.mubr.bf16.gmra.mxu0 %v372
    %v1135 = vpop.f32.mrf.mxu0
    %v1136 = vadd.f32 0.0, %v1135
    %v1137 = vpop.f32.mrf.mxu0
    %v1138 = vadd.f32 0.0, %v1137
    %v1139 = vpop.f32.mrf.mxu0
    %v1140 = vadd.f32 0.0, %v1139
    %v1141 = vpop.f32.mrf.mxu0
    %v1142 = vadd.f32 0.0, %v1141
    %1143 = vmatprep.mubr.bf16.mxu0 %v375
    %1144 = vmatmul.mubr.bf16.gmra.mxu0 %v374
    %v1145 = vpop.f32.mrf.mxu0
    %v1146 = vadd.f32 0.0, %v1145
    %v1147 = vpop.f32.mrf.mxu0
    %v1148 = vadd.f32 0.0, %v1147
    %v1149 = vpop.f32.mrf.mxu0
    %v1150 = vadd.f32 0.0, %v1149
    %v1151 = vpop.f32.mrf.mxu0
    %v1152 = vadd.f32 0.0, %v1151
    %1153 = vmatprep.mubr.bf16.mxu0 %v377
    %1154 = vmatmul.mubr.bf16.gmra.mxu0 %v376
    %v1155 = vpop.f32.mrf.mxu0
    %v1156 = vadd.f32 0.0, %v1155
    %v1157 = vpop.f32.mrf.mxu0
    %v1158 = vadd.f32 0.0, %v1157
    %v1159 = vpop.f32.mrf.mxu0
    %v1160 = vadd.f32 0.0, %v1159
    %v1161 = vpop.f32.mrf.mxu0
    %v1162 = vadd.f32 0.0, %v1161
    %1163 = vmatprep.mubr.bf16.mxu0 %v379
    %1164 = vmatmul.mubr.bf16.gmra.mxu0 %v378
    %v1165 = vpop.f32.mrf.mxu0
    %v1166 = vadd.f32 0.0, %v1165
    %v1167 = vpop.f32.mrf.mxu0
    %v1168 = vadd.f32 0.0, %v1167
    %v1169 = vpop.f32.mrf.mxu0
    %v1170 = vadd.f32 0.0, %v1169
    %v1171 = vpop.f32.mrf.mxu0
    %v1172 = vadd.f32 0.0, %v1171
    %1173 = vmatprep.mubr.bf16.mxu0 %v381
    %1174 = vmatmul.mubr.bf16.gmra.mxu0 %v380
    %v1175 = vpop.f32.mrf.mxu0
    %v1176 = vadd.f32 0.0, %v1175
    %v1177 = vpop.f32.mrf.mxu0
    %v1178 = vadd.f32 0.0, %v1177
    %v1179 = vpop.f32.mrf.mxu0
    %v1180 = vadd.f32 0.0, %v1179
    %v1181 = vpop.f32.mrf.mxu0
    %v1182 = vadd.f32 0.0, %v1181
    %1183 = vmatprep.mubr.bf16.mxu0 %v383
    %1184 = vmatmul.mubr.bf16.gmra.mxu0 %v382
    %v1185 = vpop.f32.mrf.mxu0
    %v1186 = vadd.f32 0.0, %v1185
    %v1187 = vpop.f32.mrf.mxu0
    %v1188 = vadd.f32 0.0, %v1187
    %v1189 = vpop.f32.mrf.mxu0
    %v1190 = vadd.f32 0.0, %v1189
    %v1191 = vpop.f32.mrf.mxu0
    %v1192 = vadd.f32 0.0, %v1191
    %1193 = vmatprep.mubr.bf16.mxu0 %v385
    %1194 = vmatmul.mubr.bf16.gmra.mxu0 %v384
    %v1195 = vpop.f32.mrf.mxu0
    %v1196 = vadd.f32 0.0, %v1195
    %v1197 = vpop.f32.mrf.mxu0
    %v1198 = vadd.f32 0.0, %v1197
    %v1199 = vpop.f32.mrf.mxu0
    %v1200 = vadd.f32 0.0, %v1199
    %v1201 = vpop.f32.mrf.mxu0
    %v1202 = vadd.f32 0.0, %v1201
    %1203 = vdwg.mxu0
    %1204 = vmatprep.subr.bf16.mxu0 %v808
    %1205 = vmatpush1.bf16.msra.mxu0 %v807
    %1206 = vmatprep.subr.bf16.mxu0 %v801
    %1207 = vmatpush1.bf16.msra.mxu0 %v800
    %1208 = vmatprep.subr.bf16.mxu0 %v794
    %1209 = vmatpush1.bf16.msra.mxu0 %v793
    %1210 = vmatprep.subr.bf16.mxu0 %v787
    %1211 = vmatpush1.bf16.msra.mxu0 %v786
    %1212 = vmatprep.subr.bf16.mxu0 %v780
    %1213 = vmatpush1.bf16.msra.mxu0 %v779
    %1214 = vmatprep.subr.bf16.mxu0 %v773
    %1215 = vmatpush1.bf16.msra.mxu0 %v772
    %1216 = vmatprep.subr.bf16.mxu0 %v766
    %1217 = vmatpush1.bf16.msra.mxu0 %v765
    %1218 = vmatprep.subr.bf16.mxu0 %v759
    %1219 = vmatpush1.bf16.msra.mxu0 %v758
    %1220 = vmatprep.subr.bf16.mxu0 %v864
    %1221 = vmatpush2.bf16.msra.mxu0 %v863
    %1222 = vmatprep.subr.bf16.mxu0 %v857
    %1223 = vmatpush2.bf16.msra.mxu0 %v856
    %1224 = vmatprep.subr.bf16.mxu0 %v850
    %1225 = vmatpush2.bf16.msra.mxu0 %v849
    %1226 = vmatprep.subr.bf16.mxu0 %v843
    %1227 = vmatpush2.bf16.msra.mxu0 %v842
    %1228 = vmatprep.subr.bf16.mxu0 %v836
    %1229 = vmatpush2.bf16.msra.mxu0 %v835
    %1230 = vmatprep.subr.bf16.mxu0 %v829
    %1231 = vmatpush2.bf16.msra.mxu0 %v828
    %1232 = vmatprep.subr.bf16.mxu0 %v822
    %1233 = vmatpush2.bf16.msra.mxu0 %v821
    %1234 = vmatprep.subr.bf16.mxu0 %v815
    %1235 = vmatpush2.bf16.msra.mxu0 %v814
    %1236 = vmatprep.mubr.bf16.mxu0 %v371
    %1237 = vmatmul.mubr.bf16.gmra.mxu0 %v370
    %v1238 = vpop.f32.mrf.mxu0
    %v1239 = vadd.f32 0.0, %v1238
    %v1240 = vpop.f32.mrf.mxu0
    %v1241 = vadd.f32 0.0, %v1240
    %v1242 = vpop.f32.mrf.mxu0
    %v1243 = vadd.f32 0.0, %v1242
    %v1244 = vpop.f32.mrf.mxu0
    %v1245 = vadd.f32 0.0, %v1244
    %1246 = vmatprep.mubr.bf16.mxu0 %v373
    %1247 = vmatmul.mubr.bf16.gmra.mxu0 %v372
    %v1248 = vpop.f32.mrf.mxu0
    %v1249 = vadd.f32 0.0, %v1248
    %v1250 = vpop.f32.mrf.mxu0
    %v1251 = vadd.f32 0.0, %v1250
    %v1252 = vpop.f32.mrf.mxu0
    %v1253 = vadd.f32 0.0, %v1252
    %v1254 = vpop.f32.mrf.mxu0
    %v1255 = vadd.f32 0.0, %v1254
    %1256 = vmatprep.mubr.bf16.mxu0 %v375
    %1257 = vmatmul.mubr.bf16.gmra.mxu0 %v374
    %v1258 = vpop.f32.mrf.mxu0
    %v1259 = vadd.f32 0.0, %v1258
    %v1260 = vpop.f32.mrf.mxu0
    %v1261 = vadd.f32 0.0, %v1260
    %v1262 = vpop.f32.mrf.mxu0
    %v1263 = vadd.f32 0.0, %v1262
    %v1264 = vpop.f32.mrf.mxu0
    %v1265 = vadd.f32 0.0, %v1264
    %1266 = vmatprep.mubr.bf16.mxu0 %v377
    %1267 = vmatmul.mubr.bf16.gmra.mxu0 %v376
    %v1268 = vpop.f32.mrf.mxu0
    %v1269 = vadd.f32 0.0, %v1268
    %v1270 = vpop.f32.mrf.mxu0
    %v1271 = vadd.f32 0.0, %v1270
    %v1272 = vpop.f32.mrf.mxu0
    %v1273 = vadd.f32 0.0, %v1272
    %v1274 = vpop.f32.mrf.mxu0
    %v1275 = vadd.f32 0.0, %v1274
    %1276 = vmatprep.mubr.bf16.mxu0 %v379
    %1277 = vmatmul.mubr.bf16.gmra.mxu0 %v378
    %v1278 = vpop.f32.mrf.mxu0
    %v1279 = vadd.f32 0.0, %v1278
    %v1280 = vpop.f32.mrf.mxu0
    %v1281 = vadd.f32 0.0, %v1280
    %v1282 = vpop.f32.mrf.mxu0
    %v1283 = vadd.f32 0.0, %v1282
    %v1284 = vpop.f32.mrf.mxu0
    %v1285 = vadd.f32 0.0, %v1284
    %1286 = vmatprep.mubr.bf16.mxu0 %v381
    %1287 = vmatmul.mubr.bf16.gmra.mxu0 %v380
    %v1288 = vpop.f32.mrf.mxu0
    %v1289 = vadd.f32 0.0, %v1288
    %v1290 = vpop.f32.mrf.mxu0
    %v1291 = vadd.f32 0.0, %v1290
    %v1292 = vpop.f32.mrf.mxu0
    %v1293 = vadd.f32 0.0, %v1292
    %v1294 = vpop.f32.mrf.mxu0
    %v1295 = vadd.f32 0.0, %v1294
    %1296 = vmatprep.mubr.bf16.mxu0 %v383
    %1297 = vmatmul.mubr.bf16.gmra.mxu0 %v382
    %v1298 = vpop.f32.mrf.mxu0
    %v1299 = vadd.f32 0.0, %v1298
    %v1300 = vpop.f32.mrf.mxu0
    %v1301 = vadd.f32 0.0, %v1300
    %v1302 = vpop.f32.mrf.mxu0
    %v1303 = vadd.f32 0.0, %v1302
    %v1304 = vpop.f32.mrf.mxu0
    %v1305 = vadd.f32 0.0, %v1304
    %1306 = vmatprep.mubr.bf16.mxu0 %v385
    %1307 = vmatmul.mubr.bf16.gmra.mxu0 %v384
    %v1308 = vpop.f32.mrf.mxu0
    %v1309 = vadd.f32 0.0, %v1308
    %v1310 = vpop.f32.mrf.mxu0
    %v1311 = vadd.f32 0.0, %v1310
    %v1312 = vpop.f32.mrf.mxu0
    %v1313 = vadd.f32 0.0, %v1312
    %v1314 = vpop.f32.mrf.mxu0
    %v1315 = vadd.f32 0.0, %v1314
    %1316 = vdwg.mxu0
    %1317 = vmatprep.subr.bf16.mxu0 0
    %1318 = vmatpush1.bf16.msra.mxu0 %v809
    %1319 = vmatprep.subr.bf16.mxu0 0
    %1320 = vmatpush1.bf16.msra.mxu0 %v802
    %1321 = vmatprep.subr.bf16.mxu0 0
    %1322 = vmatpush1.bf16.msra.mxu0 %v795
    %1323 = vmatprep.subr.bf16.mxu0 0
    %1324 = vmatpush1.bf16.msra.mxu0 %v788
    %1325 = vmatprep.subr.bf16.mxu0 0
    %1326 = vmatpush1.bf16.msra.mxu0 %v781
    %1327 = vmatprep.subr.bf16.mxu0 0
    %1328 = vmatpush1.bf16.msra.mxu0 %v774
    %1329 = vmatprep.subr.bf16.mxu0 0
    %1330 = vmatpush1.bf16.msra.mxu0 %v767
    %1331 = vmatprep.subr.bf16.mxu0 0
    %1332 = vmatpush1.bf16.msra.mxu0 %v760
    %1333 = vmatprep.subr.bf16.mxu0 0
    %1334 = vmatpush2.bf16.msra.mxu0 %v865
    %1335 = vmatprep.subr.bf16.mxu0 0
    %1336 = vmatpush2.bf16.msra.mxu0 %v858
    %1337 = vmatprep.subr.bf16.mxu0 0
    %1338 = vmatpush2.bf16.msra.mxu0 %v851
    %1339 = vmatprep.subr.bf16.mxu0 0
    %1340 = vmatpush2.bf16.msra.mxu0 %v844
    %1341 = vmatprep.subr.bf16.mxu0 0
    %1342 = vmatpush2.bf16.msra.mxu0 %v837
    %1343 = vmatprep.subr.bf16.mxu0 0
    %1344 = vmatpush2.bf16.msra.mxu0 %v830
    %1345 = vmatprep.subr.bf16.mxu0 0
    %1346 = vmatpush2.bf16.msra.mxu0 %v823
    %1347 = vmatprep.subr.bf16.mxu0 0
    %1348 = vmatpush2.bf16.msra.mxu0 %v816
    %1349 = vmatprep.mubr.bf16.mxu0 %v371
    %1350 = vmatmul.mubr.bf16.gmra.mxu0 %v370
    %v1351 = vpop.f32.mrf.mxu0
    %v1352 = vadd.f32 0.0, %v1351
    %v1353 = vpop.f32.mrf.mxu0
    %v1354 = vpop.f32.mrf.mxu0
    %v1355 = vadd.f32 0.0, %v1354
    %v1356 = vpop.f32.mrf.mxu0
    %1357 = vmatprep.mubr.bf16.mxu0 %v373
    %1358 = vmatmul.mubr.bf16.gmra.mxu0 %v372
    %v1359 = vpop.f32.mrf.mxu0
    %v1360 = vadd.f32 0.0, %v1359
    %v1361 = vpop.f32.mrf.mxu0
    %v1362 = vpop.f32.mrf.mxu0
    %v1363 = vadd.f32 0.0, %v1362
    %v1364 = vpop.f32.mrf.mxu0
    %1365 = vmatprep.mubr.bf16.mxu0 %v375
    %1366 = vmatmul.mubr.bf16.gmra.mxu0 %v374
    %v1367 = vpop.f32.mrf.mxu0
    %v1368 = vadd.f32 0.0, %v1367
    %v1369 = vpop.f32.mrf.mxu0
    %v1370 = vpop.f32.mrf.mxu0
    %v1371 = vadd.f32 0.0, %v1370
    %v1372 = vpop.f32.mrf.mxu0
    %1373 = vmatprep.mubr.bf16.mxu0 %v377
    %1374 = vmatmul.mubr.bf16.gmra.mxu0 %v376
    %v1375 = vpop.f32.mrf.mxu0
    %v1376 = vadd.f32 0.0, %v1375
    %v1377 = vpop.f32.mrf.mxu0
    %v1378 = vpop.f32.mrf.mxu0
    %v1379 = vadd.f32 0.0, %v1378
    %v1380 = vpop.f32.mrf.mxu0
    %1381 = vmatprep.mubr.bf16.mxu0 %v379
    %1382 = vmatmul.mubr.bf16.gmra.mxu0 %v378
    %v1383 = vpop.f32.mrf.mxu0
    %v1384 = vadd.f32 0.0, %v1383
    %v1385 = vpop.f32.mrf.mxu0
    %v1386 = vpop.f32.mrf.mxu0
    %v1387 = vadd.f32 0.0, %v1386
    %v1388 = vpop.f32.mrf.mxu0
    %1389 = vmatprep.mubr.bf16.mxu0 %v381
    %1390 = vmatmul.mubr.bf16.gmra.mxu0 %v380
    %v1391 = vpop.f32.mrf.mxu0
    %v1392 = vadd.f32 0.0, %v1391
    %v1393 = vpop.f32.mrf.mxu0
    %v1394 = vpop.f32.mrf.mxu0
    %v1395 = vadd.f32 0.0, %v1394
    %v1396 = vpop.f32.mrf.mxu0
    %1397 = vmatprep.mubr.bf16.mxu0 %v383
    %1398 = vmatmul.mubr.bf16.gmra.mxu0 %v382
    %v1399 = vpop.f32.mrf.mxu0
    %v1400 = vadd.f32 0.0, %v1399
    %v1401 = vpop.f32.mrf.mxu0
    %v1402 = vpop.f32.mrf.mxu0
    %v1403 = vadd.f32 0.0, %v1402
    %v1404 = vpop.f32.mrf.mxu0
    %1405 = vmatprep.mubr.bf16.mxu0 %v385
    %1406 = vmatmul.mubr.bf16.gmra.mxu0 %v384
    %v1407 = vpop.f32.mrf.mxu0
    %v1408 = vadd.f32 0.0, %v1407
    %v1409 = vpop.f32.mrf.mxu0
    %v1410 = vpop.f32.mrf.mxu0
    %v1411 = vadd.f32 0.0, %v1410
    %v1412 = vpop.f32.mrf.mxu0
    %1413 = vdwg.mxu0
    %v1430 = vunpack.c.l.b16 %v34
    %v1431 = vunpack.c.h.b16 %v34
    %v1432 = vunpack.c.l.b16 %v35
    %v1433 = vunpack.c.h.b16 %v35
    %v1434 = vunpack.c.l.b16 %v36
    %v1435 = vunpack.c.h.b16 %v36
    %v1436 = vunpack.c.l.b16 %v37
    %v1437 = vunpack.c.h.b16 %v37
    %v1438 = vunpack.c.l.b16 %v38
    %v1439 = vunpack.c.h.b16 %v38
    %v1440 = vunpack.c.l.b16 %v39
    %v1441 = vunpack.c.h.b16 %v39
    %v1442 = vunpack.c.l.b16 %v40
    %v1443 = vunpack.c.h.b16 %v40
    %v1444 = vunpack.c.l.b16 %v41
    %v1445 = vunpack.c.h.b16 %v41
    %v1446 = vunpack.c.l.b16 %v42
    %v1447 = vunpack.c.h.b16 %v42
    %v1448 = vunpack.c.l.b16 %v43
    %v1449 = vunpack.c.h.b16 %v43
    %v1450 = vunpack.c.l.b16 %v44
    %v1451 = vunpack.c.h.b16 %v44
    %v1452 = vunpack.c.l.b16 %v45
    %v1453 = vunpack.c.h.b16 %v45
    %v1454 = vunpack.c.l.b16 %v46
    %v1455 = vunpack.c.h.b16 %v46
    %v1456 = vunpack.c.l.b16 %v47
    %v1457 = vunpack.c.h.b16 %v47
    %v1458 = vunpack.c.l.b16 %v48
    %v1459 = vunpack.c.h.b16 %v48
    %v1460 = vunpack.c.l.b16 %v49
    %v1461 = vunpack.c.h.b16 %v49
    %v1462 = vpack.c.b16 %v1432, %v1430
    %v1463 = vpack.c.b16 %v1433, %v1431
    %v1464 = vpack.c.b16 %v1436, %v1434
    %v1465 = vpack.c.b16 %v1437, %v1435
    %v1466 = vpack.c.b16 %v1440, %v1438
    %v1467 = vpack.c.b16 %v1441, %v1439
    %v1468 = vpack.c.b16 %v1444, %v1442
    %v1469 = vpack.c.b16 %v1445, %v1443
    %v1470 = vpack.c.b16 %v1448, %v1446
    %v1471 = vpack.c.b16 %v1449, %v1447
    %v1472 = vpack.c.b16 %v1452, %v1450
    %v1473 = vpack.c.b16 %v1453, %v1451
    %v1474 = vpack.c.b16 %v1456, %v1454
    %v1475 = vpack.c.b16 %v1457, %v1455
    %v1476 = vpack.c.b16 %v1460, %v1458
    %v1477 = vpack.c.b16 %v1461, %v1459
    %v1622 = vunpack.c.l.b16 %v50
    %v1623 = vunpack.c.h.b16 %v50
    %v1624 = vunpack.c.l.b16 %v51
    %v1625 = vunpack.c.h.b16 %v51
    %v1626 = vunpack.c.l.b16 %v52
    %v1627 = vunpack.c.h.b16 %v52
    %v1628 = vunpack.c.l.b16 %v53
    %v1629 = vunpack.c.l.b16 %v54
    %v1630 = vunpack.c.h.b16 %v54
    %v1631 = vunpack.c.l.b16 %v55
    %v1632 = vunpack.c.h.b16 %v55
    %v1633 = vunpack.c.l.b16 %v56
    %v1634 = vunpack.c.h.b16 %v56
    %v1635 = vunpack.c.l.b16 %v57
    %v1636 = vunpack.c.l.b16 %v58
    %v1637 = vunpack.c.h.b16 %v58
    %v1638 = vunpack.c.l.b16 %v59
    %v1639 = vunpack.c.h.b16 %v59
    %v1640 = vunpack.c.l.b16 %v60
    %v1641 = vunpack.c.h.b16 %v60
    %v1642 = vunpack.c.l.b16 %v61
    %v1643 = vunpack.c.l.b16 %v62
    %v1644 = vunpack.c.h.b16 %v62
    %v1645 = vunpack.c.l.b16 %v63
    %v1646 = vunpack.c.h.b16 %v63
    %v1647 = vunpack.c.l.b16 %v64
    %v1648 = vunpack.c.h.b16 %v64
    %v1649 = vunpack.c.l.b16 %v65
    %v1650 = vunpack.c.l.b16 %v66
    %v1651 = vunpack.c.h.b16 %v66
    %v1652 = vunpack.c.l.b16 %v67
    %v1653 = vunpack.c.h.b16 %v67
    %v1654 = vunpack.c.l.b16 %v68
    %v1655 = vunpack.c.h.b16 %v68
    %v1656 = vunpack.c.l.b16 %v69
    %v1657 = vunpack.c.l.b16 %v70
    %v1658 = vunpack.c.h.b16 %v70
    %v1659 = vunpack.c.l.b16 %v71
    %v1660 = vunpack.c.h.b16 %v71
    %v1661 = vunpack.c.l.b16 %v72
    %v1662 = vunpack.c.h.b16 %v72
    %v1663 = vunpack.c.l.b16 %v73
    %v1664 = vunpack.c.l.b16 %v74
    %v1665 = vunpack.c.h.b16 %v74
    %v1666 = vunpack.c.l.b16 %v75
    %v1667 = vunpack.c.h.b16 %v75
    %v1668 = vunpack.c.l.b16 %v76
    %v1669 = vunpack.c.h.b16 %v76
    %v1670 = vunpack.c.l.b16 %v77
    %v1671 = vunpack.c.l.b16 %v78
    %v1672 = vunpack.c.h.b16 %v78
    %v1673 = vunpack.c.l.b16 %v79
    %v1674 = vunpack.c.h.b16 %v79
    %v1675 = vunpack.c.l.b16 %v80
    %v1676 = vunpack.c.h.b16 %v80
    %v1677 = vunpack.c.l.b16 %v81
    %v1678 = vunpack.c.l.b16 %v82
    %v1679 = vunpack.c.h.b16 %v82
    %v1680 = vunpack.c.l.b16 %v83
    %v1681 = vunpack.c.h.b16 %v83
    %v1682 = vunpack.c.l.b16 %v84
    %v1683 = vunpack.c.h.b16 %v84
    %v1684 = vunpack.c.l.b16 %v85
    %v1685 = vunpack.c.l.b16 %v86
    %v1686 = vunpack.c.h.b16 %v86
    %v1687 = vunpack.c.l.b16 %v87
    %v1688 = vunpack.c.h.b16 %v87
    %v1689 = vunpack.c.l.b16 %v88
    %v1690 = vunpack.c.h.b16 %v88
    %v1691 = vunpack.c.l.b16 %v89
    %v1692 = vunpack.c.l.b16 %v90
    %v1693 = vunpack.c.h.b16 %v90
    %v1694 = vunpack.c.l.b16 %v91
    %v1695 = vunpack.c.h.b16 %v91
    %v1696 = vunpack.c.l.b16 %v92
    %v1697 = vunpack.c.h.b16 %v92
    %v1698 = vunpack.c.l.b16 %v93
    %v1699 = vunpack.c.l.b16 %v94
    %v1700 = vunpack.c.h.b16 %v94
    %v1701 = vunpack.c.l.b16 %v95
    %v1702 = vunpack.c.h.b16 %v95
    %v1703 = vunpack.c.l.b16 %v96
    %v1704 = vunpack.c.h.b16 %v96
    %v1705 = vunpack.c.l.b16 %v97
    %v1706 = vunpack.c.l.b16 %v98
    %v1707 = vunpack.c.h.b16 %v98
    %v1708 = vunpack.c.l.b16 %v99
    %v1709 = vunpack.c.h.b16 %v99
    %v1710 = vunpack.c.l.b16 %v100
    %v1711 = vunpack.c.h.b16 %v100
    %v1712 = vunpack.c.l.b16 %v101
    %v1713 = vunpack.c.l.b16 %v102
    %v1714 = vunpack.c.h.b16 %v102
    %v1715 = vunpack.c.l.b16 %v103
    %v1716 = vunpack.c.h.b16 %v103
    %v1717 = vunpack.c.l.b16 %v104
    %v1718 = vunpack.c.h.b16 %v104
    %v1719 = vunpack.c.l.b16 %v105
    %v1720 = vunpack.c.l.b16 %v106
    %v1721 = vunpack.c.h.b16 %v106
    %v1722 = vunpack.c.l.b16 %v107
    %v1723 = vunpack.c.h.b16 %v107
    %v1724 = vunpack.c.l.b16 %v108
    %v1725 = vunpack.c.h.b16 %v108
    %v1726 = vunpack.c.l.b16 %v109
    %v1727 = vunpack.c.l.b16 %v110
    %v1728 = vunpack.c.h.b16 %v110
    %v1729 = vunpack.c.l.b16 %v111
    %v1730 = vunpack.c.h.b16 %v111
    %v1731 = vunpack.c.l.b16 %v112
    %v1732 = vunpack.c.h.b16 %v112
    %v1733 = vunpack.c.l.b16 %v113
    %v1734 = vunpack.c.l.b16 %v114
    %v1735 = vunpack.c.h.b16 %v114
    %v1736 = vunpack.c.l.b16 %v115
    %v1737 = vunpack.c.h.b16 %v115
    %v1738 = vunpack.c.l.b16 %v116
    %v1739 = vunpack.c.h.b16 %v116
    %v1740 = vunpack.c.l.b16 %v117
    %v1741 = vunpack.c.l.b16 %v118
    %v1742 = vunpack.c.h.b16 %v118
    %v1743 = vunpack.c.l.b16 %v119
    %v1744 = vunpack.c.h.b16 %v119
    %v1745 = vunpack.c.l.b16 %v120
    %v1746 = vunpack.c.h.b16 %v120
    %v1747 = vunpack.c.l.b16 %v121
    %v1748 = vunpack.c.l.b16 %v122
    %v1749 = vunpack.c.h.b16 %v122
    %v1750 = vunpack.c.l.b16 %v123
    %v1751 = vunpack.c.h.b16 %v123
    %v1752 = vunpack.c.l.b16 %v124
    %v1753 = vunpack.c.h.b16 %v124
    %v1754 = vunpack.c.l.b16 %v125
    %v1755 = vunpack.c.l.b16 %v126
    %v1756 = vunpack.c.h.b16 %v126
    %v1757 = vunpack.c.l.b16 %v127
    %v1758 = vunpack.c.h.b16 %v127
    %v1759 = vunpack.c.l.b16 %v128
    %v1760 = vunpack.c.h.b16 %v128
    %v1761 = vunpack.c.l.b16 %v129
    %v1762 = vunpack.c.l.b16 %v130
    %v1763 = vunpack.c.h.b16 %v130
    %v1764 = vunpack.c.l.b16 %v131
    %v1765 = vunpack.c.h.b16 %v131
    %v1766 = vunpack.c.l.b16 %v132
    %v1767 = vunpack.c.h.b16 %v132
    %v1768 = vunpack.c.l.b16 %v133
    %v1769 = vunpack.c.l.b16 %v134
    %v1770 = vunpack.c.h.b16 %v134
    %v1771 = vunpack.c.l.b16 %v135
    %v1772 = vunpack.c.h.b16 %v135
    %v1773 = vunpack.c.l.b16 %v136
    %v1774 = vunpack.c.h.b16 %v136
    %v1775 = vunpack.c.l.b16 %v137
    %v1776 = vunpack.c.l.b16 %v138
    %v1777 = vunpack.c.h.b16 %v138
    %v1778 = vunpack.c.l.b16 %v139
    %v1779 = vunpack.c.h.b16 %v139
    %v1780 = vunpack.c.l.b16 %v140
    %v1781 = vunpack.c.h.b16 %v140
    %v1782 = vunpack.c.l.b16 %v141
    %v1783 = vunpack.c.l.b16 %v142
    %v1784 = vunpack.c.h.b16 %v142
    %v1785 = vunpack.c.l.b16 %v143
    %v1786 = vunpack.c.h.b16 %v143
    %v1787 = vunpack.c.l.b16 %v144
    %v1788 = vunpack.c.h.b16 %v144
    %v1789 = vunpack.c.l.b16 %v145
    %v1790 = vunpack.c.l.b16 %v146
    %v1791 = vunpack.c.h.b16 %v146
    %v1792 = vunpack.c.l.b16 %v147
    %v1793 = vunpack.c.h.b16 %v147
    %v1794 = vunpack.c.l.b16 %v148
    %v1795 = vunpack.c.h.b16 %v148
    %v1796 = vunpack.c.l.b16 %v149
    %v1797 = vunpack.c.l.b16 %v150
    %v1798 = vunpack.c.h.b16 %v150
    %v1799 = vunpack.c.l.b16 %v151
    %v1800 = vunpack.c.h.b16 %v151
    %v1801 = vunpack.c.l.b16 %v152
    %v1802 = vunpack.c.h.b16 %v152
    %v1803 = vunpack.c.l.b16 %v153
    %v1804 = vunpack.c.l.b16 %v154
    %v1805 = vunpack.c.h.b16 %v154
    %v1806 = vunpack.c.l.b16 %v155
    %v1807 = vunpack.c.h.b16 %v155
    %v1808 = vunpack.c.l.b16 %v156
    %v1809 = vunpack.c.h.b16 %v156
    %v1810 = vunpack.c.l.b16 %v157
    %v1811 = vunpack.c.l.b16 %v158
    %v1812 = vunpack.c.h.b16 %v158
    %v1813 = vunpack.c.l.b16 %v159
    %v1814 = vunpack.c.h.b16 %v159
    %v1815 = vunpack.c.l.b16 %v160
    %v1816 = vunpack.c.h.b16 %v160
    %v1817 = vunpack.c.l.b16 %v161
    %v1818 = vunpack.c.l.b16 %v162
    %v1819 = vunpack.c.h.b16 %v162
    %v1820 = vunpack.c.l.b16 %v163
    %v1821 = vunpack.c.h.b16 %v163
    %v1822 = vunpack.c.l.b16 %v164
    %v1823 = vunpack.c.h.b16 %v164
    %v1824 = vunpack.c.l.b16 %v165
    %v1825 = vunpack.c.l.b16 %v166
    %v1826 = vunpack.c.h.b16 %v166
    %v1827 = vunpack.c.l.b16 %v167
    %v1828 = vunpack.c.h.b16 %v167
    %v1829 = vunpack.c.l.b16 %v168
    %v1830 = vunpack.c.h.b16 %v168
    %v1831 = vunpack.c.l.b16 %v169
    %v1832 = vunpack.c.l.b16 %v170
    %v1833 = vunpack.c.h.b16 %v170
    %v1834 = vunpack.c.l.b16 %v171
    %v1835 = vunpack.c.h.b16 %v171
    %v1836 = vunpack.c.l.b16 %v172
    %v1837 = vunpack.c.h.b16 %v172
    %v1838 = vunpack.c.l.b16 %v173
    %v1839 = vunpack.c.l.b16 %v174
    %v1840 = vunpack.c.h.b16 %v174
    %v1841 = vunpack.c.l.b16 %v175
    %v1842 = vunpack.c.h.b16 %v175
    %v1843 = vunpack.c.l.b16 %v176
    %v1844 = vunpack.c.h.b16 %v176
    %v1845 = vunpack.c.l.b16 %v177
    %v1846 = vpack.c.b16 %v1629, %v1622
    %v1847 = vpack.c.b16 %v1630, %v1623
    %v1848 = vpack.c.b16 %v1631, %v1624
    %v1849 = vpack.c.b16 %v1632, %v1625
    %v1850 = vpack.c.b16 %v1633, %v1626
    %v1851 = vpack.c.b16 %v1634, %v1627
    %v1852 = vpack.c.b16 %v1635, %v1628
    %v1853 = vpack.c.b16 %v1643, %v1636
    %v1854 = vpack.c.b16 %v1644, %v1637
    %v1855 = vpack.c.b16 %v1645, %v1638
    %v1856 = vpack.c.b16 %v1646, %v1639
    %v1857 = vpack.c.b16 %v1647, %v1640
    %v1858 = vpack.c.b16 %v1648, %v1641
    %v1859 = vpack.c.b16 %v1649, %v1642
    %v1860 = vpack.c.b16 %v1657, %v1650
    %v1861 = vpack.c.b16 %v1658, %v1651
    %v1862 = vpack.c.b16 %v1659, %v1652
    %v1863 = vpack.c.b16 %v1660, %v1653
    %v1864 = vpack.c.b16 %v1661, %v1654
    %v1865 = vpack.c.b16 %v1662, %v1655
    %v1866 = vpack.c.b16 %v1663, %v1656
    %v1867 = vpack.c.b16 %v1671, %v1664
    %v1868 = vpack.c.b16 %v1672, %v1665
    %v1869 = vpack.c.b16 %v1673, %v1666
    %v1870 = vpack.c.b16 %v1674, %v1667
    %v1871 = vpack.c.b16 %v1675, %v1668
    %v1872 = vpack.c.b16 %v1676, %v1669
    %v1873 = vpack.c.b16 %v1677, %v1670
    %v1874 = vpack.c.b16 %v1685, %v1678
    %v1875 = vpack.c.b16 %v1686, %v1679
    %v1876 = vpack.c.b16 %v1687, %v1680
    %v1877 = vpack.c.b16 %v1688, %v1681
    %v1878 = vpack.c.b16 %v1689, %v1682
    %v1879 = vpack.c.b16 %v1690, %v1683
    %v1880 = vpack.c.b16 %v1691, %v1684
    %v1881 = vpack.c.b16 %v1699, %v1692
    %v1882 = vpack.c.b16 %v1700, %v1693
    %v1883 = vpack.c.b16 %v1701, %v1694
    %v1884 = vpack.c.b16 %v1702, %v1695
    %v1885 = vpack.c.b16 %v1703, %v1696
    %v1886 = vpack.c.b16 %v1704, %v1697
    %v1887 = vpack.c.b16 %v1705, %v1698
    %v1888 = vpack.c.b16 %v1713, %v1706
    %v1889 = vpack.c.b16 %v1714, %v1707
    %v1890 = vpack.c.b16 %v1715, %v1708
    %v1891 = vpack.c.b16 %v1716, %v1709
    %v1892 = vpack.c.b16 %v1717, %v1710
    %v1893 = vpack.c.b16 %v1718, %v1711
    %v1894 = vpack.c.b16 %v1719, %v1712
    %v1895 = vpack.c.b16 %v1727, %v1720
    %v1896 = vpack.c.b16 %v1728, %v1721
    %v1897 = vpack.c.b16 %v1729, %v1722
    %v1898 = vpack.c.b16 %v1730, %v1723
    %v1899 = vpack.c.b16 %v1731, %v1724
    %v1900 = vpack.c.b16 %v1732, %v1725
    %v1901 = vpack.c.b16 %v1733, %v1726
    %v1902 = vpack.c.b16 %v1741, %v1734
    %v1903 = vpack.c.b16 %v1742, %v1735
    %v1904 = vpack.c.b16 %v1743, %v1736
    %v1905 = vpack.c.b16 %v1744, %v1737
    %v1906 = vpack.c.b16 %v1745, %v1738
    %v1907 = vpack.c.b16 %v1746, %v1739
    %v1908 = vpack.c.b16 %v1747, %v1740
    %v1909 = vpack.c.b16 %v1755, %v1748
    %v1910 = vpack.c.b16 %v1756, %v1749
    %v1911 = vpack.c.b16 %v1757, %v1750
    %v1912 = vpack.c.b16 %v1758, %v1751
    %v1913 = vpack.c.b16 %v1759, %v1752
    %v1914 = vpack.c.b16 %v1760, %v1753
    %v1915 = vpack.c.b16 %v1761, %v1754
    %v1916 = vpack.c.b16 %v1769, %v1762
    %v1917 = vpack.c.b16 %v1770, %v1763
    %v1918 = vpack.c.b16 %v1771, %v1764
    %v1919 = vpack.c.b16 %v1772, %v1765
    %v1920 = vpack.c.b16 %v1773, %v1766
    %v1921 = vpack.c.b16 %v1774, %v1767
    %v1922 = vpack.c.b16 %v1775, %v1768
    %v1923 = vpack.c.b16 %v1783, %v1776
    %v1924 = vpack.c.b16 %v1784, %v1777
    %v1925 = vpack.c.b16 %v1785, %v1778
    %v1926 = vpack.c.b16 %v1786, %v1779
    %v1927 = vpack.c.b16 %v1787, %v1780
    %v1928 = vpack.c.b16 %v1788, %v1781
    %v1929 = vpack.c.b16 %v1789, %v1782
    %v1930 = vpack.c.b16 %v1797, %v1790
    %v1931 = vpack.c.b16 %v1798, %v1791
    %v1932 = vpack.c.b16 %v1799, %v1792
    %v1933 = vpack.c.b16 %v1800, %v1793
    %v1934 = vpack.c.b16 %v1801, %v1794
    %v1935 = vpack.c.b16 %v1802, %v1795
    %v1936 = vpack.c.b16 %v1803, %v1796
    %v1937 = vpack.c.b16 %v1811, %v1804
    %v1938 = vpack.c.b16 %v1812, %v1805
    %v1939 = vpack.c.b16 %v1813, %v1806
    %v1940 = vpack.c.b16 %v1814, %v1807
    %v1941 = vpack.c.b16 %v1815, %v1808
    %v1942 = vpack.c.b16 %v1816, %v1809
    %v1943 = vpack.c.b16 %v1817, %v1810
    %v1944 = vpack.c.b16 %v1825, %v1818
    %v1945 = vpack.c.b16 %v1826, %v1819
    %v1946 = vpack.c.b16 %v1827, %v1820
    %v1947 = vpack.c.b16 %v1828, %v1821
    %v1948 = vpack.c.b16 %v1829, %v1822
    %v1949 = vpack.c.b16 %v1830, %v1823
    %v1950 = vpack.c.b16 %v1831, %v1824
    %v1951 = vpack.c.b16 %v1839, %v1832
    %v1952 = vpack.c.b16 %v1840, %v1833
    %v1953 = vpack.c.b16 %v1841, %v1834
    %v1954 = vpack.c.b16 %v1842, %v1835
    %v1955 = vpack.c.b16 %v1843, %v1836
    %v1956 = vpack.c.b16 %v1844, %v1837
    %v1957 = vpack.c.b16 %v1845, %v1838
    %2070 = vmatprep.subr.bf16.mxu0 %v1896
    %2071 = vmatpush1.bf16.msra.mxu0 %v1895
    %2072 = vmatprep.subr.bf16.mxu0 %v1889
    %2073 = vmatpush1.bf16.msra.mxu0 %v1888
    %2074 = vmatprep.subr.bf16.mxu0 %v1882
    %2075 = vmatpush1.bf16.msra.mxu0 %v1881
    %2076 = vmatprep.subr.bf16.mxu0 %v1875
    %2077 = vmatpush1.bf16.msra.mxu0 %v1874
    %2078 = vmatprep.subr.bf16.mxu0 %v1868
    %2079 = vmatpush1.bf16.msra.mxu0 %v1867
    %2080 = vmatprep.subr.bf16.mxu0 %v1861
    %2081 = vmatpush1.bf16.msra.mxu0 %v1860
    %2082 = vmatprep.subr.bf16.mxu0 %v1854
    %2083 = vmatpush1.bf16.msra.mxu0 %v1853
    %2084 = vmatprep.subr.bf16.mxu0 %v1847
    %2085 = vmatpush1.bf16.msra.mxu0 %v1846
    %2086 = vmatprep.subr.bf16.mxu0 %v1952
    %2087 = vmatpush2.bf16.msra.mxu0 %v1951
    %2088 = vmatprep.subr.bf16.mxu0 %v1945
    %2089 = vmatpush2.bf16.msra.mxu0 %v1944
    %2090 = vmatprep.subr.bf16.mxu0 %v1938
    %2091 = vmatpush2.bf16.msra.mxu0 %v1937
    %2092 = vmatprep.subr.bf16.mxu0 %v1931
    %2093 = vmatpush2.bf16.msra.mxu0 %v1930
    %2094 = vmatprep.subr.bf16.mxu0 %v1924
    %2095 = vmatpush2.bf16.msra.mxu0 %v1923
    %2096 = vmatprep.subr.bf16.mxu0 %v1917
    %2097 = vmatpush2.bf16.msra.mxu0 %v1916
    %2098 = vmatprep.subr.bf16.mxu0 %v1910
    %2099 = vmatpush2.bf16.msra.mxu0 %v1909
    %2100 = vmatprep.subr.bf16.mxu0 %v1903
    %2101 = vmatpush2.bf16.msra.mxu0 %v1902
    %2102 = vmatprep.mubr.bf16.mxu0 %v1463
    %2103 = vmatmul.mubr.bf16.gmra.mxu0 %v1462
    %v2104 = vpop.f32.mrf.mxu0
    %v2105 = vadd.f32 %v1013, %v2104
    %v2106 = vpop.f32.mrf.mxu0
    %v2107 = vadd.f32 %v1015, %v2106
    %v2108 = vpop.f32.mrf.mxu0
    %v2109 = vadd.f32 %v1017, %v2108
    %v2110 = vpop.f32.mrf.mxu0
    %v2111 = vadd.f32 %v1019, %v2110
    %2112 = vmatprep.mubr.bf16.mxu0 %v1465
    %2113 = vmatmul.mubr.bf16.gmra.mxu0 %v1464
    %v2114 = vpop.f32.mrf.mxu0
    %v2115 = vadd.f32 %v1023, %v2114
    %v2116 = vpop.f32.mrf.mxu0
    %v2117 = vadd.f32 %v1025, %v2116
    %v2118 = vpop.f32.mrf.mxu0
    %v2119 = vadd.f32 %v1027, %v2118
    %v2120 = vpop.f32.mrf.mxu0
    %v2121 = vadd.f32 %v1029, %v2120
    %2122 = vmatprep.mubr.bf16.mxu0 %v1467
    %2123 = vmatmul.mubr.bf16.gmra.mxu0 %v1466
    %v2124 = vpop.f32.mrf.mxu0
    %v2125 = vadd.f32 %v1033, %v2124
    %v2126 = vpop.f32.mrf.mxu0
    %v2127 = vadd.f32 %v1035, %v2126
    %v2128 = vpop.f32.mrf.mxu0
    %v2129 = vadd.f32 %v1037, %v2128
    %v2130 = vpop.f32.mrf.mxu0
    %v2131 = vadd.f32 %v1039, %v2130
    %2132 = vmatprep.mubr.bf16.mxu0 %v1469
    %2133 = vmatmul.mubr.bf16.gmra.mxu0 %v1468
    %v2134 = vpop.f32.mrf.mxu0
    %v2135 = vadd.f32 %v1043, %v2134
    %v2136 = vpop.f32.mrf.mxu0
    %v2137 = vadd.f32 %v1045, %v2136
    %v2138 = vpop.f32.mrf.mxu0
    %v2139 = vadd.f32 %v1047, %v2138
    %v2140 = vpop.f32.mrf.mxu0
    %v2141 = vadd.f32 %v1049, %v2140
    %2142 = vmatprep.mubr.bf16.mxu0 %v1471
    %2143 = vmatmul.mubr.bf16.gmra.mxu0 %v1470
    %v2144 = vpop.f32.mrf.mxu0
    %v2145 = vadd.f32 %v1053, %v2144
    %v2146 = vpop.f32.mrf.mxu0
    %v2147 = vadd.f32 %v1055, %v2146
    %v2148 = vpop.f32.mrf.mxu0
    %v2149 = vadd.f32 %v1057, %v2148
    %v2150 = vpop.f32.mrf.mxu0
    %v2151 = vadd.f32 %v1059, %v2150
    %2152 = vmatprep.mubr.bf16.mxu0 %v1473
    %2153 = vmatmul.mubr.bf16.gmra.mxu0 %v1472
    %v2154 = vpop.f32.mrf.mxu0
    %v2155 = vadd.f32 %v1063, %v2154
    %v2156 = vpop.f32.mrf.mxu0
    %v2157 = vadd.f32 %v1065, %v2156
    %v2158 = vpop.f32.mrf.mxu0
    %v2159 = vadd.f32 %v1067, %v2158
    %v2160 = vpop.f32.mrf.mxu0
    %v2161 = vadd.f32 %v1069, %v2160
    %2162 = vmatprep.mubr.bf16.mxu0 %v1475
    %2163 = vmatmul.mubr.bf16.gmra.mxu0 %v1474
    %v2164 = vpop.f32.mrf.mxu0
    %v2165 = vadd.f32 %v1073, %v2164
    %v2166 = vpop.f32.mrf.mxu0
    %v2167 = vadd.f32 %v1075, %v2166
    %v2168 = vpop.f32.mrf.mxu0
    %v2169 = vadd.f32 %v1077, %v2168
    %v2170 = vpop.f32.mrf.mxu0
    %v2171 = vadd.f32 %v1079, %v2170
    %2172 = vmatprep.mubr.bf16.mxu0 %v1477
    %2173 = vmatmul.mubr.bf16.gmra.mxu0 %v1476
    %v2174 = vpop.f32.mrf.mxu0
    %v2175 = vadd.f32 %v1083, %v2174
    %v2176 = vpop.f32.mrf.mxu0
    %v2177 = vadd.f32 %v1085, %v2176
    %v2178 = vpop.f32.mrf.mxu0
    %v2179 = vadd.f32 %v1087, %v2178
    %v2180 = vpop.f32.mrf.mxu0
    %v2181 = vadd.f32 %v1089, %v2180
    %2182 = vdwg.mxu0
    %2183 = vmatprep.subr.bf16.mxu0 %v1898
    %2184 = vmatpush1.bf16.msra.mxu0 %v1897
    %2185 = vmatprep.subr.bf16.mxu0 %v1891
    %2186 = vmatpush1.bf16.msra.mxu0 %v1890
    %2187 = vmatprep.subr.bf16.mxu0 %v1884
    %2188 = vmatpush1.bf16.msra.mxu0 %v1883
    %2189 = vmatprep.subr.bf16.mxu0 %v1877
    %2190 = vmatpush1.bf16.msra.mxu0 %v1876
    %2191 = vmatprep.subr.bf16.mxu0 %v1870
    %2192 = vmatpush1.bf16.msra.mxu0 %v1869
    %2193 = vmatprep.subr.bf16.mxu0 %v1863
    %2194 = vmatpush1.bf16.msra.mxu0 %v1862
    %2195 = vmatprep.subr.bf16.mxu0 %v1856
    %2196 = vmatpush1.bf16.msra.mxu0 %v1855
    %2197 = vmatprep.subr.bf16.mxu0 %v1849
    %2198 = vmatpush1.bf16.msra.mxu0 %v1848
    %2199 = vmatprep.subr.bf16.mxu0 %v1954
    %2200 = vmatpush2.bf16.msra.mxu0 %v1953
    %2201 = vmatprep.subr.bf16.mxu0 %v1947
    %2202 = vmatpush2.bf16.msra.mxu0 %v1946
    %2203 = vmatprep.subr.bf16.mxu0 %v1940
    %2204 = vmatpush2.bf16.msra.mxu0 %v1939
    %2205 = vmatprep.subr.bf16.mxu0 %v1933
    %2206 = vmatpush2.bf16.msra.mxu0 %v1932
    %2207 = vmatprep.subr.bf16.mxu0 %v1926
    %2208 = vmatpush2.bf16.msra.mxu0 %v1925
    %2209 = vmatprep.subr.bf16.mxu0 %v1919
    %2210 = vmatpush2.bf16.msra.mxu0 %v1918
    %2211 = vmatprep.subr.bf16.mxu0 %v1912
    %2212 = vmatpush2.bf16.msra.mxu0 %v1911
    %2213 = vmatprep.subr.bf16.mxu0 %v1905
    %2214 = vmatpush2.bf16.msra.mxu0 %v1904
    %2215 = vmatprep.mubr.bf16.mxu0 %v1463
    %2216 = vmatmul.mubr.bf16.gmra.mxu0 %v1462
    %v2217 = vpop.f32.mrf.mxu0
    %v2218 = vadd.f32 %v1126, %v2217
    %v2219 = vpop.f32.mrf.mxu0
    %v2220 = vadd.f32 %v1128, %v2219
    %v2221 = vpop.f32.mrf.mxu0
    %v2222 = vadd.f32 %v1130, %v2221
    %v2223 = vpop.f32.mrf.mxu0
    %v2224 = vadd.f32 %v1132, %v2223
    %2225 = vmatprep.mubr.bf16.mxu0 %v1465
    %2226 = vmatmul.mubr.bf16.gmra.mxu0 %v1464
    %v2227 = vpop.f32.mrf.mxu0
    %v2228 = vadd.f32 %v1136, %v2227
    %v2229 = vpop.f32.mrf.mxu0
    %v2230 = vadd.f32 %v1138, %v2229
    %v2231 = vpop.f32.mrf.mxu0
    %v2232 = vadd.f32 %v1140, %v2231
    %v2233 = vpop.f32.mrf.mxu0
    %v2234 = vadd.f32 %v1142, %v2233
    %2235 = vmatprep.mubr.bf16.mxu0 %v1467
    %2236 = vmatmul.mubr.bf16.gmra.mxu0 %v1466
    %v2237 = vpop.f32.mrf.mxu0
    %v2238 = vadd.f32 %v1146, %v2237
    %v2239 = vpop.f32.mrf.mxu0
    %v2240 = vadd.f32 %v1148, %v2239
    %v2241 = vpop.f32.mrf.mxu0
    %v2242 = vadd.f32 %v1150, %v2241
    %v2243 = vpop.f32.mrf.mxu0
    %v2244 = vadd.f32 %v1152, %v2243
    %2245 = vmatprep.mubr.bf16.mxu0 %v1469
    %2246 = vmatmul.mubr.bf16.gmra.mxu0 %v1468
    %v2247 = vpop.f32.mrf.mxu0
    %v2248 = vadd.f32 %v1156, %v2247
    %v2249 = vpop.f32.mrf.mxu0
    %v2250 = vadd.f32 %v1158, %v2249
    %v2251 = vpop.f32.mrf.mxu0
    %v2252 = vadd.f32 %v1160, %v2251
    %v2253 = vpop.f32.mrf.mxu0
    %v2254 = vadd.f32 %v1162, %v2253
    %2255 = vmatprep.mubr.bf16.mxu0 %v1471
    %2256 = vmatmul.mubr.bf16.gmra.mxu0 %v1470
    %v2257 = vpop.f32.mrf.mxu0
    %v2258 = vadd.f32 %v1166, %v2257
    %v2259 = vpop.f32.mrf.mxu0
    %v2260 = vadd.f32 %v1168, %v2259
    %v2261 = vpop.f32.mrf.mxu0
    %v2262 = vadd.f32 %v1170, %v2261
    %v2263 = vpop.f32.mrf.mxu0
    %v2264 = vadd.f32 %v1172, %v2263
    %2265 = vmatprep.mubr.bf16.mxu0 %v1473
    %2266 = vmatmul.mubr.bf16.gmra.mxu0 %v1472
    %v2267 = vpop.f32.mrf.mxu0
    %v2268 = vadd.f32 %v1176, %v2267
    %v2269 = vpop.f32.mrf.mxu0
    %v2270 = vadd.f32 %v1178, %v2269
    %v2271 = vpop.f32.mrf.mxu0
    %v2272 = vadd.f32 %v1180, %v2271
    %v2273 = vpop.f32.mrf.mxu0
    %v2274 = vadd.f32 %v1182, %v2273
    %2275 = vmatprep.mubr.bf16.mxu0 %v1475
    %2276 = vmatmul.mubr.bf16.gmra.mxu0 %v1474
    %v2277 = vpop.f32.mrf.mxu0
    %v2278 = vadd.f32 %v1186, %v2277
    %v2279 = vpop.f32.mrf.mxu0
    %v2280 = vadd.f32 %v1188, %v2279
    %v2281 = vpop.f32.mrf.mxu0
    %v2282 = vadd.f32 %v1190, %v2281
    %v2283 = vpop.f32.mrf.mxu0
    %v2284 = vadd.f32 %v1192, %v2283
    %2285 = vmatprep.mubr.bf16.mxu0 %v1477
    %2286 = vmatmul.mubr.bf16.gmra.mxu0 %v1476
    %v2287 = vpop.f32.mrf.mxu0
    %v2288 = vadd.f32 %v1196, %v2287
    %v2289 = vpop.f32.mrf.mxu0
    %v2290 = vadd.f32 %v1198, %v2289
    %v2291 = vpop.f32.mrf.mxu0
    %v2292 = vadd.f32 %v1200, %v2291
    %v2293 = vpop.f32.mrf.mxu0
    %v2294 = vadd.f32 %v1202, %v2293
    %2295 = vdwg.mxu0
    %2296 = vmatprep.subr.bf16.mxu0 %v1900
    %2297 = vmatpush1.bf16.msra.mxu0 %v1899
    %2298 = vmatprep.subr.bf16.mxu0 %v1893
    %2299 = vmatpush1.bf16.msra.mxu0 %v1892
    %2300 = vmatprep.subr.bf16.mxu0 %v1886
    %2301 = vmatpush1.bf16.msra.mxu0 %v1885
    %2302 = vmatprep.subr.bf16.mxu0 %v1879
    %2303 = vmatpush1.bf16.msra.mxu0 %v1878
    %2304 = vmatprep.subr.bf16.mxu0 %v1872
    %2305 = vmatpush1.bf16.msra.mxu0 %v1871
    %2306 = vmatprep.subr.bf16.mxu0 %v1865
    %2307 = vmatpush1.bf16.msra.mxu0 %v1864
    %2308 = vmatprep.subr.bf16.mxu0 %v1858
    %2309 = vmatpush1.bf16.msra.mxu0 %v1857
    %2310 = vmatprep.subr.bf16.mxu0 %v1851
    %2311 = vmatpush1.bf16.msra.mxu0 %v1850
    %2312 = vmatprep.subr.bf16.mxu0 %v1956
    %2313 = vmatpush2.bf16.msra.mxu0 %v1955
    %2314 = vmatprep.subr.bf16.mxu0 %v1949
    %2315 = vmatpush2.bf16.msra.mxu0 %v1948
    %2316 = vmatprep.subr.bf16.mxu0 %v1942
    %2317 = vmatpush2.bf16.msra.mxu0 %v1941
    %2318 = vmatprep.subr.bf16.mxu0 %v1935
    %2319 = vmatpush2.bf16.msra.mxu0 %v1934
    %2320 = vmatprep.subr.bf16.mxu0 %v1928
    %2321 = vmatpush2.bf16.msra.mxu0 %v1927
    %2322 = vmatprep.subr.bf16.mxu0 %v1921
    %2323 = vmatpush2.bf16.msra.mxu0 %v1920
    %2324 = vmatprep.subr.bf16.mxu0 %v1914
    %2325 = vmatpush2.bf16.msra.mxu0 %v1913
    %2326 = vmatprep.subr.bf16.mxu0 %v1907
    %2327 = vmatpush2.bf16.msra.mxu0 %v1906
    %2328 = vmatprep.mubr.bf16.mxu0 %v1463
    %2329 = vmatmul.mubr.bf16.gmra.mxu0 %v1462
    %v2330 = vpop.f32.mrf.mxu0
    %v2331 = vadd.f32 %v1239, %v2330
    %v2332 = vpop.f32.mrf.mxu0
    %v2333 = vadd.f32 %v1241, %v2332
    %v2334 = vpop.f32.mrf.mxu0
    %v2335 = vadd.f32 %v1243, %v2334
    %v2336 = vpop.f32.mrf.mxu0
    %v2337 = vadd.f32 %v1245, %v2336
    %2338 = vmatprep.mubr.bf16.mxu0 %v1465
    %2339 = vmatmul.mubr.bf16.gmra.mxu0 %v1464
    %v2340 = vpop.f32.mrf.mxu0
    %v2341 = vadd.f32 %v1249, %v2340
    %v2342 = vpop.f32.mrf.mxu0
    %v2343 = vadd.f32 %v1251, %v2342
    %v2344 = vpop.f32.mrf.mxu0
    %v2345 = vadd.f32 %v1253, %v2344
    %v2346 = vpop.f32.mrf.mxu0
    %v2347 = vadd.f32 %v1255, %v2346
    %2348 = vmatprep.mubr.bf16.mxu0 %v1467
    %2349 = vmatmul.mubr.bf16.gmra.mxu0 %v1466
    %v2350 = vpop.f32.mrf.mxu0
    %v2351 = vadd.f32 %v1259, %v2350
    %v2352 = vpop.f32.mrf.mxu0
    %v2353 = vadd.f32 %v1261, %v2352
    %v2354 = vpop.f32.mrf.mxu0
    %v2355 = vadd.f32 %v1263, %v2354
    %v2356 = vpop.f32.mrf.mxu0
    %v2357 = vadd.f32 %v1265, %v2356
    %2358 = vmatprep.mubr.bf16.mxu0 %v1469
    %2359 = vmatmul.mubr.bf16.gmra.mxu0 %v1468
    %v2360 = vpop.f32.mrf.mxu0
    %v2361 = vadd.f32 %v1269, %v2360
    %v2362 = vpop.f32.mrf.mxu0
    %v2363 = vadd.f32 %v1271, %v2362
    %v2364 = vpop.f32.mrf.mxu0
    %v2365 = vadd.f32 %v1273, %v2364
    %v2366 = vpop.f32.mrf.mxu0
    %v2367 = vadd.f32 %v1275, %v2366
    %2368 = vmatprep.mubr.bf16.mxu0 %v1471
    %2369 = vmatmul.mubr.bf16.gmra.mxu0 %v1470
    %v2370 = vpop.f32.mrf.mxu0
    %v2371 = vadd.f32 %v1279, %v2370
    %v2372 = vpop.f32.mrf.mxu0
    %v2373 = vadd.f32 %v1281, %v2372
    %v2374 = vpop.f32.mrf.mxu0
    %v2375 = vadd.f32 %v1283, %v2374
    %v2376 = vpop.f32.mrf.mxu0
    %v2377 = vadd.f32 %v1285, %v2376
    %2378 = vmatprep.mubr.bf16.mxu0 %v1473
    %2379 = vmatmul.mubr.bf16.gmra.mxu0 %v1472
    %v2380 = vpop.f32.mrf.mxu0
    %v2381 = vadd.f32 %v1289, %v2380
    %v2382 = vpop.f32.mrf.mxu0
    %v2383 = vadd.f32 %v1291, %v2382
    %v2384 = vpop.f32.mrf.mxu0
    %v2385 = vadd.f32 %v1293, %v2384
    %v2386 = vpop.f32.mrf.mxu0
    %v2387 = vadd.f32 %v1295, %v2386
    %2388 = vmatprep.mubr.bf16.mxu0 %v1475
    %2389 = vmatmul.mubr.bf16.gmra.mxu0 %v1474
    %v2390 = vpop.f32.mrf.mxu0
    %v2391 = vadd.f32 %v1299, %v2390
    %v2392 = vpop.f32.mrf.mxu0
    %v2393 = vadd.f32 %v1301, %v2392
    %v2394 = vpop.f32.mrf.mxu0
    %v2395 = vadd.f32 %v1303, %v2394
    %v2396 = vpop.f32.mrf.mxu0
    %v2397 = vadd.f32 %v1305, %v2396
    %2398 = vmatprep.mubr.bf16.mxu0 %v1477
    %2399 = vmatmul.mubr.bf16.gmra.mxu0 %v1476
    %v2400 = vpop.f32.mrf.mxu0
    %v2401 = vadd.f32 %v1309, %v2400
    %v2402 = vpop.f32.mrf.mxu0
    %v2403 = vadd.f32 %v1311, %v2402
    %v2404 = vpop.f32.mrf.mxu0
    %v2405 = vadd.f32 %v1313, %v2404
    %v2406 = vpop.f32.mrf.mxu0
    %v2407 = vadd.f32 %v1315, %v2406
    %2408 = vdwg.mxu0
    %2409 = vmatprep.subr.bf16.mxu0 0
    %2410 = vmatpush1.bf16.msra.mxu0 %v1901
    %2411 = vmatprep.subr.bf16.mxu0 0
    %2412 = vmatpush1.bf16.msra.mxu0 %v1894
    %2413 = vmatprep.subr.bf16.mxu0 0
    %2414 = vmatpush1.bf16.msra.mxu0 %v1887
    %2415 = vmatprep.subr.bf16.mxu0 0
    %2416 = vmatpush1.bf16.msra.mxu0 %v1880
    %2417 = vmatprep.subr.bf16.mxu0 0
    %2418 = vmatpush1.bf16.msra.mxu0 %v1873
    %2419 = vmatprep.subr.bf16.mxu0 0
    %2420 = vmatpush1.bf16.msra.mxu0 %v1866
    %2421 = vmatprep.subr.bf16.mxu0 0
    %2422 = vmatpush1.bf16.msra.mxu0 %v1859
    %2423 = vmatprep.subr.bf16.mxu0 0
    %2424 = vmatpush1.bf16.msra.mxu0 %v1852
    %2425 = vmatprep.subr.bf16.mxu0 0
    %2426 = vmatpush2.bf16.msra.mxu0 %v1957
    %2427 = vmatprep.subr.bf16.mxu0 0
    %2428 = vmatpush2.bf16.msra.mxu0 %v1950
    %2429 = vmatprep.subr.bf16.mxu0 0
    %2430 = vmatpush2.bf16.msra.mxu0 %v1943
    %2431 = vmatprep.subr.bf16.mxu0 0
    %2432 = vmatpush2.bf16.msra.mxu0 %v1936
    %2433 = vmatprep.subr.bf16.mxu0 0
    %2434 = vmatpush2.bf16.msra.mxu0 %v1929
    %2435 = vmatprep.subr.bf16.mxu0 0
    %2436 = vmatpush2.bf16.msra.mxu0 %v1922
    %2437 = vmatprep.subr.bf16.mxu0 0
    %2438 = vmatpush2.bf16.msra.mxu0 %v1915
    %2439 = vmatprep.subr.bf16.mxu0 0
    %2440 = vmatpush2.bf16.msra.mxu0 %v1908
    %2441 = vmatprep.mubr.bf16.mxu0 %v1463
    %2442 = vmatmul.mubr.bf16.gmra.mxu0 %v1462
    %v2443 = vpop.f32.mrf.mxu0
    %v2444 = vadd.f32 %v1352, %v2443
    %v2445 = vpop.f32.mrf.mxu0
    %v2446 = vpop.f32.mrf.mxu0
    %v2447 = vadd.f32 %v1355, %v2446
    %v2448 = vpop.f32.mrf.mxu0
    %2449 = vmatprep.mubr.bf16.mxu0 %v1465
    %2450 = vmatmul.mubr.bf16.gmra.mxu0 %v1464
    %v2451 = vpop.f32.mrf.mxu0
    %v2452 = vadd.f32 %v1360, %v2451
    %v2453 = vpop.f32.mrf.mxu0
    %v2454 = vpop.f32.mrf.mxu0
    %v2455 = vadd.f32 %v1363, %v2454
    %v2456 = vpop.f32.mrf.mxu0
    %2457 = vmatprep.mubr.bf16.mxu0 %v1467
    %2458 = vmatmul.mubr.bf16.gmra.mxu0 %v1466
    %v2459 = vpop.f32.mrf.mxu0
    %v2460 = vadd.f32 %v1368, %v2459
    %v2461 = vpop.f32.mrf.mxu0
    %v2462 = vpop.f32.mrf.mxu0
    %v2463 = vadd.f32 %v1371, %v2462
    %v2464 = vpop.f32.mrf.mxu0
    %2465 = vmatprep.mubr.bf16.mxu0 %v1469
    %2466 = vmatmul.mubr.bf16.gmra.mxu0 %v1468
    %v2467 = vpop.f32.mrf.mxu0
    %v2468 = vadd.f32 %v1376, %v2467
    %v2469 = vpop.f32.mrf.mxu0
    %v2470 = vpop.f32.mrf.mxu0
    %v2471 = vadd.f32 %v1379, %v2470
    %v2472 = vpop.f32.mrf.mxu0
    %2473 = vmatprep.mubr.bf16.mxu0 %v1471
    %2474 = vmatmul.mubr.bf16.gmra.mxu0 %v1470
    %v2475 = vpop.f32.mrf.mxu0
    %v2476 = vadd.f32 %v1384, %v2475
    %v2477 = vpop.f32.mrf.mxu0
    %v2478 = vpop.f32.mrf.mxu0
    %v2479 = vadd.f32 %v1387, %v2478
    %v2480 = vpop.f32.mrf.mxu0
    %2481 = vmatprep.mubr.bf16.mxu0 %v1473
    %2482 = vmatmul.mubr.bf16.gmra.mxu0 %v1472
    %v2483 = vpop.f32.mrf.mxu0
    %v2484 = vadd.f32 %v1392, %v2483
    %v2485 = vpop.f32.mrf.mxu0
    %v2486 = vpop.f32.mrf.mxu0
    %v2487 = vadd.f32 %v1395, %v2486
    %v2488 = vpop.f32.mrf.mxu0
    %2489 = vmatprep.mubr.bf16.mxu0 %v1475
    %2490 = vmatmul.mubr.bf16.gmra.mxu0 %v1474
    %v2491 = vpop.f32.mrf.mxu0
    %v2492 = vadd.f32 %v1400, %v2491
    %v2493 = vpop.f32.mrf.mxu0
    %v2494 = vpop.f32.mrf.mxu0
    %v2495 = vadd.f32 %v1403, %v2494
    %v2496 = vpop.f32.mrf.mxu0
    %2497 = vmatprep.mubr.bf16.mxu0 %v1477
    %2498 = vmatmul.mubr.bf16.gmra.mxu0 %v1476
    %v2499 = vpop.f32.mrf.mxu0
    %v2500 = vadd.f32 %v1408, %v2499
    %v2501 = vpop.f32.mrf.mxu0
    %v2502 = vpop.f32.mrf.mxu0
    %v2503 = vadd.f32 %v1411, %v2502
    %v2504 = vpop.f32.mrf.mxu0
    %2505 = vdwg.mxu0
    %v2506 = vld [vmem:[%s4] sm:$0x7f]
    %v2508 = vlaneseq
    %v2509 = vshrl.u32 %v2508, 7
    %v2510 = vsub.s32 0, %v2509
    %v2511 = vrot.slane %v2506, %v2510
    %v2512 = vlaneseq
    %v2513 = vshrl.u32 %v2512, 7
    %v2514 = vsub.s32 1, %v2513
    %v2515 = vrot.slane %v2506, %v2514
    %v2516 = vlaneseq
    %v2517 = vshrl.u32 %v2516, 7
    %v2518 = vsub.s32 2, %v2517
    %v2519 = vrot.slane %v2506, %v2518
    %v2520 = vlaneseq
    %v2521 = vshrl.u32 %v2520, 7
    %v2522 = vsub.s32 3, %v2521
    %v2523 = vrot.slane %v2506, %v2522
    %v2524 = vlaneseq
    %v2525 = vshrl.u32 %v2524, 7
    %v2526 = vsub.s32 4, %v2525
    %v2527 = vrot.slane %v2506, %v2526
    %v2528 = vlaneseq
    %v2529 = vshrl.u32 %v2528, 7
    %v2530 = vsub.s32 5, %v2529
    %v2531 = vrot.slane %v2506, %v2530
    %v2532 = vlaneseq
    %v2533 = vshrl.u32 %v2532, 7
    %v2534 = vsub.s32 6, %v2533
    %v2535 = vrot.slane %v2506, %v2534
    %v2543 = vadd.f32 %v2105, %v2511
    %v2544 = vadd.f32 %v2107, %v2515
    %v2545 = vadd.f32 %v2218, %v2519
    %v2546 = vadd.f32 %v2220, %v2523
    %v2547 = vadd.f32 %v2331, %v2527
    %v2548 = vadd.f32 %v2333, %v2531
    %v2549 = vadd.f32 %v2444, %v2535
    %v2550 = vadd.f32 %v2109, %v2511
    %v2551 = vadd.f32 %v2111, %v2515
    %v2552 = vadd.f32 %v2222, %v2519
    %v2553 = vadd.f32 %v2224, %v2523
    %v2554 = vadd.f32 %v2335, %v2527
    %v2555 = vadd.f32 %v2337, %v2531
    %v2556 = vadd.f32 %v2447, %v2535
    %v2557 = vadd.f32 %v2115, %v2511
    %v2558 = vadd.f32 %v2117, %v2515
    %v2559 = vadd.f32 %v2228, %v2519
    %v2560 = vadd.f32 %v2230, %v2523
    %v2561 = vadd.f32 %v2341, %v2527
    %v2562 = vadd.f32 %v2343, %v2531
    %v2563 = vadd.f32 %v2452, %v2535
    %v2564 = vadd.f32 %v2119, %v2511
    %v2565 = vadd.f32 %v2121, %v2515
    %v2566 = vadd.f32 %v2232, %v2519
    %v2567 = vadd.f32 %v2234, %v2523
    %v2568 = vadd.f32 %v2345, %v2527
    %v2569 = vadd.f32 %v2347, %v2531
    %v2570 = vadd.f32 %v2455, %v2535
    %v2571 = vadd.f32 %v2125, %v2511
    %v2572 = vadd.f32 %v2127, %v2515
    %v2573 = vadd.f32 %v2238, %v2519
    %v2574 = vadd.f32 %v2240, %v2523
    %v2575 = vadd.f32 %v2351, %v2527
    %v2576 = vadd.f32 %v2353, %v2531
    %v2577 = vadd.f32 %v2460, %v2535
    %v2578 = vadd.f32 %v2129, %v2511
    %v2579 = vadd.f32 %v2131, %v2515
    %v2580 = vadd.f32 %v2242, %v2519
    %v2581 = vadd.f32 %v2244, %v2523
    %v2582 = vadd.f32 %v2355, %v2527
    %v2583 = vadd.f32 %v2357, %v2531
    %v2584 = vadd.f32 %v2463, %v2535
    %v2585 = vadd.f32 %v2135, %v2511
    %v2586 = vadd.f32 %v2137, %v2515
    %v2587 = vadd.f32 %v2248, %v2519
    %v2588 = vadd.f32 %v2250, %v2523
    %v2589 = vadd.f32 %v2361, %v2527
    %v2590 = vadd.f32 %v2363, %v2531
    %v2591 = vadd.f32 %v2468, %v2535
    %v2592 = vadd.f32 %v2139, %v2511
    %v2593 = vadd.f32 %v2141, %v2515
    %v2594 = vadd.f32 %v2252, %v2519
    %v2595 = vadd.f32 %v2254, %v2523
    %v2596 = vadd.f32 %v2365, %v2527
    %v2597 = vadd.f32 %v2367, %v2531
    %v2598 = vadd.f32 %v2471, %v2535
    %v2599 = vadd.f32 %v2145, %v2511
    %v2600 = vadd.f32 %v2147, %v2515
    %v2601 = vadd.f32 %v2258, %v2519
    %v2602 = vadd.f32 %v2260, %v2523
    %v2603 = vadd.f32 %v2371, %v2527
    %v2604 = vadd.f32 %v2373, %v2531
    %v2605 = vadd.f32 %v2476, %v2535
    %v2606 = vadd.f32 %v2149, %v2511
    %v2607 = vadd.f32 %v2151, %v2515
    %v2608 = vadd.f32 %v2262, %v2519
    %v2609 = vadd.f32 %v2264, %v2523
    %v2610 = vadd.f32 %v2375, %v2527
    %v2611 = vadd.f32 %v2377, %v2531
    %v2612 = vadd.f32 %v2479, %v2535
    %v2613 = vadd.f32 %v2155, %v2511
    %v2614 = vadd.f32 %v2157, %v2515
    %v2615 = vadd.f32 %v2268, %v2519
    %v2616 = vadd.f32 %v2270, %v2523
    %v2617 = vadd.f32 %v2381, %v2527
    %v2618 = vadd.f32 %v2383, %v2531
    %v2619 = vadd.f32 %v2484, %v2535
    %v2620 = vadd.f32 %v2159, %v2511
    %v2621 = vadd.f32 %v2161, %v2515
    %v2622 = vadd.f32 %v2272, %v2519
    %v2623 = vadd.f32 %v2274, %v2523
    %v2624 = vadd.f32 %v2385, %v2527
    %v2625 = vadd.f32 %v2387, %v2531
    %v2626 = vadd.f32 %v2487, %v2535
    %v2627 = vadd.f32 %v2165, %v2511
    %v2628 = vadd.f32 %v2167, %v2515
    %v2629 = vadd.f32 %v2278, %v2519
    %v2630 = vadd.f32 %v2280, %v2523
    %v2631 = vadd.f32 %v2391, %v2527
    %v2632 = vadd.f32 %v2393, %v2531
    %v2633 = vadd.f32 %v2492, %v2535
    %v2634 = vadd.f32 %v2169, %v2511
    %v2635 = vadd.f32 %v2171, %v2515
    %v2636 = vadd.f32 %v2282, %v2519
    %v2637 = vadd.f32 %v2284, %v2523
    %v2638 = vadd.f32 %v2395, %v2527
    %v2639 = vadd.f32 %v2397, %v2531
    %v2640 = vadd.f32 %v2495, %v2535
    %v2641 = vadd.f32 %v2175, %v2511
    %v2642 = vadd.f32 %v2177, %v2515
    %v2643 = vadd.f32 %v2288, %v2519
    %v2644 = vadd.f32 %v2290, %v2523
    %v2645 = vadd.f32 %v2401, %v2527
    %v2646 = vadd.f32 %v2403, %v2531
    %v2647 = vadd.f32 %v2500, %v2535
    %v2648 = vadd.f32 %v2179, %v2511
    %v2649 = vadd.f32 %v2181, %v2515
    %v2650 = vadd.f32 %v2292, %v2519
    %v2651 = vadd.f32 %v2294, %v2523
    %v2652 = vadd.f32 %v2405, %v2527
    %v2653 = vadd.f32 %v2407, %v2531
    %v2654 = vadd.f32 %v2503, %v2535
    %v2655 = vmax.f32 %v2543, 0.0
    %v2656 = vmax.f32 %v2544, 0.0
    %v2657 = vmax.f32 %v2545, 0.0
    %v2658 = vmax.f32 %v2546, 0.0
    %v2659 = vmax.f32 %v2547, 0.0
    %v2660 = vmax.f32 %v2548, 0.0
    %v2661 = vmax.f32 %v2549, 0.0
    %v2662 = vmax.f32 %v2550, 0.0
    %v2663 = vmax.f32 %v2551, 0.0
    %v2664 = vmax.f32 %v2552, 0.0
    %v2665 = vmax.f32 %v2553, 0.0
    %v2666 = vmax.f32 %v2554, 0.0
    %v2667 = vmax.f32 %v2555, 0.0
    %v2668 = vmax.f32 %v2556, 0.0
    %v2669 = vmax.f32 %v2557, 0.0
    %v2670 = vmax.f32 %v2558, 0.0
    %v2671 = vmax.f32 %v2559, 0.0
    %v2672 = vmax.f32 %v2560, 0.0
    %v2673 = vmax.f32 %v2561, 0.0
    %v2674 = vmax.f32 %v2562, 0.0
    %v2675 = vmax.f32 %v2563, 0.0
    %v2676 = vmax.f32 %v2564, 0.0
    %v2677 = vmax.f32 %v2565, 0.0
    %v2678 = vmax.f32 %v2566, 0.0
    %v2679 = vmax.f32 %v2567, 0.0
    %v2680 = vmax.f32 %v2568, 0.0
    %v2681 = vmax.f32 %v2569, 0.0
    %v2682 = vmax.f32 %v2570, 0.0
    %v2683 = vmax.f32 %v2571, 0.0
    %v2684 = vmax.f32 %v2572, 0.0
    %v2685 = vmax.f32 %v2573, 0.0
    %v2686 = vmax.f32 %v2574, 0.0
    %v2687 = vmax.f32 %v2575, 0.0
    %v2688 = vmax.f32 %v2576, 0.0
    %v2689 = vmax.f32 %v2577, 0.0
    %v2690 = vmax.f32 %v2578, 0.0
    %v2691 = vmax.f32 %v2579, 0.0
    %v2692 = vmax.f32 %v2580, 0.0
    %v2693 = vmax.f32 %v2581, 0.0
    %v2694 = vmax.f32 %v2582, 0.0
    %v2695 = vmax.f32 %v2583, 0.0
    %v2696 = vmax.f32 %v2584, 0.0
    %v2697 = vmax.f32 %v2585, 0.0
    %v2698 = vmax.f32 %v2586, 0.0
    %v2699 = vmax.f32 %v2587, 0.0
    %v2700 = vmax.f32 %v2588, 0.0
    %v2701 = vmax.f32 %v2589, 0.0
    %v2702 = vmax.f32 %v2590, 0.0
    %v2703 = vmax.f32 %v2591, 0.0
    %v2704 = vmax.f32 %v2592, 0.0
    %v2705 = vmax.f32 %v2593, 0.0
    %v2706 = vmax.f32 %v2594, 0.0
    %v2707 = vmax.f32 %v2595, 0.0
    %v2708 = vmax.f32 %v2596, 0.0
    %v2709 = vmax.f32 %v2597, 0.0
    %v2710 = vmax.f32 %v2598, 0.0
    %v2711 = vmax.f32 %v2599, 0.0
    %v2712 = vmax.f32 %v2600, 0.0
    %v2713 = vmax.f32 %v2601, 0.0
    %v2714 = vmax.f32 %v2602, 0.0
    %v2715 = vmax.f32 %v2603, 0.0
    %v2716 = vmax.f32 %v2604, 0.0
    %v2717 = vmax.f32 %v2605, 0.0
    %v2718 = vmax.f32 %v2606, 0.0
    %v2719 = vmax.f32 %v2607, 0.0
    %v2720 = vmax.f32 %v2608, 0.0
    %v2721 = vmax.f32 %v2609, 0.0
    %v2722 = vmax.f32 %v2610, 0.0
    %v2723 = vmax.f32 %v2611, 0.0
    %v2724 = vmax.f32 %v2612, 0.0
    %v2725 = vmax.f32 %v2613, 0.0
    %v2726 = vmax.f32 %v2614, 0.0
    %v2727 = vmax.f32 %v2615, 0.0
    %v2728 = vmax.f32 %v2616, 0.0
    %v2729 = vmax.f32 %v2617, 0.0
    %v2730 = vmax.f32 %v2618, 0.0
    %v2731 = vmax.f32 %v2619, 0.0
    %v2732 = vmax.f32 %v2620, 0.0
    %v2733 = vmax.f32 %v2621, 0.0
    %v2734 = vmax.f32 %v2622, 0.0
    %v2735 = vmax.f32 %v2623, 0.0
    %v2736 = vmax.f32 %v2624, 0.0
    %v2737 = vmax.f32 %v2625, 0.0
    %v2738 = vmax.f32 %v2626, 0.0
    %v2739 = vmax.f32 %v2627, 0.0
    %v2740 = vmax.f32 %v2628, 0.0
    %v2741 = vmax.f32 %v2629, 0.0
    %v2742 = vmax.f32 %v2630, 0.0
    %v2743 = vmax.f32 %v2631, 0.0
    %v2744 = vmax.f32 %v2632, 0.0
    %v2745 = vmax.f32 %v2633, 0.0
    %v2746 = vmax.f32 %v2634, 0.0
    %v2747 = vmax.f32 %v2635, 0.0
    %v2748 = vmax.f32 %v2636, 0.0
    %v2749 = vmax.f32 %v2637, 0.0
    %v2750 = vmax.f32 %v2638, 0.0
    %v2751 = vmax.f32 %v2639, 0.0
    %v2752 = vmax.f32 %v2640, 0.0
    %v2753 = vmax.f32 %v2641, 0.0
    %v2754 = vmax.f32 %v2642, 0.0
    %v2755 = vmax.f32 %v2643, 0.0
    %v2756 = vmax.f32 %v2644, 0.0
    %v2757 = vmax.f32 %v2645, 0.0
    %v2758 = vmax.f32 %v2646, 0.0
    %v2759 = vmax.f32 %v2647, 0.0
    %v2760 = vmax.f32 %v2648, 0.0
    %v2761 = vmax.f32 %v2649, 0.0
    %v2762 = vmax.f32 %v2650, 0.0
    %v2763 = vmax.f32 %v2651, 0.0
    %v2764 = vmax.f32 %v2652, 0.0
    %v2765 = vmax.f32 %v2653, 0.0
    %v2766 = vmax.f32 %v2654, 0.0
    %v2767 = vpack.c.bf16 %v2662, %v2655
    %v2768 = vpack.c.bf16 %v2663, %v2656
    %v2769 = vpack.c.bf16 %v2664, %v2657
    %v2770 = vpack.c.bf16 %v2665, %v2658
    %v2771 = vpack.c.bf16 %v2666, %v2659
    %v2772 = vpack.c.bf16 %v2667, %v2660
    %v2773 = vpack.c.bf16 %v2668, %v2661
    %v2774 = vpack.c.bf16 %v2676, %v2669
    %v2775 = vpack.c.bf16 %v2677, %v2670
    %v2776 = vpack.c.bf16 %v2678, %v2671
    %v2777 = vpack.c.bf16 %v2679, %v2672
    %v2778 = vpack.c.bf16 %v2680, %v2673
    %v2779 = vpack.c.bf16 %v2681, %v2674
    %v2780 = vpack.c.bf16 %v2682, %v2675
    %v2781 = vpack.c.bf16 %v2690, %v2683
    %v2782 = vpack.c.bf16 %v2691, %v2684
    %v2783 = vpack.c.bf16 %v2692, %v2685
    %v2784 = vpack.c.bf16 %v2693, %v2686
    %v2785 = vpack.c.bf16 %v2694, %v2687
    %v2786 = vpack.c.bf16 %v2695, %v2688
    %v2787 = vpack.c.bf16 %v2696, %v2689
    %v2788 = vpack.c.bf16 %v2704, %v2697
    %v2789 = vpack.c.bf16 %v2705, %v2698
    %v2790 = vpack.c.bf16 %v2706, %v2699
    %v2791 = vpack.c.bf16 %v2707, %v2700
    %v2792 = vpack.c.bf16 %v2708, %v2701
    %v2793 = vpack.c.bf16 %v2709, %v2702
    %v2794 = vpack.c.bf16 %v2710, %v2703
    %v2795 = vpack.c.bf16 %v2718, %v2711
    %v2796 = vpack.c.bf16 %v2719, %v2712
    %v2797 = vpack.c.bf16 %v2720, %v2713
    %v2798 = vpack.c.bf16 %v2721, %v2714
    %v2799 = vpack.c.bf16 %v2722, %v2715
    %v2800 = vpack.c.bf16 %v2723, %v2716
    %v2801 = vpack.c.bf16 %v2724, %v2717
    %v2802 = vpack.c.bf16 %v2732, %v2725
    %v2803 = vpack.c.bf16 %v2733, %v2726
    %v2804 = vpack.c.bf16 %v2734, %v2727
    %v2805 = vpack.c.bf16 %v2735, %v2728
    %v2806 = vpack.c.bf16 %v2736, %v2729
    %v2807 = vpack.c.bf16 %v2737, %v2730
    %v2808 = vpack.c.bf16 %v2738, %v2731
    %v2809 = vpack.c.bf16 %v2746, %v2739
    %v2810 = vpack.c.bf16 %v2747, %v2740
    %v2811 = vpack.c.bf16 %v2748, %v2741
    %v2812 = vpack.c.bf16 %v2749, %v2742
    %v2813 = vpack.c.bf16 %v2750, %v2743
    %v2814 = vpack.c.bf16 %v2751, %v2744
    %v2815 = vpack.c.bf16 %v2752, %v2745
    %v2816 = vpack.c.bf16 %v2760, %v2753
    %v2817 = vpack.c.bf16 %v2761, %v2754
    %v2818 = vpack.c.bf16 %v2762, %v2755
    %v2819 = vpack.c.bf16 %v2763, %v2756
    %v2820 = vpack.c.bf16 %v2764, %v2757
    %v2821 = vpack.c.bf16 %v2765, %v2758
    %v2822 = vpack.c.bf16 %v2766, %v2759
    %v2823 = vld [vmem:[%s5] sm:$0xff]
    %v2824 = vld [vmem:[%s5 + $0x8] sm:$0xf]
    %v2825 = vld [vmem:[%s5 + $0xc] sm:$0xff]
    %v2826 = vld [vmem:[%s5 + $0x14] sm:$0xf]
    %v2827 = vld [vmem:[%s5 + $0x18] sm:$0xff]
    %v2828 = vld [vmem:[%s5 + $0x20] sm:$0xf]
    %v2829 = vld [vmem:[%s5 + $0x24] sm:$0xff]
    %v2830 = vld [vmem:[%s5 + $0x2c] sm:$0xf]
    %v2831 = vld [vmem:[%s5 + $0x30] sm:$0xff]
    %v2832 = vld [vmem:[%s5 + $0x38] sm:$0xf]
    %v2833 = vld [vmem:[%s5 + $0x3c] sm:$0xff]
    %v2834 = vld [vmem:[%s5 + $0x44] sm:$0xf]
    %v2835 = vld [vmem:[%s5 + $0x48] sm:$0xff]
    %v2836 = vld [vmem:[%s5 + $0x50] sm:$0xf]
    %v2837 = vld [vmem:[%s5 + $0x54] sm:$0xff]
    %v2838 = vld [vmem:[%s5 + $0x5c] sm:$0xf]
    %v2839 = vld [vmem:[%s5 + $0x60] sm:$0xff]
    %v2840 = vld [vmem:[%s5 + $0x68] sm:$0xf]
    %v2841 = vld [vmem:[%s5 + $0x6c] sm:$0xff]
    %v2842 = vld [vmem:[%s5 + $0x74] sm:$0xf]
    %v2843 = vld [vmem:[%s5 + $0x78] sm:$0xff]
    %v2844 = vld [vmem:[%s5 + $0x80] sm:$0xf]
    %v2845 = vld [vmem:[%s5 + $0x84] sm:$0xff]
    %v2846 = vld [vmem:[%s5 + $0x8c] sm:$0xf]
    %v2847 = vld [vmem:[%s5 + $0x90] sm:$0xff]
    %v2848 = vld [vmem:[%s5 + $0x98] sm:$0xf]
    %v2849 = vld [vmem:[%s5 + $0x9c] sm:$0xff]
    %v2850 = vld [vmem:[%s5 + $0xa4] sm:$0xf]
    %v2851 = vld [vmem:[%s5 + $0xa8] sm:$0xff]
    %v2852 = vld [vmem:[%s5 + $0xb0] sm:$0xf]
    %v2853 = vld [vmem:[%s5 + $0xb4] sm:$0xff]
    %v2854 = vld [vmem:[%s5 + $0xbc] sm:$0xf]
    %v2855 = vld [vmem:[%s5 + $0xc0] sm:$0xff]
    %v2856 = vld [vmem:[%s5 + $0xc8] sm:$0xf]
    %v2857 = vld [vmem:[%s5 + $0xcc] sm:$0xff]
    %v2858 = vld [vmem:[%s5 + $0xd4] sm:$0xf]
    %v2859 = vld [vmem:[%s5 + $0xd8] sm:$0xff]
    %v2860 = vld [vmem:[%s5 + $0xe0] sm:$0xf]
    %v2861 = vld [vmem:[%s5 + $0xe4] sm:$0xff]
    %v2862 = vld [vmem:[%s5 + $0xec] sm:$0xf]
    %v2863 = vld [vmem:[%s5 + $0xf0] sm:$0xff]
    %v2864 = vld [vmem:[%s5 + $0xf8] sm:$0xf]
    %v2865 = vld [vmem:[%s5 + $0xfc] sm:$0xff]
    %v2866 = vld [vmem:[%s5 + $0x104] sm:$0xf]
    %v2867 = vld [vmem:[%s5 + $0x108] sm:$0xff]
    %v2868 = vld [vmem:[%s5 + $0x110] sm:$0xf]
    %v2869 = vld [vmem:[%s5 + $0x114] sm:$0xff]
    %v2870 = vld [vmem:[%s5 + $0x11c] sm:$0xf]
    %v2871 = vld [vmem:[%s5 + $0x120] sm:$0xff]
    %v2872 = vld [vmem:[%s5 + $0x128] sm:$0xf]
    %v2873 = vld [vmem:[%s5 + $0x12c] sm:$0xff]
    %v2874 = vld [vmem:[%s5 + $0x134] sm:$0xf]
    %v2875 = vld [vmem:[%s5 + $0x138] sm:$0xff]
    %v2876 = vld [vmem:[%s5 + $0x140] sm:$0xf]
    %v2877 = vld [vmem:[%s5 + $0x144] sm:$0xff]
    %v2878 = vld [vmem:[%s5 + $0x14c] sm:$0xf]
    %v2879 = vld [vmem:[%s5 + $0x150] sm:$0xff]
    %v2880 = vld [vmem:[%s5 + $0x158] sm:$0xf]
    %v2881 = vld [vmem:[%s5 + $0x15c] sm:$0xff]
    %v2882 = vld [vmem:[%s5 + $0x164] sm:$0xf]
    %v2883 = vld [vmem:[%s5 + $0x168] sm:$0xff]
    %v2884 = vld [vmem:[%s5 + $0x170] sm:$0xf]
    %v2885 = vld [vmem:[%s5 + $0x174] sm:$0xff]
    %v2886 = vld [vmem:[%s5 + $0x17c] sm:$0xf]
    %v2887 = vld [vmem:[%s5 + $0x180] sm:$0xff]
    %v2888 = vld [vmem:[%s5 + $0x188] sm:$0xf]
    %v2889 = vld [vmem:[%s5 + $0x18c] sm:$0xff]
    %v2890 = vld [vmem:[%s5 + $0x194] sm:$0xf]
    %v2891 = vld [vmem:[%s5 + $0x198] sm:$0xff]
    %v2892 = vld [vmem:[%s5 + $0x1a0] sm:$0xf]
    %v2893 = vld [vmem:[%s5 + $0x1a4] sm:$0xff]
    %v2894 = vld [vmem:[%s5 + $0x1ac] sm:$0xf]
    %v2895 = vld [vmem:[%s5 + $0x1b0] sm:$0xff]
    %v2896 = vld [vmem:[%s5 + $0x1b8] sm:$0xf]
    %v2897 = vld [vmem:[%s5 + $0x1bc] sm:$0xff]
    %v2898 = vld [vmem:[%s5 + $0x1c4] sm:$0xf]
    %v2899 = vld [vmem:[%s5 + $0x1c8] sm:$0xff]
    %v2900 = vld [vmem:[%s5 + $0x1d0] sm:$0xf]
    %v2901 = vld [vmem:[%s5 + $0x1d4] sm:$0xff]
    %v2902 = vld [vmem:[%s5 + $0x1dc] sm:$0xf]
    %v2903 = vld [vmem:[%s5 + $0x1e0] sm:$0xff]
    %v2904 = vld [vmem:[%s5 + $0x1e8] sm:$0xf]
    %v2905 = vld [vmem:[%s5 + $0x1ec] sm:$0xff]
    %v2906 = vld [vmem:[%s5 + $0x1f4] sm:$0xf]
    %v2907 = vld [vmem:[%s5 + $0x1f8] sm:$0xff]
    %v2908 = vld [vmem:[%s5 + $0x200] sm:$0xf]
    %v2909 = vld [vmem:[%s5 + $0x204] sm:$0xff]
    %v2910 = vld [vmem:[%s5 + $0x20c] sm:$0xf]
    %v2911 = vld [vmem:[%s5 + $0x210] sm:$0xff]
    %v2912 = vld [vmem:[%s5 + $0x218] sm:$0xf]
    %v2913 = vld [vmem:[%s5 + $0x21c] sm:$0xff]
    %v2914 = vld [vmem:[%s5 + $0x224] sm:$0xf]
    %v2915 = vld [vmem:[%s5 + $0x228] sm:$0xff]
    %v2916 = vld [vmem:[%s5 + $0x230] sm:$0xf]
    %v2917 = vld [vmem:[%s5 + $0x234] sm:$0xff]
    %v2918 = vld [vmem:[%s5 + $0x23c] sm:$0xf]
    %v2919 = vld [vmem:[%s5 + $0x240] sm:$0xff]
    %v2920 = vld [vmem:[%s5 + $0x248] sm:$0xf]
    %v2921 = vld [vmem:[%s5 + $0x24c] sm:$0xff]
    %v2922 = vld [vmem:[%s5 + $0x254] sm:$0xf]
    %v2923 = vld [vmem:[%s5 + $0x258] sm:$0xff]
    %v2924 = vld [vmem:[%s5 + $0x260] sm:$0xf]
    %v2925 = vld [vmem:[%s5 + $0x264] sm:$0xff]
    %v2926 = vld [vmem:[%s5 + $0x26c] sm:$0xf]
    %v2927 = vld [vmem:[%s5 + $0x270] sm:$0xff]
    %v2928 = vld [vmem:[%s5 + $0x278] sm:$0xf]
    %v2929 = vld [vmem:[%s5 + $0x27c] sm:$0xff]
    %v2930 = vld [vmem:[%s5 + $0x284] sm:$0xf]
    %v2931 = vld [vmem:[%s5 + $0x288] sm:$0xff]
    %v2932 = vld [vmem:[%s5 + $0x290] sm:$0xf]
    %v2933 = vld [vmem:[%s5 + $0x294] sm:$0xff]
    %v2934 = vld [vmem:[%s5 + $0x29c] sm:$0xf]
    %v2935 = vld [vmem:[%s5 + $0x2a0] sm:$0xff]
    %v2936 = vld [vmem:[%s5 + $0x2a8] sm:$0xf]
    %v2937 = vld [vmem:[%s5 + $0x2ac] sm:$0xff]
    %v2938 = vld [vmem:[%s5 + $0x2b4] sm:$0xf]
    %v2939 = vld [vmem:[%s5 + $0x2b8] sm:$0xff]
    %v2940 = vld [vmem:[%s5 + $0x2c0] sm:$0xf]
    %v2941 = vld [vmem:[%s5 + $0x2c4] sm:$0xff]
    %v2942 = vld [vmem:[%s5 + $0x2cc] sm:$0xf]
    %v2943 = vld [vmem:[%s5 + $0x2d0] sm:$0xff]
    %v2944 = vld [vmem:[%s5 + $0x2d8] sm:$0xf]
    %v2945 = vld [vmem:[%s5 + $0x2dc] sm:$0xff]
    %v2946 = vld [vmem:[%s5 + $0x2e4] sm:$0xf]
    %v2947 = vld [vmem:[%s5 + $0x2e8] sm:$0xff]
    %v2948 = vld [vmem:[%s5 + $0x2f0] sm:$0xf]
    %v2949 = vld [vmem:[%s5 + $0x2f4] sm:$0xff]
    %v2950 = vld [vmem:[%s5 + $0x2fc] sm:$0xf]
    %v2951 = vld [vmem:[%s5 + $0x300] sm:$0xff]
    %v2952 = vld [vmem:[%s5 + $0x308] sm:$0xf]
    %v2953 = vld [vmem:[%s5 + $0x30c] sm:$0xff]
    %v2954 = vld [vmem:[%s5 + $0x314] sm:$0xf]
    %v2955 = vld [vmem:[%s5 + $0x318] sm:$0xff]
    %v2956 = vld [vmem:[%s5 + $0x320] sm:$0xf]
    %v2957 = vld [vmem:[%s5 + $0x324] sm:$0xff]
    %v2958 = vld [vmem:[%s5 + $0x32c] sm:$0xf]
    %v2959 = vld [vmem:[%s5 + $0x330] sm:$0xff]
    %v2960 = vld [vmem:[%s5 + $0x338] sm:$0xf]
    %v2961 = vld [vmem:[%s5 + $0x33c] sm:$0xff]
    %v2962 = vld [vmem:[%s5 + $0x344] sm:$0xf]
    %v2963 = vld [vmem:[%s5 + $0x348] sm:$0xff]
    %v2964 = vld [vmem:[%s5 + $0x350] sm:$0xf]
    %v2965 = vld [vmem:[%s5 + $0x354] sm:$0xff]
    %v2966 = vld [vmem:[%s5 + $0x35c] sm:$0xf]
    %v2967 = vld [vmem:[%s5 + $0x360] sm:$0xff]
    %v2968 = vld [vmem:[%s5 + $0x368] sm:$0xf]
    %v2969 = vld [vmem:[%s5 + $0x36c] sm:$0xff]
    %v2970 = vld [vmem:[%s5 + $0x374] sm:$0xf]
    %v2971 = vld [vmem:[%s5 + $0x378] sm:$0xff]
    %v2972 = vld [vmem:[%s5 + $0x380] sm:$0xf]
    %v2973 = vld [vmem:[%s5 + $0x384] sm:$0xff]
    %v2974 = vld [vmem:[%s5 + $0x38c] sm:$0xf]
    %v2975 = vld [vmem:[%s5 + $0x390] sm:$0xff]
    %v2976 = vld [vmem:[%s5 + $0x398] sm:$0xf]
    %v2977 = vld [vmem:[%s5 + $0x39c] sm:$0xff]
    %v2978 = vld [vmem:[%s5 + $0x3a4] sm:$0xf]
    %v2979 = vld [vmem:[%s5 + $0x3a8] sm:$0xff]
    %v2980 = vld [vmem:[%s5 + $0x3b0] sm:$0xf]
    %v2981 = vld [vmem:[%s5 + $0x3b4] sm:$0xff]
    %v2982 = vld [vmem:[%s5 + $0x3bc] sm:$0xf]
    %v2983 = vld [vmem:[%s5 + $0x3c0] sm:$0xff]
    %v2984 = vld [vmem:[%s5 + $0x3c8] sm:$0xf]
    %v2985 = vld [vmem:[%s5 + $0x3cc] sm:$0xff]
    %v2986 = vld [vmem:[%s5 + $0x3d4] sm:$0xf]
    %v2987 = vld [vmem:[%s5 + $0x3d8] sm:$0xff]
    %v2988 = vld [vmem:[%s5 + $0x3e0] sm:$0xf]
    %v2989 = vld [vmem:[%s5 + $0x3e4] sm:$0xff]
    %v2990 = vld [vmem:[%s5 + $0x3ec] sm:$0xf]
    %v2991 = vld [vmem:[%s5 + $0x3f0] sm:$0xff]
    %v2992 = vld [vmem:[%s5 + $0x3f8] sm:$0xf]
    %v2993 = vld [vmem:[%s5 + $0x3fc] sm:$0xff]
    %v2994 = vld [vmem:[%s5 + $0x404] sm:$0xf]
    %v2995 = vld [vmem:[%s5 + $0x408] sm:$0xff]
    %v2996 = vld [vmem:[%s5 + $0x410] sm:$0xf]
    %v2997 = vld [vmem:[%s5 + $0x414] sm:$0xff]
    %v2998 = vld [vmem:[%s5 + $0x41c] sm:$0xf]
    %v2999 = vld [vmem:[%s5 + $0x420] sm:$0xff]
    %v3000 = vld [vmem:[%s5 + $0x428] sm:$0xf]
    %v3001 = vld [vmem:[%s5 + $0x42c] sm:$0xff]
    %v3002 = vld [vmem:[%s5 + $0x434] sm:$0xf]
    %v3003 = vld [vmem:[%s5 + $0x438] sm:$0xff]
    %v3004 = vld [vmem:[%s5 + $0x440] sm:$0xf]
    %v3005 = vld [vmem:[%s5 + $0x444] sm:$0xff]
    %v3006 = vld [vmem:[%s5 + $0x44c] sm:$0xf]
    %v3007 = vld [vmem:[%s5 + $0x450] sm:$0xff]
    %v3008 = vld [vmem:[%s5 + $0x458] sm:$0xf]
    %v3009 = vld [vmem:[%s5 + $0x45c] sm:$0xff]
    %v3010 = vld [vmem:[%s5 + $0x464] sm:$0xf]
    %v3011 = vld [vmem:[%s5 + $0x468] sm:$0xff]
    %v3012 = vld [vmem:[%s5 + $0x470] sm:$0xf]
    %v3013 = vld [vmem:[%s5 + $0x474] sm:$0xff]
    %v3014 = vld [vmem:[%s5 + $0x47c] sm:$0xf]
    %v3015 = vld [vmem:[%s5 + $0x480] sm:$0xff]
    %v3016 = vld [vmem:[%s5 + $0x488] sm:$0xf]
    %v3017 = vld [vmem:[%s5 + $0x48c] sm:$0xff]
    %v3018 = vld [vmem:[%s5 + $0x494] sm:$0xf]
    %v3019 = vld [vmem:[%s5 + $0x498] sm:$0xff]
    %v3020 = vld [vmem:[%s5 + $0x4a0] sm:$0xf]
    %v3021 = vld [vmem:[%s5 + $0x4a4] sm:$0xff]
    %v3022 = vld [vmem:[%s5 + $0x4ac] sm:$0xf]
    %v3023 = vld [vmem:[%s6] sm:$0x7]
    %v3025 = vlaneseq
    %v3026 = vshrl.u32 %v3025, 7
    %v3027 = vsub.s32 0, %v3026
    %v3028 = vrot.slane %v3023, %v3027
    %v3029 = vlaneseq
    %v3030 = vshrl.u32 %v3029, 7
    %v3031 = vsub.s32 1, %v3030
    %v3032 = vrot.slane %v3023, %v3031
    %v3033 = vlaneseq
    %v3034 = vshrl.u32 %v3033, 7
    %v3035 = vsub.s32 2, %v3034
    %v3036 = vrot.slane %v3023, %v3035
    %v3240 = vunpack.c.l.b16 %v2823
    %v3241 = vunpack.c.h.b16 %v2823
    %v3242 = vunpack.c.l.b16 %v2824
    %v3243 = vunpack.c.l.b16 %v2825
    %v3244 = vunpack.c.h.b16 %v2825
    %v3245 = vunpack.c.l.b16 %v2826
    %v3246 = vunpack.c.l.b16 %v2827
    %v3247 = vunpack.c.h.b16 %v2827
    %v3248 = vunpack.c.l.b16 %v2828
    %v3249 = vunpack.c.l.b16 %v2829
    %v3250 = vunpack.c.h.b16 %v2829
    %v3251 = vunpack.c.l.b16 %v2830
    %v3252 = vunpack.c.l.b16 %v2831
    %v3253 = vunpack.c.h.b16 %v2831
    %v3254 = vunpack.c.l.b16 %v2832
    %v3255 = vunpack.c.l.b16 %v2833
    %v3256 = vunpack.c.h.b16 %v2833
    %v3257 = vunpack.c.l.b16 %v2834
    %v3258 = vunpack.c.l.b16 %v2835
    %v3259 = vunpack.c.h.b16 %v2835
    %v3260 = vunpack.c.l.b16 %v2836
    %v3261 = vunpack.c.l.b16 %v2837
    %v3262 = vunpack.c.h.b16 %v2837
    %v3263 = vunpack.c.l.b16 %v2838
    %v3264 = vunpack.c.l.b16 %v2839
    %v3265 = vunpack.c.h.b16 %v2839
    %v3266 = vunpack.c.l.b16 %v2840
    %v3267 = vunpack.c.l.b16 %v2841
    %v3268 = vunpack.c.h.b16 %v2841
    %v3269 = vunpack.c.l.b16 %v2842
    %v3270 = vunpack.c.l.b16 %v2843
    %v3271 = vunpack.c.h.b16 %v2843
    %v3272 = vunpack.c.l.b16 %v2844
    %v3273 = vunpack.c.l.b16 %v2845
    %v3274 = vunpack.c.h.b16 %v2845
    %v3275 = vunpack.c.l.b16 %v2846
    %v3276 = vunpack.c.l.b16 %v2847
    %v3277 = vunpack.c.h.b16 %v2847
    %v3278 = vunpack.c.l.b16 %v2848
    %v3279 = vunpack.c.l.b16 %v2849
    %v3280 = vunpack.c.h.b16 %v2849
    %v3281 = vunpack.c.l.b16 %v2850
    %v3282 = vunpack.c.l.b16 %v2851
    %v3283 = vunpack.c.h.b16 %v2851
    %v3284 = vunpack.c.l.b16 %v2852
    %v3285 = vunpack.c.l.b16 %v2853
    %v3286 = vunpack.c.h.b16 %v2853
    %v3287 = vunpack.c.l.b16 %v2854
    %v3288 = vunpack.c.l.b16 %v2855
    %v3289 = vunpack.c.h.b16 %v2855
    %v3290 = vunpack.c.l.b16 %v2856
    %v3291 = vunpack.c.l.b16 %v2857
    %v3292 = vunpack.c.h.b16 %v2857
    %v3293 = vunpack.c.l.b16 %v2858
    %v3294 = vunpack.c.l.b16 %v2859
    %v3295 = vunpack.c.h.b16 %v2859
    %v3296 = vunpack.c.l.b16 %v2860
    %v3297 = vunpack.c.l.b16 %v2861
    %v3298 = vunpack.c.h.b16 %v2861
    %v3299 = vunpack.c.l.b16 %v2862
    %v3300 = vunpack.c.l.b16 %v2863
    %v3301 = vunpack.c.h.b16 %v2863
    %v3302 = vunpack.c.l.b16 %v2864
    %v3303 = vunpack.c.l.b16 %v2865
    %v3304 = vunpack.c.h.b16 %v2865
    %v3305 = vunpack.c.l.b16 %v2866
    %v3306 = vunpack.c.l.b16 %v2867
    %v3307 = vunpack.c.h.b16 %v2867
    %v3308 = vunpack.c.l.b16 %v2868
    %v3309 = vunpack.c.l.b16 %v2869
    %v3310 = vunpack.c.h.b16 %v2869
    %v3311 = vunpack.c.l.b16 %v2870
    %v3312 = vunpack.c.l.b16 %v2871
    %v3313 = vunpack.c.h.b16 %v2871
    %v3314 = vunpack.c.l.b16 %v2872
    %v3315 = vunpack.c.l.b16 %v2873
    %v3316 = vunpack.c.h.b16 %v2873
    %v3317 = vunpack.c.l.b16 %v2874
    %v3318 = vunpack.c.l.b16 %v2875
    %v3319 = vunpack.c.h.b16 %v2875
    %v3320 = vunpack.c.l.b16 %v2876
    %v3321 = vunpack.c.l.b16 %v2877
    %v3322 = vunpack.c.h.b16 %v2877
    %v3323 = vunpack.c.l.b16 %v2878
    %v3324 = vunpack.c.l.b16 %v2879
    %v3325 = vunpack.c.h.b16 %v2879
    %v3326 = vunpack.c.l.b16 %v2880
    %v3327 = vunpack.c.l.b16 %v2881
    %v3328 = vunpack.c.h.b16 %v2881
    %v3329 = vunpack.c.l.b16 %v2882
    %v3330 = vunpack.c.l.b16 %v2883
    %v3331 = vunpack.c.h.b16 %v2883
    %v3332 = vunpack.c.l.b16 %v2884
    %v3333 = vunpack.c.l.b16 %v2885
    %v3334 = vunpack.c.h.b16 %v2885
    %v3335 = vunpack.c.l.b16 %v2886
    %v3336 = vunpack.c.l.b16 %v2887
    %v3337 = vunpack.c.h.b16 %v2887
    %v3338 = vunpack.c.l.b16 %v2888
    %v3339 = vunpack.c.l.b16 %v2889
    %v3340 = vunpack.c.h.b16 %v2889
    %v3341 = vunpack.c.l.b16 %v2890
    %v3342 = vunpack.c.l.b16 %v2891
    %v3343 = vunpack.c.h.b16 %v2891
    %v3344 = vunpack.c.l.b16 %v2892
    %v3345 = vunpack.c.l.b16 %v2893
    %v3346 = vunpack.c.h.b16 %v2893
    %v3347 = vunpack.c.l.b16 %v2894
    %v3348 = vunpack.c.l.b16 %v2895
    %v3349 = vunpack.c.h.b16 %v2895
    %v3350 = vunpack.c.l.b16 %v2896
    %v3351 = vunpack.c.l.b16 %v2897
    %v3352 = vunpack.c.h.b16 %v2897
    %v3353 = vunpack.c.l.b16 %v2898
    %v3354 = vunpack.c.l.b16 %v2899
    %v3355 = vunpack.c.h.b16 %v2899
    %v3356 = vunpack.c.l.b16 %v2900
    %v3357 = vunpack.c.l.b16 %v2901
    %v3358 = vunpack.c.h.b16 %v2901
    %v3359 = vunpack.c.l.b16 %v2902
    %v3360 = vunpack.c.l.b16 %v2903
    %v3361 = vunpack.c.h.b16 %v2903
    %v3362 = vunpack.c.l.b16 %v2904
    %v3363 = vunpack.c.l.b16 %v2905
    %v3364 = vunpack.c.h.b16 %v2905
    %v3365 = vunpack.c.l.b16 %v2906
    %v3366 = vunpack.c.l.b16 %v2907
    %v3367 = vunpack.c.h.b16 %v2907
    %v3368 = vunpack.c.l.b16 %v2908
    %v3369 = vunpack.c.l.b16 %v2909
    %v3370 = vunpack.c.h.b16 %v2909
    %v3371 = vunpack.c.l.b16 %v2910
    %v3372 = vunpack.c.l.b16 %v2911
    %v3373 = vunpack.c.h.b16 %v2911
    %v3374 = vunpack.c.l.b16 %v2912
    %v3375 = vunpack.c.l.b16 %v2913
    %v3376 = vunpack.c.h.b16 %v2913
    %v3377 = vunpack.c.l.b16 %v2914
    %v3378 = vunpack.c.l.b16 %v2915
    %v3379 = vunpack.c.h.b16 %v2915
    %v3380 = vunpack.c.l.b16 %v2916
    %v3381 = vunpack.c.l.b16 %v2917
    %v3382 = vunpack.c.h.b16 %v2917
    %v3383 = vunpack.c.l.b16 %v2918
    %v3384 = vunpack.c.l.b16 %v2919
    %v3385 = vunpack.c.h.b16 %v2919
    %v3386 = vunpack.c.l.b16 %v2920
    %v3387 = vunpack.c.l.b16 %v2921
    %v3388 = vunpack.c.h.b16 %v2921
    %v3389 = vunpack.c.l.b16 %v2922
    %v3390 = vunpack.c.l.b16 %v2923
    %v3391 = vunpack.c.h.b16 %v2923
    %v3392 = vunpack.c.l.b16 %v2924
    %v3393 = vunpack.c.l.b16 %v2925
    %v3394 = vunpack.c.h.b16 %v2925
    %v3395 = vunpack.c.l.b16 %v2926
    %v3396 = vunpack.c.l.b16 %v2927
    %v3397 = vunpack.c.h.b16 %v2927
    %v3398 = vunpack.c.l.b16 %v2928
    %v3399 = vunpack.c.l.b16 %v2929
    %v3400 = vunpack.c.h.b16 %v2929
    %v3401 = vunpack.c.l.b16 %v2930
    %v3402 = vunpack.c.l.b16 %v2931
    %v3403 = vunpack.c.h.b16 %v2931
    %v3404 = vunpack.c.l.b16 %v2932
    %v3405 = vunpack.c.l.b16 %v2933
    %v3406 = vunpack.c.h.b16 %v2933
    %v3407 = vunpack.c.l.b16 %v2934
    %v3408 = vunpack.c.l.b16 %v2935
    %v3409 = vunpack.c.h.b16 %v2935
    %v3410 = vunpack.c.l.b16 %v2936
    %v3411 = vunpack.c.l.b16 %v2937
    %v3412 = vunpack.c.h.b16 %v2937
    %v3413 = vunpack.c.l.b16 %v2938
    %v3414 = vunpack.c.l.b16 %v2939
    %v3415 = vunpack.c.h.b16 %v2939
    %v3416 = vunpack.c.l.b16 %v2940
    %v3417 = vunpack.c.l.b16 %v2941
    %v3418 = vunpack.c.h.b16 %v2941
    %v3419 = vunpack.c.l.b16 %v2942
    %v3420 = vunpack.c.l.b16 %v2943
    %v3421 = vunpack.c.h.b16 %v2943
    %v3422 = vunpack.c.l.b16 %v2944
    %v3423 = vunpack.c.l.b16 %v2945
    %v3424 = vunpack.c.h.b16 %v2945
    %v3425 = vunpack.c.l.b16 %v2946
    %v3426 = vunpack.c.l.b16 %v2947
    %v3427 = vunpack.c.h.b16 %v2947
    %v3428 = vunpack.c.l.b16 %v2948
    %v3429 = vunpack.c.l.b16 %v2949
    %v3430 = vunpack.c.h.b16 %v2949
    %v3431 = vunpack.c.l.b16 %v2950
    %v3432 = vunpack.c.l.b16 %v2951
    %v3433 = vunpack.c.h.b16 %v2951
    %v3434 = vunpack.c.l.b16 %v2952
    %v3435 = vunpack.c.l.b16 %v2953
    %v3436 = vunpack.c.h.b16 %v2953
    %v3437 = vunpack.c.l.b16 %v2954
    %v3438 = vunpack.c.l.b16 %v2955
    %v3439 = vunpack.c.h.b16 %v2955
    %v3440 = vunpack.c.l.b16 %v2956
    %v3441 = vunpack.c.l.b16 %v2957
    %v3442 = vunpack.c.h.b16 %v2957
    %v3443 = vunpack.c.l.b16 %v2958
    %v3444 = vunpack.c.l.b16 %v2959
    %v3445 = vunpack.c.h.b16 %v2959
    %v3446 = vunpack.c.l.b16 %v2960
    %v3447 = vunpack.c.l.b16 %v2961
    %v3448 = vunpack.c.h.b16 %v2961
    %v3449 = vunpack.c.l.b16 %v2962
    %v3450 = vunpack.c.l.b16 %v2963
    %v3451 = vunpack.c.h.b16 %v2963
    %v3452 = vunpack.c.l.b16 %v2964
    %v3453 = vunpack.c.l.b16 %v2965
    %v3454 = vunpack.c.h.b16 %v2965
    %v3455 = vunpack.c.l.b16 %v2966
    %v3456 = vunpack.c.l.b16 %v2967
    %v3457 = vunpack.c.h.b16 %v2967
    %v3458 = vunpack.c.l.b16 %v2968
    %v3459 = vunpack.c.l.b16 %v2969
    %v3460 = vunpack.c.h.b16 %v2969
    %v3461 = vunpack.c.l.b16 %v2970
    %v3462 = vunpack.c.l.b16 %v2971
    %v3463 = vunpack.c.h.b16 %v2971
    %v3464 = vunpack.c.l.b16 %v2972
    %v3465 = vunpack.c.l.b16 %v2973
    %v3466 = vunpack.c.h.b16 %v2973
    %v3467 = vunpack.c.l.b16 %v2974
    %v3468 = vunpack.c.l.b16 %v2975
    %v3469 = vunpack.c.h.b16 %v2975
    %v3470 = vunpack.c.l.b16 %v2976
    %v3471 = vunpack.c.l.b16 %v2977
    %v3472 = vunpack.c.h.b16 %v2977
    %v3473 = vunpack.c.l.b16 %v2978
    %v3474 = vunpack.c.l.b16 %v2979
    %v3475 = vunpack.c.h.b16 %v2979
    %v3476 = vunpack.c.l.b16 %v2980
    %v3477 = vunpack.c.l.b16 %v2981
    %v3478 = vunpack.c.h.b16 %v2981
    %v3479 = vunpack.c.l.b16 %v2982
    %v3480 = vunpack.c.l.b16 %v2983
    %v3481 = vunpack.c.h.b16 %v2983
    %v3482 = vunpack.c.l.b16 %v2984
    %v3483 = vunpack.c.l.b16 %v2985
    %v3484 = vunpack.c.h.b16 %v2985
    %v3485 = vunpack.c.l.b16 %v2986
    %v3486 = vunpack.c.l.b16 %v2987
    %v3487 = vunpack.c.h.b16 %v2987
    %v3488 = vunpack.c.l.b16 %v2988
    %v3489 = vunpack.c.l.b16 %v2989
    %v3490 = vunpack.c.h.b16 %v2989
    %v3491 = vunpack.c.l.b16 %v2990
    %v3492 = vunpack.c.l.b16 %v2991
    %v3493 = vunpack.c.h.b16 %v2991
    %v3494 = vunpack.c.l.b16 %v2992
    %v3495 = vunpack.c.l.b16 %v2993
    %v3496 = vunpack.c.h.b16 %v2993
    %v3497 = vunpack.c.l.b16 %v2994
    %v3498 = vunpack.c.l.b16 %v2995
    %v3499 = vunpack.c.h.b16 %v2995
    %v3500 = vunpack.c.l.b16 %v2996
    %v3501 = vunpack.c.l.b16 %v2997
    %v3502 = vunpack.c.h.b16 %v2997
    %v3503 = vunpack.c.l.b16 %v2998
    %v3504 = vunpack.c.l.b16 %v2999
    %v3505 = vunpack.c.h.b16 %v2999
    %v3506 = vunpack.c.l.b16 %v3000
    %v3507 = vunpack.c.l.b16 %v3001
    %v3508 = vunpack.c.h.b16 %v3001
    %v3509 = vunpack.c.l.b16 %v3002
    %v3510 = vunpack.c.l.b16 %v3003
    %v3511 = vunpack.c.h.b16 %v3003
    %v3512 = vunpack.c.l.b16 %v3004
    %v3513 = vunpack.c.l.b16 %v3005
    %v3514 = vunpack.c.h.b16 %v3005
    %v3515 = vunpack.c.l.b16 %v3006
    %v3516 = vunpack.c.l.b16 %v3007
    %v3517 = vunpack.c.h.b16 %v3007
    %v3518 = vunpack.c.l.b16 %v3008
    %v3519 = vunpack.c.l.b16 %v3009
    %v3520 = vunpack.c.h.b16 %v3009
    %v3521 = vunpack.c.l.b16 %v3010
    %v3522 = vunpack.c.l.b16 %v3011
    %v3523 = vunpack.c.h.b16 %v3011
    %v3524 = vunpack.c.l.b16 %v3012
    %v3525 = vunpack.c.l.b16 %v3013
    %v3526 = vunpack.c.h.b16 %v3013
    %v3527 = vunpack.c.l.b16 %v3014
    %v3528 = vunpack.c.l.b16 %v3015
    %v3529 = vunpack.c.h.b16 %v3015
    %v3530 = vunpack.c.l.b16 %v3016
    %v3531 = vunpack.c.l.b16 %v3017
    %v3532 = vunpack.c.h.b16 %v3017
    %v3533 = vunpack.c.l.b16 %v3018
    %v3534 = vunpack.c.l.b16 %v3019
    %v3535 = vunpack.c.h.b16 %v3019
    %v3536 = vunpack.c.l.b16 %v3020
    %v3537 = vunpack.c.l.b16 %v3021
    %v3538 = vunpack.c.h.b16 %v3021
    %v3539 = vunpack.c.l.b16 %v3022
    %v3540 = vpack.c.b16 %v3243, %v3240
    %v3541 = vpack.c.b16 %v3244, %v3241
    %v3542 = vpack.c.b16 %v3245, %v3242
    %v3543 = vpack.c.b16 %v3249, %v3246
    %v3544 = vpack.c.b16 %v3250, %v3247
    %v3545 = vpack.c.b16 %v3251, %v3248
    %v3546 = vpack.c.b16 %v3255, %v3252
    %v3547 = vpack.c.b16 %v3256, %v3253
    %v3548 = vpack.c.b16 %v3257, %v3254
    %v3549 = vpack.c.b16 %v3261, %v3258
    %v3550 = vpack.c.b16 %v3262, %v3259
    %v3551 = vpack.c.b16 %v3263, %v3260
    %v3552 = vpack.c.b16 %v3267, %v3264
    %v3553 = vpack.c.b16 %v3268, %v3265
    %v3554 = vpack.c.b16 %v3269, %v3266
    %v3555 = vpack.c.b16 %v3273, %v3270
    %v3556 = vpack.c.b16 %v3274, %v3271
    %v3557 = vpack.c.b16 %v3275, %v3272
    %v3558 = vpack.c.b16 %v3279, %v3276
    %v3559 = vpack.c.b16 %v3280, %v3277
    %v3560 = vpack.c.b16 %v3281, %v3278
    %v3561 = vpack.c.b16 %v3285, %v3282
    %v3562 = vpack.c.b16 %v3286, %v3283
    %v3563 = vpack.c.b16 %v3287, %v3284
    %v3564 = vpack.c.b16 %v3291, %v3288
    %v3565 = vpack.c.b16 %v3292, %v3289
    %v3566 = vpack.c.b16 %v3293, %v3290
    %v3567 = vpack.c.b16 %v3297, %v3294
    %v3568 = vpack.c.b16 %v3298, %v3295
    %v3569 = vpack.c.b16 %v3299, %v3296
    %v3570 = vpack.c.b16 %v3303, %v3300
    %v3571 = vpack.c.b16 %v3304, %v3301
    %v3572 = vpack.c.b16 %v3305, %v3302
    %v3573 = vpack.c.b16 %v3309, %v3306
    %v3574 = vpack.c.b16 %v3310, %v3307
    %v3575 = vpack.c.b16 %v3311, %v3308
    %v3576 = vpack.c.b16 %v3315, %v3312
    %v3577 = vpack.c.b16 %v3316, %v3313
    %v3578 = vpack.c.b16 %v3317, %v3314
    %v3579 = vpack.c.b16 %v3321, %v3318
    %v3580 = vpack.c.b16 %v3322, %v3319
    %v3581 = vpack.c.b16 %v3323, %v3320
    %v3582 = vpack.c.b16 %v3327, %v3324
    %v3583 = vpack.c.b16 %v3328, %v3325
    %v3584 = vpack.c.b16 %v3329, %v3326
    %v3585 = vpack.c.b16 %v3333, %v3330
    %v3586 = vpack.c.b16 %v3334, %v3331
    %v3587 = vpack.c.b16 %v3335, %v3332
    %v3588 = vpack.c.b16 %v3339, %v3336
    %v3589 = vpack.c.b16 %v3340, %v3337
    %v3590 = vpack.c.b16 %v3341, %v3338
    %v3591 = vpack.c.b16 %v3345, %v3342
    %v3592 = vpack.c.b16 %v3346, %v3343
    %v3593 = vpack.c.b16 %v3347, %v3344
    %v3594 = vpack.c.b16 %v3351, %v3348
    %v3595 = vpack.c.b16 %v3352, %v3349
    %v3596 = vpack.c.b16 %v3353, %v3350
    %v3597 = vpack.c.b16 %v3357, %v3354
    %v3598 = vpack.c.b16 %v3358, %v3355
    %v3599 = vpack.c.b16 %v3359, %v3356
    %v3600 = vpack.c.b16 %v3363, %v3360
    %v3601 = vpack.c.b16 %v3364, %v3361
    %v3602 = vpack.c.b16 %v3365, %v3362
    %v3603 = vpack.c.b16 %v3369, %v3366
    %v3604 = vpack.c.b16 %v3370, %v3367
    %v3605 = vpack.c.b16 %v3371, %v3368
    %v3606 = vpack.c.b16 %v3375, %v3372
    %v3607 = vpack.c.b16 %v3376, %v3373
    %v3608 = vpack.c.b16 %v3377, %v3374
    %v3609 = vpack.c.b16 %v3381, %v3378
    %v3610 = vpack.c.b16 %v3382, %v3379
    %v3611 = vpack.c.b16 %v3383, %v3380
    %v3612 = vpack.c.b16 %v3387, %v3384
    %v3613 = vpack.c.b16 %v3388, %v3385
    %v3614 = vpack.c.b16 %v3389, %v3386
    %v3615 = vpack.c.b16 %v3393, %v3390
    %v3616 = vpack.c.b16 %v3394, %v3391
    %v3617 = vpack.c.b16 %v3395, %v3392
    %v3618 = vpack.c.b16 %v3399, %v3396
    %v3619 = vpack.c.b16 %v3400, %v3397
    %v3620 = vpack.c.b16 %v3401, %v3398
    %v3621 = vpack.c.b16 %v3405, %v3402
    %v3622 = vpack.c.b16 %v3406, %v3403
    %v3623 = vpack.c.b16 %v3407, %v3404
    %v3624 = vpack.c.b16 %v3411, %v3408
    %v3625 = vpack.c.b16 %v3412, %v3409
    %v3626 = vpack.c.b16 %v3413, %v3410
    %v3627 = vpack.c.b16 %v3417, %v3414
    %v3628 = vpack.c.b16 %v3418, %v3415
    %v3629 = vpack.c.b16 %v3419, %v3416
    %v3630 = vpack.c.b16 %v3423, %v3420
    %v3631 = vpack.c.b16 %v3424, %v3421
    %v3632 = vpack.c.b16 %v3425, %v3422
    %v3633 = vpack.c.b16 %v3429, %v3426
    %v3634 = vpack.c.b16 %v3430, %v3427
    %v3635 = vpack.c.b16 %v3431, %v3428
    %v3636 = vpack.c.b16 %v3435, %v3432
    %v3637 = vpack.c.b16 %v3436, %v3433
    %v3638 = vpack.c.b16 %v3437, %v3434
    %v3639 = vpack.c.b16 %v3441, %v3438
    %v3640 = vpack.c.b16 %v3442, %v3439
    %v3641 = vpack.c.b16 %v3443, %v3440
    %v3642 = vpack.c.b16 %v3447, %v3444
    %v3643 = vpack.c.b16 %v3448, %v3445
    %v3644 = vpack.c.b16 %v3449, %v3446
    %v3645 = vpack.c.b16 %v3453, %v3450
    %v3646 = vpack.c.b16 %v3454, %v3451
    %v3647 = vpack.c.b16 %v3455, %v3452
    %v3648 = vpack.c.b16 %v3459, %v3456
    %v3649 = vpack.c.b16 %v3460, %v3457
    %v3650 = vpack.c.b16 %v3461, %v3458
    %v3651 = vpack.c.b16 %v3465, %v3462
    %v3652 = vpack.c.b16 %v3466, %v3463
    %v3653 = vpack.c.b16 %v3467, %v3464
    %v3654 = vpack.c.b16 %v3471, %v3468
    %v3655 = vpack.c.b16 %v3472, %v3469
    %v3656 = vpack.c.b16 %v3473, %v3470
    %v3657 = vpack.c.b16 %v3477, %v3474
    %v3658 = vpack.c.b16 %v3478, %v3475
    %v3659 = vpack.c.b16 %v3479, %v3476
    %v3660 = vpack.c.b16 %v3483, %v3480
    %v3661 = vpack.c.b16 %v3484, %v3481
    %v3662 = vpack.c.b16 %v3485, %v3482
    %v3663 = vpack.c.b16 %v3489, %v3486
    %v3664 = vpack.c.b16 %v3490, %v3487
    %v3665 = vpack.c.b16 %v3491, %v3488
    %v3666 = vpack.c.b16 %v3495, %v3492
    %v3667 = vpack.c.b16 %v3496, %v3493
    %v3668 = vpack.c.b16 %v3497, %v3494
    %v3669 = vpack.c.b16 %v3501, %v3498
    %v3670 = vpack.c.b16 %v3502, %v3499
    %v3671 = vpack.c.b16 %v3503, %v3500
    %v3672 = vpack.c.b16 %v3507, %v3504
    %v3673 = vpack.c.b16 %v3508, %v3505
    %v3674 = vpack.c.b16 %v3509, %v3506
    %v3675 = vpack.c.b16 %v3513, %v3510
    %v3676 = vpack.c.b16 %v3514, %v3511
    %v3677 = vpack.c.b16 %v3515, %v3512
    %v3678 = vpack.c.b16 %v3519, %v3516
    %v3679 = vpack.c.b16 %v3520, %v3517
    %v3680 = vpack.c.b16 %v3521, %v3518
    %v3681 = vpack.c.b16 %v3525, %v3522
    %v3682 = vpack.c.b16 %v3526, %v3523
    %v3683 = vpack.c.b16 %v3527, %v3524
    %v3684 = vpack.c.b16 %v3531, %v3528
    %v3685 = vpack.c.b16 %v3532, %v3529
    %v3686 = vpack.c.b16 %v3533, %v3530
    %v3687 = vpack.c.b16 %v3537, %v3534
    %v3688 = vpack.c.b16 %v3538, %v3535
    %v3689 = vpack.c.b16 %v3539, %v3536
    %vm3840 = vcmask 261120
    %v3842 = vsel %vm3840, %v2773, 0
    %v3845 = vsel %vm3840, %v2780, 0
    %v3848 = vsel %vm3840, %v2787, 0
    %v3851 = vsel %vm3840, %v2794, 0
    %v3854 = vsel %vm3840, %v2801, 0
    %v3857 = vsel %vm3840, %v2808, 0
    %v3860 = vsel %vm3840, %v2815, 0
    %v3863 = vsel %vm3840, %v2822, 0
    %3865 = vmatprep.subr.bf16.mxu0 %v3562
    %3866 = vmatpush1.bf16.msra.mxu0 %v3561
    %3867 = vmatprep.subr.bf16.mxu0 %v3559
    %3868 = vmatpush1.bf16.msra.mxu0 %v3558
    %3869 = vmatprep.subr.bf16.mxu0 %v3556
    %3870 = vmatpush1.bf16.msra.mxu0 %v3555
    %3871 = vmatprep.subr.bf16.mxu0 %v3553
    %3872 = vmatpush1.bf16.msra.mxu0 %v3552
    %3873 = vmatprep.subr.bf16.mxu0 %v3550
    %3874 = vmatpush1.bf16.msra.mxu0 %v3549
    %3875 = vmatprep.subr.bf16.mxu0 %v3547
    %3876 = vmatpush1.bf16.msra.mxu0 %v3546
    %3877 = vmatprep.subr.bf16.mxu0 %v3544
    %3878 = vmatpush1.bf16.msra.mxu0 %v3543
    %3879 = vmatprep.subr.bf16.mxu0 %v3541
    %3880 = vmatpush1.bf16.msra.mxu0 %v3540
    %3881 = vmatprep.subr.bf16.mxu0 %v3586
    %3882 = vmatpush2.bf16.msra.mxu0 %v3585
    %3883 = vmatprep.subr.bf16.mxu0 %v3583
    %3884 = vmatpush2.bf16.msra.mxu0 %v3582
    %3885 = vmatprep.subr.bf16.mxu0 %v3580
    %3886 = vmatpush2.bf16.msra.mxu0 %v3579
    %3887 = vmatprep.subr.bf16.mxu0 %v3577
    %3888 = vmatpush2.bf16.msra.mxu0 %v3576
    %3889 = vmatprep.subr.bf16.mxu0 %v3574
    %3890 = vmatpush2.bf16.msra.mxu0 %v3573
    %3891 = vmatprep.subr.bf16.mxu0 %v3571
    %3892 = vmatpush2.bf16.msra.mxu0 %v3570
    %3893 = vmatprep.subr.bf16.mxu0 %v3568
    %3894 = vmatpush2.bf16.msra.mxu0 %v3567
    %3895 = vmatprep.subr.bf16.mxu0 %v3565
    %3896 = vmatpush2.bf16.msra.mxu0 %v3564
    %3897 = vmatprep.mubr.bf16.mxu0 %v2768
    %3898 = vmatmul.mubr.bf16.gmra.mxu0 %v2767
    %v3899 = vpop.f32.mrf.mxu0
    %v3900 = vadd.f32 %v3028, %v3899
    %v3901 = vpop.f32.mrf.mxu0
    %v3902 = vadd.f32 %v3032, %v3901
    %v3903 = vpop.f32.mrf.mxu0
    %v3904 = vadd.f32 %v3028, %v3903
    %v3905 = vpop.f32.mrf.mxu0
    %v3906 = vadd.f32 %v3032, %v3905
    %3907 = vmatprep.mubr.bf16.mxu0 %v2775
    %3908 = vmatmul.mubr.bf16.gmra.mxu0 %v2774
    %v3909 = vpop.f32.mrf.mxu0
    %v3910 = vadd.f32 %v3028, %v3909
    %v3911 = vpop.f32.mrf.mxu0
    %v3912 = vadd.f32 %v3032, %v3911
    %v3913 = vpop.f32.mrf.mxu0
    %v3914 = vadd.f32 %v3028, %v3913
    %v3915 = vpop.f32.mrf.mxu0
    %v3916 = vadd.f32 %v3032, %v3915
    %3917 = vmatprep.mubr.bf16.mxu0 %v2782
    %3918 = vmatmul.mubr.bf16.gmra.mxu0 %v2781
    %v3919 = vpop.f32.mrf.mxu0
    %v3920 = vadd.f32 %v3028, %v3919
    %v3921 = vpop.f32.mrf.mxu0
    %v3922 = vadd.f32 %v3032, %v3921
    %v3923 = vpop.f32.mrf.mxu0
    %v3924 = vadd.f32 %v3028, %v3923
    %v3925 = vpop.f32.mrf.mxu0
    %v3926 = vadd.f32 %v3032, %v3925
    %3927 = vmatprep.mubr.bf16.mxu0 %v2789
    %3928 = vmatmul.mubr.bf16.gmra.mxu0 %v2788
    %v3929 = vpop.f32.mrf.mxu0
    %v3930 = vadd.f32 %v3028, %v3929
    %v3931 = vpop.f32.mrf.mxu0
    %v3932 = vadd.f32 %v3032, %v3931
    %v3933 = vpop.f32.mrf.mxu0
    %v3934 = vadd.f32 %v3028, %v3933
    %v3935 = vpop.f32.mrf.mxu0
    %v3936 = vadd.f32 %v3032, %v3935
    %3937 = vmatprep.mubr.bf16.mxu0 %v2796
    %3938 = vmatmul.mubr.bf16.gmra.mxu0 %v2795
    %v3939 = vpop.f32.mrf.mxu0
    %v3940 = vadd.f32 %v3028, %v3939
    %v3941 = vpop.f32.mrf.mxu0
    %v3942 = vadd.f32 %v3032, %v3941
    %v3943 = vpop.f32.mrf.mxu0
    %v3944 = vadd.f32 %v3028, %v3943
    %v3945 = vpop.f32.mrf.mxu0
    %v3946 = vadd.f32 %v3032, %v3945
    %3947 = vmatprep.mubr.bf16.mxu0 %v2803
    %3948 = vmatmul.mubr.bf16.gmra.mxu0 %v2802
    %v3949 = vpop.f32.mrf.mxu0
    %v3950 = vadd.f32 %v3028, %v3949
    %v3951 = vpop.f32.mrf.mxu0
    %v3952 = vadd.f32 %v3032, %v3951
    %v3953 = vpop.f32.mrf.mxu0
    %v3954 = vadd.f32 %v3028, %v3953
    %v3955 = vpop.f32.mrf.mxu0
    %v3956 = vadd.f32 %v3032, %v3955
    %3957 = vmatprep.mubr.bf16.mxu0 %v2810
    %3958 = vmatmul.mubr.bf16.gmra.mxu0 %v2809
    %v3959 = vpop.f32.mrf.mxu0
    %v3960 = vadd.f32 %v3028, %v3959
    %v3961 = vpop.f32.mrf.mxu0
    %v3962 = vadd.f32 %v3032, %v3961
    %v3963 = vpop.f32.mrf.mxu0
    %v3964 = vadd.f32 %v3028, %v3963
    %v3965 = vpop.f32.mrf.mxu0
    %v3966 = vadd.f32 %v3032, %v3965
    %3967 = vmatprep.mubr.bf16.mxu0 %v2817
    %3968 = vmatmul.mubr.bf16.gmra.mxu0 %v2816
    %v3969 = vpop.f32.mrf.mxu0
    %v3970 = vadd.f32 %v3028, %v3969
    %v3971 = vpop.f32.mrf.mxu0
    %v3972 = vadd.f32 %v3032, %v3971
    %v3973 = vpop.f32.mrf.mxu0
    %v3974 = vadd.f32 %v3028, %v3973
    %v3975 = vpop.f32.mrf.mxu0
    %v3976 = vadd.f32 %v3032, %v3975
    %3977 = vdwg.mxu0
    %3978 = vmatprep.subr.bf16.mxu0 %v3610
    %3979 = vmatpush1.bf16.msra.mxu0 %v3609
    %3980 = vmatprep.subr.bf16.mxu0 %v3607
    %3981 = vmatpush1.bf16.msra.mxu0 %v3606
    %3982 = vmatprep.subr.bf16.mxu0 %v3604
    %3983 = vmatpush1.bf16.msra.mxu0 %v3603
    %3984 = vmatprep.subr.bf16.mxu0 %v3601
    %3985 = vmatpush1.bf16.msra.mxu0 %v3600
    %3986 = vmatprep.subr.bf16.mxu0 %v3598
    %3987 = vmatpush1.bf16.msra.mxu0 %v3597
    %3988 = vmatprep.subr.bf16.mxu0 %v3595
    %3989 = vmatpush1.bf16.msra.mxu0 %v3594
    %3990 = vmatprep.subr.bf16.mxu0 %v3592
    %3991 = vmatpush1.bf16.msra.mxu0 %v3591
    %3992 = vmatprep.subr.bf16.mxu0 %v3589
    %3993 = vmatpush1.bf16.msra.mxu0 %v3588
    %3994 = vmatprep.subr.bf16.mxu0 %v3634
    %3995 = vmatpush2.bf16.msra.mxu0 %v3633
    %3996 = vmatprep.subr.bf16.mxu0 %v3631
    %3997 = vmatpush2.bf16.msra.mxu0 %v3630
    %3998 = vmatprep.subr.bf16.mxu0 %v3628
    %3999 = vmatpush2.bf16.msra.mxu0 %v3627
    %4000 = vmatprep.subr.bf16.mxu0 %v3625
    %4001 = vmatpush2.bf16.msra.mxu0 %v3624
    %4002 = vmatprep.subr.bf16.mxu0 %v3622
    %4003 = vmatpush2.bf16.msra.mxu0 %v3621
    %4004 = vmatprep.subr.bf16.mxu0 %v3619
    %4005 = vmatpush2.bf16.msra.mxu0 %v3618
    %4006 = vmatprep.subr.bf16.mxu0 %v3616
    %4007 = vmatpush2.bf16.msra.mxu0 %v3615
    %4008 = vmatprep.subr.bf16.mxu0 %v3613
    %4009 = vmatpush2.bf16.msra.mxu0 %v3612
    %4010 = vmatprep.mubr.bf16.mxu0 %v2770
    %4011 = vmatmul.mubr.bf16.gmra.mxu0 %v2769
    %v4012 = vpop.f32.mrf.mxu0
    %v4013 = vadd.f32 %v3900, %v4012
    %v4014 = vpop.f32.mrf.mxu0
    %v4015 = vadd.f32 %v3902, %v4014
    %v4016 = vpop.f32.mrf.mxu0
    %v4017 = vadd.f32 %v3904, %v4016
    %v4018 = vpop.f32.mrf.mxu0
    %v4019 = vadd.f32 %v3906, %v4018
    %4020 = vmatprep.mubr.bf16.mxu0 %v2777
    %4021 = vmatmul.mubr.bf16.gmra.mxu0 %v2776
    %v4022 = vpop.f32.mrf.mxu0
    %v4023 = vadd.f32 %v3910, %v4022
    %v4024 = vpop.f32.mrf.mxu0
    %v4025 = vadd.f32 %v3912, %v4024
    %v4026 = vpop.f32.mrf.mxu0
    %v4027 = vadd.f32 %v3914, %v4026
    %v4028 = vpop.f32.mrf.mxu0
    %v4029 = vadd.f32 %v3916, %v4028
    %4030 = vmatprep.mubr.bf16.mxu0 %v2784
    %4031 = vmatmul.mubr.bf16.gmra.mxu0 %v2783
    %v4032 = vpop.f32.mrf.mxu0
    %v4033 = vadd.f32 %v3920, %v4032
    %v4034 = vpop.f32.mrf.mxu0
    %v4035 = vadd.f32 %v3922, %v4034
    %v4036 = vpop.f32.mrf.mxu0
    %v4037 = vadd.f32 %v3924, %v4036
    %v4038 = vpop.f32.mrf.mxu0
    %v4039 = vadd.f32 %v3926, %v4038
    %4040 = vmatprep.mubr.bf16.mxu0 %v2791
    %4041 = vmatmul.mubr.bf16.gmra.mxu0 %v2790
    %v4042 = vpop.f32.mrf.mxu0
    %v4043 = vadd.f32 %v3930, %v4042
    %v4044 = vpop.f32.mrf.mxu0
    %v4045 = vadd.f32 %v3932, %v4044
    %v4046 = vpop.f32.mrf.mxu0
    %v4047 = vadd.f32 %v3934, %v4046
    %v4048 = vpop.f32.mrf.mxu0
    %v4049 = vadd.f32 %v3936, %v4048
    %4050 = vmatprep.mubr.bf16.mxu0 %v2798
    %4051 = vmatmul.mubr.bf16.gmra.mxu0 %v2797
    %v4052 = vpop.f32.mrf.mxu0
    %v4053 = vadd.f32 %v3940, %v4052
    %v4054 = vpop.f32.mrf.mxu0
    %v4055 = vadd.f32 %v3942, %v4054
    %v4056 = vpop.f32.mrf.mxu0
    %v4057 = vadd.f32 %v3944, %v4056
    %v4058 = vpop.f32.mrf.mxu0
    %v4059 = vadd.f32 %v3946, %v4058
    %4060 = vmatprep.mubr.bf16.mxu0 %v2805
    %4061 = vmatmul.mubr.bf16.gmra.mxu0 %v2804
    %v4062 = vpop.f32.mrf.mxu0
    %v4063 = vadd.f32 %v3950, %v4062
    %v4064 = vpop.f32.mrf.mxu0
    %v4065 = vadd.f32 %v3952, %v4064
    %v4066 = vpop.f32.mrf.mxu0
    %v4067 = vadd.f32 %v3954, %v4066
    %v4068 = vpop.f32.mrf.mxu0
    %v4069 = vadd.f32 %v3956, %v4068
    %4070 = vmatprep.mubr.bf16.mxu0 %v2812
    %4071 = vmatmul.mubr.bf16.gmra.mxu0 %v2811
    %v4072 = vpop.f32.mrf.mxu0
    %v4073 = vadd.f32 %v3960, %v4072
    %v4074 = vpop.f32.mrf.mxu0
    %v4075 = vadd.f32 %v3962, %v4074
    %v4076 = vpop.f32.mrf.mxu0
    %v4077 = vadd.f32 %v3964, %v4076
    %v4078 = vpop.f32.mrf.mxu0
    %v4079 = vadd.f32 %v3966, %v4078
    %4080 = vmatprep.mubr.bf16.mxu0 %v2819
    %4081 = vmatmul.mubr.bf16.gmra.mxu0 %v2818
    %v4082 = vpop.f32.mrf.mxu0
    %v4083 = vadd.f32 %v3970, %v4082
    %v4084 = vpop.f32.mrf.mxu0
    %v4085 = vadd.f32 %v3972, %v4084
    %v4086 = vpop.f32.mrf.mxu0
    %v4087 = vadd.f32 %v3974, %v4086
    %v4088 = vpop.f32.mrf.mxu0
    %v4089 = vadd.f32 %v3976, %v4088
    %4090 = vdwg.mxu0
    %4091 = vmatprep.subr.bf16.mxu0 %v3658
    %4092 = vmatpush1.bf16.msra.mxu0 %v3657
    %4093 = vmatprep.subr.bf16.mxu0 %v3655
    %4094 = vmatpush1.bf16.msra.mxu0 %v3654
    %4095 = vmatprep.subr.bf16.mxu0 %v3652
    %4096 = vmatpush1.bf16.msra.mxu0 %v3651
    %4097 = vmatprep.subr.bf16.mxu0 %v3649
    %4098 = vmatpush1.bf16.msra.mxu0 %v3648
    %4099 = vmatprep.subr.bf16.mxu0 %v3646
    %4100 = vmatpush1.bf16.msra.mxu0 %v3645
    %4101 = vmatprep.subr.bf16.mxu0 %v3643
    %4102 = vmatpush1.bf16.msra.mxu0 %v3642
    %4103 = vmatprep.subr.bf16.mxu0 %v3640
    %4104 = vmatpush1.bf16.msra.mxu0 %v3639
    %4105 = vmatprep.subr.bf16.mxu0 %v3637
    %4106 = vmatpush1.bf16.msra.mxu0 %v3636
    %4107 = vmatprep.subr.bf16.mxu0 %v3682
    %4108 = vmatpush2.bf16.msra.mxu0 %v3681
    %4109 = vmatprep.subr.bf16.mxu0 %v3679
    %4110 = vmatpush2.bf16.msra.mxu0 %v3678
    %4111 = vmatprep.subr.bf16.mxu0 %v3676
    %4112 = vmatpush2.bf16.msra.mxu0 %v3675
    %4113 = vmatprep.subr.bf16.mxu0 %v3673
    %4114 = vmatpush2.bf16.msra.mxu0 %v3672
    %4115 = vmatprep.subr.bf16.mxu0 %v3670
    %4116 = vmatpush2.bf16.msra.mxu0 %v3669
    %4117 = vmatprep.subr.bf16.mxu0 %v3667
    %4118 = vmatpush2.bf16.msra.mxu0 %v3666
    %4119 = vmatprep.subr.bf16.mxu0 %v3664
    %4120 = vmatpush2.bf16.msra.mxu0 %v3663
    %4121 = vmatprep.subr.bf16.mxu0 %v3661
    %4122 = vmatpush2.bf16.msra.mxu0 %v3660
    %4123 = vmatprep.mubr.bf16.mxu0 %v2772
    %4124 = vmatmul.mubr.bf16.gmra.mxu0 %v2771
    %v4125 = vpop.f32.mrf.mxu0
    %v4126 = vadd.f32 %v4013, %v4125
    %v4127 = vpop.f32.mrf.mxu0
    %v4128 = vadd.f32 %v4015, %v4127
    %v4129 = vpop.f32.mrf.mxu0
    %v4130 = vadd.f32 %v4017, %v4129
    %v4131 = vpop.f32.mrf.mxu0
    %v4132 = vadd.f32 %v4019, %v4131
    %4133 = vmatprep.mubr.bf16.mxu0 %v2779
    %4134 = vmatmul.mubr.bf16.gmra.mxu0 %v2778
    %v4135 = vpop.f32.mrf.mxu0
    %v4136 = vadd.f32 %v4023, %v4135
    %v4137 = vpop.f32.mrf.mxu0
    %v4138 = vadd.f32 %v4025, %v4137
    %v4139 = vpop.f32.mrf.mxu0
    %v4140 = vadd.f32 %v4027, %v4139
    %v4141 = vpop.f32.mrf.mxu0
    %v4142 = vadd.f32 %v4029, %v4141
    %4143 = vmatprep.mubr.bf16.mxu0 %v2786
    %4144 = vmatmul.mubr.bf16.gmra.mxu0 %v2785
    %v4145 = vpop.f32.mrf.mxu0
    %v4146 = vadd.f32 %v4033, %v4145
    %v4147 = vpop.f32.mrf.mxu0
    %v4148 = vadd.f32 %v4035, %v4147
    %v4149 = vpop.f32.mrf.mxu0
    %v4150 = vadd.f32 %v4037, %v4149
    %v4151 = vpop.f32.mrf.mxu0
    %v4152 = vadd.f32 %v4039, %v4151
    %4153 = vmatprep.mubr.bf16.mxu0 %v2793
    %4154 = vmatmul.mubr.bf16.gmra.mxu0 %v2792
    %v4155 = vpop.f32.mrf.mxu0
    %v4156 = vadd.f32 %v4043, %v4155
    %v4157 = vpop.f32.mrf.mxu0
    %v4158 = vadd.f32 %v4045, %v4157
    %v4159 = vpop.f32.mrf.mxu0
    %v4160 = vadd.f32 %v4047, %v4159
    %v4161 = vpop.f32.mrf.mxu0
    %v4162 = vadd.f32 %v4049, %v4161
    %4163 = vmatprep.mubr.bf16.mxu0 %v2800
    %4164 = vmatmul.mubr.bf16.gmra.mxu0 %v2799
    %v4165 = vpop.f32.mrf.mxu0
    %v4166 = vadd.f32 %v4053, %v4165
    %v4167 = vpop.f32.mrf.mxu0
    %v4168 = vadd.f32 %v4055, %v4167
    %v4169 = vpop.f32.mrf.mxu0
    %v4170 = vadd.f32 %v4057, %v4169
    %v4171 = vpop.f32.mrf.mxu0
    %v4172 = vadd.f32 %v4059, %v4171
    %4173 = vmatprep.mubr.bf16.mxu0 %v2807
    %4174 = vmatmul.mubr.bf16.gmra.mxu0 %v2806
    %v4175 = vpop.f32.mrf.mxu0
    %v4176 = vadd.f32 %v4063, %v4175
    %v4177 = vpop.f32.mrf.mxu0
    %v4178 = vadd.f32 %v4065, %v4177
    %v4179 = vpop.f32.mrf.mxu0
    %v4180 = vadd.f32 %v4067, %v4179
    %v4181 = vpop.f32.mrf.mxu0
    %v4182 = vadd.f32 %v4069, %v4181
    %4183 = vmatprep.mubr.bf16.mxu0 %v2814
    %4184 = vmatmul.mubr.bf16.gmra.mxu0 %v2813
    %v4185 = vpop.f32.mrf.mxu0
    %v4186 = vadd.f32 %v4073, %v4185
    %v4187 = vpop.f32.mrf.mxu0
    %v4188 = vadd.f32 %v4075, %v4187
    %v4189 = vpop.f32.mrf.mxu0
    %v4190 = vadd.f32 %v4077, %v4189
    %v4191 = vpop.f32.mrf.mxu0
    %v4192 = vadd.f32 %v4079, %v4191
    %4193 = vmatprep.mubr.bf16.mxu0 %v2821
    %4194 = vmatmul.mubr.bf16.gmra.mxu0 %v2820
    %v4195 = vpop.f32.mrf.mxu0
    %v4196 = vadd.f32 %v4083, %v4195
    %v4197 = vpop.f32.mrf.mxu0
    %v4198 = vadd.f32 %v4085, %v4197
    %v4199 = vpop.f32.mrf.mxu0
    %v4200 = vadd.f32 %v4087, %v4199
    %v4201 = vpop.f32.mrf.mxu0
    %v4202 = vadd.f32 %v4089, %v4201
    %4203 = vdwg.mxu0
    %4204 = vmatprep.subr.bf16.mxu0 0
    %4205 = vmatpush1.bf16.msra.mxu0 0
    %4206 = vmatprep.subr.bf16.mxu0 0
    %4207 = vmatpush1.bf16.msra.mxu0 0
    %4208 = vmatprep.subr.bf16.mxu0 0
    %4209 = vmatpush1.bf16.msra.mxu0 0
    %4210 = vmatprep.subr.bf16.mxu0 0
    %4211 = vmatpush1.bf16.msra.mxu0 0
    %4212 = vmatprep.subr.bf16.mxu0 0
    %4213 = vmatpush1.bf16.msra.mxu0 0
    %4214 = vmatprep.subr.bf16.mxu0 0
    %4215 = vmatpush1.bf16.msra.mxu0 0
    %4216 = vmatprep.subr.bf16.mxu0 %v3688
    %4217 = vmatpush1.bf16.msra.mxu0 %v3687
    %4218 = vmatprep.subr.bf16.mxu0 %v3685
    %4219 = vmatpush1.bf16.msra.mxu0 %v3684
    %4220 = vmatprep.subr.bf16.mxu0 0
    %4221 = vmatpush2.bf16.msra.mxu0 0
    %4222 = vmatprep.subr.bf16.mxu0 0
    %4223 = vmatpush2.bf16.msra.mxu0 0
    %4224 = vmatprep.subr.bf16.mxu0 0
    %4225 = vmatpush2.bf16.msra.mxu0 0
    %4226 = vmatprep.subr.bf16.mxu0 0
    %4227 = vmatpush2.bf16.msra.mxu0 0
    %4228 = vmatprep.subr.bf16.mxu0 0
    %4229 = vmatpush2.bf16.msra.mxu0 0
    %4230 = vmatprep.subr.bf16.mxu0 0
    %4231 = vmatpush2.bf16.msra.mxu0 0
    %4232 = vmatprep.subr.bf16.mxu0 0
    %4233 = vmatpush2.bf16.msra.mxu0 0
    %4234 = vmatprep.subr.bf16.mxu0 0
    %4235 = vmatpush2.bf16.msra.mxu0 0
    %4236 = vmatprep.mubr.bf16.mxu0 0
    %4237 = vmatmul.mubr.bf16.gmra.mxu0 %v3842
    %v4238 = vpop.f32.mrf.mxu0
    %v4239 = vadd.f32 %v4126, %v4238
    %v4240 = vpop.f32.mrf.mxu0
    %v4241 = vadd.f32 %v4128, %v4240
    %v4242 = vpop.f32.mrf.mxu0
    %v4243 = vadd.f32 %v4130, %v4242
    %v4244 = vpop.f32.mrf.mxu0
    %v4245 = vadd.f32 %v4132, %v4244
    %4246 = vmatprep.mubr.bf16.mxu0 0
    %4247 = vmatmul.mubr.bf16.gmra.mxu0 %v3845
    %v4248 = vpop.f32.mrf.mxu0
    %v4249 = vadd.f32 %v4136, %v4248
    %v4250 = vpop.f32.mrf.mxu0
    %v4251 = vadd.f32 %v4138, %v4250
    %v4252 = vpop.f32.mrf.mxu0
    %v4253 = vadd.f32 %v4140, %v4252
    %v4254 = vpop.f32.mrf.mxu0
    %v4255 = vadd.f32 %v4142, %v4254
    %4256 = vmatprep.mubr.bf16.mxu0 0
    %4257 = vmatmul.mubr.bf16.gmra.mxu0 %v3848
    %v4258 = vpop.f32.mrf.mxu0
    %v4259 = vadd.f32 %v4146, %v4258
    %v4260 = vpop.f32.mrf.mxu0
    %v4261 = vadd.f32 %v4148, %v4260
    %v4262 = vpop.f32.mrf.mxu0
    %v4263 = vadd.f32 %v4150, %v4262
    %v4264 = vpop.f32.mrf.mxu0
    %v4265 = vadd.f32 %v4152, %v4264
    %4266 = vmatprep.mubr.bf16.mxu0 0
    %4267 = vmatmul.mubr.bf16.gmra.mxu0 %v3851
    %v4268 = vpop.f32.mrf.mxu0
    %v4269 = vadd.f32 %v4156, %v4268
    %v4270 = vpop.f32.mrf.mxu0
    %v4271 = vadd.f32 %v4158, %v4270
    %v4272 = vpop.f32.mrf.mxu0
    %v4273 = vadd.f32 %v4160, %v4272
    %v4274 = vpop.f32.mrf.mxu0
    %v4275 = vadd.f32 %v4162, %v4274
    %4276 = vmatprep.mubr.bf16.mxu0 0
    %4277 = vmatmul.mubr.bf16.gmra.mxu0 %v3854
    %v4278 = vpop.f32.mrf.mxu0
    %v4279 = vadd.f32 %v4166, %v4278
    %v4280 = vpop.f32.mrf.mxu0
    %v4281 = vadd.f32 %v4168, %v4280
    %v4282 = vpop.f32.mrf.mxu0
    %v4283 = vadd.f32 %v4170, %v4282
    %v4284 = vpop.f32.mrf.mxu0
    %v4285 = vadd.f32 %v4172, %v4284
    %4286 = vmatprep.mubr.bf16.mxu0 0
    %4287 = vmatmul.mubr.bf16.gmra.mxu0 %v3857
    %v4288 = vpop.f32.mrf.mxu0
    %v4289 = vadd.f32 %v4176, %v4288
    %v4290 = vpop.f32.mrf.mxu0
    %v4291 = vadd.f32 %v4178, %v4290
    %v4292 = vpop.f32.mrf.mxu0
    %v4293 = vadd.f32 %v4180, %v4292
    %v4294 = vpop.f32.mrf.mxu0
    %v4295 = vadd.f32 %v4182, %v4294
    %4296 = vmatprep.mubr.bf16.mxu0 0
    %4297 = vmatmul.mubr.bf16.gmra.mxu0 %v3860
    %v4298 = vpop.f32.mrf.mxu0
    %v4299 = vadd.f32 %v4186, %v4298
    %v4300 = vpop.f32.mrf.mxu0
    %v4301 = vadd.f32 %v4188, %v4300
    %v4302 = vpop.f32.mrf.mxu0
    %v4303 = vadd.f32 %v4190, %v4302
    %v4304 = vpop.f32.mrf.mxu0
    %v4305 = vadd.f32 %v4192, %v4304
    %4306 = vmatprep.mubr.bf16.mxu0 0
    %4307 = vmatmul.mubr.bf16.gmra.mxu0 %v3863
    %v4308 = vpop.f32.mrf.mxu0
    %v4309 = vadd.f32 %v4196, %v4308
    %v4310 = vpop.f32.mrf.mxu0
    %v4311 = vadd.f32 %v4198, %v4310
    %v4312 = vpop.f32.mrf.mxu0
    %v4313 = vadd.f32 %v4200, %v4312
    %v4314 = vpop.f32.mrf.mxu0
    %v4315 = vadd.f32 %v4202, %v4314
    %4316 = vdwg.mxu0
    %4317 = vmatprep.subr.bf16.mxu0 0
    %4318 = vmatpush1.bf16.msra.mxu0 %v3563
    %4319 = vmatprep.subr.bf16.mxu0 0
    %4320 = vmatpush1.bf16.msra.mxu0 %v3560
    %4321 = vmatprep.subr.bf16.mxu0 0
    %4322 = vmatpush1.bf16.msra.mxu0 %v3557
    %4323 = vmatprep.subr.bf16.mxu0 0
    %4324 = vmatpush1.bf16.msra.mxu0 %v3554
    %4325 = vmatprep.subr.bf16.mxu0 0
    %4326 = vmatpush1.bf16.msra.mxu0 %v3551
    %4327 = vmatprep.subr.bf16.mxu0 0
    %4328 = vmatpush1.bf16.msra.mxu0 %v3548
    %4329 = vmatprep.subr.bf16.mxu0 0
    %4330 = vmatpush1.bf16.msra.mxu0 %v3545
    %4331 = vmatprep.subr.bf16.mxu0 0
    %4332 = vmatpush1.bf16.msra.mxu0 %v3542
    %4333 = vmatprep.subr.bf16.mxu0 0
    %4334 = vmatpush2.bf16.msra.mxu0 %v3587
    %4335 = vmatprep.subr.bf16.mxu0 0
    %4336 = vmatpush2.bf16.msra.mxu0 %v3584
    %4337 = vmatprep.subr.bf16.mxu0 0
    %4338 = vmatpush2.bf16.msra.mxu0 %v3581
    %4339 = vmatprep.subr.bf16.mxu0 0
    %4340 = vmatpush2.bf16.msra.mxu0 %v3578
    %4341 = vmatprep.subr.bf16.mxu0 0
    %4342 = vmatpush2.bf16.msra.mxu0 %v3575
    %4343 = vmatprep.subr.bf16.mxu0 0
    %4344 = vmatpush2.bf16.msra.mxu0 %v3572
    %4345 = vmatprep.subr.bf16.mxu0 0
    %4346 = vmatpush2.bf16.msra.mxu0 %v3569
    %4347 = vmatprep.subr.bf16.mxu0 0
    %4348 = vmatpush2.bf16.msra.mxu0 %v3566
    %4349 = vmatprep.mubr.bf16.mxu0 %v2768
    %4350 = vmatmul.mubr.bf16.gmra.mxu0 %v2767
    %v4351 = vpop.f32.mrf.mxu0
    %v4352 = vadd.f32 %v3036, %v4351
    %v4353 = vpop.f32.mrf.mxu0
    %v4354 = vpop.f32.mrf.mxu0
    %v4355 = vadd.f32 %v3036, %v4354
    %v4356 = vpop.f32.mrf.mxu0
    %4357 = vmatprep.mubr.bf16.mxu0 %v2775
    %4358 = vmatmul.mubr.bf16.gmra.mxu0 %v2774
    %v4359 = vpop.f32.mrf.mxu0
    %v4360 = vadd.f32 %v3036, %v4359
    %v4361 = vpop.f32.mrf.mxu0
    %v4362 = vpop.f32.mrf.mxu0
    %v4363 = vadd.f32 %v3036, %v4362
    %v4364 = vpop.f32.mrf.mxu0
    %4365 = vmatprep.mubr.bf16.mxu0 %v2782
    %4366 = vmatmul.mubr.bf16.gmra.mxu0 %v2781
    %v4367 = vpop.f32.mrf.mxu0
    %v4368 = vadd.f32 %v3036, %v4367
    %v4369 = vpop.f32.mrf.mxu0
    %v4370 = vpop.f32.mrf.mxu0
    %v4371 = vadd.f32 %v3036, %v4370
    %v4372 = vpop.f32.mrf.mxu0
    %4373 = vmatprep.mubr.bf16.mxu0 %v2789
    %4374 = vmatmul.mubr.bf16.gmra.mxu0 %v2788
    %v4375 = vpop.f32.mrf.mxu0
    %v4376 = vadd.f32 %v3036, %v4375
    %v4377 = vpop.f32.mrf.mxu0
    %v4378 = vpop.f32.mrf.mxu0
    %v4379 = vadd.f32 %v3036, %v4378
    %v4380 = vpop.f32.mrf.mxu0
    %4381 = vmatprep.mubr.bf16.mxu0 %v2796
    %4382 = vmatmul.mubr.bf16.gmra.mxu0 %v2795
    %v4383 = vpop.f32.mrf.mxu0
    %v4384 = vadd.f32 %v3036, %v4383
    %v4385 = vpop.f32.mrf.mxu0
    %v4386 = vpop.f32.mrf.mxu0
    %v4387 = vadd.f32 %v3036, %v4386
    %v4388 = vpop.f32.mrf.mxu0
    %4389 = vmatprep.mubr.bf16.mxu0 %v2803
    %4390 = vmatmul.mubr.bf16.gmra.mxu0 %v2802
    %v4391 = vpop.f32.mrf.mxu0
    %v4392 = vadd.f32 %v3036, %v4391
    %v4393 = vpop.f32.mrf.mxu0
    %v4394 = vpop.f32.mrf.mxu0
    %v4395 = vadd.f32 %v3036, %v4394
    %v4396 = vpop.f32.mrf.mxu0
    %4397 = vmatprep.mubr.bf16.mxu0 %v2810
    %4398 = vmatmul.mubr.bf16.gmra.mxu0 %v2809
    %v4399 = vpop.f32.mrf.mxu0
    %v4400 = vadd.f32 %v3036, %v4399
    %v4401 = vpop.f32.mrf.mxu0
    %v4402 = vpop.f32.mrf.mxu0
    %v4403 = vadd.f32 %v3036, %v4402
    %v4404 = vpop.f32.mrf.mxu0
    %4405 = vmatprep.mubr.bf16.mxu0 %v2817
    %4406 = vmatmul.mubr.bf16.gmra.mxu0 %v2816
    %v4407 = vpop.f32.mrf.mxu0
    %v4408 = vadd.f32 %v3036, %v4407
    %v4409 = vpop.f32.mrf.mxu0
    %v4410 = vpop.f32.mrf.mxu0
    %v4411 = vadd.f32 %v3036, %v4410
    %v4412 = vpop.f32.mrf.mxu0
    %4413 = vdwg.mxu0
    %4414 = vmatprep.subr.bf16.mxu0 0
    %4415 = vmatpush1.bf16.msra.mxu0 %v3611
    %4416 = vmatprep.subr.bf16.mxu0 0
    %4417 = vmatpush1.bf16.msra.mxu0 %v3608
    %4418 = vmatprep.subr.bf16.mxu0 0
    %4419 = vmatpush1.bf16.msra.mxu0 %v3605
    %4420 = vmatprep.subr.bf16.mxu0 0
    %4421 = vmatpush1.bf16.msra.mxu0 %v3602
    %4422 = vmatprep.subr.bf16.mxu0 0
    %4423 = vmatpush1.bf16.msra.mxu0 %v3599
    %4424 = vmatprep.subr.bf16.mxu0 0
    %4425 = vmatpush1.bf16.msra.mxu0 %v3596
    %4426 = vmatprep.subr.bf16.mxu0 0
    %4427 = vmatpush1.bf16.msra.mxu0 %v3593
    %4428 = vmatprep.subr.bf16.mxu0 0
    %4429 = vmatpush1.bf16.msra.mxu0 %v3590
    %4430 = vmatprep.subr.bf16.mxu0 0
    %4431 = vmatpush2.bf16.msra.mxu0 %v3635
    %4432 = vmatprep.subr.bf16.mxu0 0
    %4433 = vmatpush2.bf16.msra.mxu0 %v3632
    %4434 = vmatprep.subr.bf16.mxu0 0
    %4435 = vmatpush2.bf16.msra.mxu0 %v3629
    %4436 = vmatprep.subr.bf16.mxu0 0
    %4437 = vmatpush2.bf16.msra.mxu0 %v3626
    %4438 = vmatprep.subr.bf16.mxu0 0
    %4439 = vmatpush2.bf16.msra.mxu0 %v3623
    %4440 = vmatprep.subr.bf16.mxu0 0
    %4441 = vmatpush2.bf16.msra.mxu0 %v3620
    %4442 = vmatprep.subr.bf16.mxu0 0
    %4443 = vmatpush2.bf16.msra.mxu0 %v3617
    %4444 = vmatprep.subr.bf16.mxu0 0
    %4445 = vmatpush2.bf16.msra.mxu0 %v3614
    %4446 = vmatprep.mubr.bf16.mxu0 %v2770
    %4447 = vmatmul.mubr.bf16.gmra.mxu0 %v2769
    %v4448 = vpop.f32.mrf.mxu0
    %v4449 = vadd.f32 %v4352, %v4448
    %v4450 = vpop.f32.mrf.mxu0
    %v4451 = vpop.f32.mrf.mxu0
    %v4452 = vadd.f32 %v4355, %v4451
    %v4453 = vpop.f32.mrf.mxu0
    %4454 = vmatprep.mubr.bf16.mxu0 %v2777
    %4455 = vmatmul.mubr.bf16.gmra.mxu0 %v2776
    %v4456 = vpop.f32.mrf.mxu0
    %v4457 = vadd.f32 %v4360, %v4456
    %v4458 = vpop.f32.mrf.mxu0
    %v4459 = vpop.f32.mrf.mxu0
    %v4460 = vadd.f32 %v4363, %v4459
    %v4461 = vpop.f32.mrf.mxu0
    %4462 = vmatprep.mubr.bf16.mxu0 %v2784
    %4463 = vmatmul.mubr.bf16.gmra.mxu0 %v2783
    %v4464 = vpop.f32.mrf.mxu0
    %v4465 = vadd.f32 %v4368, %v4464
    %v4466 = vpop.f32.mrf.mxu0
    %v4467 = vpop.f32.mrf.mxu0
    %v4468 = vadd.f32 %v4371, %v4467
    %v4469 = vpop.f32.mrf.mxu0
    %4470 = vmatprep.mubr.bf16.mxu0 %v2791
    %4471 = vmatmul.mubr.bf16.gmra.mxu0 %v2790
    %v4472 = vpop.f32.mrf.mxu0
    %v4473 = vadd.f32 %v4376, %v4472
    %v4474 = vpop.f32.mrf.mxu0
    %v4475 = vpop.f32.mrf.mxu0
    %v4476 = vadd.f32 %v4379, %v4475
    %v4477 = vpop.f32.mrf.mxu0
    %4478 = vmatprep.mubr.bf16.mxu0 %v2798
    %4479 = vmatmul.mubr.bf16.gmra.mxu0 %v2797
    %v4480 = vpop.f32.mrf.mxu0
    %v4481 = vadd.f32 %v4384, %v4480
    %v4482 = vpop.f32.mrf.mxu0
    %v4483 = vpop.f32.mrf.mxu0
    %v4484 = vadd.f32 %v4387, %v4483
    %v4485 = vpop.f32.mrf.mxu0
    %4486 = vmatprep.mubr.bf16.mxu0 %v2805
    %4487 = vmatmul.mubr.bf16.gmra.mxu0 %v2804
    %v4488 = vpop.f32.mrf.mxu0
    %v4489 = vadd.f32 %v4392, %v4488
    %v4490 = vpop.f32.mrf.mxu0
    %v4491 = vpop.f32.mrf.mxu0
    %v4492 = vadd.f32 %v4395, %v4491
    %v4493 = vpop.f32.mrf.mxu0
    %4494 = vmatprep.mubr.bf16.mxu0 %v2812
    %4495 = vmatmul.mubr.bf16.gmra.mxu0 %v2811
    %v4496 = vpop.f32.mrf.mxu0
    %v4497 = vadd.f32 %v4400, %v4496
    %v4498 = vpop.f32.mrf.mxu0
    %v4499 = vpop.f32.mrf.mxu0
    %v4500 = vadd.f32 %v4403, %v4499
    %v4501 = vpop.f32.mrf.mxu0
    %4502 = vmatprep.mubr.bf16.mxu0 %v2819
    %4503 = vmatmul.mubr.bf16.gmra.mxu0 %v2818
    %v4504 = vpop.f32.mrf.mxu0
    %v4505 = vadd.f32 %v4408, %v4504
    %v4506 = vpop.f32.mrf.mxu0
    %v4507 = vpop.f32.mrf.mxu0
    %v4508 = vadd.f32 %v4411, %v4507
    %v4509 = vpop.f32.mrf.mxu0
    %4510 = vdwg.mxu0
    %4511 = vmatprep.subr.bf16.mxu0 0
    %4512 = vmatpush1.bf16.msra.mxu0 %v3659
    %4513 = vmatprep.subr.bf16.mxu0 0
    %4514 = vmatpush1.bf16.msra.mxu0 %v3656
    %4515 = vmatprep.subr.bf16.mxu0 0
    %4516 = vmatpush1.bf16.msra.mxu0 %v3653
    %4517 = vmatprep.subr.bf16.mxu0 0
    %4518 = vmatpush1.bf16.msra.mxu0 %v3650
    %4519 = vmatprep.subr.bf16.mxu0 0
    %4520 = vmatpush1.bf16.msra.mxu0 %v3647
    %4521 = vmatprep.subr.bf16.mxu0 0
    %4522 = vmatpush1.bf16.msra.mxu0 %v3644
    %4523 = vmatprep.subr.bf16.mxu0 0
    %4524 = vmatpush1.bf16.msra.mxu0 %v3641
    %4525 = vmatprep.subr.bf16.mxu0 0
    %4526 = vmatpush1.bf16.msra.mxu0 %v3638
    %4527 = vmatprep.subr.bf16.mxu0 0
    %4528 = vmatpush2.bf16.msra.mxu0 %v3683
    %4529 = vmatprep.subr.bf16.mxu0 0
    %4530 = vmatpush2.bf16.msra.mxu0 %v3680
    %4531 = vmatprep.subr.bf16.mxu0 0
    %4532 = vmatpush2.bf16.msra.mxu0 %v3677
    %4533 = vmatprep.subr.bf16.mxu0 0
    %4534 = vmatpush2.bf16.msra.mxu0 %v3674
    %4535 = vmatprep.subr.bf16.mxu0 0
    %4536 = vmatpush2.bf16.msra.mxu0 %v3671
    %4537 = vmatprep.subr.bf16.mxu0 0
    %4538 = vmatpush2.bf16.msra.mxu0 %v3668
    %4539 = vmatprep.subr.bf16.mxu0 0
    %4540 = vmatpush2.bf16.msra.mxu0 %v3665
    %4541 = vmatprep.subr.bf16.mxu0 0
    %4542 = vmatpush2.bf16.msra.mxu0 %v3662
    %4543 = vmatprep.mubr.bf16.mxu0 %v2772
    %4544 = vmatmul.mubr.bf16.gmra.mxu0 %v2771
    %v4545 = vpop.f32.mrf.mxu0
    %v4546 = vadd.f32 %v4449, %v4545
    %v4547 = vpop.f32.mrf.mxu0
    %v4548 = vpop.f32.mrf.mxu0
    %v4549 = vadd.f32 %v4452, %v4548
    %v4550 = vpop.f32.mrf.mxu0
    %4551 = vmatprep.mubr.bf16.mxu0 %v2779
    %4552 = vmatmul.mubr.bf16.gmra.mxu0 %v2778
    %v4553 = vpop.f32.mrf.mxu0
    %v4554 = vadd.f32 %v4457, %v4553
    %v4555 = vpop.f32.mrf.mxu0
    %v4556 = vpop.f32.mrf.mxu0
    %v4557 = vadd.f32 %v4460, %v4556
    %v4558 = vpop.f32.mrf.mxu0
    %4559 = vmatprep.mubr.bf16.mxu0 %v2786
    %4560 = vmatmul.mubr.bf16.gmra.mxu0 %v2785
    %v4561 = vpop.f32.mrf.mxu0
    %v4562 = vadd.f32 %v4465, %v4561
    %v4563 = vpop.f32.mrf.mxu0
    %v4564 = vpop.f32.mrf.mxu0
    %v4565 = vadd.f32 %v4468, %v4564
    %v4566 = vpop.f32.mrf.mxu0
    %4567 = vmatprep.mubr.bf16.mxu0 %v2793
    %4568 = vmatmul.mubr.bf16.gmra.mxu0 %v2792
    %v4569 = vpop.f32.mrf.mxu0
    %v4570 = vadd.f32 %v4473, %v4569
    %v4571 = vpop.f32.mrf.mxu0
    %v4572 = vpop.f32.mrf.mxu0
    %v4573 = vadd.f32 %v4476, %v4572
    %v4574 = vpop.f32.mrf.mxu0
    %4575 = vmatprep.mubr.bf16.mxu0 %v2800
    %4576 = vmatmul.mubr.bf16.gmra.mxu0 %v2799
    %v4577 = vpop.f32.mrf.mxu0
    %v4578 = vadd.f32 %v4481, %v4577
    %v4579 = vpop.f32.mrf.mxu0
    %v4580 = vpop.f32.mrf.mxu0
    %v4581 = vadd.f32 %v4484, %v4580
    %v4582 = vpop.f32.mrf.mxu0
    %4583 = vmatprep.mubr.bf16.mxu0 %v2807
    %4584 = vmatmul.mubr.bf16.gmra.mxu0 %v2806
    %v4585 = vpop.f32.mrf.mxu0
    %v4586 = vadd.f32 %v4489, %v4585
    %v4587 = vpop.f32.mrf.mxu0
    %v4588 = vpop.f32.mrf.mxu0
    %v4589 = vadd.f32 %v4492, %v4588
    %v4590 = vpop.f32.mrf.mxu0
    %4591 = vmatprep.mubr.bf16.mxu0 %v2814
    %4592 = vmatmul.mubr.bf16.gmra.mxu0 %v2813
    %v4593 = vpop.f32.mrf.mxu0
    %v4594 = vadd.f32 %v4497, %v4593
    %v4595 = vpop.f32.mrf.mxu0
    %v4596 = vpop.f32.mrf.mxu0
    %v4597 = vadd.f32 %v4500, %v4596
    %v4598 = vpop.f32.mrf.mxu0
    %4599 = vmatprep.mubr.bf16.mxu0 %v2821
    %4600 = vmatmul.mubr.bf16.gmra.mxu0 %v2820
    %v4601 = vpop.f32.mrf.mxu0
    %v4602 = vadd.f32 %v4505, %v4601
    %v4603 = vpop.f32.mrf.mxu0
    %v4604 = vpop.f32.mrf.mxu0
    %v4605 = vadd.f32 %v4508, %v4604
    %v4606 = vpop.f32.mrf.mxu0
    %4607 = vdwg.mxu0
    %4608 = vmatprep.subr.bf16.mxu0 0
    %4609 = vmatpush1.bf16.msra.mxu0 0
    %4610 = vmatprep.subr.bf16.mxu0 0
    %4611 = vmatpush1.bf16.msra.mxu0 0
    %4612 = vmatprep.subr.bf16.mxu0 0
    %4613 = vmatpush1.bf16.msra.mxu0 0
    %4614 = vmatprep.subr.bf16.mxu0 0
    %4615 = vmatpush1.bf16.msra.mxu0 0
    %4616 = vmatprep.subr.bf16.mxu0 0
    %4617 = vmatpush1.bf16.msra.mxu0 0
    %4618 = vmatprep.subr.bf16.mxu0 0
    %4619 = vmatpush1.bf16.msra.mxu0 0
    %4620 = vmatprep.subr.bf16.mxu0 0
    %4621 = vmatpush1.bf16.msra.mxu0 %v3689
    %4622 = vmatprep.subr.bf16.mxu0 0
    %4623 = vmatpush1.bf16.msra.mxu0 %v3686
    %4624 = vmatprep.subr.bf16.mxu0 0
    %4625 = vmatpush2.bf16.msra.mxu0 0
    %4626 = vmatprep.subr.bf16.mxu0 0
    %4627 = vmatpush2.bf16.msra.mxu0 0
    %4628 = vmatprep.subr.bf16.mxu0 0
    %4629 = vmatpush2.bf16.msra.mxu0 0
    %4630 = vmatprep.subr.bf16.mxu0 0
    %4631 = vmatpush2.bf16.msra.mxu0 0
    %4632 = vmatprep.subr.bf16.mxu0 0
    %4633 = vmatpush2.bf16.msra.mxu0 0
    %4634 = vmatprep.subr.bf16.mxu0 0
    %4635 = vmatpush2.bf16.msra.mxu0 0
    %4636 = vmatprep.subr.bf16.mxu0 0
    %4637 = vmatpush2.bf16.msra.mxu0 0
    %4638 = vmatprep.subr.bf16.mxu0 0
    %4639 = vmatpush2.bf16.msra.mxu0 0
    %4640 = vmatprep.mubr.bf16.mxu0 0
    %4641 = vmatmul.mubr.bf16.gmra.mxu0 %v3842
    %v4642 = vpop.f32.mrf.mxu0
    %v4643 = vadd.f32 %v4546, %v4642
    %v4644 = vpop.f32.mrf.mxu0
    %v4645 = vpop.f32.mrf.mxu0
    %v4646 = vadd.f32 %v4549, %v4645
    %v4647 = vpop.f32.mrf.mxu0
    %4648 = vmatprep.mubr.bf16.mxu0 0
    %4649 = vmatmul.mubr.bf16.gmra.mxu0 %v3845
    %v4650 = vpop.f32.mrf.mxu0
    %v4651 = vadd.f32 %v4554, %v4650
    %v4652 = vpop.f32.mrf.mxu0
    %v4653 = vpop.f32.mrf.mxu0
    %v4654 = vadd.f32 %v4557, %v4653
    %v4655 = vpop.f32.mrf.mxu0
    %4656 = vmatprep.mubr.bf16.mxu0 0
    %4657 = vmatmul.mubr.bf16.gmra.mxu0 %v3848
    %v4658 = vpop.f32.mrf.mxu0
    %v4659 = vadd.f32 %v4562, %v4658
    %v4660 = vpop.f32.mrf.mxu0
    %v4661 = vpop.f32.mrf.mxu0
    %v4662 = vadd.f32 %v4565, %v4661
    %v4663 = vpop.f32.mrf.mxu0
    %4664 = vmatprep.mubr.bf16.mxu0 0
    %4665 = vmatmul.mubr.bf16.gmra.mxu0 %v3851
    %v4666 = vpop.f32.mrf.mxu0
    %v4667 = vadd.f32 %v4570, %v4666
    %v4668 = vpop.f32.mrf.mxu0
    %v4669 = vpop.f32.mrf.mxu0
    %v4670 = vadd.f32 %v4573, %v4669
    %v4671 = vpop.f32.mrf.mxu0
    %4672 = vmatprep.mubr.bf16.mxu0 0
    %4673 = vmatmul.mubr.bf16.gmra.mxu0 %v3854
    %v4674 = vpop.f32.mrf.mxu0
    %v4675 = vadd.f32 %v4578, %v4674
    %v4676 = vpop.f32.mrf.mxu0
    %v4677 = vpop.f32.mrf.mxu0
    %v4678 = vadd.f32 %v4581, %v4677
    %v4679 = vpop.f32.mrf.mxu0
    %4680 = vmatprep.mubr.bf16.mxu0 0
    %4681 = vmatmul.mubr.bf16.gmra.mxu0 %v3857
    %v4682 = vpop.f32.mrf.mxu0
    %v4683 = vadd.f32 %v4586, %v4682
    %v4684 = vpop.f32.mrf.mxu0
    %v4685 = vpop.f32.mrf.mxu0
    %v4686 = vadd.f32 %v4589, %v4685
    %v4687 = vpop.f32.mrf.mxu0
    %4688 = vmatprep.mubr.bf16.mxu0 0
    %4689 = vmatmul.mubr.bf16.gmra.mxu0 %v3860
    %v4690 = vpop.f32.mrf.mxu0
    %v4691 = vadd.f32 %v4594, %v4690
    %v4692 = vpop.f32.mrf.mxu0
    %v4693 = vpop.f32.mrf.mxu0
    %v4694 = vadd.f32 %v4597, %v4693
    %v4695 = vpop.f32.mrf.mxu0
    %4696 = vmatprep.mubr.bf16.mxu0 0
    %4697 = vmatmul.mubr.bf16.gmra.mxu0 %v3863
    %v4698 = vpop.f32.mrf.mxu0
    %v4699 = vadd.f32 %v4602, %v4698
    %v4700 = vpop.f32.mrf.mxu0
    %v4701 = vpop.f32.mrf.mxu0
    %v4702 = vadd.f32 %v4605, %v4701
    %v4703 = vpop.f32.mrf.mxu0
    %4704 = vdwg.mxu0
    %v4705 = vmax.f32 %v4239, 0.0
    %v4706 = vmax.f32 %v4241, 0.0
    %v4707 = vmax.f32 %v4643, 0.0
    %v4708 = vmax.f32 %v4243, 0.0
    %v4709 = vmax.f32 %v4245, 0.0
    %v4710 = vmax.f32 %v4646, 0.0
    %v4711 = vmax.f32 %v4249, 0.0
    %v4712 = vmax.f32 %v4251, 0.0
    %v4713 = vmax.f32 %v4651, 0.0
    %v4714 = vmax.f32 %v4253, 0.0
    %v4715 = vmax.f32 %v4255, 0.0
    %v4716 = vmax.f32 %v4654, 0.0
    %v4717 = vmax.f32 %v4259, 0.0
    %v4718 = vmax.f32 %v4261, 0.0
    %v4719 = vmax.f32 %v4659, 0.0
    %v4720 = vmax.f32 %v4263, 0.0
    %v4721 = vmax.f32 %v4265, 0.0
    %v4722 = vmax.f32 %v4662, 0.0
    %v4723 = vmax.f32 %v4269, 0.0
    %v4724 = vmax.f32 %v4271, 0.0
    %v4725 = vmax.f32 %v4667, 0.0
    %v4726 = vmax.f32 %v4273, 0.0
    %v4727 = vmax.f32 %v4275, 0.0
    %v4728 = vmax.f32 %v4670, 0.0
    %v4729 = vmax.f32 %v4279, 0.0
    %v4730 = vmax.f32 %v4281, 0.0
    %v4731 = vmax.f32 %v4675, 0.0
    %v4732 = vmax.f32 %v4283, 0.0
    %v4733 = vmax.f32 %v4285, 0.0
    %v4734 = vmax.f32 %v4678, 0.0
    %v4735 = vmax.f32 %v4289, 0.0
    %v4736 = vmax.f32 %v4291, 0.0
    %v4737 = vmax.f32 %v4683, 0.0
    %v4738 = vmax.f32 %v4293, 0.0
    %v4739 = vmax.f32 %v4295, 0.0
    %v4740 = vmax.f32 %v4686, 0.0
    %v4741 = vmax.f32 %v4299, 0.0
    %v4742 = vmax.f32 %v4301, 0.0
    %v4743 = vmax.f32 %v4691, 0.0
    %v4744 = vmax.f32 %v4303, 0.0
    %v4745 = vmax.f32 %v4305, 0.0
    %v4746 = vmax.f32 %v4694, 0.0
    %v4747 = vmax.f32 %v4309, 0.0
    %v4748 = vmax.f32 %v4311, 0.0
    %v4749 = vmax.f32 %v4699, 0.0
    %v4750 = vmax.f32 %v4313, 0.0
    %v4751 = vmax.f32 %v4315, 0.0
    %v4752 = vmax.f32 %v4702, 0.0
    %v4753 = vpack.c.bf16 %v4708, %v4705
    %v4754 = vpack.c.bf16 %v4709, %v4706
    %v4755 = vpack.c.bf16 %v4710, %v4707
    %v4756 = vpack.c.bf16 %v4714, %v4711
    %v4757 = vpack.c.bf16 %v4715, %v4712
    %v4758 = vpack.c.bf16 %v4716, %v4713
    %v4759 = vpack.c.bf16 %v4720, %v4717
    %v4760 = vpack.c.bf16 %v4721, %v4718
    %v4761 = vpack.c.bf16 %v4722, %v4719
    %v4762 = vpack.c.bf16 %v4726, %v4723
    %v4763 = vpack.c.bf16 %v4727, %v4724
    %v4764 = vpack.c.bf16 %v4728, %v4725
    %v4765 = vpack.c.bf16 %v4732, %v4729
    %v4766 = vpack.c.bf16 %v4733, %v4730
    %v4767 = vpack.c.bf16 %v4734, %v4731
    %v4768 = vpack.c.bf16 %v4738, %v4735
    %v4769 = vpack.c.bf16 %v4739, %v4736
    %v4770 = vpack.c.bf16 %v4740, %v4737
    %v4771 = vpack.c.bf16 %v4744, %v4741
    %v4772 = vpack.c.bf16 %v4745, %v4742
    %v4773 = vpack.c.bf16 %v4746, %v4743
    %v4774 = vpack.c.bf16 %v4750, %v4747
    %v4775 = vpack.c.bf16 %v4751, %v4748
    %v4776 = vpack.c.bf16 %v4752, %v4749
    %v4777 = vld [vmem:[%s7] sm:$0xf]
    %v4778 = vld [vmem:[%s7 + $0x4] sm:$0xf]
    %v4779 = vld [vmem:[%s7 + $0x8] sm:$0xf]
    %v4780 = vld [vmem:[%s7 + $0xc] sm:$0xf]
    %v4781 = vld [vmem:[%s7 + $0x10] sm:$0xf]
    %v4782 = vld [vmem:[%s7 + $0x14] sm:$0xf]
    %v4783 = vld [vmem:[%s7 + $0x18] sm:$0xf]
    %v4784 = vld [vmem:[%s7 + $0x1c] sm:$0xf]
    %v4785 = vld [vmem:[%s7 + $0x20] sm:$0xf]
    %v4786 = vld [vmem:[%s7 + $0x24] sm:$0xf]
    %v4787 = vld [vmem:[%s7 + $0x28] sm:$0xf]
    %v4788 = vld [vmem:[%s7 + $0x2c] sm:$0xf]
    %v4789 = vld [vmem:[%s7 + $0x30] sm:$0xf]
    %v4790 = vld [vmem:[%s7 + $0x34] sm:$0xf]
    %v4791 = vld [vmem:[%s7 + $0x38] sm:$0xf]
    %v4792 = vld [vmem:[%s7 + $0x3c] sm:$0xf]
    %v4793 = vld [vmem:[%s7 + $0x40] sm:$0xf]
    %v4794 = vld [vmem:[%s7 + $0x44] sm:$0xf]
    %v4795 = vld [vmem:[%s7 + $0x48] sm:$0xf]
    %v4796 = vld [vmem:[%s7 + $0x4c] sm:$0xf]
    %v4797 = vld [vmem:[%s7 + $0x50] sm:$0xf]
    %v4798 = vld [vmem:[%s7 + $0x54] sm:$0xf]
    %v4799 = vld [vmem:[%s7 + $0x58] sm:$0xf]
    %v4800 = vld [vmem:[%s7 + $0x5c] sm:$0xf]
    %v4801 = vld [vmem:[%s7 + $0x60] sm:$0xf]
    %v4802 = vld [vmem:[%s7 + $0x64] sm:$0xf]
    %v4803 = vld [vmem:[%s7 + $0x68] sm:$0xf]
    %v4804 = vld [vmem:[%s7 + $0x6c] sm:$0xf]
    %v4805 = vld [vmem:[%s7 + $0x70] sm:$0xf]
    %v4806 = vld [vmem:[%s7 + $0x74] sm:$0xf]
    %v4807 = vld [vmem:[%s7 + $0x78] sm:$0xf]
    %v4808 = vld [vmem:[%s7 + $0x7c] sm:$0xf]
    %v4809 = vld [vmem:[%s7 + $0x80] sm:$0xf]
    %v4810 = vld [vmem:[%s7 + $0x84] sm:$0xf]
    %v4811 = vld [vmem:[%s7 + $0x88] sm:$0xf]
    %v4812 = vld [vmem:[%s7 + $0x8c] sm:$0xf]
    %v4813 = vld [vmem:[%s7 + $0x90] sm:$0xf]
    %v4814 = vld [vmem:[%s7 + $0x94] sm:$0x3]
    %v4815 = vld [vmem:[%s8] sm:$0x1]
    %v4817 = vlaneseq
    %v4818 = vshrl.u32 %v4817, 7
    %v4819 = vsub.s32 0, %v4818
    %v4820 = vrot.slane %v4815, %v4819
    %v4860 = vunpack.c.l.b16 %v4777
    %v4861 = vunpack.c.l.b16 %v4778
    %v4862 = vunpack.c.l.b16 %v4779
    %v4863 = vunpack.c.l.b16 %v4780
    %v4864 = vunpack.c.l.b16 %v4781
    %v4865 = vunpack.c.l.b16 %v4782
    %v4866 = vunpack.c.l.b16 %v4783
    %v4867 = vunpack.c.l.b16 %v4784
    %v4868 = vunpack.c.l.b16 %v4785
    %v4869 = vunpack.c.l.b16 %v4786
    %v4870 = vunpack.c.l.b16 %v4787
    %v4871 = vunpack.c.l.b16 %v4788
    %v4872 = vunpack.c.l.b16 %v4789
    %v4873 = vunpack.c.l.b16 %v4790
    %v4874 = vunpack.c.l.b16 %v4791
    %v4875 = vunpack.c.l.b16 %v4792
    %v4876 = vunpack.c.l.b16 %v4793
    %v4877 = vunpack.c.l.b16 %v4794
    %v4878 = vunpack.c.l.b16 %v4795
    %v4879 = vunpack.c.l.b16 %v4796
    %v4880 = vunpack.c.l.b16 %v4797
    %v4881 = vunpack.c.l.b16 %v4798
    %v4882 = vunpack.c.l.b16 %v4799
    %v4883 = vunpack.c.l.b16 %v4800
    %v4884 = vunpack.c.l.b16 %v4801
    %v4885 = vunpack.c.l.b16 %v4802
    %v4886 = vunpack.c.l.b16 %v4803
    %v4887 = vunpack.c.l.b16 %v4804
    %v4888 = vunpack.c.l.b16 %v4805
    %v4889 = vunpack.c.l.b16 %v4806
    %v4890 = vunpack.c.l.b16 %v4807
    %v4891 = vunpack.c.l.b16 %v4808
    %v4892 = vunpack.c.l.b16 %v4809
    %v4893 = vunpack.c.l.b16 %v4810
    %v4894 = vunpack.c.l.b16 %v4811
    %v4895 = vunpack.c.l.b16 %v4812
    %v4896 = vunpack.c.l.b16 %v4813
    %v4897 = vunpack.c.l.b16 %v4814
    %v4898 = vpack.c.b16 %v4861, %v4860
    %v4899 = vpack.c.b16 %v4863, %v4862
    %v4900 = vpack.c.b16 %v4865, %v4864
    %v4901 = vpack.c.b16 %v4867, %v4866
    %v4902 = vpack.c.b16 %v4869, %v4868
    %v4903 = vpack.c.b16 %v4871, %v4870
    %v4904 = vpack.c.b16 %v4873, %v4872
    %v4905 = vpack.c.b16 %v4875, %v4874
    %v4906 = vpack.c.b16 %v4877, %v4876
    %v4907 = vpack.c.b16 %v4879, %v4878
    %v4908 = vpack.c.b16 %v4881, %v4880
    %v4909 = vpack.c.b16 %v4883, %v4882
    %v4910 = vpack.c.b16 %v4885, %v4884
    %v4911 = vpack.c.b16 %v4887, %v4886
    %v4912 = vpack.c.b16 %v4889, %v4888
    %v4913 = vpack.c.b16 %v4891, %v4890
    %v4914 = vpack.c.b16 %v4893, %v4892
    %v4915 = vpack.c.b16 %v4895, %v4894
    %v4916 = vpack.c.b16 %v4897, %v4896
    %vm4935 = vcmask 359424
    %v4937 = vsel %vm4935, %v4755, 0
    %v4940 = vsel %vm4935, %v4758, 0
    %v4943 = vsel %vm4935, %v4761, 0
    %v4946 = vsel %vm4935, %v4764, 0
    %v4949 = vsel %vm4935, %v4767, 0
    %v4952 = vsel %vm4935, %v4770, 0
    %v4955 = vsel %vm4935, %v4773, 0
    %v4958 = vsel %vm4935, %v4776, 0
    %vm4960 = vcmask 1045504
    %v4962 = vsel %vm4960, %v4916, 0
    %4964 = vmatprep.subr.bf16.mxu0 0
    %4965 = vmatpush1.bf16.msra.mxu0 %v4905
    %4966 = vmatprep.subr.bf16.mxu0 0
    %4967 = vmatpush1.bf16.msra.mxu0 %v4904
    %4968 = vmatprep.subr.bf16.mxu0 0
    %4969 = vmatpush1.bf16.msra.mxu0 %v4903
    %4970 = vmatprep.subr.bf16.mxu0 0
    %4971 = vmatpush1.bf16.msra.mxu0 %v4902
    %4972 = vmatprep.subr.bf16.mxu0 0
    %4973 = vmatpush1.bf16.msra.mxu0 %v4901
    %4974 = vmatprep.subr.bf16.mxu0 0
    %4975 = vmatpush1.bf16.msra.mxu0 %v4900
    %4976 = vmatprep.subr.bf16.mxu0 0
    %4977 = vmatpush1.bf16.msra.mxu0 %v4899
    %4978 = vmatprep.subr.bf16.mxu0 0
    %4979 = vmatpush1.bf16.msra.mxu0 %v4898
    %4980 = vmatprep.subr.bf16.mxu0 0
    %4981 = vmatpush2.bf16.msra.mxu0 %v4913
    %4982 = vmatprep.subr.bf16.mxu0 0
    %4983 = vmatpush2.bf16.msra.mxu0 %v4912
    %4984 = vmatprep.subr.bf16.mxu0 0
    %4985 = vmatpush2.bf16.msra.mxu0 %v4911
    %4986 = vmatprep.subr.bf16.mxu0 0
    %4987 = vmatpush2.bf16.msra.mxu0 %v4910
    %4988 = vmatprep.subr.bf16.mxu0 0
    %4989 = vmatpush2.bf16.msra.mxu0 %v4909
    %4990 = vmatprep.subr.bf16.mxu0 0
    %4991 = vmatpush2.bf16.msra.mxu0 %v4908
    %4992 = vmatprep.subr.bf16.mxu0 0
    %4993 = vmatpush2.bf16.msra.mxu0 %v4907
    %4994 = vmatprep.subr.bf16.mxu0 0
    %4995 = vmatpush2.bf16.msra.mxu0 %v4906
    %4996 = vmatprep.mubr.bf16.mxu0 %v4754
    %4997 = vmatmul.mubr.bf16.gmra.mxu0 %v4753
    %v4998 = vpop.f32.mrf.mxu0
    %v4999 = vadd.f32 %v4820, %v4998
    %v5000 = vpop.f32.mrf.mxu0
    %v5001 = vpop.f32.mrf.mxu0
    %v5002 = vadd.f32 %v4820, %v5001
    %v5003 = vpop.f32.mrf.mxu0
    %5004 = vmatprep.mubr.bf16.mxu0 %v4757
    %5005 = vmatmul.mubr.bf16.gmra.mxu0 %v4756
    %v5006 = vpop.f32.mrf.mxu0
    %v5007 = vadd.f32 %v4820, %v5006
    %v5008 = vpop.f32.mrf.mxu0
    %v5009 = vpop.f32.mrf.mxu0
    %v5010 = vadd.f32 %v4820, %v5009
    %v5011 = vpop.f32.mrf.mxu0
    %5012 = vmatprep.mubr.bf16.mxu0 %v4760
    %5013 = vmatmul.mubr.bf16.gmra.mxu0 %v4759
    %v5014 = vpop.f32.mrf.mxu0
    %v5015 = vadd.f32 %v4820, %v5014
    %v5016 = vpop.f32.mrf.mxu0
    %v5017 = vpop.f32.mrf.mxu0
    %v5018 = vadd.f32 %v4820, %v5017
    %v5019 = vpop.f32.mrf.mxu0
    %5020 = vmatprep.mubr.bf16.mxu0 %v4763
    %5021 = vmatmul.mubr.bf16.gmra.mxu0 %v4762
    %v5022 = vpop.f32.mrf.mxu0
    %v5023 = vadd.f32 %v4820, %v5022
    %v5024 = vpop.f32.mrf.mxu0
    %v5025 = vpop.f32.mrf.mxu0
    %v5026 = vadd.f32 %v4820, %v5025
    %v5027 = vpop.f32.mrf.mxu0
    %5028 = vmatprep.mubr.bf16.mxu0 %v4766
    %5029 = vmatmul.mubr.bf16.gmra.mxu0 %v4765
    %v5030 = vpop.f32.mrf.mxu0
    %v5031 = vadd.f32 %v4820, %v5030
    %v5032 = vpop.f32.mrf.mxu0
    %v5033 = vpop.f32.mrf.mxu0
    %v5034 = vadd.f32 %v4820, %v5033
    %v5035 = vpop.f32.mrf.mxu0
    %5036 = vmatprep.mubr.bf16.mxu0 %v4769
    %5037 = vmatmul.mubr.bf16.gmra.mxu0 %v4768
    %v5038 = vpop.f32.mrf.mxu0
    %v5039 = vadd.f32 %v4820, %v5038
    %v5040 = vpop.f32.mrf.mxu0
    %v5041 = vpop.f32.mrf.mxu0
    %v5042 = vadd.f32 %v4820, %v5041
    %v5043 = vpop.f32.mrf.mxu0
    %5044 = vmatprep.mubr.bf16.mxu0 %v4772
    %5045 = vmatmul.mubr.bf16.gmra.mxu0 %v4771
    %v5046 = vpop.f32.mrf.mxu0
    %v5047 = vadd.f32 %v4820, %v5046
    %v5048 = vpop.f32.mrf.mxu0
    %v5049 = vpop.f32.mrf.mxu0
    %v5050 = vadd.f32 %v4820, %v5049
    %v5051 = vpop.f32.mrf.mxu0
    %5052 = vmatprep.mubr.bf16.mxu0 %v4775
    %5053 = vmatmul.mubr.bf16.gmra.mxu0 %v4774
    %v5054 = vpop.f32.mrf.mxu0
    %v5055 = vadd.f32 %v4820, %v5054
    %v5056 = vpop.f32.mrf.mxu0
    %v5057 = vpop.f32.mrf.mxu0
    %v5058 = vadd.f32 %v4820, %v5057
    %v5059 = vpop.f32.mrf.mxu0
    %5060 = vdwg.mxu0
    %5061 = vmatprep.subr.bf16.mxu0 0
    %5062 = vmatpush1.bf16.msra.mxu0 0
    %5063 = vmatprep.subr.bf16.mxu0 0
    %5064 = vmatpush1.bf16.msra.mxu0 0
    %5065 = vmatprep.subr.bf16.mxu0 0
    %5066 = vmatpush1.bf16.msra.mxu0 0
    %5067 = vmatprep.subr.bf16.mxu0 0
    %5068 = vmatpush1.bf16.msra.mxu0 0
    %5069 = vmatprep.subr.bf16.mxu0 0
    %5070 = vmatpush1.bf16.msra.mxu0 0
    %5071 = vmatprep.subr.bf16.mxu0 0
    %5072 = vmatpush1.bf16.msra.mxu0 %v4962
    %5073 = vmatprep.subr.bf16.mxu0 0
    %5074 = vmatpush1.bf16.msra.mxu0 %v4915
    %5075 = vmatprep.subr.bf16.mxu0 0
    %5076 = vmatpush1.bf16.msra.mxu0 %v4914
    %5077 = vmatprep.subr.bf16.mxu0 0
    %5078 = vmatpush2.bf16.msra.mxu0 0
    %5079 = vmatprep.subr.bf16.mxu0 0
    %5080 = vmatpush2.bf16.msra.mxu0 0
    %5081 = vmatprep.subr.bf16.mxu0 0
    %5082 = vmatpush2.bf16.msra.mxu0 0
    %5083 = vmatprep.subr.bf16.mxu0 0
    %5084 = vmatpush2.bf16.msra.mxu0 0
    %5085 = vmatprep.subr.bf16.mxu0 0
    %5086 = vmatpush2.bf16.msra.mxu0 0
    %5087 = vmatprep.subr.bf16.mxu0 0
    %5088 = vmatpush2.bf16.msra.mxu0 0
    %5089 = vmatprep.subr.bf16.mxu0 0
    %5090 = vmatpush2.bf16.msra.mxu0 0
    %5091 = vmatprep.subr.bf16.mxu0 0
    %5092 = vmatpush2.bf16.msra.mxu0 0
    %5093 = vmatprep.mubr.bf16.mxu0 0
    %5094 = vmatmul.mubr.bf16.gmra.mxu0 %v4937
    %v5095 = vpop.f32.mrf.mxu0
    %v5096 = vadd.f32 %v4999, %v5095
    %v5097 = vpop.f32.mrf.mxu0
    %v5098 = vpop.f32.mrf.mxu0
    %v5099 = vadd.f32 %v5002, %v5098
    %v5100 = vpop.f32.mrf.mxu0
    %5101 = vmatprep.mubr.bf16.mxu0 0
    %5102 = vmatmul.mubr.bf16.gmra.mxu0 %v4940
    %v5103 = vpop.f32.mrf.mxu0
    %v5104 = vadd.f32 %v5007, %v5103
    %v5105 = vpop.f32.mrf.mxu0
    %v5106 = vpop.f32.mrf.mxu0
    %v5107 = vadd.f32 %v5010, %v5106
    %v5108 = vpop.f32.mrf.mxu0
    %5109 = vmatprep.mubr.bf16.mxu0 0
    %5110 = vmatmul.mubr.bf16.gmra.mxu0 %v4943
    %v5111 = vpop.f32.mrf.mxu0
    %v5112 = vadd.f32 %v5015, %v5111
    %v5113 = vpop.f32.mrf.mxu0
    %v5114 = vpop.f32.mrf.mxu0
    %v5115 = vadd.f32 %v5018, %v5114
    %v5116 = vpop.f32.mrf.mxu0
    %5117 = vmatprep.mubr.bf16.mxu0 0
    %5118 = vmatmul.mubr.bf16.gmra.mxu0 %v4946
    %v5119 = vpop.f32.mrf.mxu0
    %v5120 = vadd.f32 %v5023, %v5119
    %v5121 = vpop.f32.mrf.mxu0
    %v5122 = vpop.f32.mrf.mxu0
    %v5123 = vadd.f32 %v5026, %v5122
    %v5124 = vpop.f32.mrf.mxu0
    %5125 = vmatprep.mubr.bf16.mxu0 0
    %5126 = vmatmul.mubr.bf16.gmra.mxu0 %v4949
    %v5127 = vpop.f32.mrf.mxu0
    %v5128 = vadd.f32 %v5031, %v5127
    %v5129 = vpop.f32.mrf.mxu0
    %v5130 = vpop.f32.mrf.mxu0
    %v5131 = vadd.f32 %v5034, %v5130
    %v5132 = vpop.f32.mrf.mxu0
    %5133 = vmatprep.mubr.bf16.mxu0 0
    %5134 = vmatmul.mubr.bf16.gmra.mxu0 %v4952
    %v5135 = vpop.f32.mrf.mxu0
    %v5136 = vadd.f32 %v5039, %v5135
    %v5137 = vpop.f32.mrf.mxu0
    %v5138 = vpop.f32.mrf.mxu0
    %v5139 = vadd.f32 %v5042, %v5138
    %v5140 = vpop.f32.mrf.mxu0
    %5141 = vmatprep.mubr.bf16.mxu0 0
    %5142 = vmatmul.mubr.bf16.gmra.mxu0 %v4955
    %v5143 = vpop.f32.mrf.mxu0
    %v5144 = vadd.f32 %v5047, %v5143
    %v5145 = vpop.f32.mrf.mxu0
    %v5146 = vpop.f32.mrf.mxu0
    %v5147 = vadd.f32 %v5050, %v5146
    %v5148 = vpop.f32.mrf.mxu0
    %5149 = vmatprep.mubr.bf16.mxu0 0
    %5150 = vmatmul.mubr.bf16.gmra.mxu0 %v4958
    %v5151 = vpop.f32.mrf.mxu0
    %v5152 = vadd.f32 %v5055, %v5151
    %v5153 = vpop.f32.mrf.mxu0
    %v5154 = vpop.f32.mrf.mxu0
    %v5155 = vadd.f32 %v5058, %v5154
    %v5156 = vpop.f32.mrf.mxu0
    %5157 = vdwg.mxu0
    %5158 = vst [vmem:[#allocation2] sm:$0xff] %v5096
    %5159 = vst [vmem:[#allocation2 + $0x8] sm:$0xff] %v5099
    %5160 = vst [vmem:[#allocation2 + $0x10] sm:$0xff] %v5104
    %5161 = vst [vmem:[#allocation2 + $0x18] sm:$0xff] %v5107
    %5162 = vst [vmem:[#allocation2 + $0x20] sm:$0xff] %v5112
    %5163 = vst [vmem:[#allocation2 + $0x28] sm:$0xff] %v5115
    %5164 = vst [vmem:[#allocation2 + $0x30] sm:$0xff] %v5120
    %5165 = vst [vmem:[#allocation2 + $0x38] sm:$0xff] %v5123
    %5166 = vst [vmem:[#allocation2 + $0x40] sm:$0xff] %v5128
    %5167 = vst [vmem:[#allocation2 + $0x48] sm:$0xff] %v5131
    %5168 = vst [vmem:[#allocation2 + $0x50] sm:$0xff] %v5136
    %5169 = vst [vmem:[#allocation2 + $0x58] sm:$0xff] %v5139
    %5170 = vst [vmem:[#allocation2 + $0x60] sm:$0xff] %v5144
    %5171 = vst [vmem:[#allocation2 + $0x68] sm:$0xff] %v5147
    %5172 = vst [vmem:[#allocation2 + $0x70] sm:$0xff] %v5152
    %5173 = vst [vmem:[#allocation2 + $0x78] sm:$0xff] %v5155
    // Predicated region
    $region38: #{tpu_custom_call.1} parent=1 // pred_check
      _
    $region39: #{tpu_custom_call.1} parent=1 // pred_check_branch
      %5175 = sbr.rel (0) target = $region41
    $region40: #{tpu_custom_call.1} parent=1 // pred_region
      %s5177 = ssub.s32 2048, 2048
      %5178 = vsyncadd [#allocation3], %s5177
      %s5179 = sshll.u32 [#allocation2], 4
      %s5180 = int_to_ptr.vmem [resolvable:$true] %s5179
      %5185 = dma.vmem_to_hbm [thread:$0]  %s5180, 2048, %s9, [#allocation3], 128, 128, 8
    $region41: #{tpu_custom_call.1} parent=1 // pred_fallthru
      _
    // Predicated region
    $region42: #{tpu_custom_call.1} parent=1 // pred_check
      _
    $region43: #{tpu_custom_call.1} parent=1 // pred_check_branch
      %5187 = sbr.rel (0) target = $region45
    $region44: #{tpu_custom_call.1} parent=1 // pred_region
      %5188 = dma.done [#allocation3], 2048
    $region45: #{tpu_custom_call.1} parent=1 // pred_fallthru
      _
    %5189 = vsyncpa [#allocation3], 1

// kernel: tpu_custom_call.1
$region0: #{tpu_custom_call.1}
  #allocation0 [shape = 'u32[]', space=smem, size = 0x4, offset = 0x4, fixed_abs, tag = 'smem constant byte address 0x4 - core index']
  #allocation1 [shape = 'u32[144,128]{1,0:T(1,128)}', space=vmem, size = 0x12000, scoped, tag = 'internal scratch']
  %s0 = inlined_call_operand.vmem [shape: bf16[128,256], index: 0, kind: input, shape index: {}]
  %s1 = inlined_call_operand.vmem [shape: bf16[128,256], index: 1, kind: input, shape index: {}]
  %s2 = inlined_call_operand.vmem [shape: bf16[256,800], index: 2, kind: input, shape index: {}]
  %s3 = inlined_call_operand.vmem [shape: bf16[256,800], index: 3, kind: input, shape index: {}]
  %s4 = inlined_call_operand.vmem [shape: f32[1,800], index: 4, kind: input, shape index: {}]
  %s5 = inlined_call_operand.vmem [shape: bf16[800,300], index: 5, kind: input, shape index: {}]
  %s6 = inlined_call_operand.vmem [shape: f32[1,300], index: 6, kind: input, shape index: {}]
  %s7 = inlined_call_operand.vmem [shape: bf16[300,128], index: 7, kind: input, shape index: {}]
  %s8 = inlined_call_operand.vmem [shape: f32[1,128], index: 8, kind: input, shape index: {}]
  %s9 = inlined_call_operand.hbm [shape: f32[128,128], index: 9, kind: output, shape index: {}]
  %s10 = sld [smem:[#allocation0]]
  $region46: #{tpu_custom_call.1} parent=0
    _
  %s12 = ssub.s32 1, %s10
  %s13 = scalar_select 0, %s12, %s10
  $region1: #{tpu_custom_call.1} parent=0
    #allocation2 [shape = 'u8[65536]{0}', space=vmem, size = 0x10000, scoped, tag = 'output window, operand 0, single buffered']
    #allocation3 [shape = 's32[1]{0}', space=sflag, size = 0x4, scoped, tag = 'scoped memory for tpu_custom_call.1']
    %14 = vsyncpa [#allocation3], 0
    // Predicated region
    $region2: #{tpu_custom_call.1} parent=1 // pred_check
      _
    $region3: #{tpu_custom_call.1} parent=1 // pred_check_branch
      %16 = sbr.rel (0) target = $region5
    $region4: #{tpu_custom_call.1} parent=1 // pred_region
      _
    $region5: #{tpu_custom_call.1} parent=1 // pred_fallthru
      _
    // Predicated region
    $region6: #{tpu_custom_call.1} parent=1 // pred_check
      _
    $region7: #{tpu_custom_call.1} parent=1 // pred_check_branch
      %18 = sbr.rel (0) target = $region9
    $region8: #{tpu_custom_call.1} parent=1 // pred_region
      _
    $region9: #{tpu_custom_call.1} parent=1 // pred_fallthru
      _
    // Predicated region
    $region10: #{tpu_custom_call.1} parent=1 // pred_check
      _
    $region11: #{tpu_custom_call.1} parent=1 // pred_check_branch
      %20 = sbr.rel (0) target = $region13
    $region12: #{tpu_custom_call.1} parent=1 // pred_region
      _
    $region13: #{tpu_custom_call.1} parent=1 // pred_fallthru
      _
    // Predicated region
    $region14: #{tpu_custom_call.1} parent=1 // pred_check
      _
    $region15: #{tpu_custom_call.1} parent=1 // pred_check_branch
      %22 = sbr.rel (0) target = $region17
    $region16: #{tpu_custom_call.1} parent=1 // pred_region
      _
    $region17: #{tpu_custom_call.1} parent=1 // pred_fallthru
      _
    // Predicated region
    $region18: #{tpu_custom_call.1} parent=1 // pred_check
      _
    $region19: #{tpu_custom_call.1} parent=1 // pred_check_branch
      %24 = sbr.rel (0) target = $region21
    $region20: #{tpu_custom_call.1} parent=1 // pred_region
      _
    $region21: #{tpu_custom_call.1} parent=1 // pred_fallthru
      _
    // Predicated region
    $region22: #{tpu_custom_call.1} parent=1 // pred_check
      _
    $region23: #{tpu_custom_call.1} parent=1 // pred_check_branch
      %26 = sbr.rel (0) target = $region25
    $region24: #{tpu_custom_call.1} parent=1 // pred_region
      _
    $region25: #{tpu_custom_call.1} parent=1 // pred_fallthru
      _
    // Predicated region
    $region26: #{tpu_custom_call.1} parent=1 // pred_check
      _
    $region27: #{tpu_custom_call.1} parent=1 // pred_check_branch
      %28 = sbr.rel (0) target = $region29
    $region28: #{tpu_custom_call.1} parent=1 // pred_region
      _
    $region29: #{tpu_custom_call.1} parent=1 // pred_fallthru
      _
    // Predicated region
    $region30: #{tpu_custom_call.1} parent=1 // pred_check
      _
    $region31: #{tpu_custom_call.1} parent=1 // pred_check_branch
      %30 = sbr.rel (0) target = $region33
    $region32: #{tpu_custom_call.1} parent=1 // pred_region
      _
    $region33: #{tpu_custom_call.1} parent=1 // pred_fallthru
      _
    // Predicated region
    $region34: #{tpu_custom_call.1} parent=1 // pred_check
      _
    $region35: #{tpu_custom_call.1} parent=1 // pred_check_branch
      %32 = sbr.rel (0) target = $region37
    $region36: #{tpu_custom_call.1} parent=1 // pred_region
      _
    $region37: #{tpu_custom_call.1} parent=1 // pred_fallthru
      _
    %v34 = vld [vmem:[%s0] sm:$0xff]
    %v35 = vld [vmem:[%s0 + $0x8] sm:$0xff]
    %v36 = vld [vmem:[%s0 + $0x10] sm:$0xff]
    %v37 = vld [vmem:[%s0 + $0x18] sm:$0xff]
    %v38 = vld [vmem:[%s0 + $0x20] sm:$0xff]
    %v39 = vld [vmem:[%s0 + $0x28] sm:$0xff]
    %v40 = vld [vmem:[%s0 + $0x30] sm:$0xff]
    %v41 = vld [vmem:[%s0 + $0x38] sm:$0xff]
    %v42 = vld [vmem:[%s0 + $0x40] sm:$0xff]
    %v43 = vld [vmem:[%s0 + $0x48] sm:$0xff]
    %v44 = vld [vmem:[%s0 + $0x50] sm:$0xff]
    %v45 = vld [vmem:[%s0 + $0x58] sm:$0xff]
    %v46 = vld [vmem:[%s0 + $0x60] sm:$0xff]
    %v47 = vld [vmem:[%s0 + $0x68] sm:$0xff]
    %v48 = vld [vmem:[%s0 + $0x70] sm:$0xff]
    %v49 = vld [vmem:[%s0 + $0x78] sm:$0xff]
    %v50 = vld [vmem:[%s2] sm:$0xff]
    %v51 = vld [vmem:[%s2 + $0x8] sm:$0xff]
    %v52 = vld [vmem:[%s2 + $0x10] sm:$0xff]
    %v53 = vld [vmem:[%s2 + $0x18] sm:$0xf]
    %v54 = vld [vmem:[%s2 + $0x1c] sm:$0xff]
    %v55 = vld [vmem:[%s2 + $0x24] sm:$0xff]
    %v56 = vld [vmem:[%s2 + $0x2c] sm:$0xff]
    %v57 = vld [vmem:[%s2 + $0x34] sm:$0xf]
    %v58 = vld [vmem:[%s2 + $0x38] sm:$0xff]
    %v59 = vld [vmem:[%s2 + $0x40] sm:$0xff]
    %v60 = vld [vmem:[%s2 + $0x48] sm:$0xff]
    %v61 = vld [vmem:[%s2 + $0x50] sm:$0xf]
    %v62 = vld [vmem:[%s2 + $0x54] sm:$0xff]
    %v63 = vld [vmem:[%s2 + $0x5c] sm:$0xff]
    %v64 = vld [vmem:[%s2 + $0x64] sm:$0xff]
    %v65 = vld [vmem:[%s2 + $0x6c] sm:$0xf]
    %v66 = vld [vmem:[%s2 + $0x70] sm:$0xff]
    %v67 = vld [vmem:[%s2 + $0x78] sm:$0xff]
    %v68 = vld [vmem:[%s2 + $0x80] sm:$0xff]
    %v69 = vld [vmem:[%s2 + $0x88] sm:$0xf]
    %v70 = vld [vmem:[%s2 + $0x8c] sm:$0xff]
    %v71 = vld [vmem:[%s2 + $0x94] sm:$0xff]
    %v72 = vld [vmem:[%s2 + $0x9c] sm:$0xff]
    %v73 = vld [vmem:[%s2 + $0xa4] sm:$0xf]
    %v74 = vld [vmem:[%s2 + $0xa8] sm:$0xff]
    %v75 = vld [vmem:[%s2 + $0xb0] sm:$0xff]
    %v76 = vld [vmem:[%s2 + $0xb8] sm:$0xff]
    %v77 = vld [vmem:[%s2 + $0xc0] sm:$0xf]
    %v78 = vld [vmem:[%s2 + $0xc4] sm:$0xff]
    %v79 = vld [vmem:[%s2 + $0xcc] sm:$0xff]
    %v80 = vld [vmem:[%s2 + $0xd4] sm:$0xff]
    %v81 = vld [vmem:[%s2 + $0xdc] sm:$0xf]
    %v82 = vld [vmem:[%s2 + $0xe0] sm:$0xff]
    %v83 = vld [vmem:[%s2 + $0xe8] sm:$0xff]
    %v84 = vld [vmem:[%s2 + $0xf0] sm:$0xff]
    %v85 = vld [vmem:[%s2 + $0xf8] sm:$0xf]
    %v86 = vld [vmem:[%s2 + $0xfc] sm:$0xff]
    %v87 = vld [vmem:[%s2 + $0x104] sm:$0xff]
    %v88 = vld [vmem:[%s2 + $0x10c] sm:$0xff]
    %v89 = vld [vmem:[%s2 + $0x114] sm:$0xf]
    %v90 = vld [vmem:[%s2 + $0x118] sm:$0xff]
    %v91 = vld [vmem:[%s2 + $0x120] sm:$0xff]
    %v92 = vld [vmem:[%s2 + $0x128] sm:$0xff]
    %v93 = vld [vmem:[%s2 + $0x130] sm:$0xf]
    %v94 = vld [vmem:[%s2 + $0x134] sm:$0xff]
    %v95 = vld [vmem:[%s2 + $0x13c] sm:$0xff]
    %v96 = vld [vmem:[%s2 + $0x144] sm:$0xff]
    %v97 = vld [vmem:[%s2 + $0x14c] sm:$0xf]
    %v98 = vld [vmem:[%s2 + $0x150] sm:$0xff]
    %v99 = vld [vmem:[%s2 + $0x158] sm:$0xff]
    %v100 = vld [vmem:[%s2 + $0x160] sm:$0xff]
    %v101 = vld [vmem:[%s2 + $0x168] sm:$0xf]
    %v102 = vld [vmem:[%s2 + $0x16c] sm:$0xff]
    %v103 = vld [vmem:[%s2 + $0x174] sm:$0xff]
    %v104 = vld [vmem:[%s2 + $0x17c] sm:$0xff]
    %v105 = vld [vmem:[%s2 + $0x184] sm:$0xf]
    %v106 = vld [vmem:[%s2 + $0x188] sm:$0xff]
    %v107 = vld [vmem:[%s2 + $0x190] sm:$0xff]
    %v108 = vld [vmem:[%s2 + $0x198] sm:$0xff]
    %v109 = vld [vmem:[%s2 + $0x1a0] sm:$0xf]
    %v110 = vld [vmem:[%s2 + $0x1a4] sm:$0xff]
    %v111 = vld [vmem:[%s2 + $0x1ac] sm:$0xff]
    %v112 = vld [vmem:[%s2 + $0x1b4] sm:$0xff]
    %v113 = vld [vmem:[%s2 + $0x1bc] sm:$0xf]
    %v114 = vld [vmem:[%s2 + $0x1c0] sm:$0xff]
    %v115 = vld [vmem:[%s2 + $0x1c8] sm:$0xff]
    %v116 = vld [vmem:[%s2 + $0x1d0] sm:$0xff]
    %v117 = vld [vmem:[%s2 + $0x1d8] sm:$0xf]
    %v118 = vld [vmem:[%s2 + $0x1dc] sm:$0xff]
    %v119 = vld [vmem:[%s2 + $0x1e4] sm:$0xff]
    %v120 = vld [vmem:[%s2 + $0x1ec] sm:$0xff]
    %v121 = vld [vmem:[%s2 + $0x1f4] sm:$0xf]
    %v122 = vld [vmem:[%s2 + $0x1f8] sm:$0xff]
    %v123 = vld [vmem:[%s2 + $0x200] sm:$0xff]
    %v124 = vld [vmem:[%s2 + $0x208] sm:$0xff]
    %v125 = vld [vmem:[%s2 + $0x210] sm:$0xf]
    %v126 = vld [vmem:[%s2 + $0x214] sm:$0xff]
    %v127 = vld [vmem:[%s2 + $0x21c] sm:$0xff]
    %v128 = vld [vmem:[%s2 + $0x224] sm:$0xff]
    %v129 = vld [vmem:[%s2 + $0x22c] sm:$0xf]
    %v130 = vld [vmem:[%s2 + $0x230] sm:$0xff]
    %v131 = vld [vmem:[%s2 + $0x238] sm:$0xff]
    %v132 = vld [vmem:[%s2 + $0x240] sm:$0xff]
    %v133 = vld [vmem:[%s2 + $0x248] sm:$0xf]
    %v134 = vld [vmem:[%s2 + $0x24c] sm:$0xff]
    %v135 = vld [vmem:[%s2 + $0x254] sm:$0xff]
    %v136 = vld [vmem:[%s2 + $0x25c] sm:$0xff]
    %v137 = vld [vmem:[%s2 + $0x264] sm:$0xf]
    %v138 = vld [vmem:[%s2 + $0x268] sm:$0xff]
    %v139 = vld [vmem:[%s2 + $0x270] sm:$0xff]
    %v140 = vld [vmem:[%s2 + $0x278] sm:$0xff]
    %v141 = vld [vmem:[%s2 + $0x280] sm:$0xf]
    %v142 = vld [vmem:[%s2 + $0x284] sm:$0xff]
    %v143 = vld [vmem:[%s2 + $0x28c] sm:$0xff]
    %v144 = vld [vmem:[%s2 + $0x294] sm:$0xff]
    %v145 = vld [vmem:[%s2 + $0x29c] sm:$0xf]
    %v146 = vld [vmem:[%s2 + $0x2a0] sm:$0xff]
    %v147 = vld [vmem:[%s2 + $0x2a8] sm:$0xff]
    %v148 = vld [vmem:[%s2 + $0x2b0] sm:$0xff]
    %v149 = vld [vmem:[%s2 + $0x2b8] sm:$0xf]
    %v150 = vld [vmem:[%s2 + $0x2bc] sm:$0xff]
    %v151 = vld [vmem:[%s2 + $0x2c4] sm:$0xff]
    %v152 = vld [vmem:[%s2 + $0x2cc] sm:$0xff]
    %v153 = vld [vmem:[%s2 + $0x2d4] sm:$0xf]
    %v154 = vld [vmem:[%s2 + $0x2d8] sm:$0xff]
    %v155 = vld [vmem:[%s2 + $0x2e0] sm:$0xff]
    %v156 = vld [vmem:[%s2 + $0x2e8] sm:$0xff]
    %v157 = vld [vmem:[%s2 + $0x2f0] sm:$0xf]
    %v158 = vld [vmem:[%s2 + $0x2f4] sm:$0xff]
    %v159 = vld [vmem:[%s2 + $0x2fc] sm:$0xff]
    %v160 = vld [vmem:[%s2 + $0x304] sm:$0xff]
    %v161 = vld [vmem:[%s2 + $0x30c] sm:$0xf]
    %v162 = vld [vmem:[%s2 + $0x310] sm:$0xff]
    %v163 = vld [vmem:[%s2 + $0x318] sm:$0xff]
    %v164 = vld [vmem:[%s2 + $0x320] sm:$0xff]
    %v165 = vld [vmem:[%s2 + $0x328] sm:$0xf]
    %v166 = vld [vmem:[%s2 + $0x32c] sm:$0xff]
    %v167 = vld [vmem:[%s2 + $0x334] sm:$0xff]
    %v168 = vld [vmem:[%s2 + $0x33c] sm:$0xff]
    %v169 = vld [vmem:[%s2 + $0x344] sm:$0xf]
    %v170 = vld [vmem:[%s2 + $0x348] sm:$0xff]
    %v171 = vld [vmem:[%s2 + $0x350] sm:$0xff]
    %v172 = vld [vmem:[%s2 + $0x358] sm:$0xff]
    %v173 = vld [vmem:[%s2 + $0x360] sm:$0xf]
    %v174 = vld [vmem:[%s2 + $0x364] sm:$0xff]
    %v175 = vld [vmem:[%s2 + $0x36c] sm:$0xff]
    %v176 = vld [vmem:[%s2 + $0x374] sm:$0xff]
    %v177 = vld [vmem:[%s2 + $0x37c] sm:$0xf]
    %v178 = vld [vmem:[%s1] sm:$0xff]
    %v179 = vld [vmem:[%s1 + $0x8] sm:$0xff]
    %v180 = vld [vmem:[%s1 + $0x10] sm:$0xff]
    %v181 = vld [vmem:[%s1 + $0x18] sm:$0xff]
    %v182 = vld [vmem:[%s1 + $0x20] sm:$0xff]
    %v183 = vld [vmem:[%s1 + $0x28] sm:$0xff]
    %v184 = vld [vmem:[%s1 + $0x30] sm:$0xff]
    %v185 = vld [vmem:[%s1 + $0x38] sm:$0xff]
    %v186 = vld [vmem:[%s1 + $0x40] sm:$0xff]
    %v187 = vld [vmem:[%s1 + $0x48] sm:$0xff]
    %v188 = vld [vmem:[%s1 + $0x50] sm:$0xff]
    %v189 = vld [vmem:[%s1 + $0x58] sm:$0xff]
    %v190 = vld [vmem:[%s1 + $0x60] sm:$0xff]
    %v191 = vld [vmem:[%s1 + $0x68] sm:$0xff]
    %v192 = vld [vmem:[%s1 + $0x70] sm:$0xff]
    %v193 = vld [vmem:[%s1 + $0x78] sm:$0xff]
    %v194 = vld [vmem:[%s3] sm:$0xff]
    %v195 = vld [vmem:[%s3 + $0x8] sm:$0xff]
    %v196 = vld [vmem:[%s3 + $0x10] sm:$0xff]
    %v197 = vld [vmem:[%s3 + $0x18] sm:$0xf]
    %v198 = vld [vmem:[%s3 + $0x1c] sm:$0xff]
    %v199 = vld [vmem:[%s3 + $0x24] sm:$0xff]
    %v200 = vld [vmem:[%s3 + $0x2c] sm:$0xff]
    %v201 = vld [vmem:[%s3 + $0x34] sm:$0xf]
    %v202 = vld [vmem:[%s3 + $0x38] sm:$0xff]
    %v203 = vld [vmem:[%s3 + $0x40] sm:$0xff]
    %v204 = vld [vmem:[%s3 + $0x48] sm:$0xff]
    %v205 = vld [vmem:[%s3 + $0x50] sm:$0xf]
    %v206 = vld [vmem:[%s3 + $0x54] sm:$0xff]
    %v207 = vld [vmem:[%s3 + $0x5c] sm:$0xff]
    %v208 = vld [vmem:[%s3 + $0x64] sm:$0xff]
    %v209 = vld [vmem:[%s3 + $0x6c] sm:$0xf]
    %v210 = vld [vmem:[%s3 + $0x70] sm:$0xff]
    %v211 = vld [vmem:[%s3 + $0x78] sm:$0xff]
    %v212 = vld [vmem:[%s3 + $0x80] sm:$0xff]
    %v213 = vld [vmem:[%s3 + $0x88] sm:$0xf]
    %v214 = vld [vmem:[%s3 + $0x8c] sm:$0xff]
    %v215 = vld [vmem:[%s3 + $0x94] sm:$0xff]
    %v216 = vld [vmem:[%s3 + $0x9c] sm:$0xff]
    %v217 = vld [vmem:[%s3 + $0xa4] sm:$0xf]
    %v218 = vld [vmem:[%s3 + $0xa8] sm:$0xff]
    %v219 = vld [vmem:[%s3 + $0xb0] sm:$0xff]
    %v220 = vld [vmem:[%s3 + $0xb8] sm:$0xff]
    %v221 = vld [vmem:[%s3 + $0xc0] sm:$0xf]
    %v222 = vld [vmem:[%s3 + $0xc4] sm:$0xff]
    %v223 = vld [vmem:[%s3 + $0xcc] sm:$0xff]
    %v224 = vld [vmem:[%s3 + $0xd4] sm:$0xff]
    %v225 = vld [vmem:[%s3 + $0xdc] sm:$0xf]
    %v226 = vld [vmem:[%s3 + $0xe0] sm:$0xff]
    %v227 = vld [vmem:[%s3 + $0xe8] sm:$0xff]
    %v228 = vld [vmem:[%s3 + $0xf0] sm:$0xff]
    %v229 = vld [vmem:[%s3 + $0xf8] sm:$0xf]
    %v230 = vld [vmem:[%s3 + $0xfc] sm:$0xff]
    %v231 = vld [vmem:[%s3 + $0x104] sm:$0xff]
    %v232 = vld [vmem:[%s3 + $0x10c] sm:$0xff]
    %v233 = vld [vmem:[%s3 + $0x114] sm:$0xf]
    %v234 = vld [vmem:[%s3 + $0x118] sm:$0xff]
    %v235 = vld [vmem:[%s3 + $0x120] sm:$0xff]
    %v236 = vld [vmem:[%s3 + $0x128] sm:$0xff]
    %v237 = vld [vmem:[%s3 + $0x130] sm:$0xf]
    %v238 = vld [vmem:[%s3 + $0x134] sm:$0xff]
    %v239 = vld [vmem:[%s3 + $0x13c] sm:$0xff]
    %v240 = vld [vmem:[%s3 + $0x144] sm:$0xff]
    %v241 = vld [vmem:[%s3 + $0x14c] sm:$0xf]
    %v242 = vld [vmem:[%s3 + $0x150] sm:$0xff]
    %v243 = vld [vmem:[%s3 + $0x158] sm:$0xff]
    %v244 = vld [vmem:[%s3 + $0x160] sm:$0xff]
    %v245 = vld [vmem:[%s3 + $0x168] sm:$0xf]
    %v246 = vld [vmem:[%s3 + $0x16c] sm:$0xff]
    %v247 = vld [vmem:[%s3 + $0x174] sm:$0xff]
    %v248 = vld [vmem:[%s3 + $0x17c] sm:$0xff]
    %v249 = vld [vmem:[%s3 + $0x184] sm:$0xf]
    %v250 = vld [vmem:[%s3 + $0x188] sm:$0xff]
    %v251 = vld [vmem:[%s3 + $0x190] sm:$0xff]
    %v252 = vld [vmem:[%s3 + $0x198] sm:$0xff]
    %v253 = vld [vmem:[%s3 + $0x1a0] sm:$0xf]
    %v254 = vld [vmem:[%s3 + $0x1a4] sm:$0xff]
    %v255 = vld [vmem:[%s3 + $0x1ac] sm:$0xff]
    %v256 = vld [vmem:[%s3 + $0x1b4] sm:$0xff]
    %v257 = vld [vmem:[%s3 + $0x1bc] sm:$0xf]
    %v258 = vld [vmem:[%s3 + $0x1c0] sm:$0xff]
    %v259 = vld [vmem:[%s3 + $0x1c8] sm:$0xff]
    %v260 = vld [vmem:[%s3 + $0x1d0] sm:$0xff]
    %v261 = vld [vmem:[%s3 + $0x1d8] sm:$0xf]
    %v262 = vld [vmem:[%s3 + $0x1dc] sm:$0xff]
    %v263 = vld [vmem:[%s3 + $0x1e4] sm:$0xff]
    %v264 = vld [vmem:[%s3 + $0x1ec] sm:$0xff]
    %v265 = vld [vmem:[%s3 + $0x1f4] sm:$0xf]
    %v266 = vld [vmem:[%s3 + $0x1f8] sm:$0xff]
    %v267 = vld [vmem:[%s3 + $0x200] sm:$0xff]
    %v268 = vld [vmem:[%s3 + $0x208] sm:$0xff]
    %v269 = vld [vmem:[%s3 + $0x210] sm:$0xf]
    %v270 = vld [vmem:[%s3 + $0x214] sm:$0xff]
    %v271 = vld [vmem:[%s3 + $0x21c] sm:$0xff]
    %v272 = vld [vmem:[%s3 + $0x224] sm:$0xff]
    %v273 = vld [vmem:[%s3 + $0x22c] sm:$0xf]
    %v274 = vld [vmem:[%s3 + $0x230] sm:$0xff]
    %v275 = vld [vmem:[%s3 + $0x238] sm:$0xff]
    %v276 = vld [vmem:[%s3 + $0x240] sm:$0xff]
    %v277 = vld [vmem:[%s3 + $0x248] sm:$0xf]
    %v278 = vld [vmem:[%s3 + $0x24c] sm:$0xff]
    %v279 = vld [vmem:[%s3 + $0x254] sm:$0xff]
    %v280 = vld [vmem:[%s3 + $0x25c] sm:$0xff]
    %v281 = vld [vmem:[%s3 + $0x264] sm:$0xf]
    %v282 = vld [vmem:[%s3 + $0x268] sm:$0xff]
    %v283 = vld [vmem:[%s3 + $0x270] sm:$0xff]
    %v284 = vld [vmem:[%s3 + $0x278] sm:$0xff]
    %v285 = vld [vmem:[%s3 + $0x280] sm:$0xf]
    %v286 = vld [vmem:[%s3 + $0x284] sm:$0xff]
    %v287 = vld [vmem:[%s3 + $0x28c] sm:$0xff]
    %v288 = vld [vmem:[%s3 + $0x294] sm:$0xff]
    %v289 = vld [vmem:[%s3 + $0x29c] sm:$0xf]
    %v290 = vld [vmem:[%s3 + $0x2a0] sm:$0xff]
    %v291 = vld [vmem:[%s3 + $0x2a8] sm:$0xff]
    %v292 = vld [vmem:[%s3 + $0x2b0] sm:$0xff]
    %v293 = vld [vmem:[%s3 + $0x2b8] sm:$0xf]
    %v294 = vld [vmem:[%s3 + $0x2bc] sm:$0xff]
    %v295 = vld [vmem:[%s3 + $0x2c4] sm:$0xff]
    %v296 = vld [vmem:[%s3 + $0x2cc] sm:$0xff]
    %v297 = vld [vmem:[%s3 + $0x2d4] sm:$0xf]
    %v298 = vld [vmem:[%s3 + $0x2d8] sm:$0xff]
    %v299 = vld [vmem:[%s3 + $0x2e0] sm:$0xff]
    %v300 = vld [vmem:[%s3 + $0x2e8] sm:$0xff]
    %v301 = vld [vmem:[%s3 + $0x2f0] sm:$0xf]
    %v302 = vld [vmem:[%s3 + $0x2f4] sm:$0xff]
    %v303 = vld [vmem:[%s3 + $0x2fc] sm:$0xff]
    %v304 = vld [vmem:[%s3 + $0x304] sm:$0xff]
    %v305 = vld [vmem:[%s3 + $0x30c] sm:$0xf]
    %v306 = vld [vmem:[%s3 + $0x310] sm:$0xff]
    %v307 = vld [vmem:[%s3 + $0x318] sm:$0xff]
    %v308 = vld [vmem:[%s3 + $0x320] sm:$0xff]
    %v309 = vld [vmem:[%s3 + $0x328] sm:$0xf]
    %v310 = vld [vmem:[%s3 + $0x32c] sm:$0xff]
    %v311 = vld [vmem:[%s3 + $0x334] sm:$0xff]
    %v312 = vld [vmem:[%s3 + $0x33c] sm:$0xff]
    %v313 = vld [vmem:[%s3 + $0x344] sm:$0xf]
    %v314 = vld [vmem:[%s3 + $0x348] sm:$0xff]
    %v315 = vld [vmem:[%s3 + $0x350] sm:$0xff]
    %v316 = vld [vmem:[%s3 + $0x358] sm:$0xff]
    %v317 = vld [vmem:[%s3 + $0x360] sm:$0xf]
    %v318 = vld [vmem:[%s3 + $0x364] sm:$0xff]
    %v319 = vld [vmem:[%s3 + $0x36c] sm:$0xff]
    %v320 = vld [vmem:[%s3 + $0x374] sm:$0xff]
    %v321 = vld [vmem:[%s3 + $0x37c] sm:$0xf]
    %v338 = vunpack.c.l.b16 %v178
    %v339 = vunpack.c.h.b16 %v178
    %v340 = vunpack.c.l.b16 %v179
    %v341 = vunpack.c.h.b16 %v179
    %v342 = vunpack.c.l.b16 %v180
    %v343 = vunpack.c.h.b16 %v180
    %v344 = vunpack.c.l.b16 %v181
    %v345 = vunpack.c.h.b16 %v181
    %v346 = vunpack.c.l.b16 %v182
    %v347 = vunpack.c.h.b16 %v182
    %v348 = vunpack.c.l.b16 %v183
    %v349 = vunpack.c.h.b16 %v183
    %v350 = vunpack.c.l.b16 %v184
    %v351 = vunpack.c.h.b16 %v184
    %v352 = vunpack.c.l.b16 %v185
    %v353 = vunpack.c.h.b16 %v185
    %v354 = vunpack.c.l.b16 %v186
    %v355 = vunpack.c.h.b16 %v186
    %v356 = vunpack.c.l.b16 %v187
    %v357 = vunpack.c.h.b16 %v187
    %v358 = vunpack.c.l.b16 %v188
    %v359 = vunpack.c.h.b16 %v188
    %v360 = vunpack.c.l.b16 %v189
    %v361 = vunpack.c.h.b16 %v189
    %v362 = vunpack.c.l.b16 %v190
    %v363 = vunpack.c.h.b16 %v190
    %v364 = vunpack.c.l.b16 %v191
    %v365 = vunpack.c.h.b16 %v191
    %v366 = vunpack.c.l.b16 %v192
    %v367 = vunpack.c.h.b16 %v192
    %v368 = vunpack.c.l.b16 %v193
    %v369 = vunpack.c.h.b16 %v193
    %v370 = vpack.c.b16 %v340, %v338
    %v371 = vpack.c.b16 %v341, %v339
    %v372 = vpack.c.b16 %v344, %v342
    %v373 = vpack.c.b16 %v345, %v343
    %v374 = vpack.c.b16 %v348, %v346
    %v375 = vpack.c.b16 %v349, %v347
    %v376 = vpack.c.b16 %v352, %v350
    %v377 = vpack.c.b16 %v353, %v351
    %v378 = vpack.c.b16 %v356, %v354
    %v379 = vpack.c.b16 %v357, %v355
    %v380 = vpack.c.b16 %v360, %v358
    %v381 = vpack.c.b16 %v361, %v359
    %v382 = vpack.c.b16 %v364, %v362
    %v383 = vpack.c.b16 %v365, %v363
    %v384 = vpack.c.b16 %v368, %v366
    %v385 = vpack.c.b16 %v369, %v367
    %v530 = vunpack.c.l.b16 %v194
    %v531 = vunpack.c.h.b16 %v194
    %v532 = vunpack.c.l.b16 %v195
    %v533 = vunpack.c.h.b16 %v195
    %v534 = vunpack.c.l.b16 %v196
    %v535 = vunpack.c.h.b16 %v196
    %v536 = vunpack.c.l.b16 %v197
    %v537 = vunpack.c.l.b16 %v198
    %v538 = vunpack.c.h.b16 %v198
    %v539 = vunpack.c.l.b16 %v199
    %v540 = vunpack.c.h.b16 %v199
    %v541 = vunpack.c.l.b16 %v200
    %v542 = vunpack.c.h.b16 %v200
    %v543 = vunpack.c.l.b16 %v201
    %v544 = vunpack.c.l.b16 %v202
    %v545 = vunpack.c.h.b16 %v202
    %v546 = vunpack.c.l.b16 %v203
    %v547 = vunpack.c.h.b16 %v203
    %v548 = vunpack.c.l.b16 %v204
    %v549 = vunpack.c.h.b16 %v204
    %v550 = vunpack.c.l.b16 %v205
    %v551 = vunpack.c.l.b16 %v206
    %v552 = vunpack.c.h.b16 %v206
    %v553 = vunpack.c.l.b16 %v207
    %v554 = vunpack.c.h.b16 %v207
    %v555 = vunpack.c.l.b16 %v208
    %v556 = vunpack.c.h.b16 %v208
    %v557 = vunpack.c.l.b16 %v209
    %v558 = vunpack.c.l.b16 %v210
    %v559 = vunpack.c.h.b16 %v210
    %v560 = vunpack.c.l.b16 %v211
    %v561 = vunpack.c.h.b16 %v211
    %v562 = vunpack.c.l.b16 %v212
    %v563 = vunpack.c.h.b16 %v212
    %v564 = vunpack.c.l.b16 %v213
    %v565 = vunpack.c.l.b16 %v214
    %v566 = vunpack.c.h.b16 %v214
    %v567 = vunpack.c.l.b16 %v215
    %v568 = vunpack.c.h.b16 %v215
    %v569 = vunpack.c.l.b16 %v216
    %v570 = vunpack.c.h.b16 %v216
    %v571 = vunpack.c.l.b16 %v217
    %v572 = vunpack.c.l.b16 %v218
    %v573 = vunpack.c.h.b16 %v218
    %v574 = vunpack.c.l.b16 %v219
    %v575 = vunpack.c.h.b16 %v219
    %v576 = vunpack.c.l.b16 %v220
    %v577 = vunpack.c.h.b16 %v220
    %v578 = vunpack.c.l.b16 %v221
    %v579 = vunpack.c.l.b16 %v222
    %v580 = vunpack.c.h.b16 %v222
    %v581 = vunpack.c.l.b16 %v223
    %v582 = vunpack.c.h.b16 %v223
    %v583 = vunpack.c.l.b16 %v224
    %v584 = vunpack.c.h.b16 %v224
    %v585 = vunpack.c.l.b16 %v225
    %v586 = vunpack.c.l.b16 %v226
    %v587 = vunpack.c.h.b16 %v226
    %v588 = vunpack.c.l.b16 %v227
    %v589 = vunpack.c.h.b16 %v227
    %v590 = vunpack.c.l.b16 %v228
    %v591 = vunpack.c.h.b16 %v228
    %v592 = vunpack.c.l.b16 %v229
    %v593 = vunpack.c.l.b16 %v230
    %v594 = vunpack.c.h.b16 %v230
    %v595 = vunpack.c.l.b16 %v231
    %v596 = vunpack.c.h.b16 %v231
    %v597 = vunpack.c.l.b16 %v232
    %v598 = vunpack.c.h.b16 %v232
    %v599 = vunpack.c.l.b16 %v233
    %v600 = vunpack.c.l.b16 %v234
    %v601 = vunpack.c.h.b16 %v234
    %v602 = vunpack.c.l.b16 %v235
    %v603 = vunpack.c.h.b16 %v235
    %v604 = vunpack.c.l.b16 %v236
    %v605 = vunpack.c.h.b16 %v236
    %v606 = vunpack.c.l.b16 %v237
    %v607 = vunpack.c.l.b16 %v238
    %v608 = vunpack.c.h.b16 %v238
    %v609 = vunpack.c.l.b16 %v239
    %v610 = vunpack.c.h.b16 %v239
    %v611 = vunpack.c.l.b16 %v240
    %v612 = vunpack.c.h.b16 %v240
    %v613 = vunpack.c.l.b16 %v241
    %v614 = vunpack.c.l.b16 %v242
    %v615 = vunpack.c.h.b16 %v242
    %v616 = vunpack.c.l.b16 %v243
    %v617 = vunpack.c.h.b16 %v243
    %v618 = vunpack.c.l.b16 %v244
    %v619 = vunpack.c.h.b16 %v244
    %v620 = vunpack.c.l.b16 %v245
    %v621 = vunpack.c.l.b16 %v246
    %v622 = vunpack.c.h.b16 %v246
    %v623 = vunpack.c.l.b16 %v247
    %v624 = vunpack.c.h.b16 %v247
    %v625 = vunpack.c.l.b16 %v248
    %v626 = vunpack.c.h.b16 %v248
    %v627 = vunpack.c.l.b16 %v249
    %v628 = vunpack.c.l.b16 %v250
    %v629 = vunpack.c.h.b16 %v250
    %v630 = vunpack.c.l.b16 %v251
    %v631 = vunpack.c.h.b16 %v251
    %v632 = vunpack.c.l.b16 %v252
    %v633 = vunpack.c.h.b16 %v252
    %v634 = vunpack.c.l.b16 %v253
    %v635 = vunpack.c.l.b16 %v254
    %v636 = vunpack.c.h.b16 %v254
    %v637 = vunpack.c.l.b16 %v255
    %v638 = vunpack.c.h.b16 %v255
    %v639 = vunpack.c.l.b16 %v256
    %v640 = vunpack.c.h.b16 %v256
    %v641 = vunpack.c.l.b16 %v257
    %v642 = vunpack.c.l.b16 %v258
    %v643 = vunpack.c.h.b16 %v258
    %v644 = vunpack.c.l.b16 %v259
    %v645 = vunpack.c.h.b16 %v259
    %v646 = vunpack.c.l.b16 %v260
    %v647 = vunpack.c.h.b16 %v260
    %v648 = vunpack.c.l.b16 %v261
    %v649 = vunpack.c.l.b16 %v262
    %v650 = vunpack.c.h.b16 %v262
    %v651 = vunpack.c.l.b16 %v263
    %v652 = vunpack.c.h.b16 %v263
    %v653 = vunpack.c.l.b16 %v264
    %v654 = vunpack.c.h.b16 %v264
    %v655 = vunpack.c.l.b16 %v265
    %v656 = vunpack.c.l.b16 %v266
    %v657 = vunpack.c.h.b16 %v266
    %v658 = vunpack.c.l.b16 %v267
    %v659 = vunpack.c.h.b16 %v267
    %v660 = vunpack.c.l.b16 %v268
    %v661 = vunpack.c.h.b16 %v268
    %v662 = vunpack.c.l.b16 %v269
    %v663 = vunpack.c.l.b16 %v270
    %v664 = vunpack.c.h.b16 %v270
    %v665 = vunpack.c.l.b16 %v271
    %v666 = vunpack.c.h.b16 %v271
    %v667 = vunpack.c.l.b16 %v272
    %v668 = vunpack.c.h.b16 %v272
    %v669 = vunpack.c.l.b16 %v273
    %v670 = vunpack.c.l.b16 %v274
    %v671 = vunpack.c.h.b16 %v274
    %v672 = vunpack.c.l.b16 %v275
    %v673 = vunpack.c.h.b16 %v275
    %v674 = vunpack.c.l.b16 %v276
    %v675 = vunpack.c.h.b16 %v276
    %v676 = vunpack.c.l.b16 %v277
    %v677 = vunpack.c.l.b16 %v278
    %v678 = vunpack.c.h.b16 %v278
    %v679 = vunpack.c.l.b16 %v279
    %v680 = vunpack.c.h.b16 %v279
    %v681 = vunpack.c.l.b16 %v280
    %v682 = vunpack.c.h.b16 %v280
    %v683 = vunpack.c.l.b16 %v281
    %v684 = vunpack.c.l.b16 %v282
    %v685 = vunpack.c.h.b16 %v282
    %v686 = vunpack.c.l.b16 %v283
    %v687 = vunpack.c.h.b16 %v283
    %v688 = vunpack.c.l.b16 %v284
    %v689 = vunpack.c.h.b16 %v284
    %v690 = vunpack.c.l.b16 %v285
    %v691 = vunpack.c.l.b16 %v286
    %v692 = vunpack.c.h.b16 %v286
    %v693 = vunpack.c.l.b16 %v287
    %v694 = vunpack.c.h.b16 %v287
    %v695 = vunpack.c.l.b16 %v288
    %v696 = vunpack.c.h.b16 %v288
    %v697 = vunpack.c.l.b16 %v289
    %v698 = vunpack.c.l.b16 %v290
    %v699 = vunpack.c.h.b16 %v290
    %v700 = vunpack.c.l.b16 %v291
    %v701 = vunpack.c.h.b16 %v291
    %v702 = vunpack.c.l.b16 %v292
    %v703 = vunpack.c.h.b16 %v292
    %v704 = vunpack.c.l.b16 %v293
    %v705 = vunpack.c.l.b16 %v294
    %v706 = vunpack.c.h.b16 %v294
    %v707 = vunpack.c.l.b16 %v295
    %v708 = vunpack.c.h.b16 %v295
    %v709 = vunpack.c.l.b16 %v296
    %v710 = vunpack.c.h.b16 %v296
    %v711 = vunpack.c.l.b16 %v297
    %v712 = vunpack.c.l.b16 %v298
    %v713 = vunpack.c.h.b16 %v298
    %v714 = vunpack.c.l.b16 %v299
    %v715 = vunpack.c.h.b16 %v299
    %v716 = vunpack.c.l.b16 %v300
    %v717 = vunpack.c.h.b16 %v300
    %v718 = vunpack.c.l.b16 %v301
    %v719 = vunpack.c.l.b16 %v302
    %v720 = vunpack.c.h.b16 %v302
    %v721 = vunpack.c.l.b16 %v303
    %v722 = vunpack.c.h.b16 %v303
    %v723 = vunpack.c.l.b16 %v304
    %v724 = vunpack.c.h.b16 %v304
    %v725 = vunpack.c.l.b16 %v305
    %v726 = vunpack.c.l.b16 %v306
    %v727 = vunpack.c.h.b16 %v306
    %v728 = vunpack.c.l.b16 %v307
    %v729 = vunpack.c.h.b16 %v307
    %v730 = vunpack.c.l.b16 %v308
    %v731 = vunpack.c.h.b16 %v308
    %v732 = vunpack.c.l.b16 %v309
    %v733 = vunpack.c.l.b16 %v310
    %v734 = vunpack.c.h.b16 %v310
    %v735 = vunpack.c.l.b16 %v311
    %v736 = vunpack.c.h.b16 %v311
    %v737 = vunpack.c.l.b16 %v312
    %v738 = vunpack.c.h.b16 %v312
    %v739 = vunpack.c.l.b16 %v313
    %v740 = vunpack.c.l.b16 %v314
    %v741 = vunpack.c.h.b16 %v314
    %v742 = vunpack.c.l.b16 %v315
    %v743 = vunpack.c.h.b16 %v315
    %v744 = vunpack.c.l.b16 %v316
    %v745 = vunpack.c.h.b16 %v316
    %v746 = vunpack.c.l.b16 %v317
    %v747 = vunpack.c.l.b16 %v318
    %v748 = vunpack.c.h.b16 %v318
    %v749 = vunpack.c.l.b16 %v319
    %v750 = vunpack.c.h.b16 %v319
    %v751 = vunpack.c.l.b16 %v320
    %v752 = vunpack.c.h.b16 %v320
    %v753 = vunpack.c.l.b16 %v321
    %v754 = vpack.c.b16 %v537, %v530
    %v755 = vpack.c.b16 %v538, %v531
    %v756 = vpack.c.b16 %v539, %v532
    %v757 = vpack.c.b16 %v540, %v533
    %v758 = vpack.c.b16 %v541, %v534
    %v759 = vpack.c.b16 %v542, %v535
    %v760 = vpack.c.b16 %v543, %v536
    %v761 = vpack.c.b16 %v551, %v544
    %v762 = vpack.c.b16 %v552, %v545
    %v763 = vpack.c.b16 %v553, %v546
    %v764 = vpack.c.b16 %v554, %v547
    %v765 = vpack.c.b16 %v555, %v548
    %v766 = vpack.c.b16 %v556, %v549
    %v767 = vpack.c.b16 %v557, %v550
    %v768 = vpack.c.b16 %v565, %v558
    %v769 = vpack.c.b16 %v566, %v559
    %v770 = vpack.c.b16 %v567, %v560
    %v771 = vpack.c.b16 %v568, %v561
    %v772 = vpack.c.b16 %v569, %v562
    %v773 = vpack.c.b16 %v570, %v563
    %v774 = vpack.c.b16 %v571, %v564
    %v775 = vpack.c.b16 %v579, %v572
    %v776 = vpack.c.b16 %v580, %v573
    %v777 = vpack.c.b16 %v581, %v574
    %v778 = vpack.c.b16 %v582, %v575
    %v779 = vpack.c.b16 %v583, %v576
    %v780 = vpack.c.b16 %v584, %v577
    %v781 = vpack.c.b16 %v585, %v578
    %v782 = vpack.c.b16 %v593, %v586
    %v783 = vpack.c.b16 %v594, %v587
    %v784 = vpack.c.b16 %v595, %v588
    %v785 = vpack.c.b16 %v596, %v589
    %v786 = vpack.c.b16 %v597, %v590
    %v787 = vpack.c.b16 %v598, %v591
    %v788 = vpack.c.b16 %v599, %v592
    %v789 = vpack.c.b16 %v607, %v600
    %v790 = vpack.c.b16 %v608, %v601
    %v791 = vpack.c.b16 %v609, %v602
    %v792 = vpack.c.b16 %v610, %v603
    %v793 = vpack.c.b16 %v611, %v604
    %v794 = vpack.c.b16 %v612, %v605
    %v795 = vpack.c.b16 %v613, %v606
    %v796 = vpack.c.b16 %v621, %v614
    %v797 = vpack.c.b16 %v622, %v615
    %v798 = vpack.c.b16 %v623, %v616
    %v799 = vpack.c.b16 %v624, %v617
    %v800 = vpack.c.b16 %v625, %v618
    %v801 = vpack.c.b16 %v626, %v619
    %v802 = vpack.c.b16 %v627, %v620
    %v803 = vpack.c.b16 %v635, %v628
    %v804 = vpack.c.b16 %v636, %v629
    %v805 = vpack.c.b16 %v637, %v630
    %v806 = vpack.c.b16 %v638, %v631
    %v807 = vpack.c.b16 %v639, %v632
    %v808 = vpack.c.b16 %v640, %v633
    %v809 = vpack.c.b16 %v641, %v634
    %v810 = vpack.c.b16 %v649, %v642
    %v811 = vpack.c.b16 %v650, %v643
    %v812 = vpack.c.b16 %v651, %v644
    %v813 = vpack.c.b16 %v652, %v645
    %v814 = vpack.c.b16 %v653, %v646
    %v815 = vpack.c.b16 %v654, %v647
    %v816 = vpack.c.b16 %v655, %v648
    %v817 = vpack.c.b16 %v663, %v656
    %v818 = vpack.c.b16 %v664, %v657
    %v819 = vpack.c.b16 %v665, %v658
    %v820 = vpack.c.b16 %v666, %v659
    %v821 = vpack.c.b16 %v667, %v660
    %v822 = vpack.c.b16 %v668, %v661
    %v823 = vpack.c.b16 %v669, %v662
    %v824 = vpack.c.b16 %v677, %v670
    %v825 = vpack.c.b16 %v678, %v671
    %v826 = vpack.c.b16 %v679, %v672
    %v827 = vpack.c.b16 %v680, %v673
    %v828 = vpack.c.b16 %v681, %v674
    %v829 = vpack.c.b16 %v682, %v675
    %v830 = vpack.c.b16 %v683, %v676
    %v831 = vpack.c.b16 %v691, %v684
    %v832 = vpack.c.b16 %v692, %v685
    %v833 = vpack.c.b16 %v693, %v686
    %v834 = vpack.c.b16 %v694, %v687
    %v835 = vpack.c.b16 %v695, %v688
    %v836 = vpack.c.b16 %v696, %v689
    %v837 = vpack.c.b16 %v697, %v690
    %v838 = vpack.c.b16 %v705, %v698
    %v839 = vpack.c.b16 %v706, %v699
    %v840 = vpack.c.b16 %v707, %v700
    %v841 = vpack.c.b16 %v708, %v701
    %v842 = vpack.c.b16 %v709, %v702
    %v843 = vpack.c.b16 %v710, %v703
    %v844 = vpack.c.b16 %v711, %v704
    %v845 = vpack.c.b16 %v719, %v712
    %v846 = vpack.c.b16 %v720, %v713
    %v847 = vpack.c.b16 %v721, %v714
    %v848 = vpack.c.b16 %v722, %v715
    %v849 = vpack.c.b16 %v723, %v716
    %v850 = vpack.c.b16 %v724, %v717
    %v851 = vpack.c.b16 %v725, %v718
    %v852 = vpack.c.b16 %v733, %v726
    %v853 = vpack.c.b16 %v734, %v727
    %v854 = vpack.c.b16 %v735, %v728
    %v855 = vpack.c.b16 %v736, %v729
    %v856 = vpack.c.b16 %v737, %v730
    %v857 = vpack.c.b16 %v738, %v731
    %v858 = vpack.c.b16 %v739, %v732
    %v859 = vpack.c.b16 %v747, %v740
    %v860 = vpack.c.b16 %v748, %v741
    %v861 = vpack.c.b16 %v749, %v742
    %v862 = vpack.c.b16 %v750, %v743
    %v863 = vpack.c.b16 %v751, %v744
    %v864 = vpack.c.b16 %v752, %v745
    %v865 = vpack.c.b16 %v753, %v746
    %978 = vmatprep.subr.bf16.mxu0 %v804
    %979 = vmatpush1.bf16.msra.mxu0 %v803
    %980 = vmatprep.subr.bf16.mxu0 %v797
    %981 = vmatpush1.bf16.msra.mxu0 %v796
    %982 = vmatprep.subr.bf16.mxu0 %v790
    %983 = vmatpush1.bf16.msra.mxu0 %v789
    %984 = vmatprep.subr.bf16.mxu0 %v783
    %985 = vmatpush1.bf16.msra.mxu0 %v782
    %986 = vmatprep.subr.bf16.mxu0 %v776
    %987 = vmatpush1.bf16.msra.mxu0 %v775
    %988 = vmatprep.subr.bf16.mxu0 %v769
    %989 = vmatpush1.bf16.msra.mxu0 %v768
    %990 = vmatprep.subr.bf16.mxu0 %v762
    %991 = vmatpush1.bf16.msra.mxu0 %v761
    %992 = vmatprep.subr.bf16.mxu0 %v755
    %993 = vmatpush1.bf16.msra.mxu0 %v754
    %994 = vmatprep.subr.bf16.mxu0 %v860
    %995 = vmatpush2.bf16.msra.mxu0 %v859
    %996 = vmatprep.subr.bf16.mxu0 %v853
    %997 = vmatpush2.bf16.msra.mxu0 %v852
    %998 = vmatprep.subr.bf16.mxu0 %v846
    %999 = vmatpush2.bf16.msra.mxu0 %v845
    %1000 = vmatprep.subr.bf16.mxu0 %v839
    %1001 = vmatpush2.bf16.msra.mxu0 %v838
    %1002 = vmatprep.subr.bf16.mxu0 %v832
    %1003 = vmatpush2.bf16.msra.mxu0 %v831
    %1004 = vmatprep.subr.bf16.mxu0 %v825
    %1005 = vmatpush2.bf16.msra.mxu0 %v824
    %1006 = vmatprep.subr.bf16.mxu0 %v818
    %1007 = vmatpush2.bf16.msra.mxu0 %v817
    %1008 = vmatprep.subr.bf16.mxu0 %v811
    %1009 = vmatpush2.bf16.msra.mxu0 %v810
    %1010 = vmatprep.mubr.bf16.mxu0 %v371
    %1011 = vmatmul.mubr.bf16.gmra.mxu0 %v370
    %v1012 = vpop.f32.mrf.mxu0
    %v1013 = vadd.f32 0.0, %v1012
    %v1014 = vpop.f32.mrf.mxu0
    %v1015 = vadd.f32 0.0, %v1014
    %v1016 = vpop.f32.mrf.mxu0
    %v1017 = vadd.f32 0.0, %v1016
    %v1018 = vpop.f32.mrf.mxu0
    %v1019 = vadd.f32 0.0, %v1018
    %1020 = vmatprep.mubr.bf16.mxu0 %v373
    %1021 = vmatmul.mubr.bf16.gmra.mxu0 %v372
    %v1022 = vpop.f32.mrf.mxu0
    %v1023 = vadd.f32 0.0, %v1022
    %v1024 = vpop.f32.mrf.mxu0
    %v1025 = vadd.f32 0.0, %v1024
    %v1026 = vpop.f32.mrf.mxu0
    %v1027 = vadd.f32 0.0, %v1026
    %v1028 = vpop.f32.mrf.mxu0
    %v1029 = vadd.f32 0.0, %v1028
    %1030 = vmatprep.mubr.bf16.mxu0 %v375
    %1031 = vmatmul.mubr.bf16.gmra.mxu0 %v374
    %v1032 = vpop.f32.mrf.mxu0
    %v1033 = vadd.f32 0.0, %v1032
    %v1034 = vpop.f32.mrf.mxu0
    %v1035 = vadd.f32 0.0, %v1034
    %v1036 = vpop.f32.mrf.mxu0
    %v1037 = vadd.f32 0.0, %v1036
    %v1038 = vpop.f32.mrf.mxu0
    %v1039 = vadd.f32 0.0, %v1038
    %1040 = vmatprep.mubr.bf16.mxu0 %v377
    %1041 = vmatmul.mubr.bf16.gmra.mxu0 %v376
    %v1042 = vpop.f32.mrf.mxu0
    %v1043 = vadd.f32 0.0, %v1042
    %v1044 = vpop.f32.mrf.mxu0
    %v1045 = vadd.f32 0.0, %v1044
    %v1046 = vpop.f32.mrf.mxu0
    %v1047 = vadd.f32 0.0, %v1046
    %v1048 = vpop.f32.mrf.mxu0
    %v1049 = vadd.f32 0.0, %v1048
    %1050 = vmatprep.mubr.bf16.mxu0 %v379
    %1051 = vmatmul.mubr.bf16.gmra.mxu0 %v378
    %v1052 = vpop.f32.mrf.mxu0
    %v1053 = vadd.f32 0.0, %v1052
    %v1054 = vpop.f32.mrf.mxu0
    %v1055 = vadd.f32 0.0, %v1054
    %v1056 = vpop.f32.mrf.mxu0
    %v1057 = vadd.f32 0.0, %v1056
    %v1058 = vpop.f32.mrf.mxu0
    %v1059 = vadd.f32 0.0, %v1058
    %1060 = vmatprep.mubr.bf16.mxu0 %v381
    %1061 = vmatmul.mubr.bf16.gmra.mxu0 %v380
    %v1062 = vpop.f32.mrf.mxu0
    %v1063 = vadd.f32 0.0, %v1062
    %v1064 = vpop.f32.mrf.mxu0
    %v1065 = vadd.f32 0.0, %v1064
    %v1066 = vpop.f32.mrf.mxu0
    %v1067 = vadd.f32 0.0, %v1066
    %v1068 = vpop.f32.mrf.mxu0
    %v1069 = vadd.f32 0.0, %v1068
    %1070 = vmatprep.mubr.bf16.mxu0 %v383
    %1071 = vmatmul.mubr.bf16.gmra.mxu0 %v382
    %v1072 = vpop.f32.mrf.mxu0
    %v1073 = vadd.f32 0.0, %v1072
    %v1074 = vpop.f32.mrf.mxu0
    %v1075 = vadd.f32 0.0, %v1074
    %v1076 = vpop.f32.mrf.mxu0
    %v1077 = vadd.f32 0.0, %v1076
    %v1078 = vpop.f32.mrf.mxu0
    %v1079 = vadd.f32 0.0, %v1078
    %1080 = vmatprep.mubr.bf16.mxu0 %v385
    %1081 = vmatmul.mubr.bf16.gmra.mxu0 %v384
    %v1082 = vpop.f32.mrf.mxu0
    %v1083 = vadd.f32 0.0, %v1082
    %v1084 = vpop.f32.mrf.mxu0
    %v1085 = vadd.f32 0.0, %v1084
    %v1086 = vpop.f32.mrf.mxu0
    %v1087 = vadd.f32 0.0, %v1086
    %v1088 = vpop.f32.mrf.mxu0
    %v1089 = vadd.f32 0.0, %v1088
    %1090 = vdwg.mxu0
    %1091 = vmatprep.subr.bf16.mxu0 %v806
    %1092 = vmatpush1.bf16.msra.mxu0 %v805
    %1093 = vmatprep.subr.bf16.mxu0 %v799
    %1094 = vmatpush1.bf16.msra.mxu0 %v798
    %1095 = vmatprep.subr.bf16.mxu0 %v792
    %1096 = vmatpush1.bf16.msra.mxu0 %v791
    %1097 = vmatprep.subr.bf16.mxu0 %v785
    %1098 = vmatpush1.bf16.msra.mxu0 %v784
    %1099 = vmatprep.subr.bf16.mxu0 %v778
    %1100 = vmatpush1.bf16.msra.mxu0 %v777
    %1101 = vmatprep.subr.bf16.mxu0 %v771
    %1102 = vmatpush1.bf16.msra.mxu0 %v770
    %1103 = vmatprep.subr.bf16.mxu0 %v764
    %1104 = vmatpush1.bf16.msra.mxu0 %v763
    %1105 = vmatprep.subr.bf16.mxu0 %v757
    %1106 = vmatpush1.bf16.msra.mxu0 %v756
    %1107 = vmatprep.subr.bf16.mxu0 %v862
    %1108 = vmatpush2.bf16.msra.mxu0 %v861
    %1109 = vmatprep.subr.bf16.mxu0 %v855
    %1110 = vmatpush2.bf16.msra.mxu0 %v854
    %1111 = vmatprep.subr.bf16.mxu0 %v848
    %1112 = vmatpush2.bf16.msra.mxu0 %v847
    %1113 = vmatprep.subr.bf16.mxu0 %v841
    %1114 = vmatpush2.bf16.msra.mxu0 %v840
    %1115 = vmatprep.subr.bf16.mxu0 %v834
    %1116 = vmatpush2.bf16.msra.mxu0 %v833
    %1117 = vmatprep.subr.bf16.mxu0 %v827
    %1118 = vmatpush2.bf16.msra.mxu0 %v826
    %1119 = vmatprep.subr.bf16.mxu0 %v820
    %1120 = vmatpush2.bf16.msra.mxu0 %v819
    %1121 = vmatprep.subr.bf16.mxu0 %v813
    %1122 = vmatpush2.bf16.msra.mxu0 %v812
    %1123 = vmatprep.mubr.bf16.mxu0 %v371
    %1124 = vmatmul.mubr.bf16.gmra.mxu0 %v370
    %v1125 = vpop.f32.mrf.mxu0
    %v1126 = vadd.f32 0.0, %v1125
    %v1127 = vpop.f32.mrf.mxu0
    %v1128 = vadd.f32 0.0, %v1127
    %v1129 = vpop.f32.mrf.mxu0
    %v1130 = vadd.f32 0.0, %v1129
    %v1131 = vpop.f32.mrf.mxu0
    %v1132 = vadd.f32 0.0, %v1131
    %1133 = vmatprep.mubr.bf16.mxu0 %v373
    %1134 = vmatmul.mubr.bf16.gmra.mxu0 %v372
    %v1135 = vpop.f32.mrf.mxu0
    %v1136 = vadd.f32 0.0, %v1135
    %v1137 = vpop.f32.mrf.mxu0
    %v1138 = vadd.f32 0.0, %v1137
    %v1139 = vpop.f32.mrf.mxu0
    %v1140 = vadd.f32 0.0, %v1139
    %v1141 = vpop.f32.mrf.mxu0
    %v1142 = vadd.f32 0.0, %v1141
    %1143 = vmatprep.mubr.bf16.mxu0 %v375
    %1144 = vmatmul.mubr.bf16.gmra.mxu0 %v374
    %v1145 = vpop.f32.mrf.mxu0
    %v1146 = vadd.f32 0.0, %v1145
    %v1147 = vpop.f32.mrf.mxu0
    %v1148 = vadd.f32 0.0, %v1147
    %v1149 = vpop.f32.mrf.mxu0
    %v1150 = vadd.f32 0.0, %v1149
    %v1151 = vpop.f32.mrf.mxu0
    %v1152 = vadd.f32 0.0, %v1151
    %1153 = vmatprep.mubr.bf16.mxu0 %v377
    %1154 = vmatmul.mubr.bf16.gmra.mxu0 %v376
    %v1155 = vpop.f32.mrf.mxu0
    %v1156 = vadd.f32 0.0, %v1155
    %v1157 = vpop.f32.mrf.mxu0
    %v1158 = vadd.f32 0.0, %v1157
    %v1159 = vpop.f32.mrf.mxu0
    %v1160 = vadd.f32 0.0, %v1159
    %v1161 = vpop.f32.mrf.mxu0
    %v1162 = vadd.f32 0.0, %v1161
    %1163 = vmatprep.mubr.bf16.mxu0 %v379
    %1164 = vmatmul.mubr.bf16.gmra.mxu0 %v378
    %v1165 = vpop.f32.mrf.mxu0
    %v1166 = vadd.f32 0.0, %v1165
    %v1167 = vpop.f32.mrf.mxu0
    %v1168 = vadd.f32 0.0, %v1167
    %v1169 = vpop.f32.mrf.mxu0
    %v1170 = vadd.f32 0.0, %v1169
    %v1171 = vpop.f32.mrf.mxu0
    %v1172 = vadd.f32 0.0, %v1171
    %1173 = vmatprep.mubr.bf16.mxu0 %v381
    %1174 = vmatmul.mubr.bf16.gmra.mxu0 %v380
    %v1175 = vpop.f32.mrf.mxu0
    %v1176 = vadd.f32 0.0, %v1175
    %v1177 = vpop.f32.mrf.mxu0
    %v1178 = vadd.f32 0.0, %v1177
    %v1179 = vpop.f32.mrf.mxu0
    %v1180 = vadd.f32 0.0, %v1179
    %v1181 = vpop.f32.mrf.mxu0
    %v1182 = vadd.f32 0.0, %v1181
    %1183 = vmatprep.mubr.bf16.mxu0 %v383
    %1184 = vmatmul.mubr.bf16.gmra.mxu0 %v382
    %v1185 = vpop.f32.mrf.mxu0
    %v1186 = vadd.f32 0.0, %v1185
    %v1187 = vpop.f32.mrf.mxu0
    %v1188 = vadd.f32 0.0, %v1187
    %v1189 = vpop.f32.mrf.mxu0
    %v1190 = vadd.f32 0.0, %v1189
    %v1191 = vpop.f32.mrf.mxu0
    %v1192 = vadd.f32 0.0, %v1191
    %1193 = vmatprep.mubr.bf16.mxu0 %v385
    %1194 = vmatmul.mubr.bf16.gmra.mxu0 %v384
    %v1195 = vpop.f32.mrf.mxu0
    %v1196 = vadd.f32 0.0, %v1195
    %v1197 = vpop.f32.mrf.mxu0
    %v1198 = vadd.f32 0.0, %v1197
    %v1199 = vpop.f32.mrf.mxu0
    %v1200 = vadd.f32 0.0, %v1199
    %v1201 = vpop.f32.mrf.mxu0
    %v1202 = vadd.f32 0.0, %v1201
    %1203 = vdwg.mxu0
    %1204 = vmatprep.subr.bf16.mxu0 %v808
    %1205 = vmatpush1.bf16.msra.mxu0 %v807
    %1206 = vmatprep.subr.bf16.mxu0 %v801
    %1207 = vmatpush1.bf16.msra.mxu0 %v800
    %1208 = vmatprep.subr.bf16.mxu0 %v794
    %1209 = vmatpush1.bf16.msra.mxu0 %v793
    %1210 = vmatprep.subr.bf16.mxu0 %v787
    %1211 = vmatpush1.bf16.msra.mxu0 %v786
    %1212 = vmatprep.subr.bf16.mxu0 %v780
    %1213 = vmatpush1.bf16.msra.mxu0 %v779
    %1214 = vmatprep.subr.bf16.mxu0 %v773
    %1215 = vmatpush1.bf16.msra.mxu0 %v772
    %1216 = vmatprep.subr.bf16.mxu0 %v766
    %1217 = vmatpush1.bf16.msra.mxu0 %v765
    %1218 = vmatprep.subr.bf16.mxu0 %v759
    %1219 = vmatpush1.bf16.msra.mxu0 %v758
    %1220 = vmatprep.subr.bf16.mxu0 %v864
    %1221 = vmatpush2.bf16.msra.mxu0 %v863
    %1222 = vmatprep.subr.bf16.mxu0 %v857
    %1223 = vmatpush2.bf16.msra.mxu0 %v856
    %1224 = vmatprep.subr.bf16.mxu0 %v850
    %1225 = vmatpush2.bf16.msra.mxu0 %v849
    %1226 = vmatprep.subr.bf16.mxu0 %v843
    %1227 = vmatpush2.bf16.msra.mxu0 %v842
    %1228 = vmatprep.subr.bf16.mxu0 %v836
    %1229 = vmatpush2.bf16.msra.mxu0 %v835
    %1230 = vmatprep.subr.bf16.mxu0 %v829
    %1231 = vmatpush2.bf16.msra.mxu0 %v828
    %1232 = vmatprep.subr.bf16.mxu0 %v822
    %1233 = vmatpush2.bf16.msra.mxu0 %v821
    %1234 = vmatprep.subr.bf16.mxu0 %v815
    %1235 = vmatpush2.bf16.msra.mxu0 %v814
    %1236 = vmatprep.mubr.bf16.mxu0 %v371
    %1237 = vmatmul.mubr.bf16.gmra.mxu0 %v370
    %v1238 = vpop.f32.mrf.mxu0
    %v1239 = vadd.f32 0.0, %v1238
    %v1240 = vpop.f32.mrf.mxu0
    %v1241 = vadd.f32 0.0, %v1240
    %v1242 = vpop.f32.mrf.mxu0
    %v1243 = vadd.f32 0.0, %v1242
    %v1244 = vpop.f32.mrf.mxu0
    %v1245 = vadd.f32 0.0, %v1244
    %1246 = vmatprep.mubr.bf16.mxu0 %v373
    %1247 = vmatmul.mubr.bf16.gmra.mxu0 %v372
    %v1248 = vpop.f32.mrf.mxu0
    %v1249 = vadd.f32 0.0, %v1248
    %v1250 = vpop.f32.mrf.mxu0
    %v1251 = vadd.f32 0.0, %v1250
    %v1252 = vpop.f32.mrf.mxu0
    %v1253 = vadd.f32 0.0, %v1252
    %v1254 = vpop.f32.mrf.mxu0
    %v1255 = vadd.f32 0.0, %v1254
    %1256 = vmatprep.mubr.bf16.mxu0 %v375
    %1257 = vmatmul.mubr.bf16.gmra.mxu0 %v374
    %v1258 = vpop.f32.mrf.mxu0
    %v1259 = vadd.f32 0.0, %v1258
    %v1260 = vpop.f32.mrf.mxu0
    %v1261 = vadd.f32 0.0, %v1260
    %v1262 = vpop.f32.mrf.mxu0
    %v1263 = vadd.f32 0.0, %v1262
    %v1264 = vpop.f32.mrf.mxu0
    %v1265 = vadd.f32 0.0, %v1264
    %1266 = vmatprep.mubr.bf16.mxu0 %v377
    %1267 = vmatmul.mubr.bf16.gmra.mxu0 %v376
    %v1268 = vpop.f32.mrf.mxu0
    %v1269 = vadd.f32 0.0, %v1268
    %v1270 = vpop.f32.mrf.mxu0
    %v1271 = vadd.f32 0.0, %v1270
    %v1272 = vpop.f32.mrf.mxu0
    %v1273 = vadd.f32 0.0, %v1272
    %v1274 = vpop.f32.mrf.mxu0
    %v1275 = vadd.f32 0.0, %v1274
    %1276 = vmatprep.mubr.bf16.mxu0 %v379
    %1277 = vmatmul.mubr.bf16.gmra.mxu0 %v378
    %v1278 = vpop.f32.mrf.mxu0
    %v1279 = vadd.f32 0.0, %v1278
    %v1280 = vpop.f32.mrf.mxu0
    %v1281 = vadd.f32 0.0, %v1280
    %v1282 = vpop.f32.mrf.mxu0
    %v1283 = vadd.f32 0.0, %v1282
    %v1284 = vpop.f32.mrf.mxu0
    %v1285 = vadd.f32 0.0, %v1284
    %1286 = vmatprep.mubr.bf16.mxu0 %v381
    %1287 = vmatmul.mubr.bf16.gmra.mxu0 %v380
    %v1288 = vpop.f32.mrf.mxu0
    %v1289 = vadd.f32 0.0, %v1288
    %v1290 = vpop.f32.mrf.mxu0
    %v1291 = vadd.f32 0.0, %v1290
    %v1292 = vpop.f32.mrf.mxu0
    %v1293 = vadd.f32 0.0, %v1292
    %v1294 = vpop.f32.mrf.mxu0
    %v1295 = vadd.f32 0.0, %v1294
    %1296 = vmatprep.mubr.bf16.mxu0 %v383
    %1297 = vmatmul.mubr.bf16.gmra.mxu0 %v382
    %v1298 = vpop.f32.mrf.mxu0
    %v1299 = vadd.f32 0.0, %v1298
    %v1300 = vpop.f32.mrf.mxu0
    %v1301 = vadd.f32 0.0, %v1300
    %v1302 = vpop.f32.mrf.mxu0
    %v1303 = vadd.f32 0.0, %v1302
    %v1304 = vpop.f32.mrf.mxu0
    %v1305 = vadd.f32 0.0, %v1304
    %1306 = vmatprep.mubr.bf16.mxu0 %v385
    %1307 = vmatmul.mubr.bf16.gmra.mxu0 %v384
    %v1308 = vpop.f32.mrf.mxu0
    %v1309 = vadd.f32 0.0, %v1308
    %v1310 = vpop.f32.mrf.mxu0
    %v1311 = vadd.f32 0.0, %v1310
    %v1312 = vpop.f32.mrf.mxu0
    %v1313 = vadd.f32 0.0, %v1312
    %v1314 = vpop.f32.mrf.mxu0
    %v1315 = vadd.f32 0.0, %v1314
    %1316 = vdwg.mxu0
    %1317 = vmatprep.subr.bf16.mxu0 0
    %1318 = vmatpush1.bf16.msra.mxu0 %v809
    %1319 = vmatprep.subr.bf16.mxu0 0
    %1320 = vmatpush1.bf16.msra.mxu0 %v802
    %1321 = vmatprep.subr.bf16.mxu0 0
    %1322 = vmatpush1.bf16.msra.mxu0 %v795
    %1323 = vmatprep.subr.bf16.mxu0 0
    %1324 = vmatpush1.bf16.msra.mxu0 %v788
    %1325 = vmatprep.subr.bf16.mxu0 0
    %1326 = vmatpush1.bf16.msra.mxu0 %v781
    %1327 = vmatprep.subr.bf16.mxu0 0
    %1328 = vmatpush1.bf16.msra.mxu0 %v774
    %1329 = vmatprep.subr.bf16.mxu0 0
    %1330 = vmatpush1.bf16.msra.mxu0 %v767
    %1331 = vmatprep.subr.bf16.mxu0 0
    %1332 = vmatpush1.bf16.msra.mxu0 %v760
    %1333 = vmatprep.subr.bf16.mxu0 0
    %1334 = vmatpush2.bf16.msra.mxu0 %v865
    %1335 = vmatprep.subr.bf16.mxu0 0
    %1336 = vmatpush2.bf16.msra.mxu0 %v858
    %1337 = vmatprep.subr.bf16.mxu0 0
    %1338 = vmatpush2.bf16.msra.mxu0 %v851
    %1339 = vmatprep.subr.bf16.mxu0 0
    %1340 = vmatpush2.bf16.msra.mxu0 %v844
    %1341 = vmatprep.subr.bf16.mxu0 0
    %1342 = vmatpush2.bf16.msra.mxu0 %v837
    %1343 = vmatprep.subr.bf16.mxu0 0
    %1344 = vmatpush2.bf16.msra.mxu0 %v830
    %1345 = vmatprep.subr.bf16.mxu0 0
    %1346 = vmatpush2.bf16.msra.mxu0 %v823
    %1347 = vmatprep.subr.bf16.mxu0 0
    %1348 = vmatpush2.bf16.msra.mxu0 %v816
    %1349 = vmatprep.mubr.bf16.mxu0 %v371
    %1350 = vmatmul.mubr.bf16.gmra.mxu0 %v370
    %v1351 = vpop.f32.mrf.mxu0
    %v1352 = vadd.f32 0.0, %v1351
    %v1353 = vpop.f32.mrf.mxu0
    %v1354 = vpop.f32.mrf.mxu0
    %v1355 = vadd.f32 0.0, %v1354
    %v1356 = vpop.f32.mrf.mxu0
    %1357 = vmatprep.mubr.bf16.mxu0 %v373
    %1358 = vmatmul.mubr.bf16.gmra.mxu0 %v372
    %v1359 = vpop.f32.mrf.mxu0
    %v1360 = vadd.f32 0.0, %v1359
    %v1361 = vpop.f32.mrf.mxu0
    %v1362 = vpop.f32.mrf.mxu0
    %v1363 = vadd.f32 0.0, %v1362
    %v1364 = vpop.f32.mrf.mxu0
    %1365 = vmatprep.mubr.bf16.mxu0 %v375
    %1366 = vmatmul.mubr.bf16.gmra.mxu0 %v374
    %v1367 = vpop.f32.mrf.mxu0
    %v1368 = vadd.f32 0.0, %v1367
    %v1369 = vpop.f32.mrf.mxu0
    %v1370 = vpop.f32.mrf.mxu0
    %v1371 = vadd.f32 0.0, %v1370
    %v1372 = vpop.f32.mrf.mxu0
    %1373 = vmatprep.mubr.bf16.mxu0 %v377
    %1374 = vmatmul.mubr.bf16.gmra.mxu0 %v376
    %v1375 = vpop.f32.mrf.mxu0
    %v1376 = vadd.f32 0.0, %v1375
    %v1377 = vpop.f32.mrf.mxu0
    %v1378 = vpop.f32.mrf.mxu0
    %v1379 = vadd.f32 0.0, %v1378
    %v1380 = vpop.f32.mrf.mxu0
    %1381 = vmatprep.mubr.bf16.mxu0 %v379
    %1382 = vmatmul.mubr.bf16.gmra.mxu0 %v378
    %v1383 = vpop.f32.mrf.mxu0
    %v1384 = vadd.f32 0.0, %v1383
    %v1385 = vpop.f32.mrf.mxu0
    %v1386 = vpop.f32.mrf.mxu0
    %v1387 = vadd.f32 0.0, %v1386
    %v1388 = vpop.f32.mrf.mxu0
    %1389 = vmatprep.mubr.bf16.mxu0 %v381
    %1390 = vmatmul.mubr.bf16.gmra.mxu0 %v380
    %v1391 = vpop.f32.mrf.mxu0
    %v1392 = vadd.f32 0.0, %v1391
    %v1393 = vpop.f32.mrf.mxu0
    %v1394 = vpop.f32.mrf.mxu0
    %v1395 = vadd.f32 0.0, %v1394
    %v1396 = vpop.f32.mrf.mxu0
    %1397 = vmatprep.mubr.bf16.mxu0 %v383
    %1398 = vmatmul.mubr.bf16.gmra.mxu0 %v382
    %v1399 = vpop.f32.mrf.mxu0
    %v1400 = vadd.f32 0.0, %v1399
    %v1401 = vpop.f32.mrf.mxu0
    %v1402 = vpop.f32.mrf.mxu0
    %v1403 = vadd.f32 0.0, %v1402
    %v1404 = vpop.f32.mrf.mxu0
    %1405 = vmatprep.mubr.bf16.mxu0 %v385
    %1406 = vmatmul.mubr.bf16.gmra.mxu0 %v384
    %v1407 = vpop.f32.mrf.mxu0
    %v1408 = vadd.f32 0.0, %v1407
    %v1409 = vpop.f32.mrf.mxu0
    %v1410 = vpop.f32.mrf.mxu0
    %v1411 = vadd.f32 0.0, %v1410
    %v1412 = vpop.f32.mrf.mxu0
    %1413 = vdwg.mxu0
    %v1430 = vunpack.c.l.b16 %v34
    %v1431 = vunpack.c.h.b16 %v34
    %v1432 = vunpack.c.l.b16 %v35
    %v1433 = vunpack.c.h.b16 %v35
    %v1434 = vunpack.c.l.b16 %v36
    %v1435 = vunpack.c.h.b16 %v36
    %v1436 = vunpack.c.l.b16 %v37
    %v1437 = vunpack.c.h.b16 %v37
    %v1438 = vunpack.c.l.b16 %v38
    %v1439 = vunpack.c.h.b16 %v38
    %v1440 = vunpack.c.l.b16 %v39
    %v1441 = vunpack.c.h.b16 %v39
    %v1442 = vunpack.c.l.b16 %v40
    %v1443 = vunpack.c.h.b16 %v40
    %v1444 = vunpack.c.l.b16 %v41
    %v1445 = vunpack.c.h.b16 %v41
    %v1446 = vunpack.c.l.b16 %v42
    %v1447 = vunpack.c.h.b16 %v42
    %v1448 = vunpack.c.l.b16 %v43
    %v1449 = vunpack.c.h.b16 %v43
    %v1450 = vunpack.c.l.b16 %v44
    %v1451 = vunpack.c.h.b16 %v44
    %v1452 = vunpack.c.l.b16 %v45
    %v1453 = vunpack.c.h.b16 %v45
    %v1454 = vunpack.c.l.b16 %v46
    %v1455 = vunpack.c.h.b16 %v46
    %v1456 = vunpack.c.l.b16 %v47
    %v1457 = vunpack.c.h.b16 %v47
    %v1458 = vunpack.c.l.b16 %v48
    %v1459 = vunpack.c.h.b16 %v48
    %v1460 = vunpack.c.l.b16 %v49
    %v1461 = vunpack.c.h.b16 %v49
    %v1462 = vpack.c.b16 %v1432, %v1430
    %v1463 = vpack.c.b16 %v1433, %v1431
    %v1464 = vpack.c.b16 %v1436, %v1434
    %v1465 = vpack.c.b16 %v1437, %v1435
    %v1466 = vpack.c.b16 %v1440, %v1438
    %v1467 = vpack.c.b16 %v1441, %v1439
    %v1468 = vpack.c.b16 %v1444, %v1442
    %v1469 = vpack.c.b16 %v1445, %v1443
    %v1470 = vpack.c.b16 %v1448, %v1446
    %v1471 = vpack.c.b16 %v1449, %v1447
    %v1472 = vpack.c.b16 %v1452, %v1450
    %v1473 = vpack.c.b16 %v1453, %v1451
    %v1474 = vpack.c.b16 %v1456, %v1454
    %v1475 = vpack.c.b16 %v1457, %v1455
    %v1476 = vpack.c.b16 %v1460, %v1458
    %v1477 = vpack.c.b16 %v1461, %v1459
    %v1622 = vunpack.c.l.b16 %v50
    %v1623 = vunpack.c.h.b16 %v50
    %v1624 = vunpack.c.l.b16 %v51
    %v1625 = vunpack.c.h.b16 %v51
    %v1626 = vunpack.c.l.b16 %v52
    %v1627 = vunpack.c.h.b16 %v52
    %v1628 = vunpack.c.l.b16 %v53
    %v1629 = vunpack.c.l.b16 %v54
    %v1630 = vunpack.c.h.b16 %v54
    %v1631 = vunpack.c.l.b16 %v55
    %v1632 = vunpack.c.h.b16 %v55
    %v1633 = vunpack.c.l.b16 %v56
    %v1634 = vunpack.c.h.b16 %v56
    %v1635 = vunpack.c.l.b16 %v57
    %v1636 = vunpack.c.l.b16 %v58
    %v1637 = vunpack.c.h.b16 %v58
    %v1638 = vunpack.c.l.b16 %v59
    %v1639 = vunpack.c.h.b16 %v59
    %v1640 = vunpack.c.l.b16 %v60
    %v1641 = vunpack.c.h.b16 %v60
    %v1642 = vunpack.c.l.b16 %v61
    %v1643 = vunpack.c.l.b16 %v62
    %v1644 = vunpack.c.h.b16 %v62
    %v1645 = vunpack.c.l.b16 %v63
    %v1646 = vunpack.c.h.b16 %v63
    %v1647 = vunpack.c.l.b16 %v64
    %v1648 = vunpack.c.h.b16 %v64
    %v1649 = vunpack.c.l.b16 %v65
    %v1650 = vunpack.c.l.b16 %v66
    %v1651 = vunpack.c.h.b16 %v66
    %v1652 = vunpack.c.l.b16 %v67
    %v1653 = vunpack.c.h.b16 %v67
    %v1654 = vunpack.c.l.b16 %v68
    %v1655 = vunpack.c.h.b16 %v68
    %v1656 = vunpack.c.l.b16 %v69
    %v1657 = vunpack.c.l.b16 %v70
    %v1658 = vunpack.c.h.b16 %v70
    %v1659 = vunpack.c.l.b16 %v71
    %v1660 = vunpack.c.h.b16 %v71
    %v1661 = vunpack.c.l.b16 %v72
    %v1662 = vunpack.c.h.b16 %v72
    %v1663 = vunpack.c.l.b16 %v73
    %v1664 = vunpack.c.l.b16 %v74
    %v1665 = vunpack.c.h.b16 %v74
    %v1666 = vunpack.c.l.b16 %v75
    %v1667 = vunpack.c.h.b16 %v75
    %v1668 = vunpack.c.l.b16 %v76
    %v1669 = vunpack.c.h.b16 %v76
    %v1670 = vunpack.c.l.b16 %v77
    %v1671 = vunpack.c.l.b16 %v78
    %v1672 = vunpack.c.h.b16 %v78
    %v1673 = vunpack.c.l.b16 %v79
    %v1674 = vunpack.c.h.b16 %v79
    %v1675 = vunpack.c.l.b16 %v80
    %v1676 = vunpack.c.h.b16 %v80
    %v1677 = vunpack.c.l.b16 %v81
    %v1678 = vunpack.c.l.b16 %v82
    %v1679 = vunpack.c.h.b16 %v82
    %v1680 = vunpack.c.l.b16 %v83
    %v1681 = vunpack.c.h.b16 %v83
    %v1682 = vunpack.c.l.b16 %v84
    %v1683 = vunpack.c.h.b16 %v84
    %v1684 = vunpack.c.l.b16 %v85
    %v1685 = vunpack.c.l.b16 %v86
    %v1686 = vunpack.c.h.b16 %v86
    %v1687 = vunpack.c.l.b16 %v87
    %v1688 = vunpack.c.h.b16 %v87
    %v1689 = vunpack.c.l.b16 %v88
    %v1690 = vunpack.c.h.b16 %v88
    %v1691 = vunpack.c.l.b16 %v89
    %v1692 = vunpack.c.l.b16 %v90
    %v1693 = vunpack.c.h.b16 %v90
    %v1694 = vunpack.c.l.b16 %v91
    %v1695 = vunpack.c.h.b16 %v91
    %v1696 = vunpack.c.l.b16 %v92
    %v1697 = vunpack.c.h.b16 %v92
    %v1698 = vunpack.c.l.b16 %v93
    %v1699 = vunpack.c.l.b16 %v94
    %v1700 = vunpack.c.h.b16 %v94
    %v1701 = vunpack.c.l.b16 %v95
    %v1702 = vunpack.c.h.b16 %v95
    %v1703 = vunpack.c.l.b16 %v96
    %v1704 = vunpack.c.h.b16 %v96
    %v1705 = vunpack.c.l.b16 %v97
    %v1706 = vunpack.c.l.b16 %v98
    %v1707 = vunpack.c.h.b16 %v98
    %v1708 = vunpack.c.l.b16 %v99
    %v1709 = vunpack.c.h.b16 %v99
    %v1710 = vunpack.c.l.b16 %v100
    %v1711 = vunpack.c.h.b16 %v100
    %v1712 = vunpack.c.l.b16 %v101
    %v1713 = vunpack.c.l.b16 %v102
    %v1714 = vunpack.c.h.b16 %v102
    %v1715 = vunpack.c.l.b16 %v103
    %v1716 = vunpack.c.h.b16 %v103
    %v1717 = vunpack.c.l.b16 %v104
    %v1718 = vunpack.c.h.b16 %v104
    %v1719 = vunpack.c.l.b16 %v105
    %v1720 = vunpack.c.l.b16 %v106
    %v1721 = vunpack.c.h.b16 %v106
    %v1722 = vunpack.c.l.b16 %v107
    %v1723 = vunpack.c.h.b16 %v107
    %v1724 = vunpack.c.l.b16 %v108
    %v1725 = vunpack.c.h.b16 %v108
    %v1726 = vunpack.c.l.b16 %v109
    %v1727 = vunpack.c.l.b16 %v110
    %v1728 = vunpack.c.h.b16 %v110
    %v1729 = vunpack.c.l.b16 %v111
    %v1730 = vunpack.c.h.b16 %v111
    %v1731 = vunpack.c.l.b16 %v112
    %v1732 = vunpack.c.h.b16 %v112
    %v1733 = vunpack.c.l.b16 %v113
    %v1734 = vunpack.c.l.b16 %v114
    %v1735 = vunpack.c.h.b16 %v114
    %v1736 = vunpack.c.l.b16 %v115
    %v1737 = vunpack.c.h.b16 %v115
    %v1738 = vunpack.c.l.b16 %v116
    %v1739 = vunpack.c.h.b16 %v116
    %v1740 = vunpack.c.l.b16 %v117
    %v1741 = vunpack.c.l.b16 %v118
    %v1742 = vunpack.c.h.b16 %v118
    %v1743 = vunpack.c.l.b16 %v119
    %v1744 = vunpack.c.h.b16 %v119
    %v1745 = vunpack.c.l.b16 %v120
    %v1746 = vunpack.c.h.b16 %v120
    %v1747 = vunpack.c.l.b16 %v121
    %v1748 = vunpack.c.l.b16 %v122
    %v1749 = vunpack.c.h.b16 %v122
    %v1750 = vunpack.c.l.b16 %v123
    %v1751 = vunpack.c.h.b16 %v123
    %v1752 = vunpack.c.l.b16 %v124
    %v1753 = vunpack.c.h.b16 %v124
    %v1754 = vunpack.c.l.b16 %v125
    %v1755 = vunpack.c.l.b16 %v126
    %v1756 = vunpack.c.h.b16 %v126
    %v1757 = vunpack.c.l.b16 %v127
    %v1758 = vunpack.c.h.b16 %v127
    %v1759 = vunpack.c.l.b16 %v128
    %v1760 = vunpack.c.h.b16 %v128
    %v1761 = vunpack.c.l.b16 %v129
    %v1762 = vunpack.c.l.b16 %v130
    %v1763 = vunpack.c.h.b16 %v130
    %v1764 = vunpack.c.l.b16 %v131
    %v1765 = vunpack.c.h.b16 %v131
    %v1766 = vunpack.c.l.b16 %v132
    %v1767 = vunpack.c.h.b16 %v132
    %v1768 = vunpack.c.l.b16 %v133
    %v1769 = vunpack.c.l.b16 %v134
    %v1770 = vunpack.c.h.b16 %v134
    %v1771 = vunpack.c.l.b16 %v135
    %v1772 = vunpack.c.h.b16 %v135
    %v1773 = vunpack.c.l.b16 %v136
    %v1774 = vunpack.c.h.b16 %v136
    %v1775 = vunpack.c.l.b16 %v137
    %v1776 = vunpack.c.l.b16 %v138
    %v1777 = vunpack.c.h.b16 %v138
    %v1778 = vunpack.c.l.b16 %v139
    %v1779 = vunpack.c.h.b16 %v139
    %v1780 = vunpack.c.l.b16 %v140
    %v1781 = vunpack.c.h.b16 %v140
    %v1782 = vunpack.c.l.b16 %v141
    %v1783 = vunpack.c.l.b16 %v142
    %v1784 = vunpack.c.h.b16 %v142
    %v1785 = vunpack.c.l.b16 %v143
    %v1786 = vunpack.c.h.b16 %v143
    %v1787 = vunpack.c.l.b16 %v144
    %v1788 = vunpack.c.h.b16 %v144
    %v1789 = vunpack.c.l.b16 %v145
    %v1790 = vunpack.c.l.b16 %v146
    %v1791 = vunpack.c.h.b16 %v146
    %v1792 = vunpack.c.l.b16 %v147
    %v1793 = vunpack.c.h.b16 %v147
    %v1794 = vunpack.c.l.b16 %v148
    %v1795 = vunpack.c.h.b16 %v148
    %v1796 = vunpack.c.l.b16 %v149
    %v1797 = vunpack.c.l.b16 %v150
    %v1798 = vunpack.c.h.b16 %v150
    %v1799 = vunpack.c.l.b16 %v151
    %v1800 = vunpack.c.h.b16 %v151
    %v1801 = vunpack.c.l.b16 %v152
    %v1802 = vunpack.c.h.b16 %v152
    %v1803 = vunpack.c.l.b16 %v153
    %v1804 = vunpack.c.l.b16 %v154
    %v1805 = vunpack.c.h.b16 %v154
    %v1806 = vunpack.c.l.b16 %v155
    %v1807 = vunpack.c.h.b16 %v155
    %v1808 = vunpack.c.l.b16 %v156
    %v1809 = vunpack.c.h.b16 %v156
    %v1810 = vunpack.c.l.b16 %v157
    %v1811 = vunpack.c.l.b16 %v158
    %v1812 = vunpack.c.h.b16 %v158
    %v1813 = vunpack.c.l.b16 %v159
    %v1814 = vunpack.c.h.b16 %v159
    %v1815 = vunpack.c.l.b16 %v160
    %v1816 = vunpack.c.h.b16 %v160
    %v1817 = vunpack.c.l.b16 %v161
    %v1818 = vunpack.c.l.b16 %v162
    %v1819 = vunpack.c.h.b16 %v162
    %v1820 = vunpack.c.l.b16 %v163
    %v1821 = vunpack.c.h.b16 %v163
    %v1822 = vunpack.c.l.b16 %v164
    %v1823 = vunpack.c.h.b16 %v164
    %v1824 = vunpack.c.l.b16 %v165
    %v1825 = vunpack.c.l.b16 %v166
    %v1826 = vunpack.c.h.b16 %v166
    %v1827 = vunpack.c.l.b16 %v167
    %v1828 = vunpack.c.h.b16 %v167
    %v1829 = vunpack.c.l.b16 %v168
    %v1830 = vunpack.c.h.b16 %v168
    %v1831 = vunpack.c.l.b16 %v169
    %v1832 = vunpack.c.l.b16 %v170
    %v1833 = vunpack.c.h.b16 %v170
    %v1834 = vunpack.c.l.b16 %v171
    %v1835 = vunpack.c.h.b16 %v171
    %v1836 = vunpack.c.l.b16 %v172
    %v1837 = vunpack.c.h.b16 %v172
    %v1838 = vunpack.c.l.b16 %v173
    %v1839 = vunpack.c.l.b16 %v174
    %v1840 = vunpack.c.h.b16 %v174
    %v1841 = vunpack.c.l.b16 %v175
    %v1842 = vunpack.c.h.b16 %v175
    %v1843 = vunpack.c.l.b16 %v176
    %v1844 = vunpack.c.h.b16 %v176
    %v1845 = vunpack.c.l.b16 %v177
    %v1846 = vpack.c.b16 %v1629, %v1622
    %v1847 = vpack.c.b16 %v1630, %v1623
    %v1848 = vpack.c.b16 %v1631, %v1624
    %v1849 = vpack.c.b16 %v1632, %v1625
    %v1850 = vpack.c.b16 %v1633, %v1626
    %v1851 = vpack.c.b16 %v1634, %v1627
    %v1852 = vpack.c.b16 %v1635, %v1628
    %v1853 = vpack.c.b16 %v1643, %v1636
    %v1854 = vpack.c.b16 %v1644, %v1637
    %v1855 = vpack.c.b16 %v1645, %v1638
    %v1856 = vpack.c.b16 %v1646, %v1639
    %v1857 = vpack.c.b16 %v1647, %v1640
    %v1858 = vpack.c.b16 %v1648, %v1641
    %v1859 = vpack.c.b16 %v1649, %v1642
    %v1860 = vpack.c.b16 %v1657, %v1650
    %v1861 = vpack.c.b16 %v1658, %v1651
    %v1862 = vpack.c.b16 %v1659, %v1652
    %v1863 = vpack.c.b16 %v1660, %v1653
    %v1864 = vpack.c.b16 %v1661, %v1654
    %v1865 = vpack.c.b16 %v1662, %v1655
    %v1866 = vpack.c.b16 %v1663, %v1656
    %v1867 = vpack.c.b16 %v1671, %v1664
    %v1868 = vpack.c.b16 %v1672, %v1665
    %v1869 = vpack.c.b16 %v1673, %v1666
    %v1870 = vpack.c.b16 %v1674, %v1667
    %v1871 = vpack.c.b16 %v1675, %v1668
    %v1872 = vpack.c.b16 %v1676, %v1669
    %v1873 = vpack.c.b16 %v1677, %v1670
    %v1874 = vpack.c.b16 %v1685, %v1678
    %v1875 = vpack.c.b16 %v1686, %v1679
    %v1876 = vpack.c.b16 %v1687, %v1680
    %v1877 = vpack.c.b16 %v1688, %v1681
    %v1878 = vpack.c.b16 %v1689, %v1682
    %v1879 = vpack.c.b16 %v1690, %v1683
    %v1880 = vpack.c.b16 %v1691, %v1684
    %v1881 = vpack.c.b16 %v1699, %v1692
    %v1882 = vpack.c.b16 %v1700, %v1693
    %v1883 = vpack.c.b16 %v1701, %v1694
    %v1884 = vpack.c.b16 %v1702, %v1695
    %v1885 = vpack.c.b16 %v1703, %v1696
    %v1886 = vpack.c.b16 %v1704, %v1697
    %v1887 = vpack.c.b16 %v1705, %v1698
    %v1888 = vpack.c.b16 %v1713, %v1706
    %v1889 = vpack.c.b16 %v1714, %v1707
    %v1890 = vpack.c.b16 %v1715, %v1708
    %v1891 = vpack.c.b16 %v1716, %v1709
    %v1892 = vpack.c.b16 %v1717, %v1710
    %v1893 = vpack.c.b16 %v1718, %v1711
    %v1894 = vpack.c.b16 %v1719, %v1712
    %v1895 = vpack.c.b16 %v1727, %v1720
    %v1896 = vpack.c.b16 %v1728, %v1721
    %v1897 = vpack.c.b16 %v1729, %v1722
    %v1898 = vpack.c.b16 %v1730, %v1723
    %v1899 = vpack.c.b16 %v1731, %v1724
    %v1900 = vpack.c.b16 %v1732, %v1725
    %v1901 = vpack.c.b16 %v1733, %v1726
    %v1902 = vpack.c.b16 %v1741, %v1734
    %v1903 = vpack.c.b16 %v1742, %v1735
    %v1904 = vpack.c.b16 %v1743, %v1736
    %v1905 = vpack.c.b16 %v1744, %v1737
    %v1906 = vpack.c.b16 %v1745, %v1738
    %v1907 = vpack.c.b16 %v1746, %v1739
    %v1908 = vpack.c.b16 %v1747, %v1740
    %v1909 = vpack.c.b16 %v1755, %v1748
    %v1910 = vpack.c.b16 %v1756, %v1749
    %v1911 = vpack.c.b16 %v1757, %v1750
    %v1912 = vpack.c.b16 %v1758, %v1751
    %v1913 = vpack.c.b16 %v1759, %v1752
    %v1914 = vpack.c.b16 %v1760, %v1753
    %v1915 = vpack.c.b16 %v1761, %v1754
    %v1916 = vpack.c.b16 %v1769, %v1762
    %v1917 = vpack.c.b16 %v1770, %v1763
    %v1918 = vpack.c.b16 %v1771, %v1764
    %v1919 = vpack.c.b16 %v1772, %v1765
    %v1920 = vpack.c.b16 %v1773, %v1766
    %v1921 = vpack.c.b16 %v1774, %v1767
    %v1922 = vpack.c.b16 %v1775, %v1768
    %v1923 = vpack.c.b16 %v1783, %v1776
    %v1924 = vpack.c.b16 %v1784, %v1777
    %v1925 = vpack.c.b16 %v1785, %v1778
    %v1926 = vpack.c.b16 %v1786, %v1779
    %v1927 = vpack.c.b16 %v1787, %v1780
    %v1928 = vpack.c.b16 %v1788, %v1781
    %v1929 = vpack.c.b16 %v1789, %v1782
    %v1930 = vpack.c.b16 %v1797, %v1790
    %v1931 = vpack.c.b16 %v1798, %v1791
    %v1932 = vpack.c.b16 %v1799, %v1792
    %v1933 = vpack.c.b16 %v1800, %v1793
    %v1934 = vpack.c.b16 %v1801, %v1794
    %v1935 = vpack.c.b16 %v1802, %v1795
    %v1936 = vpack.c.b16 %v1803, %v1796
    %v1937 = vpack.c.b16 %v1811, %v1804
    %v1938 = vpack.c.b16 %v1812, %v1805
    %v1939 = vpack.c.b16 %v1813, %v1806
    %v1940 = vpack.c.b16 %v1814, %v1807
    %v1941 = vpack.c.b16 %v1815, %v1808
    %v1942 = vpack.c.b16 %v1816, %v1809
    %v1943 = vpack.c.b16 %v1817, %v1810
    %v1944 = vpack.c.b16 %v1825, %v1818
    %v1945 = vpack.c.b16 %v1826, %v1819
    %v1946 = vpack.c.b16 %v1827, %v1820
    %v1947 = vpack.c.b16 %v1828, %v1821
    %v1948 = vpack.c.b16 %v1829, %v1822
    %v1949 = vpack.c.b16 %v1830, %v1823
    %v1950 = vpack.c.b16 %v1831, %v1824
    %v1951 = vpack.c.b16 %v1839, %v1832
    %v1952 = vpack.c.b16 %v1840, %v1833
    %v1953 = vpack.c.b16 %v1841, %v1834
    %v1954 = vpack.c.b16 %v1842, %v1835
    %v1955 = vpack.c.b16 %v1843, %v1836
    %v1956 = vpack.c.b16 %v1844, %v1837
    %v1957 = vpack.c.b16 %v1845, %v1838
    %2070 = vmatprep.subr.bf16.mxu0 %v1896
    %2071 = vmatpush1.bf16.msra.mxu0 %v1895
    %2072 = vmatprep.subr.bf16.mxu0 %v1889
    %2073 = vmatpush1.bf16.msra.mxu0 %v1888
    %2074 = vmatprep.subr.bf16.mxu0 %v1882
    %2075 = vmatpush1.bf16.msra.mxu0 %v1881
    %2076 = vmatprep.subr.bf16.mxu0 %v1875
    %2077 = vmatpush1.bf16.msra.mxu0 %v1874
    %2078 = vmatprep.subr.bf16.mxu0 %v1868
    %2079 = vmatpush1.bf16.msra.mxu0 %v1867
    %2080 = vmatprep.subr.bf16.mxu0 %v1861
    %2081 = vmatpush1.bf16.msra.mxu0 %v1860
    %2082 = vmatprep.subr.bf16.mxu0 %v1854
    %2083 = vmatpush1.bf16.msra.mxu0 %v1853
    %2084 = vmatprep.subr.bf16.mxu0 %v1847
    %2085 = vmatpush1.bf16.msra.mxu0 %v1846
    %2086 = vmatprep.subr.bf16.mxu0 %v1952
    %2087 = vmatpush2.bf16.msra.mxu0 %v1951
    %2088 = vmatprep.subr.bf16.mxu0 %v1945
    %2089 = vmatpush2.bf16.msra.mxu0 %v1944
    %2090 = vmatprep.subr.bf16.mxu0 %v1938
    %2091 = vmatpush2.bf16.msra.mxu0 %v1937
    %2092 = vmatprep.subr.bf16.mxu0 %v1931
    %2093 = vmatpush2.bf16.msra.mxu0 %v1930
    %2094 = vmatprep.subr.bf16.mxu0 %v1924
    %2095 = vmatpush2.bf16.msra.mxu0 %v1923
    %2096 = vmatprep.subr.bf16.mxu0 %v1917
    %2097 = vmatpush2.bf16.msra.mxu0 %v1916
    %2098 = vmatprep.subr.bf16.mxu0 %v1910
    %2099 = vmatpush2.bf16.msra.mxu0 %v1909
    %2100 = vmatprep.subr.bf16.mxu0 %v1903
    %2101 = vmatpush2.bf16.msra.mxu0 %v1902
    %2102 = vmatprep.mubr.bf16.mxu0 %v1463
    %2103 = vmatmul.mubr.bf16.gmra.mxu0 %v1462
    %v2104 = vpop.f32.mrf.mxu0
    %v2105 = vadd.f32 %v1013, %v2104
    %v2106 = vpop.f32.mrf.mxu0
    %v2107 = vadd.f32 %v1015, %v2106
    %v2108 = vpop.f32.mrf.mxu0
    %v2109 = vadd.f32 %v1017, %v2108
    %v2110 = vpop.f32.mrf.mxu0
    %v2111 = vadd.f32 %v1019, %v2110
    %2112 = vmatprep.mubr.bf16.mxu0 %v1465
    %2113 = vmatmul.mubr.bf16.gmra.mxu0 %v1464
    %v2114 = vpop.f32.mrf.mxu0
    %v2115 = vadd.f32 %v1023, %v2114
    %v2116 = vpop.f32.mrf.mxu0
    %v2117 = vadd.f32 %v1025, %v2116
    %v2118 = vpop.f32.mrf.mxu0
    %v2119 = vadd.f32 %v1027, %v2118
    %v2120 = vpop.f32.mrf.mxu0
    %v2121 = vadd.f32 %v1029, %v2120
    %2122 = vmatprep.mubr.bf16.mxu0 %v1467
    %2123 = vmatmul.mubr.bf16.gmra.mxu0 %v1466
    %v2124 = vpop.f32.mrf.mxu0
    %v2125 = vadd.f32 %v1033, %v2124
    %v2126 = vpop.f32.mrf.mxu0
    %v2127 = vadd.f32 %v1035, %v2126
    %v2128 = vpop.f32.mrf.mxu0
    %v2129 = vadd.f32 %v1037, %v2128
    %v2130 = vpop.f32.mrf.mxu0
    %v2131 = vadd.f32 %v1039, %v2130
    %2132 = vmatprep.mubr.bf16.mxu0 %v1469
    %2133 = vmatmul.mubr.bf16.gmra.mxu0 %v1468
    %v2134 = vpop.f32.mrf.mxu0
    %v2135 = vadd.f32 %v1043, %v2134
    %v2136 = vpop.f32.mrf.mxu0
    %v2137 = vadd.f32 %v1045, %v2136
    %v2138 = vpop.f32.mrf.mxu0
    %v2139 = vadd.f32 %v1047, %v2138
    %v2140 = vpop.f32.mrf.mxu0
    %v2141 = vadd.f32 %v1049, %v2140
    %2142 = vmatprep.mubr.bf16.mxu0 %v1471
    %2143 = vmatmul.mubr.bf16.gmra.mxu0 %v1470
    %v2144 = vpop.f32.mrf.mxu0
    %v2145 = vadd.f32 %v1053, %v2144
    %v2146 = vpop.f32.mrf.mxu0
    %v2147 = vadd.f32 %v1055, %v2146
    %v2148 = vpop.f32.mrf.mxu0
    %v2149 = vadd.f32 %v1057, %v2148
    %v2150 = vpop.f32.mrf.mxu0
    %v2151 = vadd.f32 %v1059, %v2150
    %2152 = vmatprep.mubr.bf16.mxu0 %v1473
    %2153 = vmatmul.mubr.bf16.gmra.mxu0 %v1472
    %v2154 = vpop.f32.mrf.mxu0
    %v2155 = vadd.f32 %v1063, %v2154
    %v2156 = vpop.f32.mrf.mxu0
    %v2157 = vadd.f32 %v1065, %v2156
    %v2158 = vpop.f32.mrf.mxu0
    %v2159 = vadd.f32 %v1067, %v2158
    %v2160 = vpop.f32.mrf.mxu0
    %v2161 = vadd.f32 %v1069, %v2160
    %2162 = vmatprep.mubr.bf16.mxu0 %v1475
    %2163 = vmatmul.mubr.bf16.gmra.mxu0 %v1474
    %v2164 = vpop.f32.mrf.mxu0
    %v2165 = vadd.f32 %v1073, %v2164
    %v2166 = vpop.f32.mrf.mxu0
    %v2167 = vadd.f32 %v1075, %v2166
    %v2168 = vpop.f32.mrf.mxu0
    %v2169 = vadd.f32 %v1077, %v2168
    %v2170 = vpop.f32.mrf.mxu0
    %v2171 = vadd.f32 %v1079, %v2170
    %2172 = vmatprep.mubr.bf16.mxu0 %v1477
    %2173 = vmatmul.mubr.bf16.gmra.mxu0 %v1476
    %v2174 = vpop.f32.mrf.mxu0
    %v2175 = vadd.f32 %v1083, %v2174
    %v2176 = vpop.f32.mrf.mxu0
    %v2177 = vadd.f32 %v1085, %v2176
    %v2178 = vpop.f32.mrf.mxu0
    %v2179 = vadd.f32 %v1087, %v2178
    %v2180 = vpop.f32.mrf.mxu0
    %v2181 = vadd.f32 %v1089, %v2180
    %2182 = vdwg.mxu0
    %2183 = vmatprep.subr.bf16.mxu0 %v1898
    %2184 = vmatpush1.bf16.msra.mxu0 %v1897
    %2185 = vmatprep.subr.bf16.mxu0 %v1891
    %2186 = vmatpush1.bf16.msra.mxu0 %v1890
    %2187 = vmatprep.subr.bf16.mxu0 %v1884
    %2188 = vmatpush1.bf16.msra.mxu0 %v1883
    %2189 = vmatprep.subr.bf16.mxu0 %v1877
    %2190 = vmatpush1.bf16.msra.mxu0 %v1876
    %2191 = vmatprep.subr.bf16.mxu0 %v1870
    %2192 = vmatpush1.bf16.msra.mxu0 %v1869
    %2193 = vmatprep.subr.bf16.mxu0 %v1863
    %2194 = vmatpush1.bf16.msra.mxu0 %v1862
    %2195 = vmatprep.subr.bf16.mxu0 %v1856
    %2196 = vmatpush1.bf16.msra.mxu0 %v1855
    %2197 = vmatprep.subr.bf16.mxu0 %v1849
    %2198 = vmatpush1.bf16.msra.mxu0 %v1848
    %2199 = vmatprep.subr.bf16.mxu0 %v1954
    %2200 = vmatpush2.bf16.msra.mxu0 %v1953
    %2201 = vmatprep.subr.bf16.mxu0 %v1947
    %2202 = vmatpush2.bf16.msra.mxu0 %v1946
    %2203 = vmatprep.subr.bf16.mxu0 %v1940
    %2204 = vmatpush2.bf16.msra.mxu0 %v1939
    %2205 = vmatprep.subr.bf16.mxu0 %v1933
    %2206 = vmatpush2.bf16.msra.mxu0 %v1932
    %2207 = vmatprep.subr.bf16.mxu0 %v1926
    %2208 = vmatpush2.bf16.msra.mxu0 %v1925
    %2209 = vmatprep.subr.bf16.mxu0 %v1919
    %2210 = vmatpush2.bf16.msra.mxu0 %v1918
    %2211 = vmatprep.subr.bf16.mxu0 %v1912
    %2212 = vmatpush2.bf16.msra.mxu0 %v1911
    %2213 = vmatprep.subr.bf16.mxu0 %v1905
    %2214 = vmatpush2.bf16.msra.mxu0 %v1904
    %2215 = vmatprep.mubr.bf16.mxu0 %v1463
    %2216 = vmatmul.mubr.bf16.gmra.mxu0 %v1462
    %v2217 = vpop.f32.mrf.mxu0
    %v2218 = vadd.f32 %v1126, %v2217
    %v2219 = vpop.f32.mrf.mxu0
    %v2220 = vadd.f32 %v1128, %v2219
    %v2221 = vpop.f32.mrf.mxu0
    %v2222 = vadd.f32 %v1130, %v2221
    %v2223 = vpop.f32.mrf.mxu0
    %v2224 = vadd.f32 %v1132, %v2223
    %2225 = vmatprep.mubr.bf16.mxu0 %v1465
    %2226 = vmatmul.mubr.bf16.gmra.mxu0 %v1464
    %v2227 = vpop.f32.mrf.mxu0
    %v2228 = vadd.f32 %v1136, %v2227
    %v2229 = vpop.f32.mrf.mxu0
    %v2230 = vadd.f32 %v1138, %v2229
    %v2231 = vpop.f32.mrf.mxu0
    %v2232 = vadd.f32 %v1140, %v2231
    %v2233 = vpop.f32.mrf.mxu0
    %v2234 = vadd.f32 %v1142, %v2233
    %2235 = vmatprep.mubr.bf16.mxu0 %v1467
    %2236 = vmatmul.mubr.bf16.gmra.mxu0 %v1466
    %v2237 = vpop.f32.mrf.mxu0
    %v2238 = vadd.f32 %v1146, %v2237
    %v2239 = vpop.f32.mrf.mxu0
    %v2240 = vadd.f32 %v1148, %v2239
    %v2241 = vpop.f32.mrf.mxu0
    %v2242 = vadd.f32 %v1150, %v2241
    %v2243 = vpop.f32.mrf.mxu0
    %v2244 = vadd.f32 %v1152, %v2243
    %2245 = vmatprep.mubr.bf16.mxu0 %v1469
    %2246 = vmatmul.mubr.bf16.gmra.mxu0 %v1468
    %v2247 = vpop.f32.mrf.mxu0
    %v2248 = vadd.f32 %v1156, %v2247
    %v2249 = vpop.f32.mrf.mxu0
    %v2250 = vadd.f32 %v1158, %v2249
    %v2251 = vpop.f32.mrf.mxu0
    %v2252 = vadd.f32 %v1160, %v2251
    %v2253 = vpop.f32.mrf.mxu0
    %v2254 = vadd.f32 %v1162, %v2253
    %2255 = vmatprep.mubr.bf16.mxu0 %v1471
    %2256 = vmatmul.mubr.bf16.gmra.mxu0 %v1470
    %v2257 = vpop.f32.mrf.mxu0
    %v2258 = vadd.f32 %v1166, %v2257
    %v2259 = vpop.f32.mrf.mxu0
    %v2260 = vadd.f32 %v1168, %v2259
    %v2261 = vpop.f32.mrf.mxu0
    %v2262 = vadd.f32 %v1170, %v2261
    %v2263 = vpop.f32.mrf.mxu0
    %v2264 = vadd.f32 %v1172, %v2263
    %2265 = vmatprep.mubr.bf16.mxu0 %v1473
    %2266 = vmatmul.mubr.bf16.gmra.mxu0 %v1472
    %v2267 = vpop.f32.mrf.mxu0
    %v2268 = vadd.f32 %v1176, %v2267
    %v2269 = vpop.f32.mrf.mxu0
    %v2270 = vadd.f32 %v1178, %v2269
    %v2271 = vpop.f32.mrf.mxu0
    %v2272 = vadd.f32 %v1180, %v2271
    %v2273 = vpop.f32.mrf.mxu0
    %v2274 = vadd.f32 %v1182, %v2273
    %2275 = vmatprep.mubr.bf16.mxu0 %v1475
    %2276 = vmatmul.mubr.bf16.gmra.mxu0 %v1474
    %v2277 = vpop.f32.mrf.mxu0
    %v2278 = vadd.f32 %v1186, %v2277
    %v2279 = vpop.f32.mrf.mxu0
    %v2280 = vadd.f32 %v1188, %v2279
    %v2281 = vpop.f32.mrf.mxu0
    %v2282 = vadd.f32 %v1190, %v2281
    %v2283 = vpop.f32.mrf.mxu0
    %v2284 = vadd.f32 %v1192, %v2283
    %2285 = vmatprep.mubr.bf16.mxu0 %v1477
    %2286 = vmatmul.mubr.bf16.gmra.mxu0 %v1476
    %v2287 = vpop.f32.mrf.mxu0
    %v2288 = vadd.f32 %v1196, %v2287
    %v2289 = vpop.f32.mrf.mxu0
    %v2290 = vadd.f32 %v1198, %v2289
    %v2291 = vpop.f32.mrf.mxu0
    %v2292 = vadd.f32 %v1200, %v2291
    %v2293 = vpop.f32.mrf.mxu0
    %v2294 = vadd.f32 %v1202, %v2293
    %2295 = vdwg.mxu0
    %2296 = vmatprep.subr.bf16.mxu0 %v1900
    %2297 = vmatpush1.bf16.msra.mxu0 %v1899
    %2298 = vmatprep.subr.bf16.mxu0 %v1893
    %2299 = vmatpush1.bf16.msra.mxu0 %v1892
    %2300 = vmatprep.subr.bf16.mxu0 %v1886
    %2301 = vmatpush1.bf16.msra.mxu0 %v1885
    %2302 = vmatprep.subr.bf16.mxu0 %v1879
    %2303 = vmatpush1.bf16.msra.mxu0 %v1878
    %2304 = vmatprep.subr.bf16.mxu0 %v1872
    %2305 = vmatpush1.bf16.msra.mxu0 %v1871
    %2306 = vmatprep.subr.bf16.mxu0 %v1865
    %2307 = vmatpush1.bf16.msra.mxu0 %v1864
    %2308 = vmatprep.subr.bf16.mxu0 %v1858
    %2309 = vmatpush1.bf16.msra.mxu0 %v1857
    %2310 = vmatprep.subr.bf16.mxu0 %v1851
    %2311 = vmatpush1.bf16.msra.mxu0 %v1850
    %2312 = vmatprep.subr.bf16.mxu0 %v1956
    %2313 = vmatpush2.bf16.msra.mxu0 %v1955
    %2314 = vmatprep.subr.bf16.mxu0 %v1949
    %2315 = vmatpush2.bf16.msra.mxu0 %v1948
    %2316 = vmatprep.subr.bf16.mxu0 %v1942
    %2317 = vmatpush2.bf16.msra.mxu0 %v1941
    %2318 = vmatprep.subr.bf16.mxu0 %v1935
    %2319 = vmatpush2.bf16.msra.mxu0 %v1934
    %2320 = vmatprep.subr.bf16.mxu0 %v1928
    %2321 = vmatpush2.bf16.msra.mxu0 %v1927
    %2322 = vmatprep.subr.bf16.mxu0 %v1921
    %2323 = vmatpush2.bf16.msra.mxu0 %v1920
    %2324 = vmatprep.subr.bf16.mxu0 %v1914
    %2325 = vmatpush2.bf16.msra.mxu0 %v1913
    %2326 = vmatprep.subr.bf16.mxu0 %v1907
    %2327 = vmatpush2.bf16.msra.mxu0 %v1906
    %2328 = vmatprep.mubr.bf16.mxu0 %v1463
    %2329 = vmatmul.mubr.bf16.gmra.mxu0 %v1462
    %v2330 = vpop.f32.mrf.mxu0
    %v2331 = vadd.f32 %v1239, %v2330
    %v2332 = vpop.f32.mrf.mxu0
    %v2333 = vadd.f32 %v1241, %v2332
    %v2334 = vpop.f32.mrf.mxu0
    %v2335 = vadd.f32 %v1243, %v2334
    %v2336 = vpop.f32.mrf.mxu0
    %v2337 = vadd.f32 %v1245, %v2336
    %2338 = vmatprep.mubr.bf16.mxu0 %v1465
    %2339 = vmatmul.mubr.bf16.gmra.mxu0 %v1464
    %v2340 = vpop.f32.mrf.mxu0
    %v2341 = vadd.f32 %v1249, %v2340
    %v2342 = vpop.f32.mrf.mxu0
    %v2343 = vadd.f32 %v1251, %v2342
    %v2344 = vpop.f32.mrf.mxu0
    %v2345 = vadd.f32 %v1253, %v2344
    %v2346 = vpop.f32.mrf.mxu0
    %v2347 = vadd.f32 %v1255, %v2346
    %2348 = vmatprep.mubr.bf16.mxu0 %v1467
    %2349 = vmatmul.mubr.bf16.gmra.mxu0 %v1466
    %v2350 = vpop.f32.mrf.mxu0
    %v2351 = vadd.f32 %v1259, %v2350
    %v2352 = vpop.f32.mrf.mxu0
    %v2353 = vadd.f32 %v1261, %v2352
    %v2354 = vpop.f32.mrf.mxu0
    %v2355 = vadd.f32 %v1263, %v2354
    %v2356 = vpop.f32.mrf.mxu0
    %v2357 = vadd.f32 %v1265, %v2356
    %2358 = vmatprep.mubr.bf16.mxu0 %v1469
    %2359 = vmatmul.mubr.bf16.gmra.mxu0 %v1468
    %v2360 = vpop.f32.mrf.mxu0
    %v2361 = vadd.f32 %v1269, %v2360
    %v2362 = vpop.f32.mrf.mxu0
    %v2363 = vadd.f32 %v1271, %v2362
    %v2364 = vpop.f32.mrf.mxu0
    %v2365 = vadd.f32 %v1273, %v2364
    %v2366 = vpop.f32.mrf.mxu0
    %v2367 = vadd.f32 %v1275, %v2366
    %2368 = vmatprep.mubr.bf16.mxu0 %v1471
    %2369 = vmatmul.mubr.bf16.gmra.mxu0 %v1470
    %v2370 = vpop.f32.mrf.mxu0
    %v2371 = vadd.f32 %v1279, %v2370
    %v2372 = vpop.f32.mrf.mxu0
    %v2373 = vadd.f32 %v1281, %v2372
    %v2374 = vpop.f32.mrf.mxu0
    %v2375 = vadd.f32 %v1283, %v2374
    %v2376 = vpop.f32.mrf.mxu0
    %v2377 = vadd.f32 %v1285, %v2376
    %2378 = vmatprep.mubr.bf16.mxu0 %v1473
    %2379 = vmatmul.mubr.bf16.gmra.mxu0 %v1472
    %v2380 = vpop.f32.mrf.mxu0
    %v2381 = vadd.f32 %v1289, %v2380
    %v2382 = vpop.f32.mrf.mxu0
    %v2383 = vadd.f32 %v1291, %v2382
    %v2384 = vpop.f32.mrf.mxu0
    %v2385 = vadd.f32 %v1293, %v2384
    %v2386 = vpop.f32.mrf.mxu0
    %v2387 = vadd.f32 %v1295, %v2386
    %2388 = vmatprep.mubr.bf16.mxu0 %v1475
    %2389 = vmatmul.mubr.bf16.gmra.mxu0 %v1474
    %v2390 = vpop.f32.mrf.mxu0
    %v2391 = vadd.f32 %v1299, %v2390
    %v2392 = vpop.f32.mrf.mxu0
    %v2393 = vadd.f32 %v1301, %v2392
    %v2394 = vpop.f32.mrf.mxu0
    %v2395 = vadd.f32 %v1303, %v2394
    %v2396 = vpop.f32.mrf.mxu0
    %v2397 = vadd.f32 %v1305, %v2396
    %2398 = vmatprep.mubr.bf16.mxu0 %v1477
    %2399 = vmatmul.mubr.bf16.gmra.mxu0 %v1476
    %v2400 = vpop.f32.mrf.mxu0
    %v2401 = vadd.f32 %v1309, %v2400
    %v2402 = vpop.f32.mrf.mxu0
    %v2403 = vadd.f32 %v1311, %v2402
    %v2404 = vpop.f32.mrf.mxu0
    %v2405 = vadd.f32 %v1313, %v2404
    %v2406 = vpop.f32.mrf.mxu0
    %v2407 = vadd.f32 %v1315, %v2406
    %2408 = vdwg.mxu0
    %2409 = vmatprep.subr.bf16.mxu0 0
    %2410 = vmatpush1.bf16.msra.mxu0 %v1901
    %2411 = vmatprep.subr.bf16.mxu0 0
    %2412 = vmatpush1.bf16.msra.mxu0 %v1894
    %2413 = vmatprep.subr.bf16.mxu0 0
    %2414 = vmatpush1.bf16.msra.mxu0 %v1887
    %2415 = vmatprep.subr.bf16.mxu0 0
    %2416 = vmatpush1.bf16.msra.mxu0 %v1880
    %2417 = vmatprep.subr.bf16.mxu0 0
    %2418 = vmatpush1.bf16.msra.mxu0 %v1873
    %2419 = vmatprep.subr.bf16.mxu0 0
    %2420 = vmatpush1.bf16.msra.mxu0 %v1866
    %2421 = vmatprep.subr.bf16.mxu0 0
    %2422 = vmatpush1.bf16.msra.mxu0 %v1859
    %2423 = vmatprep.subr.bf16.mxu0 0
    %2424 = vmatpush1.bf16.msra.mxu0 %v1852
    %2425 = vmatprep.subr.bf16.mxu0 0
    %2426 = vmatpush2.bf16.msra.mxu0 %v1957
    %2427 = vmatprep.subr.bf16.mxu0 0
    %2428 = vmatpush2.bf16.msra.mxu0 %v1950
    %2429 = vmatprep.subr.bf16.mxu0 0
    %2430 = vmatpush2.bf16.msra.mxu0 %v1943
    %2431 = vmatprep.subr.bf16.mxu0 0
    %2432 = vmatpush2.bf16.msra.mxu0 %v1936
    %2433 = vmatprep.subr.bf16.mxu0 0
    %2434 = vmatpush2.bf16.msra.mxu0 %v1929
    %2435 = vmatprep.subr.bf16.mxu0 0
    %2436 = vmatpush2.bf16.msra.mxu0 %v1922
    %2437 = vmatprep.subr.bf16.mxu0 0
    %2438 = vmatpush2.bf16.msra.mxu0 %v1915
    %2439 = vmatprep.subr.bf16.mxu0 0
    %2440 = vmatpush2.bf16.msra.mxu0 %v1908
    %2441 = vmatprep.mubr.bf16.mxu0 %v1463
    %2442 = vmatmul.mubr.bf16.gmra.mxu0 %v1462
    %v2443 = vpop.f32.mrf.mxu0
    %v2444 = vadd.f32 %v1352, %v2443
    %v2445 = vpop.f32.mrf.mxu0
    %v2446 = vpop.f32.mrf.mxu0
    %v2447 = vadd.f32 %v1355, %v2446
    %v2448 = vpop.f32.mrf.mxu0
    %2449 = vmatprep.mubr.bf16.mxu0 %v1465
    %2450 = vmatmul.mubr.bf16.gmra.mxu0 %v1464
    %v2451 = vpop.f32.mrf.mxu0
    %v2452 = vadd.f32 %v1360, %v2451
    %v2453 = vpop.f32.mrf.mxu0
    %v2454 = vpop.f32.mrf.mxu0
    %v2455 = vadd.f32 %v1363, %v2454
    %v2456 = vpop.f32.mrf.mxu0
    %2457 = vmatprep.mubr.bf16.mxu0 %v1467
    %2458 = vmatmul.mubr.bf16.gmra.mxu0 %v1466
    %v2459 = vpop.f32.mrf.mxu0
    %v2460 = vadd.f32 %v1368, %v2459
    %v2461 = vpop.f32.mrf.mxu0
    %v2462 = vpop.f32.mrf.mxu0
    %v2463 = vadd.f32 %v1371, %v2462
    %v2464 = vpop.f32.mrf.mxu0
    %2465 = vmatprep.mubr.bf16.mxu0 %v1469
    %2466 = vmatmul.mubr.bf16.gmra.mxu0 %v1468
    %v2467 = vpop.f32.mrf.mxu0
    %v2468 = vadd.f32 %v1376, %v2467
    %v2469 = vpop.f32.mrf.mxu0
    %v2470 = vpop.f32.mrf.mxu0
    %v2471 = vadd.f32 %v1379, %v2470
    %v2472 = vpop.f32.mrf.mxu0
    %2473 = vmatprep.mubr.bf16.mxu0 %v1471
    %2474 = vmatmul.mubr.bf16.gmra.mxu0 %v1470
    %v2475 = vpop.f32.mrf.mxu0
    %v2476 = vadd.f32 %v1384, %v2475
    %v2477 = vpop.f32.mrf.mxu0
    %v2478 = vpop.f32.mrf.mxu0
    %v2479 = vadd.f32 %v1387, %v2478
    %v2480 = vpop.f32.mrf.mxu0
    %2481 = vmatprep.mubr.bf16.mxu0 %v1473
    %2482 = vmatmul.mubr.bf16.gmra.mxu0 %v1472
    %v2483 = vpop.f32.mrf.mxu0
    %v2484 = vadd.f32 %v1392, %v2483
    %v2485 = vpop.f32.mrf.mxu0
    %v2486 = vpop.f32.mrf.mxu0
    %v2487 = vadd.f32 %v1395, %v2486
    %v2488 = vpop.f32.mrf.mxu0
    %2489 = vmatprep.mubr.bf16.mxu0 %v1475
    %2490 = vmatmul.mubr.bf16.gmra.mxu0 %v1474
    %v2491 = vpop.f32.mrf.mxu0
    %v2492 = vadd.f32 %v1400, %v2491
    %v2493 = vpop.f32.mrf.mxu0
    %v2494 = vpop.f32.mrf.mxu0
    %v2495 = vadd.f32 %v1403, %v2494
    %v2496 = vpop.f32.mrf.mxu0
    %2497 = vmatprep.mubr.bf16.mxu0 %v1477
    %2498 = vmatmul.mubr.bf16.gmra.mxu0 %v1476
    %v2499 = vpop.f32.mrf.mxu0
    %v2500 = vadd.f32 %v1408, %v2499
    %v2501 = vpop.f32.mrf.mxu0
    %v2502 = vpop.f32.mrf.mxu0
    %v2503 = vadd.f32 %v1411, %v2502
    %v2504 = vpop.f32.mrf.mxu0
    %2505 = vdwg.mxu0
    %v2506 = vld [vmem:[%s4] sm:$0x7f]
    %v2508 = vlaneseq
    %v2509 = vshrl.u32 %v2508, 7
    %v2510 = vsub.s32 0, %v2509
    %v2511 = vrot.slane %v2506, %v2510
    %v2512 = vlaneseq
    %v2513 = vshrl.u32 %v2512, 7
    %v2514 = vsub.s32 1, %v2513
    %v2515 = vrot.slane %v2506, %v2514
    %v2516 = vlaneseq
    %v2517 = vshrl.u32 %v2516, 7
    %v2518 = vsub.s32 2, %v2517
    %v2519 = vrot.slane %v2506, %v2518
    %v2520 = vlaneseq
    %v2521 = vshrl.u32 %v2520, 7
    %v2522 = vsub.s32 3, %v2521
    %v2523 = vrot.slane %v2506, %v2522
    %v2524 = vlaneseq
    %v2525 = vshrl.u32 %v2524, 7
    %v2526 = vsub.s32 4, %v2525
    %v2527 = vrot.slane %v2506, %v2526
    %v2528 = vlaneseq
    %v2529 = vshrl.u32 %v2528, 7
    %v2530 = vsub.s32 5, %v2529
    %v2531 = vrot.slane %v2506, %v2530
    %v2532 = vlaneseq
    %v2533 = vshrl.u32 %v2532, 7
    %v2534 = vsub.s32 6, %v2533
    %v2535 = vrot.slane %v2506, %v2534
    %v2543 = vadd.f32 %v2105, %v2511
    %v2544 = vadd.f32 %v2107, %v2515
    %v2545 = vadd.f32 %v2218, %v2519
    %v2546 = vadd.f32 %v2220, %v2523
    %v2547 = vadd.f32 %v2331, %v2527
    %v2548 = vadd.f32 %v2333, %v2531
    %v2549 = vadd.f32 %v2444, %v2535
    %v2550 = vadd.f32 %v2109, %v2511
    %v2551 = vadd.f32 %v2111, %v2515
    %v2552 = vadd.f32 %v2222, %v2519
    %v2553 = vadd.f32 %v2224, %v2523
    %v2554 = vadd.f32 %v2335, %v2527
    %v2555 = vadd.f32 %v2337, %v2531
    %v2556 = vadd.f32 %v2447, %v2535
    %v2557 = vadd.f32 %v2115, %v2511
    %v2558 = vadd.f32 %v2117, %v2515
    %v2559 = vadd.f32 %v2228, %v2519
    %v2560 = vadd.f32 %v2230, %v2523
    %v2561 = vadd.f32 %v2341, %v2527
    %v2562 = vadd.f32 %v2343, %v2531
    %v2563 = vadd.f32 %v2452, %v2535
    %v2564 = vadd.f32 %v2119, %v2511
    %v2565 = vadd.f32 %v2121, %v2515
    %v2566 = vadd.f32 %v2232, %v2519
    %v2567 = vadd.f32 %v2234, %v2523
    %v2568 = vadd.f32 %v2345, %v2527
    %v2569 = vadd.f32 %v2347, %v2531
    %v2570 = vadd.f32 %v2455, %v2535
    %v2571 = vadd.f32 %v2125, %v2511
    %v2572 = vadd.f32 %v2127, %v2515
    %v2573 = vadd.f32 %v2238, %v2519
    %v2574 = vadd.f32 %v2240, %v2523
    %v2575 = vadd.f32 %v2351, %v2527
    %v2576 = vadd.f32 %v2353, %v2531
    %v2577 = vadd.f32 %v2460, %v2535
    %v2578 = vadd.f32 %v2129, %v2511
    %v2579 = vadd.f32 %v2131, %v2515
    %v2580 = vadd.f32 %v2242, %v2519
    %v2581 = vadd.f32 %v2244, %v2523
    %v2582 = vadd.f32 %v2355, %v2527
    %v2583 = vadd.f32 %v2357, %v2531
    %v2584 = vadd.f32 %v2463, %v2535
    %v2585 = vadd.f32 %v2135, %v2511
    %v2586 = vadd.f32 %v2137, %v2515
    %v2587 = vadd.f32 %v2248, %v2519
    %v2588 = vadd.f32 %v2250, %v2523
    %v2589 = vadd.f32 %v2361, %v2527
    %v2590 = vadd.f32 %v2363, %v2531
    %v2591 = vadd.f32 %v2468, %v2535
    %v2592 = vadd.f32 %v2139, %v2511
    %v2593 = vadd.f32 %v2141, %v2515
    %v2594 = vadd.f32 %v2252, %v2519
    %v2595 = vadd.f32 %v2254, %v2523
    %v2596 = vadd.f32 %v2365, %v2527
    %v2597 = vadd.f32 %v2367, %v2531
    %v2598 = vadd.f32 %v2471, %v2535
    %v2599 = vadd.f32 %v2145, %v2511
    %v2600 = vadd.f32 %v2147, %v2515
    %v2601 = vadd.f32 %v2258, %v2519
    %v2602 = vadd.f32 %v2260, %v2523
    %v2603 = vadd.f32 %v2371, %v2527
    %v2604 = vadd.f32 %v2373, %v2531
    %v2605 = vadd.f32 %v2476, %v2535
    %v2606 = vadd.f32 %v2149, %v2511
    %v2607 = vadd.f32 %v2151, %v2515
    %v2608 = vadd.f32 %v2262, %v2519
    %v2609 = vadd.f32 %v2264, %v2523
    %v2610 = vadd.f32 %v2375, %v2527
    %v2611 = vadd.f32 %v2377, %v2531
    %v2612 = vadd.f32 %v2479, %v2535
    %v2613 = vadd.f32 %v2155, %v2511
    %v2614 = vadd.f32 %v2157, %v2515
    %v2615 = vadd.f32 %v2268, %v2519
    %v2616 = vadd.f32 %v2270, %v2523
    %v2617 = vadd.f32 %v2381, %v2527
    %v2618 = vadd.f32 %v2383, %v2531
    %v2619 = vadd.f32 %v2484, %v2535
    %v2620 = vadd.f32 %v2159, %v2511
    %v2621 = vadd.f32 %v2161, %v2515
    %v2622 = vadd.f32 %v2272, %v2519
    %v2623 = vadd.f32 %v2274, %v2523
    %v2624 = vadd.f32 %v2385, %v2527
    %v2625 = vadd.f32 %v2387, %v2531
    %v2626 = vadd.f32 %v2487, %v2535
    %v2627 = vadd.f32 %v2165, %v2511
    %v2628 = vadd.f32 %v2167, %v2515
    %v2629 = vadd.f32 %v2278, %v2519
    %v2630 = vadd.f32 %v2280, %v2523
    %v2631 = vadd.f32 %v2391, %v2527
    %v2632 = vadd.f32 %v2393, %v2531
    %v2633 = vadd.f32 %v2492, %v2535
    %v2634 = vadd.f32 %v2169, %v2511
    %v2635 = vadd.f32 %v2171, %v2515
    %v2636 = vadd.f32 %v2282, %v2519
    %v2637 = vadd.f32 %v2284, %v2523
    %v2638 = vadd.f32 %v2395, %v2527
    %v2639 = vadd.f32 %v2397, %v2531
    %v2640 = vadd.f32 %v2495, %v2535
    %v2641 = vadd.f32 %v2175, %v2511
    %v2642 = vadd.f32 %v2177, %v2515
    %v2643 = vadd.f32 %v2288, %v2519
    %v2644 = vadd.f32 %v2290, %v2523
    %v2645 = vadd.f32 %v2401, %v2527
    %v2646 = vadd.f32 %v2403, %v2531
    %v2647 = vadd.f32 %v2500, %v2535
    %v2648 = vadd.f32 %v2179, %v2511
    %v2649 = vadd.f32 %v2181, %v2515
    %v2650 = vadd.f32 %v2292, %v2519
    %v2651 = vadd.f32 %v2294, %v2523
    %v2652 = vadd.f32 %v2405, %v2527
    %v2653 = vadd.f32 %v2407, %v2531
    %v2654 = vadd.f32 %v2503, %v2535
    %v2655 = vmax.f32 %v2543, 0.0
    %v2656 = vmax.f32 %v2544, 0.0
    %v2657 = vmax.f32 %v2545, 0.0
    %v2658 = vmax.f32 %v2546, 0.0
    %v2659 = vmax.f32 %v2547, 0.0
    %v2660 = vmax.f32 %v2548, 0.0
    %v2661 = vmax.f32 %v2549, 0.0
    %v2662 = vmax.f32 %v2550, 0.0
    %v2663 = vmax.f32 %v2551, 0.0
    %v2664 = vmax.f32 %v2552, 0.0
    %v2665 = vmax.f32 %v2553, 0.0
    %v2666 = vmax.f32 %v2554, 0.0
    %v2667 = vmax.f32 %v2555, 0.0
    %v2668 = vmax.f32 %v2556, 0.0
    %v2669 = vmax.f32 %v2557, 0.0
    %v2670 = vmax.f32 %v2558, 0.0
    %v2671 = vmax.f32 %v2559, 0.0
    %v2672 = vmax.f32 %v2560, 0.0
    %v2673 = vmax.f32 %v2561, 0.0
    %v2674 = vmax.f32 %v2562, 0.0
    %v2675 = vmax.f32 %v2563, 0.0
    %v2676 = vmax.f32 %v2564, 0.0
    %v2677 = vmax.f32 %v2565, 0.0
    %v2678 = vmax.f32 %v2566, 0.0
    %v2679 = vmax.f32 %v2567, 0.0
    %v2680 = vmax.f32 %v2568, 0.0
    %v2681 = vmax.f32 %v2569, 0.0
    %v2682 = vmax.f32 %v2570, 0.0
    %v2683 = vmax.f32 %v2571, 0.0
    %v2684 = vmax.f32 %v2572, 0.0
    %v2685 = vmax.f32 %v2573, 0.0
    %v2686 = vmax.f32 %v2574, 0.0
    %v2687 = vmax.f32 %v2575, 0.0
    %v2688 = vmax.f32 %v2576, 0.0
    %v2689 = vmax.f32 %v2577, 0.0
    %v2690 = vmax.f32 %v2578, 0.0
    %v2691 = vmax.f32 %v2579, 0.0
    %v2692 = vmax.f32 %v2580, 0.0
    %v2693 = vmax.f32 %v2581, 0.0
    %v2694 = vmax.f32 %v2582, 0.0
    %v2695 = vmax.f32 %v2583, 0.0
    %v2696 = vmax.f32 %v2584, 0.0
    %v2697 = vmax.f32 %v2585, 0.0
    %v2698 = vmax.f32 %v2586, 0.0
    %v2699 = vmax.f32 %v2587, 0.0
    %v2700 = vmax.f32 %v2588, 0.0
    %v2701 = vmax.f32 %v2589, 0.0
    %v2702 = vmax.f32 %v2590, 0.0
    %v2703 = vmax.f32 %v2591, 0.0
    %v2704 = vmax.f32 %v2592, 0.0
    %v2705 = vmax.f32 %v2593, 0.0
    %v2706 = vmax.f32 %v2594, 0.0
    %v2707 = vmax.f32 %v2595, 0.0
    %v2708 = vmax.f32 %v2596, 0.0
    %v2709 = vmax.f32 %v2597, 0.0
    %v2710 = vmax.f32 %v2598, 0.0
    %v2711 = vmax.f32 %v2599, 0.0
    %v2712 = vmax.f32 %v2600, 0.0
    %v2713 = vmax.f32 %v2601, 0.0
    %v2714 = vmax.f32 %v2602, 0.0
    %v2715 = vmax.f32 %v2603, 0.0
    %v2716 = vmax.f32 %v2604, 0.0
    %v2717 = vmax.f32 %v2605, 0.0
    %v2718 = vmax.f32 %v2606, 0.0
    %v2719 = vmax.f32 %v2607, 0.0
    %v2720 = vmax.f32 %v2608, 0.0
    %v2721 = vmax.f32 %v2609, 0.0
    %v2722 = vmax.f32 %v2610, 0.0
    %v2723 = vmax.f32 %v2611, 0.0
    %v2724 = vmax.f32 %v2612, 0.0
    %v2725 = vmax.f32 %v2613, 0.0
    %v2726 = vmax.f32 %v2614, 0.0
    %v2727 = vmax.f32 %v2615, 0.0
    %v2728 = vmax.f32 %v2616, 0.0
    %v2729 = vmax.f32 %v2617, 0.0
    %v2730 = vmax.f32 %v2618, 0.0
    %v2731 = vmax.f32 %v2619, 0.0
    %v2732 = vmax.f32 %v2620, 0.0
    %v2733 = vmax.f32 %v2621, 0.0
    %v2734 = vmax.f32 %v2622, 0.0
    %v2735 = vmax.f32 %v2623, 0.0
    %v2736 = vmax.f32 %v2624, 0.0
    %v2737 = vmax.f32 %v2625, 0.0
    %v2738 = vmax.f32 %v2626, 0.0
    %v2739 = vmax.f32 %v2627, 0.0
    %v2740 = vmax.f32 %v2628, 0.0
    %v2741 = vmax.f32 %v2629, 0.0
    %v2742 = vmax.f32 %v2630, 0.0
    %v2743 = vmax.f32 %v2631, 0.0
    %v2744 = vmax.f32 %v2632, 0.0
    %v2745 = vmax.f32 %v2633, 0.0
    %v2746 = vmax.f32 %v2634, 0.0
    %v2747 = vmax.f32 %v2635, 0.0
    %v2748 = vmax.f32 %v2636, 0.0
    %v2749 = vmax.f32 %v2637, 0.0
    %v2750 = vmax.f32 %v2638, 0.0
    %v2751 = vmax.f32 %v2639, 0.0
    %v2752 = vmax.f32 %v2640, 0.0
    %v2753 = vmax.f32 %v2641, 0.0
    %v2754 = vmax.f32 %v2642, 0.0
    %v2755 = vmax.f32 %v2643, 0.0
    %v2756 = vmax.f32 %v2644, 0.0
    %v2757 = vmax.f32 %v2645, 0.0
    %v2758 = vmax.f32 %v2646, 0.0
    %v2759 = vmax.f32 %v2647, 0.0
    %v2760 = vmax.f32 %v2648, 0.0
    %v2761 = vmax.f32 %v2649, 0.0
    %v2762 = vmax.f32 %v2650, 0.0
    %v2763 = vmax.f32 %v2651, 0.0
    %v2764 = vmax.f32 %v2652, 0.0
    %v2765 = vmax.f32 %v2653, 0.0
    %v2766 = vmax.f32 %v2654, 0.0
    %v2767 = vpack.c.bf16 %v2662, %v2655
    %v2768 = vpack.c.bf16 %v2663, %v2656
    %v2769 = vpack.c.bf16 %v2664, %v2657
    %v2770 = vpack.c.bf16 %v2665, %v2658
    %v2771 = vpack.c.bf16 %v2666, %v2659
    %v2772 = vpack.c.bf16 %v2667, %v2660
    %v2773 = vpack.c.bf16 %v2668, %v2661
    %v2774 = vpack.c.bf16 %v2676, %v2669
    %v2775 = vpack.c.bf16 %v2677, %v2670
    %v2776 = vpack.c.bf16 %v2678, %v2671
    %v2777 = vpack.c.bf16 %v2679, %v2672
    %v2778 = vpack.c.bf16 %v2680, %v2673
    %v2779 = vpack.c.bf16 %v2681, %v2674
    %v2780 = vpack.c.bf16 %v2682, %v2675
    %v2781 = vpack.c.bf16 %v2690, %v2683
    %v2782 = vpack.c.bf16 %v2691, %v2684
    %v2783 = vpack.c.bf16 %v2692, %v2685
    %v2784 = vpack.c.bf16 %v2693, %v2686
    %v2785 = vpack.c.bf16 %v2694, %v2687
    %v2786 = vpack.c.bf16 %v2695, %v2688
    %v2787 = vpack.c.bf16 %v2696, %v2689
    %v2788 = vpack.c.bf16 %v2704, %v2697
    %v2789 = vpack.c.bf16 %v2705, %v2698
    %v2790 = vpack.c.bf16 %v2706, %v2699
    %v2791 = vpack.c.bf16 %v2707, %v2700
    %v2792 = vpack.c.bf16 %v2708, %v2701
    %v2793 = vpack.c.bf16 %v2709, %v2702
    %v2794 = vpack.c.bf16 %v2710, %v2703
    %v2795 = vpack.c.bf16 %v2718, %v2711
    %v2796 = vpack.c.bf16 %v2719, %v2712
    %v2797 = vpack.c.bf16 %v2720, %v2713
    %v2798 = vpack.c.bf16 %v2721, %v2714
    %v2799 = vpack.c.bf16 %v2722, %v2715
    %v2800 = vpack.c.bf16 %v2723, %v2716
    %v2801 = vpack.c.bf16 %v2724, %v2717
    %v2802 = vpack.c.bf16 %v2732, %v2725
    %v2803 = vpack.c.bf16 %v2733, %v2726
    %v2804 = vpack.c.bf16 %v2734, %v2727
    %v2805 = vpack.c.bf16 %v2735, %v2728
    %v2806 = vpack.c.bf16 %v2736, %v2729
    %v2807 = vpack.c.bf16 %v2737, %v2730
    %v2808 = vpack.c.bf16 %v2738, %v2731
    %v2809 = vpack.c.bf16 %v2746, %v2739
    %v2810 = vpack.c.bf16 %v2747, %v2740
    %v2811 = vpack.c.bf16 %v2748, %v2741
    %v2812 = vpack.c.bf16 %v2749, %v2742
    %v2813 = vpack.c.bf16 %v2750, %v2743
    %v2814 = vpack.c.bf16 %v2751, %v2744
    %v2815 = vpack.c.bf16 %v2752, %v2745
    %v2816 = vpack.c.bf16 %v2760, %v2753
    %v2817 = vpack.c.bf16 %v2761, %v2754
    %v2818 = vpack.c.bf16 %v2762, %v2755
    %v2819 = vpack.c.bf16 %v2763, %v2756
    %v2820 = vpack.c.bf16 %v2764, %v2757
    %v2821 = vpack.c.bf16 %v2765, %v2758
    %v2822 = vpack.c.bf16 %v2766, %v2759
    %v2823 = vld [vmem:[%s5] sm:$0xff]
    %v2824 = vld [vmem:[%s5 + $0x8] sm:$0xf]
    %v2825 = vld [vmem:[%s5 + $0xc] sm:$0xff]
    %v2826 = vld [vmem:[%s5 + $0x14] sm:$0xf]
    %v2827 = vld [vmem:[%s5 + $0x18] sm:$0xff]
    %v2828 = vld [vmem:[%s5 + $0x20] sm:$0xf]
    %v2829 = vld [vmem:[%s5 + $0x24] sm:$0xff]
    %v2830 = vld [vmem:[%s5 + $0x2c] sm:$0xf]
    %v2831 = vld [vmem:[%s5 + $0x30] sm:$0xff]
    %v2832 = vld [vmem:[%s5 + $0x38] sm:$0xf]
    %v2833 = vld [vmem:[%s5 + $0x3c] sm:$0xff]
    %v2834 = vld [vmem:[%s5 + $0x44] sm:$0xf]
    %v2835 = vld [vmem:[%s5 + $0x48] sm:$0xff]
    %v2836 = vld [vmem:[%s5 + $0x50] sm:$0xf]
    %v2837 = vld [vmem:[%s5 + $0x54] sm:$0xff]
    %v2838 = vld [vmem:[%s5 + $0x5c] sm:$0xf]
    %v2839 = vld [vmem:[%s5 + $0x60] sm:$0xff]
    %v2840 = vld [vmem:[%s5 + $0x68] sm:$0xf]
    %v2841 = vld [vmem:[%s5 + $0x6c] sm:$0xff]
    %v2842 = vld [vmem:[%s5 + $0x74] sm:$0xf]
    %v2843 = vld [vmem:[%s5 + $0x78] sm:$0xff]
    %v2844 = vld [vmem:[%s5 + $0x80] sm:$0xf]
    %v2845 = vld [vmem:[%s5 + $0x84] sm:$0xff]
    %v2846 = vld [vmem:[%s5 + $0x8c] sm:$0xf]
    %v2847 = vld [vmem:[%s5 + $0x90] sm:$0xff]
    %v2848 = vld [vmem:[%s5 + $0x98] sm:$0xf]
    %v2849 = vld [vmem:[%s5 + $0x9c] sm:$0xff]
    %v2850 = vld [vmem:[%s5 + $0xa4] sm:$0xf]
    %v2851 = vld [vmem:[%s5 + $0xa8] sm:$0xff]
    %v2852 = vld [vmem:[%s5 + $0xb0] sm:$0xf]
    %v2853 = vld [vmem:[%s5 + $0xb4] sm:$0xff]
    %v2854 = vld [vmem:[%s5 + $0xbc] sm:$0xf]
    %v2855 = vld [vmem:[%s5 + $0xc0] sm:$0xff]
    %v2856 = vld [vmem:[%s5 + $0xc8] sm:$0xf]
    %v2857 = vld [vmem:[%s5 + $0xcc] sm:$0xff]
    %v2858 = vld [vmem:[%s5 + $0xd4] sm:$0xf]
    %v2859 = vld [vmem:[%s5 + $0xd8] sm:$0xff]
    %v2860 = vld [vmem:[%s5 + $0xe0] sm:$0xf]
    %v2861 = vld [vmem:[%s5 + $0xe4] sm:$0xff]
    %v2862 = vld [vmem:[%s5 + $0xec] sm:$0xf]
    %v2863 = vld [vmem:[%s5 + $0xf0] sm:$0xff]
    %v2864 = vld [vmem:[%s5 + $0xf8] sm:$0xf]
    %v2865 = vld [vmem:[%s5 + $0xfc] sm:$0xff]
    %v2866 = vld [vmem:[%s5 + $0x104] sm:$0xf]
    %v2867 = vld [vmem:[%s5 + $0x108] sm:$0xff]
    %v2868 = vld [vmem:[%s5 + $0x110] sm:$0xf]
    %v2869 = vld [vmem:[%s5 + $0x114] sm:$0xff]
    %v2870 = vld [vmem:[%s5 + $0x11c] sm:$0xf]
    %v2871 = vld [vmem:[%s5 + $0x120] sm:$0xff]
    %v2872 = vld [vmem:[%s5 + $0x128] sm:$0xf]
    %v2873 = vld [vmem:[%s5 + $0x12c] sm:$0xff]
    %v2874 = vld [vmem:[%s5 + $0x134] sm:$0xf]
    %v2875 = vld [vmem:[%s5 + $0x138] sm:$0xff]
    %v2876 = vld [vmem:[%s5 + $0x140] sm:$0xf]
    %v2877 = vld [vmem:[%s5 + $0x144] sm:$0xff]
    %v2878 = vld [vmem:[%s5 + $0x14c] sm:$0xf]
    %v2879 = vld [vmem:[%s5 + $0x150] sm:$0xff]
    %v2880 = vld [vmem:[%s5 + $0x158] sm:$0xf]
    %v2881 = vld [vmem:[%s5 + $0x15c] sm:$0xff]
    %v2882 = vld [vmem:[%s5 + $0x164] sm:$0xf]
    %v2883 = vld [vmem:[%s5 + $0x168] sm:$0xff]
    %v2884 = vld [vmem:[%s5 + $0x170] sm:$0xf]
    %v2885 = vld [vmem:[%s5 + $0x174] sm:$0xff]
    %v2886 = vld [vmem:[%s5 + $0x17c] sm:$0xf]
    %v2887 = vld [vmem:[%s5 + $0x180] sm:$0xff]
    %v2888 = vld [vmem:[%s5 + $0x188] sm:$0xf]
    %v2889 = vld [vmem:[%s5 + $0x18c] sm:$0xff]
    %v2890 = vld [vmem:[%s5 + $0x194] sm:$0xf]
    %v2891 = vld [vmem:[%s5 + $0x198] sm:$0xff]
    %v2892 = vld [vmem:[%s5 + $0x1a0] sm:$0xf]
    %v2893 = vld [vmem:[%s5 + $0x1a4] sm:$0xff]
    %v2894 = vld [vmem:[%s5 + $0x1ac] sm:$0xf]
    %v2895 = vld [vmem:[%s5 + $0x1b0] sm:$0xff]
    %v2896 = vld [vmem:[%s5 + $0x1b8] sm:$0xf]
    %v2897 = vld [vmem:[%s5 + $0x1bc] sm:$0xff]
    %v2898 = vld [vmem:[%s5 + $0x1c4] sm:$0xf]
    %v2899 = vld [vmem:[%s5 + $0x1c8] sm:$0xff]
    %v2900 = vld [vmem:[%s5 + $0x1d0] sm:$0xf]
    %v2901 = vld [vmem:[%s5 + $0x1d4] sm:$0xff]
    %v2902 = vld [vmem:[%s5 + $0x1dc] sm:$0xf]
    %v2903 = vld [vmem:[%s5 + $0x1e0] sm:$0xff]
    %v2904 = vld [vmem:[%s5 + $0x1e8] sm:$0xf]
    %v2905 = vld [vmem:[%s5 + $0x1ec] sm:$0xff]
    %v2906 = vld [vmem:[%s5 + $0x1f4] sm:$0xf]
    %v2907 = vld [vmem:[%s5 + $0x1f8] sm:$0xff]
    %v2908 = vld [vmem:[%s5 + $0x200] sm:$0xf]
    %v2909 = vld [vmem:[%s5 + $0x204] sm:$0xff]
    %v2910 = vld [vmem:[%s5 + $0x20c] sm:$0xf]
    %v2911 = vld [vmem:[%s5 + $0x210] sm:$0xff]
    %v2912 = vld [vmem:[%s5 + $0x218] sm:$0xf]
    %v2913 = vld [vmem:[%s5 + $0x21c] sm:$0xff]
    %v2914 = vld [vmem:[%s5 + $0x224] sm:$0xf]
    %v2915 = vld [vmem:[%s5 + $0x228] sm:$0xff]
    %v2916 = vld [vmem:[%s5 + $0x230] sm:$0xf]
    %v2917 = vld [vmem:[%s5 + $0x234] sm:$0xff]
    %v2918 = vld [vmem:[%s5 + $0x23c] sm:$0xf]
    %v2919 = vld [vmem:[%s5 + $0x240] sm:$0xff]
    %v2920 = vld [vmem:[%s5 + $0x248] sm:$0xf]
    %v2921 = vld [vmem:[%s5 + $0x24c] sm:$0xff]
    %v2922 = vld [vmem:[%s5 + $0x254] sm:$0xf]
    %v2923 = vld [vmem:[%s5 + $0x258] sm:$0xff]
    %v2924 = vld [vmem:[%s5 + $0x260] sm:$0xf]
    %v2925 = vld [vmem:[%s5 + $0x264] sm:$0xff]
    %v2926 = vld [vmem:[%s5 + $0x26c] sm:$0xf]
    %v2927 = vld [vmem:[%s5 + $0x270] sm:$0xff]
    %v2928 = vld [vmem:[%s5 + $0x278] sm:$0xf]
    %v2929 = vld [vmem:[%s5 + $0x27c] sm:$0xff]
    %v2930 = vld [vmem:[%s5 + $0x284] sm:$0xf]
    %v2931 = vld [vmem:[%s5 + $0x288] sm:$0xff]
    %v2932 = vld [vmem:[%s5 + $0x290] sm:$0xf]
    %v2933 = vld [vmem:[%s5 + $0x294] sm:$0xff]
    %v2934 = vld [vmem:[%s5 + $0x29c] sm:$0xf]
    %v2935 = vld [vmem:[%s5 + $0x2a0] sm:$0xff]
    %v2936 = vld [vmem:[%s5 + $0x2a8] sm:$0xf]
    %v2937 = vld [vmem:[%s5 + $0x2ac] sm:$0xff]
    %v2938 = vld [vmem:[%s5 + $0x2b4] sm:$0xf]
    %v2939 = vld [vmem:[%s5 + $0x2b8] sm:$0xff]
    %v2940 = vld [vmem:[%s5 + $0x2c0] sm:$0xf]
    %v2941 = vld [vmem:[%s5 + $0x2c4] sm:$0xff]
    %v2942 = vld [vmem:[%s5 + $0x2cc] sm:$0xf]
    %v2943 = vld [vmem:[%s5 + $0x2d0] sm:$0xff]
    %v2944 = vld [vmem:[%s5 + $0x2d8] sm:$0xf]
    %v2945 = vld [vmem:[%s5 + $0x2dc] sm:$0xff]
    %v2946 = vld [vmem:[%s5 + $0x2e4] sm:$0xf]
    %v2947 = vld [vmem:[%s5 + $0x2e8] sm:$0xff]
    %v2948 = vld [vmem:[%s5 + $0x2f0] sm:$0xf]
    %v2949 = vld [vmem:[%s5 + $0x2f4] sm:$0xff]
    %v2950 = vld [vmem:[%s5 + $0x2fc] sm:$0xf]
    %v2951 = vld [vmem:[%s5 + $0x300] sm:$0xff]
    %v2952 = vld [vmem:[%s5 + $0x308] sm:$0xf]
    %v2953 = vld [vmem:[%s5 + $0x30c] sm:$0xff]
    %v2954 = vld [vmem:[%s5 + $0x314] sm:$0xf]
    %v2955 = vld [vmem:[%s5 + $0x318] sm:$0xff]
    %v2956 = vld [vmem:[%s5 + $0x320] sm:$0xf]
    %v2957 = vld [vmem:[%s5 + $0x324] sm:$0xff]
    %v2958 = vld [vmem:[%s5 + $0x32c] sm:$0xf]
    %v2959 = vld [vmem:[%s5 + $0x330] sm:$0xff]
    %v2960 = vld [vmem:[%s5 + $0x338] sm:$0xf]
    %v2961 = vld [vmem:[%s5 + $0x33c] sm:$0xff]
    %v2962 = vld [vmem:[%s5 + $0x344] sm:$0xf]
    %v2963 = vld [vmem:[%s5 + $0x348] sm:$0xff]
    %v2964 = vld [vmem:[%s5 + $0x350] sm:$0xf]
    %v2965 = vld [vmem:[%s5 + $0x354] sm:$0xff]
    %v2966 = vld [vmem:[%s5 + $0x35c] sm:$0xf]
    %v2967 = vld [vmem:[%s5 + $0x360] sm:$0xff]
    %v2968 = vld [vmem:[%s5 + $0x368] sm:$0xf]
    %v2969 = vld [vmem:[%s5 + $0x36c] sm:$0xff]
    %v2970 = vld [vmem:[%s5 + $0x374] sm:$0xf]
    %v2971 = vld [vmem:[%s5 + $0x378] sm:$0xff]
    %v2972 = vld [vmem:[%s5 + $0x380] sm:$0xf]
    %v2973 = vld [vmem:[%s5 + $0x384] sm:$0xff]
    %v2974 = vld [vmem:[%s5 + $0x38c] sm:$0xf]
    %v2975 = vld [vmem:[%s5 + $0x390] sm:$0xff]
    %v2976 = vld [vmem:[%s5 + $0x398] sm:$0xf]
    %v2977 = vld [vmem:[%s5 + $0x39c] sm:$0xff]
    %v2978 = vld [vmem:[%s5 + $0x3a4] sm:$0xf]
    %v2979 = vld [vmem:[%s5 + $0x3a8] sm:$0xff]
    %v2980 = vld [vmem:[%s5 + $0x3b0] sm:$0xf]
    %v2981 = vld [vmem:[%s5 + $0x3b4] sm:$0xff]
    %v2982 = vld [vmem:[%s5 + $0x3bc] sm:$0xf]
    %v2983 = vld [vmem:[%s5 + $0x3c0] sm:$0xff]
    %v2984 = vld [vmem:[%s5 + $0x3c8] sm:$0xf]
    %v2985 = vld [vmem:[%s5 + $0x3cc] sm:$0xff]
    %v2986 = vld [vmem:[%s5 + $0x3d4] sm:$0xf]
    %v2987 = vld [vmem:[%s5 + $0x3d8] sm:$0xff]
    %v2988 = vld [vmem:[%s5 + $0x3e0] sm:$0xf]
    %v2989 = vld [vmem:[%s5 + $0x3e4] sm:$0xff]
    %v2990 = vld [vmem:[%s5 + $0x3ec] sm:$0xf]
    %v2991 = vld [vmem:[%s5 + $0x3f0] sm:$0xff]
    %v2992 = vld [vmem:[%s5 + $0x3f8] sm:$0xf]
    %v2993 = vld [vmem:[%s5 + $0x3fc] sm:$0xff]
    %v2994 = vld [vmem:[%s5 + $0x404] sm:$0xf]
    %v2995 = vld [vmem:[%s5 + $0x408] sm:$0xff]
    %v2996 = vld [vmem:[%s5 + $0x410] sm:$0xf]
    %v2997 = vld [vmem:[%s5 + $0x414] sm:$0xff]
    %v2998 = vld [vmem:[%s5 + $0x41c] sm:$0xf]
    %v2999 = vld [vmem:[%s5 + $0x420] sm:$0xff]
    %v3000 = vld [vmem:[%s5 + $0x428] sm:$0xf]
    %v3001 = vld [vmem:[%s5 + $0x42c] sm:$0xff]
    %v3002 = vld [vmem:[%s5 + $0x434] sm:$0xf]
    %v3003 = vld [vmem:[%s5 + $0x438] sm:$0xff]
    %v3004 = vld [vmem:[%s5 + $0x440] sm:$0xf]
    %v3005 = vld [vmem:[%s5 + $0x444] sm:$0xff]
    %v3006 = vld [vmem:[%s5 + $0x44c] sm:$0xf]
    %v3007 = vld [vmem:[%s5 + $0x450] sm:$0xff]
    %v3008 = vld [vmem:[%s5 + $0x458] sm:$0xf]
    %v3009 = vld [vmem:[%s5 + $0x45c] sm:$0xff]
    %v3010 = vld [vmem:[%s5 + $0x464] sm:$0xf]
    %v3011 = vld [vmem:[%s5 + $0x468] sm:$0xff]
    %v3012 = vld [vmem:[%s5 + $0x470] sm:$0xf]
    %v3013 = vld [vmem:[%s5 + $0x474] sm:$0xff]
    %v3014 = vld [vmem:[%s5 + $0x47c] sm:$0xf]
    %v3015 = vld [vmem:[%s5 + $0x480] sm:$0xff]
    %v3016 = vld [vmem:[%s5 + $0x488] sm:$0xf]
    %v3017 = vld [vmem:[%s5 + $0x48c] sm:$0xff]
    %v3018 = vld [vmem:[%s5 + $0x494] sm:$0xf]
    %v3019 = vld [vmem:[%s5 + $0x498] sm:$0xff]
    %v3020 = vld [vmem:[%s5 + $0x4a0] sm:$0xf]
    %v3021 = vld [vmem:[%s5 + $0x4a4] sm:$0xff]
    %v3022 = vld [vmem:[%s5 + $0x4ac] sm:$0xf]
    %v3023 = vld [vmem:[%s6] sm:$0x7]
    %v3025 = vlaneseq
    %v3026 = vshrl.u32 %v3025, 7
    %v3027 = vsub.s32 0, %v3026
    %v3028 = vrot.slane %v3023, %v3027
    %v3029 = vlaneseq
    %v3030 = vshrl.u32 %v3029, 7
    %v3031 = vsub.s32 1, %v3030
    %v3032 = vrot.slane %v3023, %v3031
    %v3033 = vlaneseq
    %v3034 = vshrl.u32 %v3033, 7
    %v3035 = vsub.s32 2, %v3034
    %v3036 = vrot.slane %v3023, %v3035
    %v3240 = vunpack.c.l.b16 %v2823
    %v3241 = vunpack.c.h.b16 %v2823
    %v3242 = vunpack.c.l.b16 %v2824
    %v3243 = vunpack.c.l.b16 %v2825
    %v3244 = vunpack.c.h.b16 %v2825
    %v3245 = vunpack.c.l.b16 %v2826
    %v3246 = vunpack.c.l.b16 %v2827
    %v3247 = vunpack.c.h.b16 %v2827
    %v3248 = vunpack.c.l.b16 %v2828
    %v3249 = vunpack.c.l.b16 %v2829
    %v3250 = vunpack.c.h.b16 %v2829
    %v3251 = vunpack.c.l.b16 %v2830
    %v3252 = vunpack.c.l.b16 %v2831
    %v3253 = vunpack.c.h.b16 %v2831
    %v3254 = vunpack.c.l.b16 %v2832
    %v3255 = vunpack.c.l.b16 %v2833
    %v3256 = vunpack.c.h.b16 %v2833
    %v3257 = vunpack.c.l.b16 %v2834
    %v3258 = vunpack.c.l.b16 %v2835
    %v3259 = vunpack.c.h.b16 %v2835
    %v3260 = vunpack.c.l.b16 %v2836
    %v3261 = vunpack.c.l.b16 %v2837
    %v3262 = vunpack.c.h.b16 %v2837
    %v3263 = vunpack.c.l.b16 %v2838
    %v3264 = vunpack.c.l.b16 %v2839
    %v3265 = vunpack.c.h.b16 %v2839
    %v3266 = vunpack.c.l.b16 %v2840
    %v3267 = vunpack.c.l.b16 %v2841
    %v3268 = vunpack.c.h.b16 %v2841
    %v3269 = vunpack.c.l.b16 %v2842
    %v3270 = vunpack.c.l.b16 %v2843
    %v3271 = vunpack.c.h.b16 %v2843
    %v3272 = vunpack.c.l.b16 %v2844
    %v3273 = vunpack.c.l.b16 %v2845
    %v3274 = vunpack.c.h.b16 %v2845
    %v3275 = vunpack.c.l.b16 %v2846
    %v3276 = vunpack.c.l.b16 %v2847
    %v3277 = vunpack.c.h.b16 %v2847
    %v3278 = vunpack.c.l.b16 %v2848
    %v3279 = vunpack.c.l.b16 %v2849
    %v3280 = vunpack.c.h.b16 %v2849
    %v3281 = vunpack.c.l.b16 %v2850
    %v3282 = vunpack.c.l.b16 %v2851
    %v3283 = vunpack.c.h.b16 %v2851
    %v3284 = vunpack.c.l.b16 %v2852
    %v3285 = vunpack.c.l.b16 %v2853
    %v3286 = vunpack.c.h.b16 %v2853
    %v3287 = vunpack.c.l.b16 %v2854
    %v3288 = vunpack.c.l.b16 %v2855
    %v3289 = vunpack.c.h.b16 %v2855
    %v3290 = vunpack.c.l.b16 %v2856
    %v3291 = vunpack.c.l.b16 %v2857
    %v3292 = vunpack.c.h.b16 %v2857
    %v3293 = vunpack.c.l.b16 %v2858
    %v3294 = vunpack.c.l.b16 %v2859
    %v3295 = vunpack.c.h.b16 %v2859
    %v3296 = vunpack.c.l.b16 %v2860
    %v3297 = vunpack.c.l.b16 %v2861
    %v3298 = vunpack.c.h.b16 %v2861
    %v3299 = vunpack.c.l.b16 %v2862
    %v3300 = vunpack.c.l.b16 %v2863
    %v3301 = vunpack.c.h.b16 %v2863
    %v3302 = vunpack.c.l.b16 %v2864
    %v3303 = vunpack.c.l.b16 %v2865
    %v3304 = vunpack.c.h.b16 %v2865
    %v3305 = vunpack.c.l.b16 %v2866
    %v3306 = vunpack.c.l.b16 %v2867
    %v3307 = vunpack.c.h.b16 %v2867
    %v3308 = vunpack.c.l.b16 %v2868
    %v3309 = vunpack.c.l.b16 %v2869
    %v3310 = vunpack.c.h.b16 %v2869
    %v3311 = vunpack.c.l.b16 %v2870
    %v3312 = vunpack.c.l.b16 %v2871
    %v3313 = vunpack.c.h.b16 %v2871
    %v3314 = vunpack.c.l.b16 %v2872
    %v3315 = vunpack.c.l.b16 %v2873
    %v3316 = vunpack.c.h.b16 %v2873
    %v3317 = vunpack.c.l.b16 %v2874
    %v3318 = vunpack.c.l.b16 %v2875
    %v3319 = vunpack.c.h.b16 %v2875
    %v3320 = vunpack.c.l.b16 %v2876
    %v3321 = vunpack.c.l.b16 %v2877
    %v3322 = vunpack.c.h.b16 %v2877
    %v3323 = vunpack.c.l.b16 %v2878
    %v3324 = vunpack.c.l.b16 %v2879
    %v3325 = vunpack.c.h.b16 %v2879
    %v3326 = vunpack.c.l.b16 %v2880
    %v3327 = vunpack.c.l.b16 %v2881
    %v3328 = vunpack.c.h.b16 %v2881
    %v3329 = vunpack.c.l.b16 %v2882
    %v3330 = vunpack.c.l.b16 %v2883
    %v3331 = vunpack.c.h.b16 %v2883
    %v3332 = vunpack.c.l.b16 %v2884
    %v3333 = vunpack.c.l.b16 %v2885
    %v3334 = vunpack.c.h.b16 %v2885
    %v3335 = vunpack.c.l.b16 %v2886
    %v3336 = vunpack.c.l.b16 %v2887
    %v3337 = vunpack.c.h.b16 %v2887
    %v3338 = vunpack.c.l.b16 %v2888
    %v3339 = vunpack.c.l.b16 %v2889
    %v3340 = vunpack.c.h.b16 %v2889
    %v3341 = vunpack.c.l.b16 %v2890
    %v3342 = vunpack.c.l.b16 %v2891
    %v3343 = vunpack.c.h.b16 %v2891
    %v3344 = vunpack.c.l.b16 %v2892
    %v3345 = vunpack.c.l.b16 %v2893
    %v3346 = vunpack.c.h.b16 %v2893
    %v3347 = vunpack.c.l.b16 %v2894
    %v3348 = vunpack.c.l.b16 %v2895
    %v3349 = vunpack.c.h.b16 %v2895
    %v3350 = vunpack.c.l.b16 %v2896
    %v3351 = vunpack.c.l.b16 %v2897
    %v3352 = vunpack.c.h.b16 %v2897
    %v3353 = vunpack.c.l.b16 %v2898
    %v3354 = vunpack.c.l.b16 %v2899
    %v3355 = vunpack.c.h.b16 %v2899
    %v3356 = vunpack.c.l.b16 %v2900
    %v3357 = vunpack.c.l.b16 %v2901
    %v3358 = vunpack.c.h.b16 %v2901
    %v3359 = vunpack.c.l.b16 %v2902
    %v3360 = vunpack.c.l.b16 %v2903
    %v3361 = vunpack.c.h.b16 %v2903
    %v3362 = vunpack.c.l.b16 %v2904
    %v3363 = vunpack.c.l.b16 %v2905
    %v3364 = vunpack.c.h.b16 %v2905
    %v3365 = vunpack.c.l.b16 %v2906
    %v3366 = vunpack.c.l.b16 %v2907
    %v3367 = vunpack.c.h.b16 %v2907
    %v3368 = vunpack.c.l.b16 %v2908
    %v3369 = vunpack.c.l.b16 %v2909
    %v3370 = vunpack.c.h.b16 %v2909
    %v3371 = vunpack.c.l.b16 %v2910
    %v3372 = vunpack.c.l.b16 %v2911
    %v3373 = vunpack.c.h.b16 %v2911
    %v3374 = vunpack.c.l.b16 %v2912
    %v3375 = vunpack.c.l.b16 %v2913
    %v3376 = vunpack.c.h.b16 %v2913
    %v3377 = vunpack.c.l.b16 %v2914
    %v3378 = vunpack.c.l.b16 %v2915
    %v3379 = vunpack.c.h.b16 %v2915
    %v3380 = vunpack.c.l.b16 %v2916
    %v3381 = vunpack.c.l.b16 %v2917
    %v3382 = vunpack.c.h.b16 %v2917
    %v3383 = vunpack.c.l.b16 %v2918
    %v3384 = vunpack.c.l.b16 %v2919
    %v3385 = vunpack.c.h.b16 %v2919
    %v3386 = vunpack.c.l.b16 %v2920
    %v3387 = vunpack.c.l.b16 %v2921
    %v3388 = vunpack.c.h.b16 %v2921
    %v3389 = vunpack.c.l.b16 %v2922
    %v3390 = vunpack.c.l.b16 %v2923
    %v3391 = vunpack.c.h.b16 %v2923
    %v3392 = vunpack.c.l.b16 %v2924
    %v3393 = vunpack.c.l.b16 %v2925
    %v3394 = vunpack.c.h.b16 %v2925
    %v3395 = vunpack.c.l.b16 %v2926
    %v3396 = vunpack.c.l.b16 %v2927
    %v3397 = vunpack.c.h.b16 %v2927
    %v3398 = vunpack.c.l.b16 %v2928
    %v3399 = vunpack.c.l.b16 %v2929
    %v3400 = vunpack.c.h.b16 %v2929
    %v3401 = vunpack.c.l.b16 %v2930
    %v3402 = vunpack.c.l.b16 %v2931
    %v3403 = vunpack.c.h.b16 %v2931
    %v3404 = vunpack.c.l.b16 %v2932
    %v3405 = vunpack.c.l.b16 %v2933
    %v3406 = vunpack.c.h.b16 %v2933
    %v3407 = vunpack.c.l.b16 %v2934
    %v3408 = vunpack.c.l.b16 %v2935
    %v3409 = vunpack.c.h.b16 %v2935
    %v3410 = vunpack.c.l.b16 %v2936
    %v3411 = vunpack.c.l.b16 %v2937
    %v3412 = vunpack.c.h.b16 %v2937
    %v3413 = vunpack.c.l.b16 %v2938
    %v3414 = vunpack.c.l.b16 %v2939
    %v3415 = vunpack.c.h.b16 %v2939
    %v3416 = vunpack.c.l.b16 %v2940
    %v3417 = vunpack.c.l.b16 %v2941
    %v3418 = vunpack.c.h.b16 %v2941
    %v3419 = vunpack.c.l.b16 %v2942
    %v3420 = vunpack.c.l.b16 %v2943
    %v3421 = vunpack.c.h.b16 %v2943
    %v3422 = vunpack.c.l.b16 %v2944
    %v3423 = vunpack.c.l.b16 %v2945
    %v3424 = vunpack.c.h.b16 %v2945
    %v3425 = vunpack.c.l.b16 %v2946
    %v3426 = vunpack.c.l.b16 %v2947
    %v3427 = vunpack.c.h.b16 %v2947
    %v3428 = vunpack.c.l.b16 %v2948
    %v3429 = vunpack.c.l.b16 %v2949
    %v3430 = vunpack.c.h.b16 %v2949
    %v3431 = vunpack.c.l.b16 %v2950
    %v3432 = vunpack.c.l.b16 %v2951
    %v3433 = vunpack.c.h.b16 %v2951
    %v3434 = vunpack.c.l.b16 %v2952
    %v3435 = vunpack.c.l.b16 %v2953
    %v3436 = vunpack.c.h.b16 %v2953
    %v3437 = vunpack.c.l.b16 %v2954
    %v3438 = vunpack.c.l.b16 %v2955
    %v3439 = vunpack.c.h.b16 %v2955
    %v3440 = vunpack.c.l.b16 %v2956
    %v3441 = vunpack.c.l.b16 %v2957
    %v3442 = vunpack.c.h.b16 %v2957
    %v3443 = vunpack.c.l.b16 %v2958
    %v3444 = vunpack.c.l.b16 %v2959
    %v3445 = vunpack.c.h.b16 %v2959
    %v3446 = vunpack.c.l.b16 %v2960
    %v3447 = vunpack.c.l.b16 %v2961
    %v3448 = vunpack.c.h.b16 %v2961
    %v3449 = vunpack.c.l.b16 %v2962
    %v3450 = vunpack.c.l.b16 %v2963
    %v3451 = vunpack.c.h.b16 %v2963
    %v3452 = vunpack.c.l.b16 %v2964
    %v3453 = vunpack.c.l.b16 %v2965
    %v3454 = vunpack.c.h.b16 %v2965
    %v3455 = vunpack.c.l.b16 %v2966
    %v3456 = vunpack.c.l.b16 %v2967
    %v3457 = vunpack.c.h.b16 %v2967
    %v3458 = vunpack.c.l.b16 %v2968
    %v3459 = vunpack.c.l.b16 %v2969
    %v3460 = vunpack.c.h.b16 %v2969
    %v3461 = vunpack.c.l.b16 %v2970
    %v3462 = vunpack.c.l.b16 %v2971
    %v3463 = vunpack.c.h.b16 %v2971
    %v3464 = vunpack.c.l.b16 %v2972
    %v3465 = vunpack.c.l.b16 %v2973
    %v3466 = vunpack.c.h.b16 %v2973
    %v3467 = vunpack.c.l.b16 %v2974
    %v3468 = vunpack.c.l.b16 %v2975
    %v3469 = vunpack.c.h.b16 %v2975
    %v3470 = vunpack.c.l.b16 %v2976
    %v3471 = vunpack.c.l.b16 %v2977
    %v3472 = vunpack.c.h.b16 %v2977
    %v3473 = vunpack.c.l.b16 %v2978
    %v3474 = vunpack.c.l.b16 %v2979
    %v3475 = vunpack.c.h.b16 %v2979
    %v3476 = vunpack.c.l.b16 %v2980
    %v3477 = vunpack.c.l.b16 %v2981
    %v3478 = vunpack.c.h.b16 %v2981
    %v3479 = vunpack.c.l.b16 %v2982
    %v3480 = vunpack.c.l.b16 %v2983
    %v3481 = vunpack.c.h.b16 %v2983
    %v3482 = vunpack.c.l.b16 %v2984
    %v3483 = vunpack.c.l.b16 %v2985
    %v3484 = vunpack.c.h.b16 %v2985
    %v3485 = vunpack.c.l.b16 %v2986
    %v3486 = vunpack.c.l.b16 %v2987
    %v3487 = vunpack.c.h.b16 %v2987
    %v3488 = vunpack.c.l.b16 %v2988
    %v3489 = vunpack.c.l.b16 %v2989
    %v3490 = vunpack.c.h.b16 %v2989
    %v3491 = vunpack.c.l.b16 %v2990
    %v3492 = vunpack.c.l.b16 %v2991
    %v3493 = vunpack.c.h.b16 %v2991
    %v3494 = vunpack.c.l.b16 %v2992
    %v3495 = vunpack.c.l.b16 %v2993
    %v3496 = vunpack.c.h.b16 %v2993
    %v3497 = vunpack.c.l.b16 %v2994
    %v3498 = vunpack.c.l.b16 %v2995
    %v3499 = vunpack.c.h.b16 %v2995
    %v3500 = vunpack.c.l.b16 %v2996
    %v3501 = vunpack.c.l.b16 %v2997
    %v3502 = vunpack.c.h.b16 %v2997
    %v3503 = vunpack.c.l.b16 %v2998
    %v3504 = vunpack.c.l.b16 %v2999
    %v3505 = vunpack.c.h.b16 %v2999
    %v3506 = vunpack.c.l.b16 %v3000
    %v3507 = vunpack.c.l.b16 %v3001
    %v3508 = vunpack.c.h.b16 %v3001
    %v3509 = vunpack.c.l.b16 %v3002
    %v3510 = vunpack.c.l.b16 %v3003
    %v3511 = vunpack.c.h.b16 %v3003
    %v3512 = vunpack.c.l.b16 %v3004
    %v3513 = vunpack.c.l.b16 %v3005
    %v3514 = vunpack.c.h.b16 %v3005
    %v3515 = vunpack.c.l.b16 %v3006
    %v3516 = vunpack.c.l.b16 %v3007
    %v3517 = vunpack.c.h.b16 %v3007
    %v3518 = vunpack.c.l.b16 %v3008
    %v3519 = vunpack.c.l.b16 %v3009
    %v3520 = vunpack.c.h.b16 %v3009
    %v3521 = vunpack.c.l.b16 %v3010
    %v3522 = vunpack.c.l.b16 %v3011
    %v3523 = vunpack.c.h.b16 %v3011
    %v3524 = vunpack.c.l.b16 %v3012
    %v3525 = vunpack.c.l.b16 %v3013
    %v3526 = vunpack.c.h.b16 %v3013
    %v3527 = vunpack.c.l.b16 %v3014
    %v3528 = vunpack.c.l.b16 %v3015
    %v3529 = vunpack.c.h.b16 %v3015
    %v3530 = vunpack.c.l.b16 %v3016
    %v3531 = vunpack.c.l.b16 %v3017
    %v3532 = vunpack.c.h.b16 %v3017
    %v3533 = vunpack.c.l.b16 %v3018
    %v3534 = vunpack.c.l.b16 %v3019
    %v3535 = vunpack.c.h.b16 %v3019
    %v3536 = vunpack.c.l.b16 %v3020
    %v3537 = vunpack.c.l.b16 %v3021
    %v3538 = vunpack.c.h.b16 %v3021
    %v3539 = vunpack.c.l.b16 %v3022
    %v3540 = vpack.c.b16 %v3243, %v3240
    %v3541 = vpack.c.b16 %v3244, %v3241
    %v3542 = vpack.c.b16 %v3245, %v3242
    %v3543 = vpack.c.b16 %v3249, %v3246
    %v3544 = vpack.c.b16 %v3250, %v3247
    %v3545 = vpack.c.b16 %v3251, %v3248
    %v3546 = vpack.c.b16 %v3255, %v3252
    %v3547 = vpack.c.b16 %v3256, %v3253
    %v3548 = vpack.c.b16 %v3257, %v3254
    %v3549 = vpack.c.b16 %v3261, %v3258
    %v3550 = vpack.c.b16 %v3262, %v3259
    %v3551 = vpack.c.b16 %v3263, %v3260
    %v3552 = vpack.c.b16 %v3267, %v3264
    %v3553 = vpack.c.b16 %v3268, %v3265
    %v3554 = vpack.c.b16 %v3269, %v3266
    %v3555 = vpack.c.b16 %v3273, %v3270
    %v3556 = vpack.c.b16 %v3274, %v3271
    %v3557 = vpack.c.b16 %v3275, %v3272
    %v3558 = vpack.c.b16 %v3279, %v3276
    %v3559 = vpack.c.b16 %v3280, %v3277
    %v3560 = vpack.c.b16 %v3281, %v3278
    %v3561 = vpack.c.b16 %v3285, %v3282
    %v3562 = vpack.c.b16 %v3286, %v3283
    %v3563 = vpack.c.b16 %v3287, %v3284
    %v3564 = vpack.c.b16 %v3291, %v3288
    %v3565 = vpack.c.b16 %v3292, %v3289
    %v3566 = vpack.c.b16 %v3293, %v3290
    %v3567 = vpack.c.b16 %v3297, %v3294
    %v3568 = vpack.c.b16 %v3298, %v3295
    %v3569 = vpack.c.b16 %v3299, %v3296
    %v3570 = vpack.c.b16 %v3303, %v3300
    %v3571 = vpack.c.b16 %v3304, %v3301
    %v3572 = vpack.c.b16 %v3305, %v3302
    %v3573 = vpack.c.b16 %v3309, %v3306
    %v3574 = vpack.c.b16 %v3310, %v3307
    %v3575 = vpack.c.b16 %v3311, %v3308
    %v3576 = vpack.c.b16 %v3315, %v3312
    %v3577 = vpack.c.b16 %v3316, %v3313
    %v3578 = vpack.c.b16 %v3317, %v3314
    %v3579 = vpack.c.b16 %v3321, %v3318
    %v3580 = vpack.c.b16 %v3322, %v3319
    %v3581 = vpack.c.b16 %v3323, %v3320
    %v3582 = vpack.c.b16 %v3327, %v3324
    %v3583 = vpack.c.b16 %v3328, %v3325
    %v3584 = vpack.c.b16 %v3329, %v3326
    %v3585 = vpack.c.b16 %v3333, %v3330
    %v3586 = vpack.c.b16 %v3334, %v3331
    %v3587 = vpack.c.b16 %v3335, %v3332
    %v3588 = vpack.c.b16 %v3339, %v3336
    %v3589 = vpack.c.b16 %v3340, %v3337
    %v3590 = vpack.c.b16 %v3341, %v3338
    %v3591 = vpack.c.b16 %v3345, %v3342
    %v3592 = vpack.c.b16 %v3346, %v3343
    %v3593 = vpack.c.b16 %v3347, %v3344
    %v3594 = vpack.c.b16 %v3351, %v3348
    %v3595 = vpack.c.b16 %v3352, %v3349
    %v3596 = vpack.c.b16 %v3353, %v3350
    %v3597 = vpack.c.b16 %v3357, %v3354
    %v3598 = vpack.c.b16 %v3358, %v3355
    %v3599 = vpack.c.b16 %v3359, %v3356
    %v3600 = vpack.c.b16 %v3363, %v3360
    %v3601 = vpack.c.b16 %v3364, %v3361
    %v3602 = vpack.c.b16 %v3365, %v3362
    %v3603 = vpack.c.b16 %v3369, %v3366
    %v3604 = vpack.c.b16 %v3370, %v3367
    %v3605 = vpack.c.b16 %v3371, %v3368
    %v3606 = vpack.c.b16 %v3375, %v3372
    %v3607 = vpack.c.b16 %v3376, %v3373
    %v3608 = vpack.c.b16 %v3377, %v3374
    %v3609 = vpack.c.b16 %v3381, %v3378
    %v3610 = vpack.c.b16 %v3382, %v3379
    %v3611 = vpack.c.b16 %v3383, %v3380
    %v3612 = vpack.c.b16 %v3387, %v3384
    %v3613 = vpack.c.b16 %v3388, %v3385
    %v3614 = vpack.c.b16 %v3389, %v3386
    %v3615 = vpack.c.b16 %v3393, %v3390
    %v3616 = vpack.c.b16 %v3394, %v3391
    %v3617 = vpack.c.b16 %v3395, %v3392
    %v3618 = vpack.c.b16 %v3399, %v3396
    %v3619 = vpack.c.b16 %v3400, %v3397
    %v3620 = vpack.c.b16 %v3401, %v3398
    %v3621 = vpack.c.b16 %v3405, %v3402
    %v3622 = vpack.c.b16 %v3406, %v3403
    %v3623 = vpack.c.b16 %v3407, %v3404
    %v3624 = vpack.c.b16 %v3411, %v3408
    %v3625 = vpack.c.b16 %v3412, %v3409
    %v3626 = vpack.c.b16 %v3413, %v3410
    %v3627 = vpack.c.b16 %v3417, %v3414
    %v3628 = vpack.c.b16 %v3418, %v3415
    %v3629 = vpack.c.b16 %v3419, %v3416
    %v3630 = vpack.c.b16 %v3423, %v3420
    %v3631 = vpack.c.b16 %v3424, %v3421
    %v3632 = vpack.c.b16 %v3425, %v3422
    %v3633 = vpack.c.b16 %v3429, %v3426
    %v3634 = vpack.c.b16 %v3430, %v3427
    %v3635 = vpack.c.b16 %v3431, %v3428
    %v3636 = vpack.c.b16 %v3435, %v3432
    %v3637 = vpack.c.b16 %v3436, %v3433
    %v3638 = vpack.c.b16 %v3437, %v3434
    %v3639 = vpack.c.b16 %v3441, %v3438
    %v3640 = vpack.c.b16 %v3442, %v3439
    %v3641 = vpack.c.b16 %v3443, %v3440
    %v3642 = vpack.c.b16 %v3447, %v3444
    %v3643 = vpack.c.b16 %v3448, %v3445
    %v3644 = vpack.c.b16 %v3449, %v3446
    %v3645 = vpack.c.b16 %v3453, %v3450
    %v3646 = vpack.c.b16 %v3454, %v3451
    %v3647 = vpack.c.b16 %v3455, %v3452
    %v3648 = vpack.c.b16 %v3459, %v3456
    %v3649 = vpack.c.b16 %v3460, %v3457
    %v3650 = vpack.c.b16 %v3461, %v3458
    %v3651 = vpack.c.b16 %v3465, %v3462
    %v3652 = vpack.c.b16 %v3466, %v3463
    %v3653 = vpack.c.b16 %v3467, %v3464
    %v3654 = vpack.c.b16 %v3471, %v3468
    %v3655 = vpack.c.b16 %v3472, %v3469
    %v3656 = vpack.c.b16 %v3473, %v3470
    %v3657 = vpack.c.b16 %v3477, %v3474
    %v3658 = vpack.c.b16 %v3478, %v3475
    %v3659 = vpack.c.b16 %v3479, %v3476
    %v3660 = vpack.c.b16 %v3483, %v3480
    %v3661 = vpack.c.b16 %v3484, %v3481
    %v3662 = vpack.c.b16 %v3485, %v3482
    %v3663 = vpack.c.b16 %v3489, %v3486
    %v3664 = vpack.c.b16 %v3490, %v3487
    %v3665 = vpack.c.b16 %v3491, %v3488
    %v3666 = vpack.c.b16 %v3495, %v3492
    %v3667 = vpack.c.b16 %v3496, %v3493
    %v3668 = vpack.c.b16 %v3497, %v3494
    %v3669 = vpack.c.b16 %v3501, %v3498
    %v3670 = vpack.c.b16 %v3502, %v3499
    %v3671 = vpack.c.b16 %v3503, %v3500
    %v3672 = vpack.c.b16 %v3507, %v3504
    %v3673 = vpack.c.b16 %v3508, %v3505
    %v3674 = vpack.c.b16 %v3509, %v3506
    %v3675 = vpack.c.b16 %v3513, %v3510
    %v3676 = vpack.c.b16 %v3514, %v3511
    %v3677 = vpack.c.b16 %v3515, %v3512
    %v3678 = vpack.c.b16 %v3519, %v3516
    %v3679 = vpack.c.b16 %v3520, %v3517
    %v3680 = vpack.c.b16 %v3521, %v3518
    %v3681 = vpack.c.b16 %v3525, %v3522
    %v3682 = vpack.c.b16 %v3526, %v3523
    %v3683 = vpack.c.b16 %v3527, %v3524
    %v3684 = vpack.c.b16 %v3531, %v3528
    %v3685 = vpack.c.b16 %v3532, %v3529
    %v3686 = vpack.c.b16 %v3533, %v3530
    %v3687 = vpack.c.b16 %v3537, %v3534
    %v3688 = vpack.c.b16 %v3538, %v3535
    %v3689 = vpack.c.b16 %v3539, %v3536
    %vm3840 = vcmask 261120
    %v3842 = vsel %vm3840, %v2773, 0
    %v3845 = vsel %vm3840, %v2780, 0
    %v3848 = vsel %vm3840, %v2787, 0
    %v3851 = vsel %vm3840, %v2794, 0
    %v3854 = vsel %vm3840, %v2801, 0
    %v3857 = vsel %vm3840, %v2808, 0
    %v3860 = vsel %vm3840, %v2815, 0
    %v3863 = vsel %vm3840, %v2822, 0
    %3865 = vmatprep.subr.bf16.mxu0 %v3562
    %3866 = vmatpush1.bf16.msra.mxu0 %v3561
    %3867 = vmatprep.subr.bf16.mxu0 %v3559
    %3868 = vmatpush1.bf16.msra.mxu0 %v3558
    %3869 = vmatprep.subr.bf16.mxu0 %v3556
    %3870 = vmatpush1.bf16.msra.mxu0 %v3555
    %3871 = vmatprep.subr.bf16.mxu0 %v3553
    %3872 = vmatpush1.bf16.msra.mxu0 %v3552
    %3873 = vmatprep.subr.bf16.mxu0 %v3550
    %3874 = vmatpush1.bf16.msra.mxu0 %v3549
    %3875 = vmatprep.subr.bf16.mxu0 %v3547
    %3876 = vmatpush1.bf16.msra.mxu0 %v3546
    %3877 = vmatprep.subr.bf16.mxu0 %v3544
    %3878 = vmatpush1.bf16.msra.mxu0 %v3543
    %3879 = vmatprep.subr.bf16.mxu0 %v3541
    %3880 = vmatpush1.bf16.msra.mxu0 %v3540
    %3881 = vmatprep.subr.bf16.mxu0 %v3586
    %3882 = vmatpush2.bf16.msra.mxu0 %v3585
    %3883 = vmatprep.subr.bf16.mxu0 %v3583
    %3884 = vmatpush2.bf16.msra.mxu0 %v3582
    %3885 = vmatprep.subr.bf16.mxu0 %v3580
    %3886 = vmatpush2.bf16.msra.mxu0 %v3579
    %3887 = vmatprep.subr.bf16.mxu0 %v3577
    %3888 = vmatpush2.bf16.msra.mxu0 %v3576
    %3889 = vmatprep.subr.bf16.mxu0 %v3574
    %3890 = vmatpush2.bf16.msra.mxu0 %v3573
    %3891 = vmatprep.subr.bf16.mxu0 %v3571
    %3892 = vmatpush2.bf16.msra.mxu0 %v3570
    %3893 = vmatprep.subr.bf16.mxu0 %v3568
    %3894 = vmatpush2.bf16.msra.mxu0 %v3567
    %3895 = vmatprep.subr.bf16.mxu0 %v3565
    %3896 = vmatpush2.bf16.msra.mxu0 %v3564
    %3897 = vmatprep.mubr.bf16.mxu0 %v2768
    %3898 = vmatmul.mubr.bf16.gmra.mxu0 %v2767
    %v3899 = vpop.f32.mrf.mxu0
    %v3900 = vadd.f32 %v3028, %v3899
    %v3901 = vpop.f32.mrf.mxu0
    %v3902 = vadd.f32 %v3032, %v3901
    %v3903 = vpop.f32.mrf.mxu0
    %v3904 = vadd.f32 %v3028, %v3903
    %v3905 = vpop.f32.mrf.mxu0
    %v3906 = vadd.f32 %v3032, %v3905
    %3907 = vmatprep.mubr.bf16.mxu0 %v2775
    %3908 = vmatmul.mubr.bf16.gmra.mxu0 %v2774
    %v3909 = vpop.f32.mrf.mxu0
    %v3910 = vadd.f32 %v3028, %v3909
    %v3911 = vpop.f32.mrf.mxu0
    %v3912 = vadd.f32 %v3032, %v3911
    %v3913 = vpop.f32.mrf.mxu0
    %v3914 = vadd.f32 %v3028, %v3913
    %v3915 = vpop.f32.mrf.mxu0
    %v3916 = vadd.f32 %v3032, %v3915
    %3917 = vmatprep.mubr.bf16.mxu0 %v2782
    %3918 = vmatmul.mubr.bf16.gmra.mxu0 %v2781
    %v3919 = vpop.f32.mrf.mxu0
    %v3920 = vadd.f32 %v3028, %v3919
    %v3921 = vpop.f32.mrf.mxu0
    %v3922 = vadd.f32 %v3032, %v3921
    %v3923 = vpop.f32.mrf.mxu0
    %v3924 = vadd.f32 %v3028, %v3923
    %v3925 = vpop.f32.mrf.mxu0
    %v3926 = vadd.f32 %v3032, %v3925
    %3927 = vmatprep.mubr.bf16.mxu0 %v2789
    %3928 = vmatmul.mubr.bf16.gmra.mxu0 %v2788
    %v3929 = vpop.f32.mrf.mxu0
    %v3930 = vadd.f32 %v3028, %v3929
    %v3931 = vpop.f32.mrf.mxu0
    %v3932 = vadd.f32 %v3032, %v3931
    %v3933 = vpop.f32.mrf.mxu0
    %v3934 = vadd.f32 %v3028, %v3933
    %v3935 = vpop.f32.mrf.mxu0
    %v3936 = vadd.f32 %v3032, %v3935
    %3937 = vmatprep.mubr.bf16.mxu0 %v2796
    %3938 = vmatmul.mubr.bf16.gmra.mxu0 %v2795
    %v3939 = vpop.f32.mrf.mxu0
    %v3940 = vadd.f32 %v3028, %v3939
    %v3941 = vpop.f32.mrf.mxu0
    %v3942 = vadd.f32 %v3032, %v3941
    %v3943 = vpop.f32.mrf.mxu0
    %v3944 = vadd.f32 %v3028, %v3943
    %v3945 = vpop.f32.mrf.mxu0
    %v3946 = vadd.f32 %v3032, %v3945
    %3947 = vmatprep.mubr.bf16.mxu0 %v2803
    %3948 = vmatmul.mubr.bf16.gmra.mxu0 %v2802
    %v3949 = vpop.f32.mrf.mxu0
    %v3950 = vadd.f32 %v3028, %v3949
    %v3951 = vpop.f32.mrf.mxu0
    %v3952 = vadd.f32 %v3032, %v3951
    %v3953 = vpop.f32.mrf.mxu0
    %v3954 = vadd.f32 %v3028, %v3953
    %v3955 = vpop.f32.mrf.mxu0
    %v3956 = vadd.f32 %v3032, %v3955
    %3957 = vmatprep.mubr.bf16.mxu0 %v2810
    %3958 = vmatmul.mubr.bf16.gmra.mxu0 %v2809
    %v3959 = vpop.f32.mrf.mxu0
    %v3960 = vadd.f32 %v3028, %v3959
    %v3961 = vpop.f32.mrf.mxu0
    %v3962 = vadd.f32 %v3032, %v3961
    %v3963 = vpop.f32.mrf.mxu0
    %v3964 = vadd.f32 %v3028, %v3963
    %v3965 = vpop.f32.mrf.mxu0
    %v3966 = vadd.f32 %v3032, %v3965
    %3967 = vmatprep.mubr.bf16.mxu0 %v2817
    %3968 = vmatmul.mubr.bf16.gmra.mxu0 %v2816
    %v3969 = vpop.f32.mrf.mxu0
    %v3970 = vadd.f32 %v3028, %v3969
    %v3971 = vpop.f32.mrf.mxu0
    %v3972 = vadd.f32 %v3032, %v3971
    %v3973 = vpop.f32.mrf.mxu0
    %v3974 = vadd.f32 %v3028, %v3973
    %v3975 = vpop.f32.mrf.mxu0
    %v3976 = vadd.f32 %v3032, %v3975
    %3977 = vdwg.mxu0
    %3978 = vmatprep.subr.bf16.mxu0 %v3610
    %3979 = vmatpush1.bf16.msra.mxu0 %v3609
    %3980 = vmatprep.subr.bf16.mxu0 %v3607
    %3981 = vmatpush1.bf16.msra.mxu0 %v3606
    %3982 = vmatprep.subr.bf16.mxu0 %v3604
    %3983 = vmatpush1.bf16.msra.mxu0 %v3603
    %3984 = vmatprep.subr.bf16.mxu0 %v3601
    %3985 = vmatpush1.bf16.msra.mxu0 %v3600
    %3986 = vmatprep.subr.bf16.mxu0 %v3598
    %3987 = vmatpush1.bf16.msra.mxu0 %v3597
    %3988 = vmatprep.subr.bf16.mxu0 %v3595
    %3989 = vmatpush1.bf16.msra.mxu0 %v3594
    %3990 = vmatprep.subr.bf16.mxu0 %v3592
    %3991 = vmatpush1.bf16.msra.mxu0 %v3591
    %3992 = vmatprep.subr.bf16.mxu0 %v3589
    %3993 = vmatpush1.bf16.msra.mxu0 %v3588
    %3994 = vmatprep.subr.bf16.mxu0 %v3634
    %3995 = vmatpush2.bf16.msra.mxu0 %v3633
    %3996 = vmatprep.subr.bf16.mxu0 %v3631
    %3997 = vmatpush2.bf16.msra.mxu0 %v3630
    %3998 = vmatprep.subr.bf16.mxu0 %v3628
    %3999 = vmatpush2.bf16.msra.mxu0 %v3627
    %4000 = vmatprep.subr.bf16.mxu0 %v3625
    %4001 = vmatpush2.bf16.msra.mxu0 %v3624
    %4002 = vmatprep.subr.bf16.mxu0 %v3622
    %4003 = vmatpush2.bf16.msra.mxu0 %v3621
    %4004 = vmatprep.subr.bf16.mxu0 %v3619
    %4005 = vmatpush2.bf16.msra.mxu0 %v3618
    %4006 = vmatprep.subr.bf16.mxu0 %v3616
    %4007 = vmatpush2.bf16.msra.mxu0 %v3615
    %4008 = vmatprep.subr.bf16.mxu0 %v3613
    %4009 = vmatpush2.bf16.msra.mxu0 %v3612
    %4010 = vmatprep.mubr.bf16.mxu0 %v2770
    %4011 = vmatmul.mubr.bf16.gmra.mxu0 %v2769
    %v4012 = vpop.f32.mrf.mxu0
    %v4013 = vadd.f32 %v3900, %v4012
    %v4014 = vpop.f32.mrf.mxu0
    %v4015 = vadd.f32 %v3902, %v4014
    %v4016 = vpop.f32.mrf.mxu0
    %v4017 = vadd.f32 %v3904, %v4016
    %v4018 = vpop.f32.mrf.mxu0
    %v4019 = vadd.f32 %v3906, %v4018
    %4020 = vmatprep.mubr.bf16.mxu0 %v2777
    %4021 = vmatmul.mubr.bf16.gmra.mxu0 %v2776
    %v4022 = vpop.f32.mrf.mxu0
    %v4023 = vadd.f32 %v3910, %v4022
    %v4024 = vpop.f32.mrf.mxu0
    %v4025 = vadd.f32 %v3912, %v4024
    %v4026 = vpop.f32.mrf.mxu0
    %v4027 = vadd.f32 %v3914, %v4026
    %v4028 = vpop.f32.mrf.mxu0
    %v4029 = vadd.f32 %v3916, %v4028
    %4030 = vmatprep.mubr.bf16.mxu0 %v2784
    %4031 = vmatmul.mubr.bf16.gmra.mxu0 %v2783
    %v4032 = vpop.f32.mrf.mxu0
    %v4033 = vadd.f32 %v3920, %v4032
    %v4034 = vpop.f32.mrf.mxu0
    %v4035 = vadd.f32 %v3922, %v4034
    %v4036 = vpop.f32.mrf.mxu0
    %v4037 = vadd.f32 %v3924, %v4036
    %v4038 = vpop.f32.mrf.mxu0
    %v4039 = vadd.f32 %v3926, %v4038
    %4040 = vmatprep.mubr.bf16.mxu0 %v2791
    %4041 = vmatmul.mubr.bf16.gmra.mxu0 %v2790
    %v4042 = vpop.f32.mrf.mxu0
    %v4043 = vadd.f32 %v3930, %v4042
    %v4044 = vpop.f32.mrf.mxu0
    %v4045 = vadd.f32 %v3932, %v4044
    %v4046 = vpop.f32.mrf.mxu0
    %v4047 = vadd.f32 %v3934, %v4046
    %v4048 = vpop.f32.mrf.mxu0
    %v4049 = vadd.f32 %v3936, %v4048
    %4050 = vmatprep.mubr.bf16.mxu0 %v2798
    %4051 = vmatmul.mubr.bf16.gmra.mxu0 %v2797
    %v4052 = vpop.f32.mrf.mxu0
    %v4053 = vadd.f32 %v3940, %v4052
    %v4054 = vpop.f32.mrf.mxu0
    %v4055 = vadd.f32 %v3942, %v4054
    %v4056 = vpop.f32.mrf.mxu0
    %v4057 = vadd.f32 %v3944, %v4056
    %v4058 = vpop.f32.mrf.mxu0
    %v4059 = vadd.f32 %v3946, %v4058
    %4060 = vmatprep.mubr.bf16.mxu0 %v2805
    %4061 = vmatmul.mubr.bf16.gmra.mxu0 %v2804
    %v4062 = vpop.f32.mrf.mxu0
    %v4063 = vadd.f32 %v3950, %v4062
    %v4064 = vpop.f32.mrf.mxu0
    %v4065 = vadd.f32 %v3952, %v4064
    %v4066 = vpop.f32.mrf.mxu0
    %v4067 = vadd.f32 %v3954, %v4066
    %v4068 = vpop.f32.mrf.mxu0
    %v4069 = vadd.f32 %v3956, %v4068
    %4070 = vmatprep.mubr.bf16.mxu0 %v2812
    %4071 = vmatmul.mubr.bf16.gmra.mxu0 %v2811
    %v4072 = vpop.f32.mrf.mxu0
    %v4073 = vadd.f32 %v3960, %v4072
    %v4074 = vpop.f32.mrf.mxu0
    %v4075 = vadd.f32 %v3962, %v4074
    %v4076 = vpop.f32.mrf.mxu0
    %v4077 = vadd.f32 %v3964, %v4076
    %v4078 = vpop.f32.mrf.mxu0
    %v4079 = vadd.f32 %v3966, %v4078
    %4080 = vmatprep.mubr.bf16.mxu0 %v2819
    %4081 = vmatmul.mubr.bf16.gmra.mxu0 %v2818
    %v4082 = vpop.f32.mrf.mxu0
    %v4083 = vadd.f32 %v3970, %v4082
    %v4084 = vpop.f32.mrf.mxu0
    %v4085 = vadd.f32 %v3972, %v4084
    %v4086 = vpop.f32.mrf.mxu0
    %v4087 = vadd.f32 %v3974, %v4086
    %v4088 = vpop.f32.mrf.mxu0
    %v4089 = vadd.f32 %v3976, %v4088
    %4090 = vdwg.mxu0
    %4091 = vmatprep.subr.bf16.mxu0 %v3658
    %4092 = vmatpush1.bf16.msra.mxu0 %v3657
    %4093 = vmatprep.subr.bf16.mxu0 %v3655
    %4094 = vmatpush1.bf16.msra.mxu0 %v3654
    %4095 = vmatprep.subr.bf16.mxu0 %v3652
    %4096 = vmatpush1.bf16.msra.mxu0 %v3651
    %4097 = vmatprep.subr.bf16.mxu0 %v3649
    %4098 = vmatpush1.bf16.msra.mxu0 %v3648
    %4099 = vmatprep.subr.bf16.mxu0 %v3646
    %4100 = vmatpush1.bf16.msra.mxu0 %v3645
    %4101 = vmatprep.subr.bf16.mxu0 %v3643
    %4102 = vmatpush1.bf16.msra.mxu0 %v3642
    %4103 = vmatprep.subr.bf16.mxu0 %v3640
    %4104 = vmatpush1.bf16.msra.mxu0 %v3639
    %4105 = vmatprep.subr.bf16.mxu0 %v3637
    %4106 = vmatpush1.bf16.msra.mxu0 %v3636
    %4107 = vmatprep.subr.bf16.mxu0 %v3682
    %4108 = vmatpush2.bf16.msra.mxu0 %v3681
    %4109 = vmatprep.subr.bf16.mxu0 %v3679
    %4110 = vmatpush2.bf16.msra.mxu0 %v3678
    %4111 = vmatprep.subr.bf16.mxu0 %v3676
    %4112 = vmatpush2.bf16.msra.mxu0 %v3675
    %4113 = vmatprep.subr.bf16.mxu0 %v3673
    %4114 = vmatpush2.bf16.msra.mxu0 %v3672
    %4115 = vmatprep.subr.bf16.mxu0 %v3670
    %4116 = vmatpush2.bf16.msra.mxu0 %v3669
    %4117 = vmatprep.subr.bf16.mxu0 %v3667
    %4118 = vmatpush2.bf16.msra.mxu0 %v3666
    %4119 = vmatprep.subr.bf16.mxu0 %v3664
    %4120 = vmatpush2.bf16.msra.mxu0 %v3663
    %4121 = vmatprep.subr.bf16.mxu0 %v3661
    %4122 = vmatpush2.bf16.msra.mxu0 %v3660
    %4123 = vmatprep.mubr.bf16.mxu0 %v2772
    %4124 = vmatmul.mubr.bf16.gmra.mxu0 %v2771
    %v4125 = vpop.f32.mrf.mxu0
    %v4126 = vadd.f32 %v4013, %v4125
    %v4127 = vpop.f32.mrf.mxu0
    %v4128 = vadd.f32 %v4015, %v4127
    %v4129 = vpop.f32.mrf.mxu0
    %v4130 = vadd.f32 %v4017, %v4129
    %v4131 = vpop.f32.mrf.mxu0
    %v4132 = vadd.f32 %v4019, %v4131
    %4133 = vmatprep.mubr.bf16.mxu0 %v2779
    %4134 = vmatmul.mubr.bf16.gmra.mxu0 %v2778
    %v4135 = vpop.f32.mrf.mxu0
    %v4136 = vadd.f32 %v4023, %v4135
    %v4137 = vpop.f32.mrf.mxu0
    %v4138 = vadd.f32 %v4025, %v4137
    %v4139 = vpop.f32.mrf.mxu0
    %v4140 = vadd.f32 %v4027, %v4139
    %v4141 = vpop.f32.mrf.mxu0
    %v4142 = vadd.f32 %v4029, %v4141
    %4143 = vmatprep.mubr.bf16.mxu0 %v2786
    %4144 = vmatmul.mubr.bf16.gmra.mxu0 %v2785
    %v4145 = vpop.f32.mrf.mxu0
    %v4146 = vadd.f32 %v4033, %v4145
    %v4147 = vpop.f32.mrf.mxu0
    %v4148 = vadd.f32 %v4035, %v4147
    %v4149 = vpop.f32.mrf.mxu0
    %v4150 = vadd.f32 %v4037, %v4149
    %v4151 = vpop.f32.mrf.mxu0
    %v4152 = vadd.f32 %v4039, %v4151
    %4153 = vmatprep.mubr.bf16.mxu0 %v2793
    %4154 = vmatmul.mubr.bf16.gmra.mxu0 %v2792
    %v4155 = vpop.f32.mrf.mxu0
    %v4156 = vadd.f32 %v4043, %v4155
    %v4157 = vpop.f32.mrf.mxu0
    %v4158 = vadd.f32 %v4045, %v4157
    %v4159 = vpop.f32.mrf.mxu0
    %v4160 = vadd.f32 %v4047, %v4159
    %v4161 = vpop.f32.mrf.mxu0
    %v4162 = vadd.f32 %v4049, %v4161
    %4163 = vmatprep.mubr.bf16.mxu0 %v2800
    %4164 = vmatmul.mubr.bf16.gmra.mxu0 %v2799
    %v4165 = vpop.f32.mrf.mxu0
    %v4166 = vadd.f32 %v4053, %v4165
    %v4167 = vpop.f32.mrf.mxu0
    %v4168 = vadd.f32 %v4055, %v4167
    %v4169 = vpop.f32.mrf.mxu0
    %v4170 = vadd.f32 %v4057, %v4169
    %v4171 = vpop.f32.mrf.mxu0
    %v4172 = vadd.f32 %v4059, %v4171
    %4173 = vmatprep.mubr.bf16.mxu0 %v2807
    %4174 = vmatmul.mubr.bf16.gmra.mxu0 %v2806
    %v4175 = vpop.f32.mrf.mxu0
    %v4176 = vadd.f32 %v4063, %v4175
    %v4177 = vpop.f32.mrf.mxu0
    %v4178 = vadd.f32 %v4065, %v4177
    %v4179 = vpop.f32.mrf.mxu0
    %v4180 = vadd.f32 %v4067, %v4179
    %v4181 = vpop.f32.mrf.mxu0
    %v4182 = vadd.f32 %v4069, %v4181
    %4183 = vmatprep.mubr.bf16.mxu0 %v2814
    %4184 = vmatmul.mubr.bf16.gmra.mxu0 %v2813
    %v4185 = vpop.f32.mrf.mxu0
    %v4186 = vadd.f32 %v4073, %v4185
    %v4187 = vpop.f32.mrf.mxu0
    %v4188 = vadd.f32 %v4075, %v4187
    %v4189 = vpop.f32.mrf.mxu0
    %v4190 = vadd.f32 %v4077, %v4189
    %v4191 = vpop.f32.mrf.mxu0
    %v4192 = vadd.f32 %v4079, %v4191
    %4193 = vmatprep.mubr.bf16.mxu0 %v2821
    %4194 = vmatmul.mubr.bf16.gmra.mxu0 %v2820
    %v4195 = vpop.f32.mrf.mxu0
    %v4196 = vadd.f32 %v4083, %v4195
    %v4197 = vpop.f32.mrf.mxu0
    %v4198 = vadd.f32 %v4085, %v4197
    %v4199 = vpop.f32.mrf.mxu0
    %v4200 = vadd.f32 %v4087, %v4199
    %v4201 = vpop.f32.mrf.mxu0
    %v4202 = vadd.f32 %v4089, %v4201
    %4203 = vdwg.mxu0
    %4204 = vmatprep.subr.bf16.mxu0 0
    %4205 = vmatpush1.bf16.msra.mxu0 0
    %4206 = vmatprep.subr.bf16.mxu0 0
    %4207 = vmatpush1.bf16.msra.mxu0 0
    %4208 = vmatprep.subr.bf16.mxu0 0
    %4209 = vmatpush1.bf16.msra.mxu0 0
    %4210 = vmatprep.subr.bf16.mxu0 0
    %4211 = vmatpush1.bf16.msra.mxu0 0
    %4212 = vmatprep.subr.bf16.mxu0 0
    %4213 = vmatpush1.bf16.msra.mxu0 0
    %4214 = vmatprep.subr.bf16.mxu0 0
    %4215 = vmatpush1.bf16.msra.mxu0 0
    %4216 = vmatprep.subr.bf16.mxu0 %v3688
    %4217 = vmatpush1.bf16.msra.mxu0 %v3687
    %4218 = vmatprep.subr.bf16.mxu0 %v3685
    %4219 = vmatpush1.bf16.msra.mxu0 %v3684
    %4220 = vmatprep.subr.bf16.mxu0 0
    %4221 = vmatpush2.bf16.msra.mxu0 0
    %4222 = vmatprep.subr.bf16.mxu0 0
    %4223 = vmatpush2.bf16.msra.mxu0 0
    %4224 = vmatprep.subr.bf16.mxu0 0
    %4225 = vmatpush2.bf16.msra.mxu0 0
    %4226 = vmatprep.subr.bf16.mxu0 0
    %4227 = vmatpush2.bf16.msra.mxu0 0
    %4228 = vmatprep.subr.bf16.mxu0 0
    %4229 = vmatpush2.bf16.msra.mxu0 0
    %4230 = vmatprep.subr.bf16.mxu0 0
    %4231 = vmatpush2.bf16.msra.mxu0 0
    %4232 = vmatprep.subr.bf16.mxu0 0
    %4233 = vmatpush2.bf16.msra.mxu0 0
    %4234 = vmatprep.subr.bf16.mxu0 0
    %4235 = vmatpush2.bf16.msra.mxu0 0
    %4236 = vmatprep.mubr.bf16.mxu0 0
    %4237 = vmatmul.mubr.bf16.gmra.mxu0 %v3842
    %v4238 = vpop.f32.mrf.mxu0
    %v4239 = vadd.f32 %v4126, %v4238
    %v4240 = vpop.f32.mrf.mxu0
    %v4241 = vadd.f32 %v4128, %v4240
    %v4242 = vpop.f32.mrf.mxu0
    %v4243 = vadd.f32 %v4130, %v4242
    %v4244 = vpop.f32.mrf.mxu0
    %v4245 = vadd.f32 %v4132, %v4244
    %4246 = vmatprep.mubr.bf16.mxu0 0
    %4247 = vmatmul.mubr.bf16.gmra.mxu0 %v3845
    %v4248 = vpop.f32.mrf.mxu0
    %v4249 = vadd.f32 %v4136, %v4248
    %v4250 = vpop.f32.mrf.mxu0
    %v4251 = vadd.f32 %v4138, %v4250
    %v4252 = vpop.f32.mrf.mxu0
    %v4253 = vadd.f32 %v4140, %v4252
    %v4254 = vpop.f32.mrf.mxu0
    %v4255 = vadd.f32 %v4142, %v4254
    %4256 = vmatprep.mubr.bf16.mxu0 0
    %4257 = vmatmul.mubr.bf16.gmra.mxu0 %v3848
    %v4258 = vpop.f32.mrf.mxu0
    %v4259 = vadd.f32 %v4146, %v4258
    %v4260 = vpop.f32.mrf.mxu0
    %v4261 = vadd.f32 %v4148, %v4260
    %v4262 = vpop.f32.mrf.mxu0
    %v4263 = vadd.f32 %v4150, %v4262
    %v4264 = vpop.f32.mrf.mxu0
    %v4265 = vadd.f32 %v4152, %v4264
    %4266 = vmatprep.mubr.bf16.mxu0 0
    %4267 = vmatmul.mubr.bf16.gmra.mxu0 %v3851
    %v4268 = vpop.f32.mrf.mxu0
    %v4269 = vadd.f32 %v4156, %v4268
    %v4270 = vpop.f32.mrf.mxu0
    %v4271 = vadd.f32 %v4158, %v4270
    %v4272 = vpop.f32.mrf.mxu0
    %v4273 = vadd.f32 %v4160, %v4272
    %v4274 = vpop.f32.mrf.mxu0
    %v4275 = vadd.f32 %v4162, %v4274
    %4276 = vmatprep.mubr.bf16.mxu0 0
    %4277 = vmatmul.mubr.bf16.gmra.mxu0 %v3854
    %v4278 = vpop.f32.mrf.mxu0
    %v4279 = vadd.f32 %v4166, %v4278
    %v4280 = vpop.f32.mrf.mxu0
    %v4281 = vadd.f32 %v4168, %v4280
    %v4282 = vpop.f32.mrf.mxu0
    %v4283 = vadd.f32 %v4170, %v4282
    %v4284 = vpop.f32.mrf.mxu0
    %v4285 = vadd.f32 %v4172, %v4284
    %4286 = vmatprep.mubr.bf16.mxu0 0
    %4287 = vmatmul.mubr.bf16.gmra.mxu0 %v3857
    %v4288 = vpop.f32.mrf.mxu0
    %v4289 = vadd.f32 %v4176, %v4288
    %v4290 = vpop.f32.mrf.mxu0
    %v4291 = vadd.f32 %v4178, %v4290
    %v4292 = vpop.f32.mrf.mxu0
    %v4293 = vadd.f32 %v4180, %v4292
    %v4294 = vpop.f32.mrf.mxu0
    %v4295 = vadd.f32 %v4182, %v4294
    %4296 = vmatprep.mubr.bf16.mxu0 0
    %4297 = vmatmul.mubr.bf16.gmra.mxu0 %v3860
    %v4298 = vpop.f32.mrf.mxu0
    %v4299 = vadd.f32 %v4186, %v4298
    %v4300 = vpop.f32.mrf.mxu0
    %v4301 = vadd.f32 %v4188, %v4300
    %v4302 = vpop.f32.mrf.mxu0
    %v4303 = vadd.f32 %v4190, %v4302
    %v4304 = vpop.f32.mrf.mxu0
    %v4305 = vadd.f32 %v4192, %v4304
    %4306 = vmatprep.mubr.bf16.mxu0 0
    %4307 = vmatmul.mubr.bf16.gmra.mxu0 %v3863
    %v4308 = vpop.f32.mrf.mxu0
    %v4309 = vadd.f32 %v4196, %v4308
    %v4310 = vpop.f32.mrf.mxu0
    %v4311 = vadd.f32 %v4198, %v4310
    %v4312 = vpop.f32.mrf.mxu0
    %v4313 = vadd.f32 %v4200, %v4312
    %v4314 = vpop.f32.mrf.mxu0
    %v4315 = vadd.f32 %v4202, %v4314
    %4316 = vdwg.mxu0
    %4317 = vmatprep.subr.bf16.mxu0 0
    %4318 = vmatpush1.bf16.msra.mxu0 %v3563
    %4319 = vmatprep.subr.bf16.mxu0 0
    %4320 = vmatpush1.bf16.msra.mxu0 %v3560
    %4321 = vmatprep.subr.bf16.mxu0 0
    %4322 = vmatpush1.bf16.msra.mxu0 %v3557
    %4323 = vmatprep.subr.bf16.mxu0 0
    %4324 = vmatpush1.bf16.msra.mxu0 %v3554
    %4325 = vmatprep.subr.bf16.mxu0 0
    %4326 = vmatpush1.bf16.msra.mxu0 %v3551
    %4327 = vmatprep.subr.bf16.mxu0 0
    %4328 = vmatpush1.bf16.msra.mxu0 %v3548
    %4329 = vmatprep.subr.bf16.mxu0 0
    %4330 = vmatpush1.bf16.msra.mxu0 %v3545
    %4331 = vmatprep.subr.bf16.mxu0 0
    %4332 = vmatpush1.bf16.msra.mxu0 %v3542
    %4333 = vmatprep.subr.bf16.mxu0 0
    %4334 = vmatpush2.bf16.msra.mxu0 %v3587
    %4335 = vmatprep.subr.bf16.mxu0 0
    %4336 = vmatpush2.bf16.msra.mxu0 %v3584
    %4337 = vmatprep.subr.bf16.mxu0 0
    %4338 = vmatpush2.bf16.msra.mxu0 %v3581
    %4339 = vmatprep.subr.bf16.mxu0 0
    %4340 = vmatpush2.bf16.msra.mxu0 %v3578
    %4341 = vmatprep.subr.bf16.mxu0 0
    %4342 = vmatpush2.bf16.msra.mxu0 %v3575
    %4343 = vmatprep.subr.bf16.mxu0 0
    %4344 = vmatpush2.bf16.msra.mxu0 %v3572
    %4345 = vmatprep.subr.bf16.mxu0 0
    %4346 = vmatpush2.bf16.msra.mxu0 %v3569
    %4347 = vmatprep.subr.bf16.mxu0 0
    %4348 = vmatpush2.bf16.msra.mxu0 %v3566
    %4349 = vmatprep.mubr.bf16.mxu0 %v2768
    %4350 = vmatmul.mubr.bf16.gmra.mxu0 %v2767
    %v4351 = vpop.f32.mrf.mxu0
    %v4352 = vadd.f32 %v3036, %v4351
    %v4353 = vpop.f32.mrf.mxu0
    %v4354 = vpop.f32.mrf.mxu0
    %v4355 = vadd.f32 %v3036, %v4354
    %v4356 = vpop.f32.mrf.mxu0
    %4357 = vmatprep.mubr.bf16.mxu0 %v2775
    %4358 = vmatmul.mubr.bf16.gmra.mxu0 %v2774
    %v4359 = vpop.f32.mrf.mxu0
    %v4360 = vadd.f32 %v3036, %v4359
    %v4361 = vpop.f32.mrf.mxu0
    %v4362 = vpop.f32.mrf.mxu0
    %v4363 = vadd.f32 %v3036, %v4362
    %v4364 = vpop.f32.mrf.mxu0
    %4365 = vmatprep.mubr.bf16.mxu0 %v2782
    %4366 = vmatmul.mubr.bf16.gmra.mxu0 %v2781
    %v4367 = vpop.f32.mrf.mxu0
    %v4368 = vadd.f32 %v3036, %v4367
    %v4369 = vpop.f32.mrf.mxu0
    %v4370 = vpop.f32.mrf.mxu0
    %v4371 = vadd.f32 %v3036, %v4370
    %v4372 = vpop.f32.mrf.mxu0
    %4373 = vmatprep.mubr.bf16.mxu0 %v2789
    %4374 = vmatmul.mubr.bf16.gmra.mxu0 %v2788
    %v4375 = vpop.f32.mrf.mxu0
    %v4376 = vadd.f32 %v3036, %v4375
    %v4377 = vpop.f32.mrf.mxu0
    %v4378 = vpop.f32.mrf.mxu0
    %v4379 = vadd.f32 %v3036, %v4378
    %v4380 = vpop.f32.mrf.mxu0
    %4381 = vmatprep.mubr.bf16.mxu0 %v2796
    %4382 = vmatmul.mubr.bf16.gmra.mxu0 %v2795
    %v4383 = vpop.f32.mrf.mxu0
    %v4384 = vadd.f32 %v3036, %v4383
    %v4385 = vpop.f32.mrf.mxu0
    %v4386 = vpop.f32.mrf.mxu0
    %v4387 = vadd.f32 %v3036, %v4386
    %v4388 = vpop.f32.mrf.mxu0
    %4389 = vmatprep.mubr.bf16.mxu0 %v2803
    %4390 = vmatmul.mubr.bf16.gmra.mxu0 %v2802
    %v4391 = vpop.f32.mrf.mxu0
    %v4392 = vadd.f32 %v3036, %v4391
    %v4393 = vpop.f32.mrf.mxu0
    %v4394 = vpop.f32.mrf.mxu0
    %v4395 = vadd.f32 %v3036, %v4394
    %v4396 = vpop.f32.mrf.mxu0
    %4397 = vmatprep.mubr.bf16.mxu0 %v2810
    %4398 = vmatmul.mubr.bf16.gmra.mxu0 %v2809
    %v4399 = vpop.f32.mrf.mxu0
    %v4400 = vadd.f32 %v3036, %v4399
    %v4401 = vpop.f32.mrf.mxu0
    %v4402 = vpop.f32.mrf.mxu0
    %v4403 = vadd.f32 %v3036, %v4402
    %v4404 = vpop.f32.mrf.mxu0
    %4405 = vmatprep.mubr.bf16.mxu0 %v2817
    %4406 = vmatmul.mubr.bf16.gmra.mxu0 %v2816
    %v4407 = vpop.f32.mrf.mxu0
    %v4408 = vadd.f32 %v3036, %v4407
    %v4409 = vpop.f32.mrf.mxu0
    %v4410 = vpop.f32.mrf.mxu0
    %v4411 = vadd.f32 %v3036, %v4410
    %v4412 = vpop.f32.mrf.mxu0
    %4413 = vdwg.mxu0
    %4414 = vmatprep.subr.bf16.mxu0 0
    %4415 = vmatpush1.bf16.msra.mxu0 %v3611
    %4416 = vmatprep.subr.bf16.mxu0 0
    %4417 = vmatpush1.bf16.msra.mxu0 %v3608
    %4418 = vmatprep.subr.bf16.mxu0 0
    %4419 = vmatpush1.bf16.msra.mxu0 %v3605
    %4420 = vmatprep.subr.bf16.mxu0 0
    %4421 = vmatpush1.bf16.msra.mxu0 %v3602
    %4422 = vmatprep.subr.bf16.mxu0 0
    %4423 = vmatpush1.bf16.msra.mxu0 %v3599
    %4424 = vmatprep.subr.bf16.mxu0 0
    %4425 = vmatpush1.bf16.msra.mxu0 %v3596
    %4426 = vmatprep.subr.bf16.mxu0 0
    %4427 = vmatpush1.bf16.msra.mxu0 %v3593
    %4428 = vmatprep.subr.bf16.mxu0 0
    %4429 = vmatpush1.bf16.msra.mxu0 %v3590
    %4430 = vmatprep.subr.bf16.mxu0 0
    %4431 = vmatpush2.bf16.msra.mxu0 %v3635
    %4432 = vmatprep.subr.bf16.mxu0 0
    %4433 = vmatpush2.bf16.msra.mxu0 %v3632
    %4434 = vmatprep.subr.bf16.mxu0 0
    %4435 = vmatpush2.bf16.msra.mxu0 %v3629
    %4436 = vmatprep.subr.bf16.mxu0 0
    %4437 = vmatpush2.bf16.msra.mxu0 %v3626
    %4438 = vmatprep.subr.bf16.mxu0 0
    %4439 = vmatpush2.bf16.msra.mxu0 %v3623
    %4440 = vmatprep.subr.bf16.mxu0 0
    %4441 = vmatpush2.bf16.msra.mxu0 %v3620
    %4442 = vmatprep.subr.bf16.mxu0 0
    %4443 = vmatpush2.bf16.msra.mxu0 %v3617
    %4444 = vmatprep.subr.bf16.mxu0 0
    %4445 = vmatpush2.bf16.msra.mxu0 %v3614
    %4446 = vmatprep.mubr.bf16.mxu0 %v2770
    %4447 = vmatmul.mubr.bf16.gmra.mxu0 %v2769
    %v4448 = vpop.f32.mrf.mxu0
    %v4449 = vadd.f32 %v4352, %v4448
    %v4450 = vpop.f32.mrf.mxu0
    %v4451 = vpop.f32.mrf.mxu0
    %v4452 = vadd.f32 %v4355, %v4451
    %v4453 = vpop.f32.mrf.mxu0
    %4454 = vmatprep.mubr.bf16.mxu0 %v2777
    %4455 = vmatmul.mubr.bf16.gmra.mxu0 %v2776
    %v4456 = vpop.f32.mrf.mxu0
    %v4457 = vadd.f32 %v4360, %v4456
    %v4458 = vpop.f32.mrf.mxu0
    %v4459 = vpop.f32.mrf.mxu0
    %v4460 = vadd.f32 %v4363, %v4459
    %v4461 = vpop.f32.mrf.mxu0
    %4462 = vmatprep.mubr.bf16.mxu0 %v2784
    %4463 = vmatmul.mubr.bf16.gmra.mxu0 %v2783
    %v4464 = vpop.f32.mrf.mxu0
    %v4465 = vadd.f32 %v4368, %v4464
    %v4466 = vpop.f32.mrf.mxu0
    %v4467 = vpop.f32.mrf.mxu0
    %v4468 = vadd.f32 %v4371, %v4467
    %v4469 = vpop.f32.mrf.mxu0
    %4470 = vmatprep.mubr.bf16.mxu0 %v2791
    %4471 = vmatmul.mubr.bf16.gmra.mxu0 %v2790
    %v4472 = vpop.f32.mrf.mxu0
    %v4473 = vadd.f32 %v4376, %v4472
    %v4474 = vpop.f32.mrf.mxu0
    %v4475 = vpop.f32.mrf.mxu0
    %v4476 = vadd.f32 %v4379, %v4475
    %v4477 = vpop.f32.mrf.mxu0
    %4478 = vmatprep.mubr.bf16.mxu0 %v2798
    %4479 = vmatmul.mubr.bf16.gmra.mxu0 %v2797
    %v4480 = vpop.f32.mrf.mxu0
    %v4481 = vadd.f32 %v4384, %v4480
    %v4482 = vpop.f32.mrf.mxu0
    %v4483 = vpop.f32.mrf.mxu0
    %v4484 = vadd.f32 %v4387, %v4483
    %v4485 = vpop.f32.mrf.mxu0
    %4486 = vmatprep.mubr.bf16.mxu0 %v2805
    %4487 = vmatmul.mubr.bf16.gmra.mxu0 %v2804
    %v4488 = vpop.f32.mrf.mxu0
    %v4489 = vadd.f32 %v4392, %v4488
    %v4490 = vpop.f32.mrf.mxu0
    %v4491 = vpop.f32.mrf.mxu0
    %v4492 = vadd.f32 %v4395, %v4491
    %v4493 = vpop.f32.mrf.mxu0
    %4494 = vmatprep.mubr.bf16.mxu0 %v2812
    %4495 = vmatmul.mubr.bf16.gmra.mxu0 %v2811
    %v4496 = vpop.f32.mrf.mxu0
    %v4497 = vadd.f32 %v4400, %v4496
    %v4498 = vpop.f32.mrf.mxu0
    %v4499 = vpop.f32.mrf.mxu0
    %v4500 = vadd.f32 %v4403, %v4499
    %v4501 = vpop.f32.mrf.mxu0
    %4502 = vmatprep.mubr.bf16.mxu0 %v2819
    %4503 = vmatmul.mubr.bf16.gmra.mxu0 %v2818
    %v4504 = vpop.f32.mrf.mxu0
    %v4505 = vadd.f32 %v4408, %v4504
    %v4506 = vpop.f32.mrf.mxu0
    %v4507 = vpop.f32.mrf.mxu0
    %v4508 = vadd.f32 %v4411, %v4507
    %v4509 = vpop.f32.mrf.mxu0
    %4510 = vdwg.mxu0
    %4511 = vmatprep.subr.bf16.mxu0 0
    %4512 = vmatpush1.bf16.msra.mxu0 %v3659
    %4513 = vmatprep.subr.bf16.mxu0 0
    %4514 = vmatpush1.bf16.msra.mxu0 %v3656
    %4515 = vmatprep.subr.bf16.mxu0 0
    %4516 = vmatpush1.bf16.msra.mxu0 %v3653
    %4517 = vmatprep.subr.bf16.mxu0 0
    %4518 = vmatpush1.bf16.msra.mxu0 %v3650
    %4519 = vmatprep.subr.bf16.mxu0 0
    %4520 = vmatpush1.bf16.msra.mxu0 %v3647
    %4521 = vmatprep.subr.bf16.mxu0 0
    %4522 = vmatpush1.bf16.msra.mxu0 %v3644
    %4523 = vmatprep.subr.bf16.mxu0 0
    %4524 = vmatpush1.bf16.msra.mxu0 %v3641
    %4525 = vmatprep.subr.bf16.mxu0 0
    %4526 = vmatpush1.bf16.msra.mxu0 %v3638
    %4527 = vmatprep.subr.bf16.mxu0 0
    %4528 = vmatpush2.bf16.msra.mxu0 %v3683
    %4529 = vmatprep.subr.bf16.mxu0 0
    %4530 = vmatpush2.bf16.msra.mxu0 %v3680
    %4531 = vmatprep.subr.bf16.mxu0 0
    %4532 = vmatpush2.bf16.msra.mxu0 %v3677
    %4533 = vmatprep.subr.bf16.mxu0 0
    %4534 = vmatpush2.bf16.msra.mxu0 %v3674
    %4535 = vmatprep.subr.bf16.mxu0 0
    %4536 = vmatpush2.bf16.msra.mxu0 %v3671
    %4537 = vmatprep.subr.bf16.mxu0 0
    %4538 = vmatpush2.bf16.msra.mxu0 %v3668
    %4539 = vmatprep.subr.bf16.mxu0 0
    %4540 = vmatpush2.bf16.msra.mxu0 %v3665
    %4541 = vmatprep.subr.bf16.mxu0 0
    %4542 = vmatpush2.bf16.msra.mxu0 %v3662
    %4543 = vmatprep.mubr.bf16.mxu0 %v2772
    %4544 = vmatmul.mubr.bf16.gmra.mxu0 %v2771
    %v4545 = vpop.f32.mrf.mxu0
    %v4546 = vadd.f32 %v4449, %v4545
    %v4547 = vpop.f32.mrf.mxu0
    %v4548 = vpop.f32.mrf.mxu0
    %v4549 = vadd.f32 %v4452, %v4548
    %v4550 = vpop.f32.mrf.mxu0
    %4551 = vmatprep.mubr.bf16.mxu0 %v2779
    %4552 = vmatmul.mubr.bf16.gmra.mxu0 %v2778
    %v4553 = vpop.f32.mrf.mxu0
    %v4554 = vadd.f32 %v4457, %v4553
    %v4555 = vpop.f32.mrf.mxu0
    %v4556 = vpop.f32.mrf.mxu0
    %v4557 = vadd.f32 %v4460, %v4556
    %v4558 = vpop.f32.mrf.mxu0
    %4559 = vmatprep.mubr.bf16.mxu0 %v2786
    %4560 = vmatmul.mubr.bf16.gmra.mxu0 %v2785
    %v4561 = vpop.f32.mrf.mxu0
    %v4562 = vadd.f32 %v4465, %v4561
    %v4563 = vpop.f32.mrf.mxu0
    %v4564 = vpop.f32.mrf.mxu0
    %v4565 = vadd.f32 %v4468, %v4564
    %v4566 = vpop.f32.mrf.mxu0
    %4567 = vmatprep.mubr.bf16.mxu0 %v2793
    %4568 = vmatmul.mubr.bf16.gmra.mxu0 %v2792
    %v4569 = vpop.f32.mrf.mxu0
    %v4570 = vadd.f32 %v4473, %v4569
    %v4571 = vpop.f32.mrf.mxu0
    %v4572 = vpop.f32.mrf.mxu0
    %v4573 = vadd.f32 %v4476, %v4572
    %v4574 = vpop.f32.mrf.mxu0
    %4575 = vmatprep.mubr.bf16.mxu0 %v2800
    %4576 = vmatmul.mubr.bf16.gmra.mxu0 %v2799
    %v4577 = vpop.f32.mrf.mxu0
    %v4578 = vadd.f32 %v4481, %v4577
    %v4579 = vpop.f32.mrf.mxu0
    %v4580 = vpop.f32.mrf.mxu0
    %v4581 = vadd.f32 %v4484, %v4580
    %v4582 = vpop.f32.mrf.mxu0
    %4583 = vmatprep.mubr.bf16.mxu0 %v2807
    %4584 = vmatmul.mubr.bf16.gmra.mxu0 %v2806
    %v4585 = vpop.f32.mrf.mxu0
    %v4586 = vadd.f32 %v4489, %v4585
    %v4587 = vpop.f32.mrf.mxu0
    %v4588 = vpop.f32.mrf.mxu0
    %v4589 = vadd.f32 %v4492, %v4588
    %v4590 = vpop.f32.mrf.mxu0
    %4591 = vmatprep.mubr.bf16.mxu0 %v2814
    %4592 = vmatmul.mubr.bf16.gmra.mxu0 %v2813
    %v4593 = vpop.f32.mrf.mxu0
    %v4594 = vadd.f32 %v4497, %v4593
    %v4595 = vpop.f32.mrf.mxu0
    %v4596 = vpop.f32.mrf.mxu0
    %v4597 = vadd.f32 %v4500, %v4596
    %v4598 = vpop.f32.mrf.mxu0
    %4599 = vmatprep.mubr.bf16.mxu0 %v2821
    %4600 = vmatmul.mubr.bf16.gmra.mxu0 %v2820
    %v4601 = vpop.f32.mrf.mxu0
    %v4602 = vadd.f32 %v4505, %v4601
    %v4603 = vpop.f32.mrf.mxu0
    %v4604 = vpop.f32.mrf.mxu0
    %v4605 = vadd.f32 %v4508, %v4604
    %v4606 = vpop.f32.mrf.mxu0
    %4607 = vdwg.mxu0
    %4608 = vmatprep.subr.bf16.mxu0 0
    %4609 = vmatpush1.bf16.msra.mxu0 0
    %4610 = vmatprep.subr.bf16.mxu0 0
    %4611 = vmatpush1.bf16.msra.mxu0 0
    %4612 = vmatprep.subr.bf16.mxu0 0
    %4613 = vmatpush1.bf16.msra.mxu0 0
    %4614 = vmatprep.subr.bf16.mxu0 0
    %4615 = vmatpush1.bf16.msra.mxu0 0
    %4616 = vmatprep.subr.bf16.mxu0 0
    %4617 = vmatpush1.bf16.msra.mxu0 0
    %4618 = vmatprep.subr.bf16.mxu0 0
    %4619 = vmatpush1.bf16.msra.mxu0 0
    %4620 = vmatprep.subr.bf16.mxu0 0
    %4621 = vmatpush1.bf16.msra.mxu0 %v3689
    %4622 = vmatprep.subr.bf16.mxu0 0
    %4623 = vmatpush1.bf16.msra.mxu0 %v3686
    %4624 = vmatprep.subr.bf16.mxu0 0
    %4625 = vmatpush2.bf16.msra.mxu0 0
    %4626 = vmatprep.subr.bf16.mxu0 0
    %4627 = vmatpush2.bf16.msra.mxu0 0
    %4628 = vmatprep.subr.bf16.mxu0 0
    %4629 = vmatpush2.bf16.msra.mxu0 0
    %4630 = vmatprep.subr.bf16.mxu0 0
    %4631 = vmatpush2.bf16.msra.mxu0 0
    %4632 = vmatprep.subr.bf16.mxu0 0
    %4633 = vmatpush2.bf16.msra.mxu0 0
    %4634 = vmatprep.subr.bf16.mxu0 0
    %4635 = vmatpush2.bf16.msra.mxu0 0
    %4636 = vmatprep.subr.bf16.mxu0 0
    %4637 = vmatpush2.bf16.msra.mxu0 0
    %4638 = vmatprep.subr.bf16.mxu0 0
    %4639 = vmatpush2.bf16.msra.mxu0 0
    %4640 = vmatprep.mubr.bf16.mxu0 0
    %4641 = vmatmul.mubr.bf16.gmra.mxu0 %v3842
    %v4642 = vpop.f32.mrf.mxu0
    %v4643 = vadd.f32 %v4546, %v4642
    %v4644 = vpop.f32.mrf.mxu0
    %v4645 = vpop.f32.mrf.mxu0
    %v4646 = vadd.f32 %v4549, %v4645
    %v4647 = vpop.f32.mrf.mxu0
    %4648 = vmatprep.mubr.bf16.mxu0 0
    %4649 = vmatmul.mubr.bf16.gmra.mxu0 %v3845
    %v4650 = vpop.f32.mrf.mxu0
    %v4651 = vadd.f32 %v4554, %v4650
    %v4652 = vpop.f32.mrf.mxu0
    %v4653 = vpop.f32.mrf.mxu0
    %v4654 = vadd.f32 %v4557, %v4653
    %v4655 = vpop.f32.mrf.mxu0
    %4656 = vmatprep.mubr.bf16.mxu0 0
    %4657 = vmatmul.mubr.bf16.gmra.mxu0 %v3848
    %v4658 = vpop.f32.mrf.mxu0
    %v4659 = vadd.f32 %v4562, %v4658
    %v4660 = vpop.f32.mrf.mxu0
    %v4661 = vpop.f32.mrf.mxu0
    %v4662 = vadd.f32 %v4565, %v4661
    %v4663 = vpop.f32.mrf.mxu0
    %4664 = vmatprep.mubr.bf16.mxu0 0
    %4665 = vmatmul.mubr.bf16.gmra.mxu0 %v3851
    %v4666 = vpop.f32.mrf.mxu0
    %v4667 = vadd.f32 %v4570, %v4666
    %v4668 = vpop.f32.mrf.mxu0
    %v4669 = vpop.f32.mrf.mxu0
    %v4670 = vadd.f32 %v4573, %v4669
    %v4671 = vpop.f32.mrf.mxu0
    %4672 = vmatprep.mubr.bf16.mxu0 0
    %4673 = vmatmul.mubr.bf16.gmra.mxu0 %v3854
    %v4674 = vpop.f32.mrf.mxu0
    %v4675 = vadd.f32 %v4578, %v4674
    %v4676 = vpop.f32.mrf.mxu0
    %v4677 = vpop.f32.mrf.mxu0
    %v4678 = vadd.f32 %v4581, %v4677
    %v4679 = vpop.f32.mrf.mxu0
    %4680 = vmatprep.mubr.bf16.mxu0 0
    %4681 = vmatmul.mubr.bf16.gmra.mxu0 %v3857
    %v4682 = vpop.f32.mrf.mxu0
    %v4683 = vadd.f32 %v4586, %v4682
    %v4684 = vpop.f32.mrf.mxu0
    %v4685 = vpop.f32.mrf.mxu0
    %v4686 = vadd.f32 %v4589, %v4685
    %v4687 = vpop.f32.mrf.mxu0
    %4688 = vmatprep.mubr.bf16.mxu0 0
    %4689 = vmatmul.mubr.bf16.gmra.mxu0 %v3860
    %v4690 = vpop.f32.mrf.mxu0
    %v4691 = vadd.f32 %v4594, %v4690
    %v4692 = vpop.f32.mrf.mxu0
    %v4693 = vpop.f32.mrf.mxu0
    %v4694 = vadd.f32 %v4597, %v4693
    %v4695 = vpop.f32.mrf.mxu0
    %4696 = vmatprep.mubr.bf16.mxu0 0
    %4697 = vmatmul.mubr.bf16.gmra.mxu0 %v3863
    %v4698 = vpop.f32.mrf.mxu0
    %v4699 = vadd.f32 %v4602, %v4698
    %v4700 = vpop.f32.mrf.mxu0
    %v4701 = vpop.f32.mrf.mxu0
    %v4702 = vadd.f32 %v4605, %v4701
    %v4703 = vpop.f32.mrf.mxu0
    %4704 = vdwg.mxu0
    %v4705 = vmax.f32 %v4239, 0.0
    %v4706 = vmax.f32 %v4241, 0.0
    %v4707 = vmax.f32 %v4643, 0.0
    %v4708 = vmax.f32 %v4243, 0.0
    %v4709 = vmax.f32 %v4245, 0.0
    %v4710 = vmax.f32 %v4646, 0.0
    %v4711 = vmax.f32 %v4249, 0.0
    %v4712 = vmax.f32 %v4251, 0.0
    %v4713 = vmax.f32 %v4651, 0.0
    %v4714 = vmax.f32 %v4253, 0.0
    %v4715 = vmax.f32 %v4255, 0.0
    %v4716 = vmax.f32 %v4654, 0.0
    %v4717 = vmax.f32 %v4259, 0.0
    %v4718 = vmax.f32 %v4261, 0.0
    %v4719 = vmax.f32 %v4659, 0.0
    %v4720 = vmax.f32 %v4263, 0.0
    %v4721 = vmax.f32 %v4265, 0.0
    %v4722 = vmax.f32 %v4662, 0.0
    %v4723 = vmax.f32 %v4269, 0.0
    %v4724 = vmax.f32 %v4271, 0.0
    %v4725 = vmax.f32 %v4667, 0.0
    %v4726 = vmax.f32 %v4273, 0.0
    %v4727 = vmax.f32 %v4275, 0.0
    %v4728 = vmax.f32 %v4670, 0.0
    %v4729 = vmax.f32 %v4279, 0.0
    %v4730 = vmax.f32 %v4281, 0.0
    %v4731 = vmax.f32 %v4675, 0.0
    %v4732 = vmax.f32 %v4283, 0.0
    %v4733 = vmax.f32 %v4285, 0.0
    %v4734 = vmax.f32 %v4678, 0.0
    %v4735 = vmax.f32 %v4289, 0.0
    %v4736 = vmax.f32 %v4291, 0.0
    %v4737 = vmax.f32 %v4683, 0.0
    %v4738 = vmax.f32 %v4293, 0.0
    %v4739 = vmax.f32 %v4295, 0.0
    %v4740 = vmax.f32 %v4686, 0.0
    %v4741 = vmax.f32 %v4299, 0.0
    %v4742 = vmax.f32 %v4301, 0.0
    %v4743 = vmax.f32 %v4691, 0.0
    %v4744 = vmax.f32 %v4303, 0.0
    %v4745 = vmax.f32 %v4305, 0.0
    %v4746 = vmax.f32 %v4694, 0.0
    %v4747 = vmax.f32 %v4309, 0.0
    %v4748 = vmax.f32 %v4311, 0.0
    %v4749 = vmax.f32 %v4699, 0.0
    %v4750 = vmax.f32 %v4313, 0.0
    %v4751 = vmax.f32 %v4315, 0.0
    %v4752 = vmax.f32 %v4702, 0.0
    %v4753 = vpack.c.bf16 %v4708, %v4705
    %v4754 = vpack.c.bf16 %v4709, %v4706
    %v4755 = vpack.c.bf16 %v4710, %v4707
    %v4756 = vpack.c.bf16 %v4714, %v4711
    %v4757 = vpack.c.bf16 %v4715, %v4712
    %v4758 = vpack.c.bf16 %v4716, %v4713
    %v4759 = vpack.c.bf16 %v4720, %v4717
    %v4760 = vpack.c.bf16 %v4721, %v4718
    %v4761 = vpack.c.bf16 %v4722, %v4719
    %v4762 = vpack.c.bf16 %v4726, %v4723
    %v4763 = vpack.c.bf16 %v4727, %v4724
    %v4764 = vpack.c.bf16 %v4728, %v4725
    %v4765 = vpack.c.bf16 %v4732, %v4729
    %v4766 = vpack.c.bf16 %v4733, %v4730
    %v4767 = vpack.c.bf16 %v4734, %v4731
    %v4768 = vpack.c.bf16 %v4738, %v4735
    %v4769 = vpack.c.bf16 %v4739, %v4736
    %v4770 = vpack.c.bf16 %v4740, %v4737
    %v4771 = vpack.c.bf16 %v4744, %v4741
    %v4772 = vpack.c.bf16 %v4745, %v4742
    %v4773 = vpack.c.bf16 %v4746, %v4743
    %v4774 = vpack.c.bf16 %v4750, %v4747
    %v4775 = vpack.c.bf16 %v4751, %v4748
    %v4776 = vpack.c.bf16 %v4752, %v4749
    %v4777 = vld [vmem:[%s7] sm:$0xf]
    %v4778 = vld [vmem:[%s7 + $0x4] sm:$0xf]
    %v4779 = vld [vmem:[%s7 + $0x8] sm:$0xf]
    %v4780 = vld [vmem:[%s7 + $0xc] sm:$0xf]
    %v4781 = vld [vmem:[%s7 + $0x10] sm:$0xf]
    %v4782 = vld [vmem:[%s7 + $0x14] sm:$0xf]
    %v4783 = vld [vmem:[%s7 + $0x18] sm:$0xf]
    %v4784 = vld [vmem:[%s7 + $0x1c] sm:$0xf]
    %v4785 = vld [vmem:[%s7 + $0x20] sm:$0xf]
    %v4786 = vld [vmem:[%s7 + $0x24] sm:$0xf]
    %v4787 = vld [vmem:[%s7 + $0x28] sm:$0xf]
    %v4788 = vld [vmem:[%s7 + $0x2c] sm:$0xf]
    %v4789 = vld [vmem:[%s7 + $0x30] sm:$0xf]
    %v4790 = vld [vmem:[%s7 + $0x34] sm:$0xf]
    %v4791 = vld [vmem:[%s7 + $0x38] sm:$0xf]
    %v4792 = vld [vmem:[%s7 + $0x3c] sm:$0xf]
    %v4793 = vld [vmem:[%s7 + $0x40] sm:$0xf]
    %v4794 = vld [vmem:[%s7 + $0x44] sm:$0xf]
    %v4795 = vld [vmem:[%s7 + $0x48] sm:$0xf]
    %v4796 = vld [vmem:[%s7 + $0x4c] sm:$0xf]
    %v4797 = vld [vmem:[%s7 + $0x50] sm:$0xf]
    %v4798 = vld [vmem:[%s7 + $0x54] sm:$0xf]
    %v4799 = vld [vmem:[%s7 + $0x58] sm:$0xf]
    %v4800 = vld [vmem:[%s7 + $0x5c] sm:$0xf]
    %v4801 = vld [vmem:[%s7 + $0x60] sm:$0xf]
    %v4802 = vld [vmem:[%s7 + $0x64] sm:$0xf]
    %v4803 = vld [vmem:[%s7 + $0x68] sm:$0xf]
    %v4804 = vld [vmem:[%s7 + $0x6c] sm:$0xf]
    %v4805 = vld [vmem:[%s7 + $0x70] sm:$0xf]
    %v4806 = vld [vmem:[%s7 + $0x74] sm:$0xf]
    %v4807 = vld [vmem:[%s7 + $0x78] sm:$0xf]
    %v4808 = vld [vmem:[%s7 + $0x7c] sm:$0xf]
    %v4809 = vld [vmem:[%s7 + $0x80] sm:$0xf]
    %v4810 = vld [vmem:[%s7 + $0x84] sm:$0xf]
    %v4811 = vld [vmem:[%s7 + $0x88] sm:$0xf]
    %v4812 = vld [vmem:[%s7 + $0x8c] sm:$0xf]
    %v4813 = vld [vmem:[%s7 + $0x90] sm:$0xf]
    %v4814 = vld [vmem:[%s7 + $0x94] sm:$0x3]
    %v4815 = vld [vmem:[%s8] sm:$0x1]
    %v4817 = vlaneseq
    %v4818 = vshrl.u32 %v4817, 7
    %v4819 = vsub.s32 0, %v4818
    %v4820 = vrot.slane %v4815, %v4819
    %v4860 = vunpack.c.l.b16 %v4777
    %v4861 = vunpack.c.l.b16 %v4778
    %v4862 = vunpack.c.l.b16 %v4779
    %v4863 = vunpack.c.l.b16 %v4780
    %v4864 = vunpack.c.l.b16 %v4781
    %v4865 = vunpack.c.l.b16 %v4782
    %v4866 = vunpack.c.l.b16 %v4783
    %v4867 = vunpack.c.l.b16 %v4784
    %v4868 = vunpack.c.l.b16 %v4785
    %v4869 = vunpack.c.l.b16 %v4786
    %v4870 = vunpack.c.l.b16 %v4787
    %v4871 = vunpack.c.l.b16 %v4788
    %v4872 = vunpack.c.l.b16 %v4789
    %v4873 = vunpack.c.l.b16 %v4790
    %v4874 = vunpack.c.l.b16 %v4791
    %v4875 = vunpack.c.l.b16 %v4792
    %v4876 = vunpack.c.l.b16 %v4793
    %v4877 = vunpack.c.l.b16 %v4794
    %v4878 = vunpack.c.l.b16 %v4795
    %v4879 = vunpack.c.l.b16 %v4796
    %v4880 = vunpack.c.l.b16 %v4797
    %v4881 = vunpack.c.l.b16 %v4798
    %v4882 = vunpack.c.l.b16 %v4799
    %v4883 = vunpack.c.l.b16 %v4800
    %v4884 = vunpack.c.l.b16 %v4801
    %v4885 = vunpack.c.l.b16 %v4802
    %v4886 = vunpack.c.l.b16 %v4803
    %v4887 = vunpack.c.l.b16 %v4804
    %v4888 = vunpack.c.l.b16 %v4805
    %v4889 = vunpack.c.l.b16 %v4806
    %v4890 = vunpack.c.l.b16 %v4807
    %v4891 = vunpack.c.l.b16 %v4808
    %v4892 = vunpack.c.l.b16 %v4809
    %v4893 = vunpack.c.l.b16 %v4810
    %v4894 = vunpack.c.l.b16 %v4811
    %v4895 = vunpack.c.l.b16 %v4812
    %v4896 = vunpack.c.l.b16 %v4813
    %v4897 = vunpack.c.l.b16 %v4814
    %v4898 = vpack.c.b16 %v4861, %v4860
    %v4899 = vpack.c.b16 %v4863, %v4862
    %v4900 = vpack.c.b16 %v4865, %v4864
    %v4901 = vpack.c.b16 %v4867, %v4866
    %v4902 = vpack.c.b16 %v4869, %v4868
    %v4903 = vpack.c.b16 %v4871, %v4870
    %v4904 = vpack.c.b16 %v4873, %v4872
    %v4905 = vpack.c.b16 %v4875, %v4874
    %v4906 = vpack.c.b16 %v4877, %v4876
    %v4907 = vpack.c.b16 %v4879, %v4878
    %v4908 = vpack.c.b16 %v4881, %v4880
    %v4909 = vpack.c.b16 %v4883, %v4882
    %v4910 = vpack.c.b16 %v4885, %v4884
    %v4911 = vpack.c.b16 %v4887, %v4886
    %v4912 = vpack.c.b16 %v4889, %v4888
    %v4913 = vpack.c.b16 %v4891, %v4890
    %v4914 = vpack.c.b16 %v4893, %v4892
    %v4915 = vpack.c.b16 %v4895, %v4894
    %v4916 = vpack.c.b16 %v4897, %v4896
    %vm4935 = vcmask 359424
    %v4937 = vsel %vm4935, %v4755, 0
    %v4940 = vsel %vm4935, %v4758, 0
    %v4943 = vsel %vm4935, %v4761, 0
    %v4946 = vsel %vm4935, %v4764, 0
    %v4949 = vsel %vm4935, %v4767, 0
    %v4952 = vsel %vm4935, %v4770, 0
    %v4955 = vsel %vm4935, %v4773, 0
    %v4958 = vsel %vm4935, %v4776, 0
    %vm4960 = vcmask 1045504
    %v4962 = vsel %vm4960, %v4916, 0
    %4964 = vmatprep.subr.bf16.mxu0 0
    %4965 = vmatpush1.bf16.msra.mxu0 %v4905
    %4966 = vmatprep.subr.bf16.mxu0 0
    %4967 = vmatpush1.bf16.msra.mxu0 %v4904
    %4968 = vmatprep.subr.bf16.mxu0 0
    %4969 = vmatpush1.bf16.msra.mxu0 %v4903
    %4970 = vmatprep.subr.bf16.mxu0 0
    %4971 = vmatpush1.bf16.msra.mxu0 %v4902
    %4972 = vmatprep.subr.bf16.mxu0 0
    %4973 = vmatpush1.bf16.msra.mxu0 %v4901
    %4974 = vmatprep.subr.bf16.mxu0 0
    %4975 = vmatpush1.bf16.msra.mxu0 %v4900
    %4976 = vmatprep.subr.bf16.mxu0 0
    %4977 = vmatpush1.bf16.msra.mxu0 %v4899
    %4978 = vmatprep.subr.bf16.mxu0 0
    %4979 = vmatpush1.bf16.msra.mxu0 %v4898
    %4980 = vmatprep.subr.bf16.mxu0 0
    %4981 = vmatpush2.bf16.msra.mxu0 %v4913
    %4982 = vmatprep.subr.bf16.mxu0 0
    %4983 = vmatpush2.bf16.msra.mxu0 %v4912
    %4984 = vmatprep.subr.bf16.mxu0 0
    %4985 = vmatpush2.bf16.msra.mxu0 %v4911
    %4986 = vmatprep.subr.bf16.mxu0 0
    %4987 = vmatpush2.bf16.msra.mxu0 %v4910
    %4988 = vmatprep.subr.bf16.mxu0 0
    %4989 = vmatpush2.bf16.msra.mxu0 %v4909
    %4990 = vmatprep.subr.bf16.mxu0 0
    %4991 = vmatpush2.bf16.msra.mxu0 %v4908
    %4992 = vmatprep.subr.bf16.mxu0 0
    %4993 = vmatpush2.bf16.msra.mxu0 %v4907
    %4994 = vmatprep.subr.bf16.mxu0 0
    %4995 = vmatpush2.bf16.msra.mxu0 %v4906
    %4996 = vmatprep.mubr.bf16.mxu0 %v4754
    %4997 = vmatmul.mubr.bf16.gmra.mxu0 %v4753
    %v4998 = vpop.f32.mrf.mxu0
    %v4999 = vadd.f32 %v4820, %v4998
    %v5000 = vpop.f32.mrf.mxu0
    %v5001 = vpop.f32.mrf.mxu0
    %v5002 = vadd.f32 %v4820, %v5001
    %v5003 = vpop.f32.mrf.mxu0
    %5004 = vmatprep.mubr.bf16.mxu0 %v4757
    %5005 = vmatmul.mubr.bf16.gmra.mxu0 %v4756
    %v5006 = vpop.f32.mrf.mxu0
    %v5007 = vadd.f32 %v4820, %v5006
    %v5008 = vpop.f32.mrf.mxu0
    %v5009 = vpop.f32.mrf.mxu0
    %v5010 = vadd.f32 %v4820, %v5009
    %v5011 = vpop.f32.mrf.mxu0
    %5012 = vmatprep.mubr.bf16.mxu0 %v4760
    %5013 = vmatmul.mubr.bf16.gmra.mxu0 %v4759
    %v5014 = vpop.f32.mrf.mxu0
    %v5015 = vadd.f32 %v4820, %v5014
    %v5016 = vpop.f32.mrf.mxu0
    %v5017 = vpop.f32.mrf.mxu0
    %v5018 = vadd.f32 %v4820, %v5017
    %v5019 = vpop.f32.mrf.mxu0
    %5020 = vmatprep.mubr.bf16.mxu0 %v4763
    %5021 = vmatmul.mubr.bf16.gmra.mxu0 %v4762
    %v5022 = vpop.f32.mrf.mxu0
    %v5023 = vadd.f32 %v4820, %v5022
    %v5024 = vpop.f32.mrf.mxu0
    %v5025 = vpop.f32.mrf.mxu0
    %v5026 = vadd.f32 %v4820, %v5025
    %v5027 = vpop.f32.mrf.mxu0
    %5028 = vmatprep.mubr.bf16.mxu0 %v4766
    %5029 = vmatmul.mubr.bf16.gmra.mxu0 %v4765
    %v5030 = vpop.f32.mrf.mxu0
    %v5031 = vadd.f32 %v4820, %v5030
    %v5032 = vpop.f32.mrf.mxu0
    %v5033 = vpop.f32.mrf.mxu0
    %v5034 = vadd.f32 %v4820, %v5033
    %v5035 = vpop.f32.mrf.mxu0
    %5036 = vmatprep.mubr.bf16.mxu0 %v4769
    %5037 = vmatmul.mubr.bf16.gmra.mxu0 %v4768
    %v5038 = vpop.f32.mrf.mxu0
    %v5039 = vadd.f32 %v4820, %v5038
    %v5040 = vpop.f32.mrf.mxu0
    %v5041 = vpop.f32.mrf.mxu0
    %v5042 = vadd.f32 %v4820, %v5041
    %v5043 = vpop.f32.mrf.mxu0
    %5044 = vmatprep.mubr.bf16.mxu0 %v4772
    %5045 = vmatmul.mubr.bf16.gmra.mxu0 %v4771
    %v5046 = vpop.f32.mrf.mxu0
    %v5047 = vadd.f32 %v4820, %v5046
    %v5048 = vpop.f32.mrf.mxu0
    %v5049 = vpop.f32.mrf.mxu0
    %v5050 = vadd.f32 %v4820, %v5049
    %v5051 = vpop.f32.mrf.mxu0
    %5052 = vmatprep.mubr.bf16.mxu0 %v4775
    %5053 = vmatmul.mubr.bf16.gmra.mxu0 %v4774
    %v5054 = vpop.f32.mrf.mxu0
    %v5055 = vadd.f32 %v4820, %v5054
    %v5056 = vpop.f32.mrf.mxu0
    %v5057 = vpop.f32.mrf.mxu0
    %v5058 = vadd.f32 %v4820, %v5057
    %v5059 = vpop.f32.mrf.mxu0
    %5060 = vdwg.mxu0
    %5061 = vmatprep.subr.bf16.mxu0 0
    %5062 = vmatpush1.bf16.msra.mxu0 0
    %5063 = vmatprep.subr.bf16.mxu0 0
    %5064 = vmatpush1.bf16.msra.mxu0 0
    %5065 = vmatprep.subr.bf16.mxu0 0
    %5066 = vmatpush1.bf16.msra.mxu0 0
    %5067 = vmatprep.subr.bf16.mxu0 0
    %5068 = vmatpush1.bf16.msra.mxu0 0
    %5069 = vmatprep.subr.bf16.mxu0 0
    %5070 = vmatpush1.bf16.msra.mxu0 0
    %5071 = vmatprep.subr.bf16.mxu0 0
    %5072 = vmatpush1.bf16.msra.mxu0 %v4962
    %5073 = vmatprep.subr.bf16.mxu0 0
    %5074 = vmatpush1.bf16.msra.mxu0 %v4915
    %5075 = vmatprep.subr.bf16.mxu0 0
    %5076 = vmatpush1.bf16.msra.mxu0 %v4914
    %5077 = vmatprep.subr.bf16.mxu0 0
    %5078 = vmatpush2.bf16.msra.mxu0 0
    %5079 = vmatprep.subr.bf16.mxu0 0
    %5080 = vmatpush2.bf16.msra.mxu0 0
    %5081 = vmatprep.subr.bf16.mxu0 0
    %5082 = vmatpush2.bf16.msra.mxu0 0
    %5083 = vmatprep.subr.bf16.mxu0 0
    %5084 = vmatpush2.bf16.msra.mxu0 0
    %5085 = vmatprep.subr.bf16.mxu0 0
    %5086 = vmatpush2.bf16.msra.mxu0 0
    %5087 = vmatprep.subr.bf16.mxu0 0
    %5088 = vmatpush2.bf16.msra.mxu0 0
    %5089 = vmatprep.subr.bf16.mxu0 0
    %5090 = vmatpush2.bf16.msra.mxu0 0
    %5091 = vmatprep.subr.bf16.mxu0 0
    %5092 = vmatpush2.bf16.msra.mxu0 0
    %5093 = vmatprep.mubr.bf16.mxu0 0
    %5094 = vmatmul.mubr.bf16.gmra.mxu0 %v4937
    %v5095 = vpop.f32.mrf.mxu0
    %v5096 = vadd.f32 %v4999, %v5095
    %v5097 = vpop.f32.mrf.mxu0
    %v5098 = vpop.f32.mrf.mxu0
    %v5099 = vadd.f32 %v5002, %v5098
    %v5100 = vpop.f32.mrf.mxu0
    %5101 = vmatprep.mubr.bf16.mxu0 0
    %5102 = vmatmul.mubr.bf16.gmra.mxu0 %v4940
    %v5103 = vpop.f32.mrf.mxu0
    %v5104 = vadd.f32 %v5007, %v5103
    %v5105 = vpop.f32.mrf.mxu0
    %v5106 = vpop.f32.mrf.mxu0
    %v5107 = vadd.f32 %v5010, %v5106
    %v5108 = vpop.f32.mrf.mxu0
    %5109 = vmatprep.mubr.bf16.mxu0 0
    %5110 = vmatmul.mubr.bf16.gmra.mxu0 %v4943
    %v5111 = vpop.f32.mrf.mxu0
    %v5112 = vadd.f32 %v5015, %v5111
    %v5113 = vpop.f32.mrf.mxu0
    %v5114 = vpop.f32.mrf.mxu0
    %v5115 = vadd.f32 %v5018, %v5114
    %v5116 = vpop.f32.mrf.mxu0
    %5117 = vmatprep.mubr.bf16.mxu0 0
    %5118 = vmatmul.mubr.bf16.gmra.mxu0 %v4946
    %v5119 = vpop.f32.mrf.mxu0
    %v5120 = vadd.f32 %v5023, %v5119
    %v5121 = vpop.f32.mrf.mxu0
    %v5122 = vpop.f32.mrf.mxu0
    %v5123 = vadd.f32 %v5026, %v5122
    %v5124 = vpop.f32.mrf.mxu0
    %5125 = vmatprep.mubr.bf16.mxu0 0
    %5126 = vmatmul.mubr.bf16.gmra.mxu0 %v4949
    %v5127 = vpop.f32.mrf.mxu0
    %v5128 = vadd.f32 %v5031, %v5127
    %v5129 = vpop.f32.mrf.mxu0
    %v5130 = vpop.f32.mrf.mxu0
    %v5131 = vadd.f32 %v5034, %v5130
    %v5132 = vpop.f32.mrf.mxu0
    %5133 = vmatprep.mubr.bf16.mxu0 0
    %5134 = vmatmul.mubr.bf16.gmra.mxu0 %v4952
    %v5135 = vpop.f32.mrf.mxu0
    %v5136 = vadd.f32 %v5039, %v5135
    %v5137 = vpop.f32.mrf.mxu0
    %v5138 = vpop.f32.mrf.mxu0
    %v5139 = vadd.f32 %v5042, %v5138
    %v5140 = vpop.f32.mrf.mxu0
    %5141 = vmatprep.mubr.bf16.mxu0 0
    %5142 = vmatmul.mubr.bf16.gmra.mxu0 %v4955
    %v5143 = vpop.f32.mrf.mxu0
    %v5144 = vadd.f32 %v5047, %v5143
    %v5145 = vpop.f32.mrf.mxu0
    %v5146 = vpop.f32.mrf.mxu0
    %v5147 = vadd.f32 %v5050, %v5146
    %v5148 = vpop.f32.mrf.mxu0
    %5149 = vmatprep.mubr.bf16.mxu0 0
    %5150 = vmatmul.mubr.bf16.gmra.mxu0 %v4958
    %v5151 = vpop.f32.mrf.mxu0
    %v5152 = vadd.f32 %v5055, %v5151
    %v5153 = vpop.f32.mrf.mxu0
    %v5154 = vpop.f32.mrf.mxu0
    %v5155 = vadd.f32 %v5058, %v5154
    %v5156 = vpop.f32.mrf.mxu0
    %5157 = vdwg.mxu0
    %5158 = vst [vmem:[#allocation2] sm:$0xff] %v5096
    %5159 = vst [vmem:[#allocation2 + $0x8] sm:$0xff] %v5099
    %5160 = vst [vmem:[#allocation2 + $0x10] sm:$0xff] %v5104
    %5161 = vst [vmem:[#allocation2 + $0x18] sm:$0xff] %v5107
    %5162 = vst [vmem:[#allocation2 + $0x20] sm:$0xff] %v5112
    %5163 = vst [vmem:[#allocation2 + $0x28] sm:$0xff] %v5115
    %5164 = vst [vmem:[#allocation2 + $0x30] sm:$0xff] %v5120
    %5165 = vst [vmem:[#allocation2 + $0x38] sm:$0xff] %v5123
    %5166 = vst [vmem:[#allocation2 + $0x40] sm:$0xff] %v5128
    %5167 = vst [vmem:[#allocation2 + $0x48] sm:$0xff] %v5131
    %5168 = vst [vmem:[#allocation2 + $0x50] sm:$0xff] %v5136
    %5169 = vst [vmem:[#allocation2 + $0x58] sm:$0xff] %v5139
    %5170 = vst [vmem:[#allocation2 + $0x60] sm:$0xff] %v5144
    %5171 = vst [vmem:[#allocation2 + $0x68] sm:$0xff] %v5147
    %5172 = vst [vmem:[#allocation2 + $0x70] sm:$0xff] %v5152
    %5173 = vst [vmem:[#allocation2 + $0x78] sm:$0xff] %v5155
    // Predicated region
    $region38: #{tpu_custom_call.1} parent=1 // pred_check
      _
    $region39: #{tpu_custom_call.1} parent=1 // pred_check_branch
      %5175 = sbr.rel (0) target = $region41
    $region40: #{tpu_custom_call.1} parent=1 // pred_region
      %s5177 = ssub.s32 2048, 2048
      %5178 = vsyncadd [#allocation3], %s5177
      %s5179 = sshll.u32 [#allocation2], 4
      %s5180 = int_to_ptr.vmem [resolvable:$true] %s5179
      %5185 = dma.vmem_to_hbm [thread:$0]  %s5180, 2048, %s9, [#allocation3], 128, 128, 8
    $region41: #{tpu_custom_call.1} parent=1 // pred_fallthru
      _
    // Predicated region
    $region42: #{tpu_custom_call.1} parent=1 // pred_check
      _
    $region43: #{tpu_custom_call.1} parent=1 // pred_check_branch
      %5187 = sbr.rel (0) target = $region45
    $region44: #{tpu_custom_call.1} parent=1 // pred_region
      %5188 = dma.done [#allocation3], 2048
    $region45: #{tpu_custom_call.1} parent=1 // pred_fallthru
      _
    %5189 = vsyncpa [#allocation3], 1

</llo_original>
